<compile_context>
chip_gen: v5e
topology: v5e:2x2
jax: 0.10.0
libtpu: 0.0.40
codegen_flags: <defaults>
</compile_context>

<pallas_src>
import functools
from math import ceil

import jax
import jax.numpy as jnp
import numpy as np
from jax import lax
from jax.experimental import pallas as pl
from jax.experimental.pallas import tpu as pltpu

# ResVesselNet default config
CHANNELS = [2, 5, 10, 20, 50, 1]
KERNELS = [3, 5, 5, 3, 1]
DEPTH = 5


def _round_up(x, m):
    return m * ((x + m - 1) // m)


def _tap_order(k):
    """k^3 conv-tap coordinates with the centre tap FIRST (residual source)."""
    c = k // 2
    rest = [(kd, kh, kw) for kd in range(k) for kh in range(k) for kw in range(k)
            if (kd, kh, kw) != (c, c, c)]
    return [(c, c, c)] + rest


# ---------------------------------------------------------------- Pallas kernels
def _convT_kernel(p_ref, w_ref, b_ref, o_ref, *, apply_relu):
    """outT = W^T @ [relu](P^T) + b   (plain conv layer, no residual)."""
    p = p_ref[...]
    if apply_relu:
        p = jnp.maximum(p, 0)
    acc = jnp.dot(w_ref[...], p, preferred_element_type=jnp.float32)
    o_ref[...] = (acc + b_ref[...]).astype(o_ref.dtype)


def _convT_res_kernel(p_ref, w_ref, b_ref, s_ref, o_ref):
    """Res_Block: outT = W^T @ relu(P^T) + b + S @ centre_tap(P^T).

    The residual is the torch centre-crop + channel-repeat of the (pre-ReLU) block
    input; with centre-tap-first patch ordering it is rows [0:cin] of the patches,
    channel-tiled by the tiny 0/1 selector matmul S (coutp, cin) on the MXU."""
    cin = s_ref.shape[1]
    z = jnp.dot(s_ref[...], p_ref[:cin, :], preferred_element_type=jnp.float32)
    acc = jnp.dot(w_ref[...], jnp.maximum(p_ref[...], 0),
                  preferred_element_type=jnp.float32)
    o_ref[...] = (acc + b_ref[...] + z).astype(o_ref.dtype)


def _convT_res_head_kernel(p_ref, w_ref, b_ref, s_ref, w4_ref, b4_ref, o_ref):
    """Layer-3 Res_Block fused with the final ReLU + 1x1x1 conv (layer 4);
    the (c3p, tm) layer-3 activations never leave VMEM."""
    cin = s_ref.shape[1]
    z = jnp.dot(s_ref[...], p_ref[:cin, :], preferred_element_type=jnp.float32)
    h3 = jnp.dot(w_ref[...], jnp.maximum(p_ref[...], 0),
                 preferred_element_type=jnp.float32)
    h3 = h3 + b_ref[...] + z
    h4 = jnp.maximum(h3, 0.0).astype(jnp.bfloat16)            # layer-4 ReLU
    o_ref[...] = (jnp.dot(w4_ref[...], h4, preferred_element_type=jnp.float32)
                  + b4_ref[...]).astype(o_ref.dtype)


# ------------------------------------------------------------------ layer driver
def conv_layerT(patchesT, wT, b, *, cout, apply_relu=False, sel=None, head=None,
                out_dtype=jnp.bfloat16, vmem_budget=8 << 20, min_steps=4):
    """One conv layer as a single pallas_call.

    patchesT : (Kp, M)  bf16 transposed im2col patches, centre tap first, Kp a
               multiple of 16 (zero rows appended), M unpadded.
    wT       : (coutp, Kp) bf16 ;  b : (coutp, 1) f32
    sel      : (coutp, cin) bf16 residual selector (Res_Block layers) or None
    head     : optional (w4T (c4p, coutp) bf16, b4 (c4p, 1) f32) fused final conv
    Returns (cout, M) array of `out_dtype`."""
    Kp, M = patchesT.shape
    coutp = wT.shape[0]
    c_rows = head[0].shape[0] if head is not None else coutp

    # VMEM-budgeted tile: double-buffered (patches + output) bytes per column kept
    # under `vmem_budget` (safe on v5e/v6e/v7x scoped VMEM), then at least
    # `min_steps` (even) grid steps so patch DMA overlaps compute on single-TC
    # chips and the parallel axis load-balances across v7x's two TensorCores.
    out_b = np.dtype(out_dtype).itemsize
    bytes_per_col = 2 * (Kp * 2 + c_rows * out_b)
    tm_cap = max(128, (vmem_budget // bytes_per_col) // 128 * 128)
    max_steps = pl.cdiv(M, 128)
    steps = min(max(pl.cdiv(M, tm_cap), min_steps), max_steps)
    if steps > 1 and steps % 2:
        steps = min(steps + 1, max_steps)
    tm = 128 * pl.cdiv(pl.cdiv(M, steps), 128)
    steps = pl.cdiv(M, tm)
    # Output padded to full blocks -> always-unmasked lane-dense stores; the ragged
    # trailing *input* block is handled by Pallas (its columns beyond M only feed
    # output columns beyond M, which are sliced off below).
    Mp = steps * tm

    in_specs = [pl.BlockSpec((Kp, tm), lambda i: (0, i)),       # patches tile
                pl.BlockSpec((coutp, Kp), lambda i: (0, 0)),    # full weight (tiny)
                pl.BlockSpec((coutp, 1), lambda i: (0, 0))]     # bias
    args = [patchesT, wT, b]

    if sel is not None:
        in_specs.append(pl.BlockSpec(sel.shape, lambda i: (0, 0)))
        args.append(sel)

    if head is not None:
        w4T, b4 = head
        in_specs += [pl.BlockSpec(w4T.shape, lambda i: (0, 0)),
                     pl.BlockSpec(b4.shape, lambda i: (0, 0))]
        args += [w4T, b4]
        kernel = _convT_res_head_kernel
    elif sel is not None:
        kernel = _convT_res_kernel
    else:
        kernel = functools.partial(_convT_kernel, apply_relu=apply_relu)

    out = pl.pallas_call(
        kernel,
        out_shape=jax.ShapeDtypeStruct((c_rows, Mp), out_dtype),
        grid=(steps,),
        in_specs=in_specs,
        out_specs=pl.BlockSpec((c_rows, tm), lambda i: (0, i)),
        compiler_params=pltpu.CompilerParams(dimension_semantics=("parallel",)),
    )(*args)
    return out[:cout, :M]


# ---------------------------------------------------------------------- JAX glue
def im2colT(x, k):
    """x: (C, N, D, H, W) bf16 -> (Kp, M) bf16 patches in ONE fused XLA pass.

    Row order is (tap, c) with the centre tap first; K is zero-padded to a
    multiple of 16 (bf16 sublane tile) inside the same concatenate; columns are
    (n, do, ho, wo) flattened and left unpadded (ragged last grid block)."""
    C, N, D, H, W = x.shape
    Do, Ho, Wo = D - k + 1, H - k + 1, W - k + 1
    M = N * Do * Ho * Wo
    cols = [x[:, :, kd:kd + Do, kh:kh + Ho, kw:kw + Wo].reshape(C, M)
            for (kd, kh, kw) in _tap_order(k)]
    K = k * k * k * C
    Kp = _round_up(K, 16)
    if Kp > K:
        cols.append(jnp.zeros((Kp - K, M), x.dtype))
    return jnp.concatenate(cols, axis=0)


def prep_weightT(w, b, *, cout_pad):
    """(k,k,k,cin,cout) conv weight -> (coutp, Kp) bf16 with rows matching
    im2colT's centre-tap-first order; bias -> (coutp, 1) f32 (zero-padded rows)."""
    k, cin, cout = w.shape[0], w.shape[3], w.shape[4]
    wK = jnp.concatenate([w[kd, kh, kw] for (kd, kh, kw) in _tap_order(k)], axis=0)
    K = k * k * k * cin
    Kp = _round_up(K, 16)
    coutp = _round_up(cout, cout_pad)
    wT = jnp.pad(wK.T, ((0, coutp - cout), (0, Kp - K))).astype(jnp.bfloat16)
    b2 = jnp.pad(b, (0, coutp - cout)).astype(jnp.float32).reshape(coutp, 1)
    return wT, b2, coutp


def residual_selector(cin, cout, coutp):
    """(coutp, cin) 0/1 matrix: output channel o takes centre-tap channel o % cin
    (torch Res_Block channel repeat + [:cout]); zero rows beyond cout."""
    s = np.zeros((coutp, cin), np.float32)
    for o in range(cout):
        s[o, o % cin] = 1.0
    return jnp.asarray(s, jnp.bfloat16)


def init_params(key):
    params = []
    for l in range(DEPTH):
        k, cin, cout = KERNELS[l], CHANNELS[l], CHANNELS[l + 1]
        key, kw_, kb_ = jax.random.split(key, 3)
        bound = 1.0 / np.sqrt(cin * k ** 3)            # PyTorch Conv3d default bound
        w = jax.random.uniform(kw_, (k, k, k, cin, cout), jnp.float32, -bound, bound)
        bi = jax.random.uniform(kb_, (cout,), jnp.float32, -bound, bound)
        params.append((w, bi))
    return params


def resvesselnet_pallas(x_ncdhw, params):
    """x: (N, C, D, H, W) float32 -> (N, 1, D-12, H-12, W-12) float32."""
    h = jnp.transpose(x_ncdhw, (1, 0, 2, 3, 4)).astype(jnp.bfloat16)   # (C,N,D,H,W)

    def spatial_out(arr, k):
        _, n, d, hh, w = arr.shape
        return n, d - k + 1, hh - k + 1, w - k + 1

    # layer 0: Conv3d(2 -> 5, k=3); no ReLU, no residual; bf16 output.
    k0, cout0 = KERNELS[0], CHANNELS[1]
    n, do, ho, wo = spatial_out(h, k0)
    wT, b2, _ = prep_weightT(*params[0], cout_pad=16)
    out = conv_layerT(im2colT(h, k0), wT, b2, cout=cout0, apply_relu=False,
                      out_dtype=jnp.bfloat16)
    h = out.reshape(cout0, n, do, ho, wo)

    # layers 1, 2: Res_Block (ReLU -> conv) with the centre-tap residual fused
    # in-kernel; bf16 intermediate outputs.
    for l in (1, 2):
        k, cin, cout = KERNELS[l], CHANNELS[l], CHANNELS[l + 1]
        n, do, ho, wo = spatial_out(h, k)
        wT, b2, coutp = prep_weightT(*params[l], cout_pad=16)
        sel = residual_selector(cin, cout, coutp)
        out = conv_layerT(im2colT(h, k), wT, b2, cout=cout, sel=sel,
                          out_dtype=jnp.bfloat16)
        h = out.reshape(cout, n, do, ho, wo)

    # layer 3 (Res_Block) fused with layer 4 (ReLU + 1x1x1 Conv3d(50 -> 1)): the
    # layer-3 activations never reach HBM; only the tiny head result is stored.
    (w3, b3), (w4, b4) = params[3], params[4]
    k3, c2, c3, c4 = KERNELS[3], CHANNELS[3], CHANNELS[4], CHANNELS[5]
    n, do, ho, wo = spatial_out(h, k3)
    wT3, b23, c3p = prep_weightT(w3, b3, cout_pad=8)
    sel = residual_selector(c2, c3, c3p)
    c4p = _round_up(c4, 8)
    w4T = jnp.pad(w4.reshape(c3, c4).T,
                  ((0, c4p - c4), (0, c3p - c3))).astype(jnp.bfloat16)
    b4p = jnp.pad(b4, (0, c4p - c4)).astype(jnp.float32).reshape(c4p, 1)
    out = conv_layerT(im2colT(h, k3), wT3, b23, cout=c4, sel=sel,
                      head=(w4T, b4p), out_dtype=jnp.float32)
    h = out.reshape(c4, n, do, ho, wo)
    return jnp.transpose(h, (1, 0, 2, 3, 4))                  # -> (N, 1, Do, Ho, Wo)


def resvesselnet_ref(x_ncdhw, params):
    """Pure-JAX f32 reference (lax.conv_general_dilated; independent residual)."""
    h = jnp.transpose(x_ncdhw, (0, 2, 3, 4, 1))               # NDHWC
    for l in range(DEPTH):
        w, bi = params[l]
        k, cout = KERNELS[l], CHANNELS[l + 1]
        inp = h
        act = jnp.maximum(inp, 0.0) if l > 0 else inp
        conv = lax.conv_general_dilated(
            act, w, window_strides=(1, 1, 1), padding="VALID",
            dimension_numbers=("NDHWC", "DHWIO", "NDHWC"),
            preferred_element_type=jnp.float32) + bi
        if l in (1, 2, 3):                                    # Res_Block skip
            c = k // 2
            z = lax.pad(inp, jnp.float32(0),
                        [(0, 0, 0), (-c, -c, 0), (-c, -c, 0), (-c, -c, 0), (0, 0, 0)])
            reps = ceil(cout / inp.shape[-1])
            z = jnp.concatenate([z] * reps, axis=-1)[..., :cout]
            conv = conv + z
        h = conv
    return jnp.transpose(h, (0, 4, 1, 2, 3))


if __name__ == "__main__":
    key = jax.random.PRNGKey(0)
    kx, kp = jax.random.split(key)
    # input spatial must be >= 13 (total valid-conv shrink is 12); use 16^3
    x = jax.random.normal(kx, (2, 2, 16, 16, 16), jnp.float32)   # (N, C, D, H, W)
    params = init_params(kp)

    out = jax.jit(resvesselnet_pallas)(x, params)
    out = jax.block_until_ready(out)

    assert out.shape == (2, 1, 4, 4, 4), out.shape
    ref = resvesselnet_ref(x, params)
    np.testing.assert_allclose(np.asarray(out), np.asarray(ref), rtol=5e-2, atol=5e-2)
    print("KERNEL_OK")
</pallas_src>

<mosaic_0001>
module attributes {stable_mosaic.version = 11 : i64} {
  func.func @_convT_kernel(%arg0: i32, %arg1: memref<64x1408xbf16, #tpu.memory_space<vmem>>, %arg2: memref<16x64xbf16, #tpu.memory_space<vmem>>, %arg3: memref<16x1xf32, #tpu.memory_space<vmem>>, %arg4: memref<16x1408xbf16, #tpu.memory_space<vmem>>) attributes {dimension_semantics = [#tpu.dimension_semantics<parallel>], iteration_bounds = array<i64: 4>, scalar_prefetch = 0 : i64, scratch_operands = 0 : i64, tpu.core_type = #tpu.core_type<tc>, window_params = [{transform_indices = @transform_0, window_bounds = array<i64: 64, 1408>}, {pipeline_mode = #tpu.pipeline_mode<synchronous>, transform_indices = @transform_1, window_bounds = array<i64: 16, 64>}, {pipeline_mode = #tpu.pipeline_mode<synchronous>, transform_indices = @transform_2, window_bounds = array<i64: 16, 1>}, {transform_indices = @transform_3, window_bounds = array<i64: 16, 1408>}]} {
    %c0 = arith.constant 0 : index
    %c0_0 = arith.constant 0 : index
    %0 = vector.load %arg1[%c0, %c0_0] : memref<64x1408xbf16, #tpu.memory_space<vmem>>, vector<64x1408xbf16>
    %c0_1 = arith.constant 0 : index
    %c0_2 = arith.constant 0 : index
    %1 = vector.load %arg2[%c0_1, %c0_2] : memref<16x64xbf16, #tpu.memory_space<vmem>>, vector<16x64xbf16>
    %cst = arith.constant dense<0.000000e+00> : vector<16x1408xf32>
    %2 = tpu.matmul %1, %0, %cst {dimension_numbers = #tpu.dot_dimension_numbers<[1], [0], [0], [1], [0, 0, 1, 1], [], []>} : vector<16x64xbf16>, vector<64x1408xbf16>, vector<16x1408xf32> -> vector<16x1408xf32>
    %c0_3 = arith.constant 0 : index
    %c0_4 = arith.constant 0 : index
    %3 = vector.load %arg3[%c0_3, %c0_4] : memref<16x1xf32, #tpu.memory_space<vmem>>, vector<16x1xf32>
    %4 = vector.broadcast %3 : vector<16x1xf32> to vector<16x1408xf32>
    %5 = arith.addf %2, %4 : vector<16x1408xf32>
    %6 = arith.truncf %5 : vector<16x1408xf32> to vector<16x1408xbf16>
    %c0_5 = arith.constant 0 : index
    %c0_6 = arith.constant 0 : index
    %7 = vector.load %arg4[%c0_5, %c0_6] : memref<16x1408xbf16, #tpu.memory_space<vmem>>, vector<16x1408xbf16>
    tpu.vector_store %arg4[%c0_5, %c0_6], %6 {strides = array<i32>} : memref<16x1408xbf16, #tpu.memory_space<vmem>>, vector<16x1408xbf16>,
    return
  }
  func.func @transform_0(%arg0: i32) -> (i32, i32) {
    %c0_i32 = arith.constant 0 : i32
    %c0_i32_0 = arith.constant 0 : i32
    return %c0_i32, %arg0 : i32, i32
  }
  func.func @transform_1(%arg0: i32) -> (i32, i32) {
    %c0_i32 = arith.constant 0 : i32
    %c0_i32_0 = arith.constant 0 : i32
    %c0_i32_1 = arith.constant 0 : i32
    return %c0_i32, %c0_i32_0 : i32, i32
  }
  func.func @transform_2(%arg0: i32) -> (i32, i32) {
    %c0_i32 = arith.constant 0 : i32
    %c0_i32_0 = arith.constant 0 : i32
    %c0_i32_1 = arith.constant 0 : i32
    return %c0_i32, %c0_i32_0 : i32, i32
  }
  func.func @transform_3(%arg0: i32) -> (i32, i32) {
    %c0_i32 = arith.constant 0 : i32
    %c0_i32_0 = arith.constant 0 : i32
    return %c0_i32, %arg0 : i32, i32
  }
}

module attributes {stable_mosaic.version = 11 : i64} {
  func.func @_convT_res_kernel(%arg0: i32, %arg1: memref<640x512xbf16, #tpu.memory_space<vmem>>, %arg2: memref<16x640xbf16, #tpu.memory_space<vmem>>, %arg3: memref<16x1xf32, #tpu.memory_space<vmem>>, %arg4: memref<16x5xbf16, #tpu.memory_space<vmem>>, %arg5: memref<16x512xbf16, #tpu.memory_space<vmem>>) attributes {dimension_semantics = [#tpu.dimension_semantics<parallel>], iteration_bounds = array<i64: 4>, scalar_prefetch = 0 : i64, scratch_operands = 0 : i64, tpu.core_type = #tpu.core_type<tc>, window_params = [{transform_indices = @transform_0, window_bounds = array<i64: 640, 512>}, {pipeline_mode = #tpu.pipeline_mode<synchronous>, transform_indices = @transform_1, window_bounds = array<i64: 16, 640>}, {pipeline_mode = #tpu.pipeline_mode<synchronous>, transform_indices = @transform_2, window_bounds = array<i64: 16, 1>}, {pipeline_mode = #tpu.pipeline_mode<synchronous>, transform_indices = @transform_3, window_bounds = array<i64: 16, 5>}, {transform_indices = @transform_4, window_bounds = array<i64: 16, 512>}]} {
    %c0 = arith.constant 0 : index
    %c0_0 = arith.constant 0 : index
    %0 = vector.load %arg4[%c0, %c0_0] : memref<16x5xbf16, #tpu.memory_space<vmem>>, vector<16x5xbf16>
    %c0_1 = arith.constant 0 : index
    %c0_2 = arith.constant 0 : index
    %1 = vector.load %arg1[%c0_1, %c0_2] : memref<640x512xbf16, #tpu.memory_space<vmem>>, vector<5x512xbf16>
    %cst = arith.constant dense<0.000000e+00> : vector<16x512xf32>
    %2 = tpu.matmul %0, %1, %cst {dimension_numbers = #tpu.dot_dimension_numbers<[1], [0], [0], [1], [0, 0, 1, 1], [], []>} : vector<16x5xbf16>, vector<5x512xbf16>, vector<16x512xf32> -> vector<16x512xf32>
    %c0_3 = arith.constant 0 : index
    %c0_4 = arith.constant 0 : index
    %3 = vector.load %arg2[%c0_3, %c0_4] : memref<16x640xbf16, #tpu.memory_space<vmem>>, vector<16x640xbf16>
    %c0_5 = arith.constant 0 : index
    %c0_6 = arith.constant 0 : index
    %4 = vector.load %arg1[%c0_5, %c0_6] : memref<640x512xbf16, #tpu.memory_space<vmem>>, vector<640x512xbf16>
    %cst_7 = arith.constant 0.000000e+00 : bf16
    %5 = vector.broadcast %cst_7 : bf16 to vector<640x512xbf16>
    %6 = arith.maximumf %4, %5 : vector<640x512xbf16>
    %cst_8 = arith.constant dense<0.000000e+00> : vector<16x512xf32>
    %7 = tpu.matmul %3, %6, %cst_8 {dimension_numbers = #tpu.dot_dimension_numbers<[1], [0], [0], [1], [0, 0, 1, 1], [], []>} : vector<16x640xbf16>, vector<640x512xbf16>, vector<16x512xf32> -> vector<16x512xf32>
    %c0_9 = arith.constant 0 : index
    %c0_10 = arith.constant 0 : index
    %8 = vector.load %arg3[%c0_9, %c0_10] : memref<16x1xf32, #tpu.memory_space<vmem>>, vector<16x1xf32>
    %9 = vector.broadcast %8 : vector<16x1xf32> to vector<16x512xf32>
    %10 = arith.addf %7, %9 : vector<16x512xf32>
    %11 = arith.addf %10, %2 : vector<16x512xf32>
    %12 = arith.truncf %11 : vector<16x512xf32> to vector<16x512xbf16>
    %c0_11 = arith.constant 0 : index
    %c0_12 = arith.constant 0 : index
    %13 = vector.load %arg5[%c0_11, %c0_12] : memref<16x512xbf16, #tpu.memory_space<vmem>>, vector<16x512xbf16>
    tpu.vector_store %arg5[%c0_11, %c0_12], %12 {strides = array<i32>} : memref<16x512xbf16, #tpu.memory_space<vmem>>, vector<16x512xbf16>,
    return
  }
  func.func @transform_0(%arg0: i32) -> (i32, i32) {
    %c0_i32 = arith.constant 0 : i32
    %c0_i32_0 = arith.constant 0 : i32
    return %c0_i32, %arg0 : i32, i32
  }
  func.func @transform_1(%arg0: i32) -> (i32, i32) {
    %c0_i32 = arith.constant 0 : i32
    %c0_i32_0 = arith.constant 0 : i32
    %c0_i32_1 = arith.constant 0 : i32
    return %c0_i32, %c0_i32_0 : i32, i32
  }
  func.func @transform_2(%arg0: i32) -> (i32, i32) {
    %c0_i32 = arith.constant 0 : i32
    %c0_i32_0 = arith.constant 0 : i32
    %c0_i32_1 = arith.constant 0 : i32
    return %c0_i32, %c0_i32_0 : i32, i32
  }
  func.func @transform_3(%arg0: i32) -> (i32, i32) {
    %c0_i32 = arith.constant 0 : i32
    %c0_i32_0 = arith.constant 0 : i32
    %c0_i32_1 = arith.constant 0 : i32
    return %c0_i32, %c0_i32_0 : i32, i32
  }
  func.func @transform_4(%arg0: i32) -> (i32, i32) {
    %c0_i32 = arith.constant 0 : i32
    %c0_i32_0 = arith.constant 0 : i32
    return %c0_i32, %arg0 : i32, i32
  }
}

module attributes {stable_mosaic.version = 11 : i64} {
  func.func @_convT_res_kernel(%arg0: i32, %arg1: memref<1264x128xbf16, #tpu.memory_space<vmem>>, %arg2: memref<32x1264xbf16, #tpu.memory_space<vmem>>, %arg3: memref<32x1xf32, #tpu.memory_space<vmem>>, %arg4: memref<32x10xbf16, #tpu.memory_space<vmem>>, %arg5: memref<32x128xbf16, #tpu.memory_space<vmem>>) attributes {dimension_semantics = [#tpu.dimension_semantics<parallel>], iteration_bounds = array<i64: 4>, scalar_prefetch = 0 : i64, scratch_operands = 0 : i64, tpu.core_type = #tpu.core_type<tc>, window_params = [{transform_indices = @transform_0, window_bounds = array<i64: 1264, 128>}, {pipeline_mode = #tpu.pipeline_mode<synchronous>, transform_indices = @transform_1, window_bounds = array<i64: 32, 1264>}, {pipeline_mode = #tpu.pipeline_mode<synchronous>, transform_indices = @transform_2, window_bounds = array<i64: 32, 1>}, {pipeline_mode = #tpu.pipeline_mode<synchronous>, transform_indices = @transform_3, window_bounds = array<i64: 32, 10>}, {transform_indices = @transform_4, window_bounds = array<i64: 32, 128>}]} {
    %c0 = arith.constant 0 : index
    %c0_0 = arith.constant 0 : index
    %0 = vector.load %arg4[%c0, %c0_0] : memref<32x10xbf16, #tpu.memory_space<vmem>>, vector<32x10xbf16>
    %c0_1 = arith.constant 0 : index
    %c0_2 = arith.constant 0 : index
    %1 = vector.load %arg1[%c0_1, %c0_2] : memref<1264x128xbf16, #tpu.memory_space<vmem>>, vector<10x128xbf16>
    %cst = arith.constant dense<0.000000e+00> : vector<32x128xf32>
    %2 = tpu.matmul %0, %1, %cst {dimension_numbers = #tpu.dot_dimension_numbers<[1], [0], [0], [1], [0, 0, 1, 1], [], []>} : vector<32x10xbf16>, vector<10x128xbf16>, vector<32x128xf32> -> vector<32x128xf32>
    %c0_3 = arith.constant 0 : index
    %c0_4 = arith.constant 0 : index
    %3 = vector.load %arg2[%c0_3, %c0_4] : memref<32x1264xbf16, #tpu.memory_space<vmem>>, vector<32x1264xbf16>
    %c0_5 = arith.constant 0 : index
    %c0_6 = arith.constant 0 : index
    %4 = vector.load %arg1[%c0_5, %c0_6] : memref<1264x128xbf16, #tpu.memory_space<vmem>>, vector<1264x128xbf16>
    %cst_7 = arith.constant 0.000000e+00 : bf16
    %5 = vector.broadcast %cst_7 : bf16 to vector<1264x128xbf16>
    %6 = arith.maximumf %4, %5 : vector<1264x128xbf16>
    %cst_8 = arith.constant dense<0.000000e+00> : vector<32x128xf32>
    %7 = tpu.matmul %3, %6, %cst_8 {dimension_numbers = #tpu.dot_dimension_numbers<[1], [0], [0], [1], [0, 0, 1, 1], [], []>} : vector<32x1264xbf16>, vector<1264x128xbf16>, vector<32x128xf32> -> vector<32x128xf32>
    %c0_9 = arith.constant 0 : index
    %c0_10 = arith.constant 0 : index
    %8 = vector.load %arg3[%c0_9, %c0_10] : memref<32x1xf32, #tpu.memory_space<vmem>>, vector<32x1xf32>
    %9 = vector.broadcast %8 : vector<32x1xf32> to vector<32x128xf32>
    %10 = arith.addf %7, %9 : vector<32x128xf32>
    %11 = arith.addf %10, %2 : vector<32x128xf32>
    %12 = arith.truncf %11 : vector<32x128xf32> to vector<32x128xbf16>
    %c0_11 = arith.constant 0 : index
    %c0_12 = arith.constant 0 : index
    %13 = vector.load %arg5[%c0_11, %c0_12] : memref<32x128xbf16, #tpu.memory_space<vmem>>, vector<32x128xbf16>
    tpu.vector_store %arg5[%c0_11, %c0_12], %12 {strides = array<i32>} : memref<32x128xbf16, #tpu.memory_space<vmem>>, vector<32x128xbf16>,
    return
  }
  func.func @transform_0(%arg0: i32) -> (i32, i32) {
    %c0_i32 = arith.constant 0 : i32
    %c0_i32_0 = arith.constant 0 : i32
    return %c0_i32, %arg0 : i32, i32
  }
  func.func @transform_1(%arg0: i32) -> (i32, i32) {
    %c0_i32 = arith.constant 0 : i32
    %c0_i32_0 = arith.constant 0 : i32
    %c0_i32_1 = arith.constant 0 : i32
    return %c0_i32, %c0_i32_0 : i32, i32
  }
  func.func @transform_2(%arg0: i32) -> (i32, i32) {
    %c0_i32 = arith.constant 0 : i32
    %c0_i32_0 = arith.constant 0 : i32
    %c0_i32_1 = arith.constant 0 : i32
    return %c0_i32, %c0_i32_0 : i32, i32
  }
  func.func @transform_3(%arg0: i32) -> (i32, i32) {
    %c0_i32 = arith.constant 0 : i32
    %c0_i32_0 = arith.constant 0 : i32
    %c0_i32_1 = arith.constant 0 : i32
    return %c0_i32, %c0_i32_0 : i32, i32
  }
  func.func @transform_4(%arg0: i32) -> (i32, i32) {
    %c0_i32 = arith.constant 0 : i32
    %c0_i32_0 = arith.constant 0 : i32
    return %c0_i32, %arg0 : i32, i32
  }
}

module attributes {stable_mosaic.version = 11 : i64} {
  func.func @_convT_res_head_kernel(%arg0: i32, %arg1: memref<544x128xbf16, #tpu.memory_space<vmem>>, %arg2: memref<56x544xbf16, #tpu.memory_space<vmem>>, %arg3: memref<56x1xf32, #tpu.memory_space<vmem>>, %arg4: memref<56x20xbf16, #tpu.memory_space<vmem>>, %arg5: memref<8x56xbf16, #tpu.memory_space<vmem>>, %arg6: memref<8x1xf32, #tpu.memory_space<vmem>>, %arg7: memref<8x128xf32, #tpu.memory_space<vmem>>) attributes {dimension_semantics = [#tpu.dimension_semantics<parallel>], iteration_bounds = array<i64: 1>, scalar_prefetch = 0 : i64, scratch_operands = 0 : i64, tpu.core_type = #tpu.core_type<tc>, window_params = [{transform_indices = @transform_0, window_bounds = array<i64: 544, 128>}, {pipeline_mode = #tpu.pipeline_mode<synchronous>, transform_indices = @transform_1, window_bounds = array<i64: 56, 544>}, {pipeline_mode = #tpu.pipeline_mode<synchronous>, transform_indices = @transform_2, window_bounds = array<i64: 56, 1>}, {pipeline_mode = #tpu.pipeline_mode<synchronous>, transform_indices = @transform_3, window_bounds = array<i64: 56, 20>}, {pipeline_mode = #tpu.pipeline_mode<synchronous>, transform_indices = @transform_4, window_bounds = array<i64: 8, 56>}, {pipeline_mode = #tpu.pipeline_mode<synchronous>, transform_indices = @transform_5, window_bounds = array<i64: 8, 1>}, {transform_indices = @transform_6, window_bounds = array<i64: 8, 128>}]} {
    %c0 = arith.constant 0 : index
    %c0_0 = arith.constant 0 : index
    %0 = vector.load %arg4[%c0, %c0_0] : memref<56x20xbf16, #tpu.memory_space<vmem>>, vector<56x20xbf16>
    %c0_1 = arith.constant 0 : index
    %c0_2 = arith.constant 0 : index
    %1 = vector.load %arg1[%c0_1, %c0_2] : memref<544x128xbf16, #tpu.memory_space<vmem>>, vector<20x128xbf16>
    %cst = arith.constant dense<0.000000e+00> : vector<56x128xf32>
    %2 = tpu.matmul %0, %1, %cst {dimension_numbers = #tpu.dot_dimension_numbers<[1], [0], [0], [1], [0, 0, 1, 1], [], []>} : vector<56x20xbf16>, vector<20x128xbf16>, vector<56x128xf32> -> vector<56x128xf32>
    %c0_3 = arith.constant 0 : index
    %c0_4 = arith.constant 0 : index
    %3 = vector.load %arg2[%c0_3, %c0_4] : memref<56x544xbf16, #tpu.memory_space<vmem>>, vector<56x544xbf16>
    %c0_5 = arith.constant 0 : index
    %c0_6 = arith.constant 0 : index
    %4 = vector.load %arg1[%c0_5, %c0_6] : memref<544x128xbf16, #tpu.memory_space<vmem>>, vector<544x128xbf16>
    %cst_7 = arith.constant 0.000000e+00 : bf16
    %5 = vector.broadcast %cst_7 : bf16 to vector<544x128xbf16>
    %6 = arith.maximumf %4, %5 : vector<544x128xbf16>
    %cst_8 = arith.constant dense<0.000000e+00> : vector<56x128xf32>
    %7 = tpu.matmul %3, %6, %cst_8 {dimension_numbers = #tpu.dot_dimension_numbers<[1], [0], [0], [1], [0, 0, 1, 1], [], []>} : vector<56x544xbf16>, vector<544x128xbf16>, vector<56x128xf32> -> vector<56x128xf32>
    %c0_9 = arith.constant 0 : index
    %c0_10 = arith.constant 0 : index
    %8 = vector.load %arg3[%c0_9, %c0_10] : memref<56x1xf32, #tpu.memory_space<vmem>>, vector<56x1xf32>
    %9 = vector.broadcast %8 : vector<56x1xf32> to vector<56x128xf32>
    %10 = arith.addf %7, %9 : vector<56x128xf32>
    %11 = arith.addf %10, %2 : vector<56x128xf32>
    %cst_11 = arith.constant 0.000000e+00 : f32
    %12 = vector.broadcast %cst_11 : f32 to vector<56x128xf32>
    %13 = arith.maximumf %11, %12 : vector<56x128xf32>
    %14 = arith.truncf %13 : vector<56x128xf32> to vector<56x128xbf16>
    %c0_12 = arith.constant 0 : index
    %c0_13 = arith.constant 0 : index
    %15 = vector.load %arg5[%c0_12, %c0_13] : memref<8x56xbf16, #tpu.memory_space<vmem>>, vector<8x56xbf16>
    %cst_14 = arith.constant dense<0.000000e+00> : vector<8x128xf32>
    %16 = tpu.matmul %15, %14, %cst_14 {dimension_numbers = #tpu.dot_dimension_numbers<[1], [0], [0], [1], [0, 0, 1, 1], [], []>} : vector<8x56xbf16>, vector<56x128xbf16>, vector<8x128xf32> -> vector<8x128xf32>
    %c0_15 = arith.constant 0 : index
    %c0_16 = arith.constant 0 : index
    %17 = vector.load %arg6[%c0_15, %c0_16] : memref<8x1xf32, #tpu.memory_space<vmem>>, vector<8x1xf32>
    %18 = vector.broadcast %17 : vector<8x1xf32> to vector<8x128xf32>
    %19 = arith.addf %16, %18 : vector<8x128xf32>
    %c0_17 = arith.constant 0 : index
    %c0_18 = arith.constant 0 : index
    %20 = vector.load %arg7[%c0_17, %c0_18] : memref<8x128xf32, #tpu.memory_space<vmem>>, vector<8x128xf32>
    tpu.vector_store %arg7[%c0_17, %c0_18], %19 {strides = array<i32>} : memref<8x128xf32, #tpu.memory_space<vmem>>, vector<8x128xf32>,
    return
  }
  func.func @transform_0(%arg0: i32) -> (i32, i32) {
    %c0_i32 = arith.constant 0 : i32
    %c0_i32_0 = arith.constant 0 : i32
    return %c0_i32, %arg0 : i32, i32
  }
  func.func @transform_1(%arg0: i32) -> (i32, i32) {
    %c0_i32 = arith.constant 0 : i32
    %c0_i32_0 = arith.constant 0 : i32
    %c0_i32_1 = arith.constant 0 : i32
    return %c0_i32, %c0_i32_0 : i32, i32
  }
  func.func @transform_2(%arg0: i32) -> (i32, i32) {
    %c0_i32 = arith.constant 0 : i32
    %c0_i32_0 = arith.constant 0 : i32
    %c0_i32_1 = arith.constant 0 : i32
    return %c0_i32, %c0_i32_0 : i32, i32
  }
  func.func @transform_3(%arg0: i32) -> (i32, i32) {
    %c0_i32 = arith.constant 0 : i32
    %c0_i32_0 = arith.constant 0 : i32
    %c0_i32_1 = arith.constant 0 : i32
    return %c0_i32, %c0_i32_0 : i32, i32
  }
  func.func @transform_4(%arg0: i32) -> (i32, i32) {
    %c0_i32 = arith.constant 0 : i32
    %c0_i32_0 = arith.constant 0 : i32
    %c0_i32_1 = arith.constant 0 : i32
    return %c0_i32, %c0_i32_0 : i32, i32
  }
  func.func @transform_5(%arg0: i32) -> (i32, i32) {
    %c0_i32 = arith.constant 0 : i32
    %c0_i32_0 = arith.constant 0 : i32
    %c0_i32_1 = arith.constant 0 : i32
    return %c0_i32, %c0_i32_0 : i32, i32
  }
  func.func @transform_6(%arg0: i32) -> (i32, i32) {
    %c0_i32 = arith.constant 0 : i32
    %c0_i32_0 = arith.constant 0 : i32
    return %c0_i32, %arg0 : i32, i32
  }
}

</mosaic_0001>

<llo_original>
// kernel: resvesselnet_pallas.4
$region0: #{resvesselnet_pallas.4}
  #allocation0 [shape = 'u32[]', space=smem, size = 0x4, offset = 0x4, fixed_abs, tag = 'smem constant byte address 0x4 - core index']
  #allocation1 [shape = 'u32[72,128]{1,0:T(1,128)}', space=vmem, size = 0x9000, scoped, tag = 'internal scratch']
  %s0 = inlined_call_operand.vmem [shape: bf16[64,5488], index: 0, kind: input, shape index: {}]
  %s1 = inlined_call_operand.vmem [shape: bf16[16,64], index: 1, kind: input, shape index: {}]
  %s2 = inlined_call_operand.vmem [shape: f32[16,1], index: 2, kind: input, shape index: {}]
  %s3 = inlined_call_operand.vmem [shape: bf16[16,5632], index: 3, kind: output, shape index: {}]
  %s4 = sld [smem:[#allocation0]]
  $region133: #{resvesselnet_pallas.4} parent=0
    _
  %s6 = ssub.s32 1, %s4
  %s7 = scalar_select 0, %s6, %s4
  $region1: #{resvesselnet_pallas.4} parent=0
    #allocation2 [shape = 'u8[360448]{0}', space=vmem, size = 0x58000, scoped, tag = 'input window, operand 0']
    #allocation3 [shape = 'u8[90112]{0}', space=vmem, size = 0x16000, scoped, tag = 'output window, operand 0']
    loop: start=0, step=1, limit=6
    $region2: #{resvesselnet_pallas.4} parent=1 // loop_pre_header
      _
    $region3: #{resvesselnet_pallas.4} parent=1 // loop_header
      %s9 = sphi 0, %s13
      %p10 = scmp.ge.s32.totalorder %s9, 6
      %s19 = sphi 0, %s21
      %s22 = sphi 0, %s19
      %s23 = sphi 0, %s22
      %s39 = sphi 0, %s23
      %s43 = sphi 0, %s43
      %s45 = sphi 0, %s43
      %s46 = sphi 0, %s45
      %s60 = sphi 0, %s46
      %s64 = sphi 0, %s64
      %s66 = sphi 0, %s64
      %s67 = sphi 0, %s66
      %s81 = sphi 0, %s67
      %s87 = sphi 0, %s89
      %s90 = sphi 0, %s87
      %s91 = sphi 0, %s90
      %s107 = sphi 0, %s91
    $region4: #{resvesselnet_pallas.4} parent=1 // loop_header_branch
      %12 = sbr.rel (%p10) target = $region8
    $region5: #{resvesselnet_pallas.4} parent=1 // loop_body
      %s14 = ssub.s32 %s9, 1
      %s15 = ssub.s32 %s9, 2
      %s16 = sadd.s32 %s9, 1
      %s17 = ssub.s32 %s9, %s16
      %p18 = scmp.eq.s32.totalorder %s17, 0
      %s20 = sadd.s32 %s19, 1
      %s21 = scalar_select %p18, %s19, %s20
      %p24 = pneg %p18
      %p25 = scmp.eq.s32.totalorder %s9, 3
      %p26 = por %p24, %p25
      %p27 = scmp.ne.s32.totalorder %s19, %s22
      %p28 = scmp.eq.s32.totalorder %s9, 0
      %p29 = por %p27, %p28
      %p30 = scmp.ne.s32.totalorder %s19, %s22
      %p31 = scmp.eq.s32.totalorder %s14, 3
      %p32 = por %p30, %p31
      %p33 = scmp.ne.s32.totalorder %s22, %s23
      %p34 = scmp.eq.s32.totalorder %s14, 0
      %p35 = por %p33, %p34
      %p36 = scmp.ne.s32.totalorder %s22, %s23
      %p37 = scmp.eq.s32.totalorder %s15, 3
      %p38 = por %p36, %p37
      %p40 = scmp.ne.s32.totalorder %s23, %s39
      %p41 = scmp.eq.s32.totalorder %s15, 0
      %p42 = por %p40, %p41
      %s44 = sadd.s32 %s43, 1
      %p47 = scmp.eq.s32.totalorder %s9, 3
      %p48 = scmp.ne.s32.totalorder %s43, %s45
      %p49 = scmp.eq.s32.totalorder %s9, 0
      %p50 = por %p48, %p49
      %p51 = scmp.ne.s32.totalorder %s43, %s45
      %p52 = scmp.eq.s32.totalorder %s14, 3
      %p53 = por %p51, %p52
      %p54 = scmp.ne.s32.totalorder %s45, %s46
      %p55 = scmp.eq.s32.totalorder %s14, 0
      %p56 = por %p54, %p55
      %p57 = scmp.ne.s32.totalorder %s45, %s46
      %p58 = scmp.eq.s32.totalorder %s15, 3
      %p59 = por %p57, %p58
      %p61 = scmp.ne.s32.totalorder %s46, %s60
      %p62 = scmp.eq.s32.totalorder %s15, 0
      %p63 = por %p61, %p62
      %s65 = sadd.s32 %s64, 1
      %p68 = scmp.eq.s32.totalorder %s9, 3
      %p69 = scmp.ne.s32.totalorder %s64, %s66
      %p70 = scmp.eq.s32.totalorder %s9, 0
      %p71 = por %p69, %p70
      %p72 = scmp.ne.s32.totalorder %s64, %s66
      %p73 = scmp.eq.s32.totalorder %s14, 3
      %p74 = por %p72, %p73
      %p75 = scmp.ne.s32.totalorder %s66, %s67
      %p76 = scmp.eq.s32.totalorder %s14, 0
      %p77 = por %p75, %p76
      %p78 = scmp.ne.s32.totalorder %s66, %s67
      %p79 = scmp.eq.s32.totalorder %s15, 3
      %p80 = por %p78, %p79
      %p82 = scmp.ne.s32.totalorder %s67, %s81
      %p83 = scmp.eq.s32.totalorder %s15, 0
      %p84 = por %p82, %p83
      %s85 = ssub.s32 %s9, %s16
      %p86 = scmp.eq.s32.totalorder %s85, 0
      %s88 = sadd.s32 %s87, 1
      %s89 = scalar_select %p86, %s87, %s88
      %p92 = pneg %p86
      %p93 = scmp.eq.s32.totalorder %s9, 3
      %p94 = por %p92, %p93
      %p95 = scmp.ne.s32.totalorder %s87, %s90
      %p96 = scmp.eq.s32.totalorder %s9, 0
      %p97 = por %p95, %p96
      %p98 = scmp.ne.s32.totalorder %s87, %s90
      %p99 = scmp.eq.s32.totalorder %s14, 3
      %p100 = por %p98, %p99
      %p101 = scmp.ne.s32.totalorder %s90, %s91
      %p102 = scmp.eq.s32.totalorder %s14, 0
      %p103 = por %p101, %p102
      %p104 = scmp.ne.s32.totalorder %s90, %s91
      %p105 = scmp.eq.s32.totalorder %s15, 3
      %p106 = por %p104, %p105
      %p108 = scmp.ne.s32.totalorder %s91, %s107
      %p109 = scmp.eq.s32.totalorder %s15, 0
      %p110 = por %p108, %p109
      %p111 = scmp.le.s32.totalorder 1, %s9
      %p112 = scmp.lt.s32.totalorder %s9, 5
      %p113 = pnand %p111, %p112
      %p114 = pneg %p113
      // Predicated region
      $region9: #{resvesselnet_pallas.4} parent=5 // pred_check
        _
      $region10: #{resvesselnet_pallas.4} parent=5 // pred_check_branch
        %116 = sbr.rel (%p113) target = $region12
      $region11: #{resvesselnet_pallas.4} parent=5 // pred_region
        %s117 = ssub.s32 %s9, 1
        // Predicated region
        $region13: #{resvesselnet_pallas.4} parent=11 // pred_check
          %p118 = pneg %p56
        $region14: #{resvesselnet_pallas.4} parent=11 // pred_check_branch
          %120 = sbr.rel (%p118) target = $region16
        $region15: #{resvesselnet_pallas.4} parent=11 // pred_region
          _
        $region16: #{resvesselnet_pallas.4} parent=11 // pred_fallthru
          _
        // Predicated region
        $region17: #{resvesselnet_pallas.4} parent=11 // pred_check
          %p121 = pneg %p77
        $region18: #{resvesselnet_pallas.4} parent=11 // pred_check_branch
          %123 = sbr.rel (%p121) target = $region20
        $region19: #{resvesselnet_pallas.4} parent=11 // pred_region
          _
        $region20: #{resvesselnet_pallas.4} parent=11 // pred_fallthru
          _
      $region12: #{resvesselnet_pallas.4} parent=5 // pred_fallthru
        _
      %p124 = scmp.lt.s32.totalorder %s9, 4
      // Predicated region
      $region21: #{resvesselnet_pallas.4} parent=5 // pred_check
        %p125 = pneg %p124
      $region22: #{resvesselnet_pallas.4} parent=5 // pred_check_branch
        %127 = sbr.rel (%p125) target = $region24
      $region23: #{resvesselnet_pallas.4} parent=5 // pred_region
        // Predicated region
        $region25: #{resvesselnet_pallas.4} parent=23 // pred_check
          %p128 = pneg %p29
        $region26: #{resvesselnet_pallas.4} parent=23 // pred_check_branch
          %130 = sbr.rel (%p128) target = $region28
        $region27: #{resvesselnet_pallas.4} parent=23 // pred_region
          %s131 = sand.u32 %s19, 1
          %s132 = sand.u32 %s19, 1
          %s133 = smul.addr %s132, 352
          %s134 = scalar_lea.vmem [#allocation2], %s133
          %s135 = smul.u32 11, %s9
          %s136 = ssub.s32 43, %s135
          %p137 = scmp.lt.s32.totalorder %s136, 11
          %s138 = scalar_select %p137, %s136, 11
          %s139 = smul.u32 32, %s138
          %p140 = scmp.ne.s32.totalorder 0, %s139
          %s141 = smul.addr %s135, 4
          %s142 = scalar_lea.vmem %s0, %s141
          %s143 = smul.u32 %s138, 4
          // Predicated region
          $region29: #{resvesselnet_pallas.4} parent=27 // pred_check
            %p144 = pneg %p140
          $region30: #{resvesselnet_pallas.4} parent=27 // pred_check_branch
            %146 = sbr.rel (%p144) target = $region32
          $region31: #{resvesselnet_pallas.4} parent=27 // pred_region
            %p147 = scmp.lt.u32.totalorder %s143, 8
            %p148 = pneg %p147
            // Predicated region
            $region33: #{resvesselnet_pallas.4} parent=31 // pred_check
              _
            $region34: #{resvesselnet_pallas.4} parent=31 // pred_check_branch
              %150 = sbr.rel (%p147) target = $region36
            $region35: #{resvesselnet_pallas.4} parent=31 // pred_region
              %s180 = sand.u32 %s143, 7
              %p181 = scmp.eq.s32.totalorder %s180, 0
              // Predicated region
              $region48: #{resvesselnet_pallas.4} parent=35 // pred_check
                %p182 = pneg %p181
              $region49: #{resvesselnet_pallas.4} parent=35 // pred_check_branch
                %184 = sbr.rel (%p182) target = $region51
              $region50: #{resvesselnet_pallas.4} parent=35 // pred_region
                %s185 = sshrl.u32 %s143, 3
                %s186 = sshrl.u32 %s185, 2
                // While loop
                $region52: #{resvesselnet_pallas.4} parent=50 // loop_pre_header
                  _
                $region53: #{resvesselnet_pallas.4} parent=50 // loop_header
                  %s188 = sphi 0, %s190
                  %p189 = scmp.ge.s32.totalorder %s188, %s186
                  %s193 = sphi 0, %s262
                  %s194 = sphi %s142, %s265
                  %s195 = sphi %s134, %s266
                $region54: #{resvesselnet_pallas.4} parent=50 // loop_header_branch
                  %192 = sbr.rel (%p189) target = $region58
                $region55: #{resvesselnet_pallas.4} parent=50 // loop_body
                  %v196 = vld [vmem:[%s194] sm:$0xff]
                  %197 = vst [vmem:[%s195] sm:$0xff] %v196
                  %v198 = vld [vmem:[%s194 + $0x8] sm:$0xff]
                  %199 = vst [vmem:[%s195 + $0x8] sm:$0xff] %v198
                  %v200 = vld [vmem:[%s194 + $0x10] sm:$0xff]
                  %201 = vst [vmem:[%s195 + $0x10] sm:$0xff] %v200
                  %v202 = vld [vmem:[%s194 + $0x18] sm:$0xff]
                  %203 = vst [vmem:[%s195 + $0x18] sm:$0xff] %v202
                  %v204 = vld [vmem:[%s194 + $0xac] sm:$0xff]
                  %205 = vst [vmem:[%s195 + $0x2c] sm:$0xff] %v204
                  %v206 = vld [vmem:[%s194 + $0xb4] sm:$0xff]
                  %207 = vst [vmem:[%s195 + $0x34] sm:$0xff] %v206
                  %v208 = vld [vmem:[%s194 + $0xbc] sm:$0xff]
                  %209 = vst [vmem:[%s195 + $0x3c] sm:$0xff] %v208
                  %v210 = vld [vmem:[%s194 + $0xc4] sm:$0xff]
                  %211 = vst [vmem:[%s195 + $0x44] sm:$0xff] %v210
                  %v212 = vld [vmem:[%s194 + $0x158] sm:$0xff]
                  %213 = vst [vmem:[%s195 + $0x58] sm:$0xff] %v212
                  %v214 = vld [vmem:[%s194 + $0x160] sm:$0xff]
                  %215 = vst [vmem:[%s195 + $0x60] sm:$0xff] %v214
                  %v216 = vld [vmem:[%s194 + $0x168] sm:$0xff]
                  %217 = vst [vmem:[%s195 + $0x68] sm:$0xff] %v216
                  %v218 = vld [vmem:[%s194 + $0x170] sm:$0xff]
                  %219 = vst [vmem:[%s195 + $0x70] sm:$0xff] %v218
                  %v220 = vld [vmem:[%s194 + $0x204] sm:$0xff]
                  %221 = vst [vmem:[%s195 + $0x84] sm:$0xff] %v220
                  %v222 = vld [vmem:[%s194 + $0x20c] sm:$0xff]
                  %223 = vst [vmem:[%s195 + $0x8c] sm:$0xff] %v222
                  %v224 = vld [vmem:[%s194 + $0x214] sm:$0xff]
                  %225 = vst [vmem:[%s195 + $0x94] sm:$0xff] %v224
                  %v226 = vld [vmem:[%s194 + $0x21c] sm:$0xff]
                  %227 = vst [vmem:[%s195 + $0x9c] sm:$0xff] %v226
                  %v228 = vld [vmem:[%s194 + $0x2b0] sm:$0xff]
                  %229 = vst [vmem:[%s195 + $0xb0] sm:$0xff] %v228
                  %v230 = vld [vmem:[%s194 + $0x2b8] sm:$0xff]
                  %231 = vst [vmem:[%s195 + $0xb8] sm:$0xff] %v230
                  %v232 = vld [vmem:[%s194 + $0x2c0] sm:$0xff]
                  %233 = vst [vmem:[%s195 + $0xc0] sm:$0xff] %v232
                  %v234 = vld [vmem:[%s194 + $0x2c8] sm:$0xff]
                  %235 = vst [vmem:[%s195 + $0xc8] sm:$0xff] %v234
                  %v236 = vld [vmem:[%s194 + $0x35c] sm:$0xff]
                  %237 = vst [vmem:[%s195 + $0xdc] sm:$0xff] %v236
                  %v238 = vld [vmem:[%s194 + $0x364] sm:$0xff]
                  %239 = vst [vmem:[%s195 + $0xe4] sm:$0xff] %v238
                  %v240 = vld [vmem:[%s194 + $0x36c] sm:$0xff]
                  %241 = vst [vmem:[%s195 + $0xec] sm:$0xff] %v240
                  %v242 = vld [vmem:[%s194 + $0x374] sm:$0xff]
                  %243 = vst [vmem:[%s195 + $0xf4] sm:$0xff] %v242
                  %v244 = vld [vmem:[%s194 + $0x408] sm:$0xff]
                  %245 = vst [vmem:[%s195 + $0x108] sm:$0xff] %v244
                  %v246 = vld [vmem:[%s194 + $0x410] sm:$0xff]
                  %247 = vst [vmem:[%s195 + $0x110] sm:$0xff] %v246
                  %v248 = vld [vmem:[%s194 + $0x418] sm:$0xff]
                  %249 = vst [vmem:[%s195 + $0x118] sm:$0xff] %v248
                  %v250 = vld [vmem:[%s194 + $0x420] sm:$0xff]
                  %251 = vst [vmem:[%s195 + $0x120] sm:$0xff] %v250
                  %v252 = vld [vmem:[%s194 + $0x4b4] sm:$0xff]
                  %253 = vst [vmem:[%s195 + $0x134] sm:$0xff] %v252
                  %v254 = vld [vmem:[%s194 + $0x4bc] sm:$0xff]
                  %255 = vst [vmem:[%s195 + $0x13c] sm:$0xff] %v254
                  %v256 = vld [vmem:[%s194 + $0x4c4] sm:$0xff]
                  %257 = vst [vmem:[%s195 + $0x144] sm:$0xff] %v256
                  %v258 = vld [vmem:[%s194 + $0x4cc] sm:$0xff]
                  %259 = vst [vmem:[%s195 + $0x14c] sm:$0xff] %v258
                  %s260 = sadd.s32 1, %s193
                  %p261 = scmp.ge.s32.totalorder %s260, %s186
                  %s262 = scalar_select %p261, 0, %s260
                  %s263 = smul.u32 %s262, 32
                  %s264 = smul.u32 %s262, 32
                  %s265 = scalar_lea.vmem %s142, %s263
                  %s266 = scalar_lea.vmem %s134, %s264 [#allocation2]
                $region56: #{resvesselnet_pallas.4} parent=50 // loop_footer
                  %s190 = sadd.s32 %s188, 1
                $region57: #{resvesselnet_pallas.4} parent=50 // loop_footer_branch
                  %187 = sbr.rel target = $region53
                $region58: #{resvesselnet_pallas.4} parent=50 // loop_exit
                  _
                %s267 = sshrl.u32 %s185, 2
                %s268 = sand.u32 %s185, 3
                %s269 = smul.u32 %s267, 4
                %s270 = smul.u32 8, %s269
                %s271 = scalar_lea.vmem %s142, %s270
                %s272 = smul.u32 8, %s269
                %s273 = scalar_lea.vmem %s134, %s272 [#allocation2]
                // While loop
                $region59: #{resvesselnet_pallas.4} parent=50 // loop_pre_header
                  _
                $region60: #{resvesselnet_pallas.4} parent=50 // loop_header
                  %s275 = sphi 0, %s277
                  %p276 = scmp.ge.s32.totalorder %s275, %s268
                  %s280 = sphi 0, %s301
                  %s281 = sphi %s271, %s304
                  %s282 = sphi %s273, %s305
                $region61: #{resvesselnet_pallas.4} parent=50 // loop_header_branch
                  %279 = sbr.rel (%p276) target = $region65
                $region62: #{resvesselnet_pallas.4} parent=50 // loop_body
                  %v283 = vld [vmem:[%s281] sm:$0xff]
                  %284 = vst [vmem:[%s282] sm:$0xff] %v283
                  %v285 = vld [vmem:[%s281 + $0xac] sm:$0xff]
                  %286 = vst [vmem:[%s282 + $0x2c] sm:$0xff] %v285
                  %v287 = vld [vmem:[%s281 + $0x158] sm:$0xff]
                  %288 = vst [vmem:[%s282 + $0x58] sm:$0xff] %v287
                  %v289 = vld [vmem:[%s281 + $0x204] sm:$0xff]
                  %290 = vst [vmem:[%s282 + $0x84] sm:$0xff] %v289
                  %v291 = vld [vmem:[%s281 + $0x2b0] sm:$0xff]
                  %292 = vst [vmem:[%s282 + $0xb0] sm:$0xff] %v291
                  %v293 = vld [vmem:[%s281 + $0x35c] sm:$0xff]
                  %294 = vst [vmem:[%s282 + $0xdc] sm:$0xff] %v293
                  %v295 = vld [vmem:[%s281 + $0x408] sm:$0xff]
                  %296 = vst [vmem:[%s282 + $0x108] sm:$0xff] %v295
                  %v297 = vld [vmem:[%s281 + $0x4b4] sm:$0xff]
                  %298 = vst [vmem:[%s282 + $0x134] sm:$0xff] %v297
                  %s299 = sadd.s32 1, %s280
                  %p300 = scmp.ge.s32.totalorder %s299, %s268
                  %s301 = scalar_select %p300, 0, %s299
                  %s302 = smul.u32 %s301, 8
                  %s303 = smul.u32 %s301, 8
                  %s304 = scalar_lea.vmem %s271, %s302
                  %s305 = scalar_lea.vmem %s273, %s303 [#allocation2]
                $region63: #{resvesselnet_pallas.4} parent=50 // loop_footer
                  %s277 = sadd.s32 %s275, 1
                $region64: #{resvesselnet_pallas.4} parent=50 // loop_footer_branch
                  %274 = sbr.rel target = $region60
                $region65: #{resvesselnet_pallas.4} parent=50 // loop_exit
                  _
              $region51: #{resvesselnet_pallas.4} parent=35 // pred_fallthru
                _
              %p306 = pneg %p181
              // Predicated region
              $region66: #{resvesselnet_pallas.4} parent=35 // pred_check
                _
              $region67: #{resvesselnet_pallas.4} parent=35 // pred_check_branch
                %308 = sbr.rel (%p181) target = $region69
              $region68: #{resvesselnet_pallas.4} parent=35 // pred_region
                %s309 = sand.u32 %s143, 7
                %s310 = ssub.s32 %s143, %s309
                %s311 = scalar_lea.vmem %s142, %s310
                %s312 = ssub.s32 %s143, %s309
                %s313 = scalar_lea.vmem %s134, %s312 [#allocation2]
                %s314 = sshrl.u32 %s143, 3
                %s315 = sshrl.u32 %s314, 2
                // While loop
                $region70: #{resvesselnet_pallas.4} parent=68 // loop_pre_header
                  _
                $region71: #{resvesselnet_pallas.4} parent=68 // loop_header
                  %s317 = sphi 0, %s319
                  %p318 = scmp.ge.s32.totalorder %s317, %s315
                  %s322 = sphi 0, %s391
                  %s323 = sphi %s142, %s394
                  %s324 = sphi %s134, %s395
                $region72: #{resvesselnet_pallas.4} parent=68 // loop_header_branch
                  %321 = sbr.rel (%p318) target = $region76
                $region73: #{resvesselnet_pallas.4} parent=68 // loop_body
                  %v325 = vld [vmem:[%s323] sm:$0xff]
                  %326 = vst [vmem:[%s324] sm:$0xff] %v325
                  %v327 = vld [vmem:[%s323 + $0x8] sm:$0xff]
                  %328 = vst [vmem:[%s324 + $0x8] sm:$0xff] %v327
                  %v329 = vld [vmem:[%s323 + $0x10] sm:$0xff]
                  %330 = vst [vmem:[%s324 + $0x10] sm:$0xff] %v329
                  %v331 = vld [vmem:[%s323 + $0x18] sm:$0xff]
                  %332 = vst [vmem:[%s324 + $0x18] sm:$0xff] %v331
                  %v333 = vld [vmem:[%s323 + $0xac] sm:$0xff]
                  %334 = vst [vmem:[%s324 + $0x2c] sm:$0xff] %v333
                  %v335 = vld [vmem:[%s323 + $0xb4] sm:$0xff]
                  %336 = vst [vmem:[%s324 + $0x34] sm:$0xff] %v335
                  %v337 = vld [vmem:[%s323 + $0xbc] sm:$0xff]
                  %338 = vst [vmem:[%s324 + $0x3c] sm:$0xff] %v337
                  %v339 = vld [vmem:[%s323 + $0xc4] sm:$0xff]
                  %340 = vst [vmem:[%s324 + $0x44] sm:$0xff] %v339
                  %v341 = vld [vmem:[%s323 + $0x158] sm:$0xff]
                  %342 = vst [vmem:[%s324 + $0x58] sm:$0xff] %v341
                  %v343 = vld [vmem:[%s323 + $0x160] sm:$0xff]
                  %344 = vst [vmem:[%s324 + $0x60] sm:$0xff] %v343
                  %v345 = vld [vmem:[%s323 + $0x168] sm:$0xff]
                  %346 = vst [vmem:[%s324 + $0x68] sm:$0xff] %v345
                  %v347 = vld [vmem:[%s323 + $0x170] sm:$0xff]
                  %348 = vst [vmem:[%s324 + $0x70] sm:$0xff] %v347
                  %v349 = vld [vmem:[%s323 + $0x204] sm:$0xff]
                  %350 = vst [vmem:[%s324 + $0x84] sm:$0xff] %v349
                  %v351 = vld [vmem:[%s323 + $0x20c] sm:$0xff]
                  %352 = vst [vmem:[%s324 + $0x8c] sm:$0xff] %v351
                  %v353 = vld [vmem:[%s323 + $0x214] sm:$0xff]
                  %354 = vst [vmem:[%s324 + $0x94] sm:$0xff] %v353
                  %v355 = vld [vmem:[%s323 + $0x21c] sm:$0xff]
                  %356 = vst [vmem:[%s324 + $0x9c] sm:$0xff] %v355
                  %v357 = vld [vmem:[%s323 + $0x2b0] sm:$0xff]
                  %358 = vst [vmem:[%s324 + $0xb0] sm:$0xff] %v357
                  %v359 = vld [vmem:[%s323 + $0x2b8] sm:$0xff]
                  %360 = vst [vmem:[%s324 + $0xb8] sm:$0xff] %v359
                  %v361 = vld [vmem:[%s323 + $0x2c0] sm:$0xff]
                  %362 = vst [vmem:[%s324 + $0xc0] sm:$0xff] %v361
                  %v363 = vld [vmem:[%s323 + $0x2c8] sm:$0xff]
                  %364 = vst [vmem:[%s324 + $0xc8] sm:$0xff] %v363
                  %v365 = vld [vmem:[%s323 + $0x35c] sm:$0xff]
                  %366 = vst [vmem:[%s324 + $0xdc] sm:$0xff] %v365
                  %v367 = vld [vmem:[%s323 + $0x364] sm:$0xff]
                  %368 = vst [vmem:[%s324 + $0xe4] sm:$0xff] %v367
                  %v369 = vld [vmem:[%s323 + $0x36c] sm:$0xff]
                  %370 = vst [vmem:[%s324 + $0xec] sm:$0xff] %v369
                  %v371 = vld [vmem:[%s323 + $0x374] sm:$0xff]
                  %372 = vst [vmem:[%s324 + $0xf4] sm:$0xff] %v371
                  %v373 = vld [vmem:[%s323 + $0x408] sm:$0xff]
                  %374 = vst [vmem:[%s324 + $0x108] sm:$0xff] %v373
                  %v375 = vld [vmem:[%s323 + $0x410] sm:$0xff]
                  %376 = vst [vmem:[%s324 + $0x110] sm:$0xff] %v375
                  %v377 = vld [vmem:[%s323 + $0x418] sm:$0xff]
                  %378 = vst [vmem:[%s324 + $0x118] sm:$0xff] %v377
                  %v379 = vld [vmem:[%s323 + $0x420] sm:$0xff]
                  %380 = vst [vmem:[%s324 + $0x120] sm:$0xff] %v379
                  %v381 = vld [vmem:[%s323 + $0x4b4] sm:$0xff]
                  %382 = vst [vmem:[%s324 + $0x134] sm:$0xff] %v381
                  %v383 = vld [vmem:[%s323 + $0x4bc] sm:$0xff]
                  %384 = vst [vmem:[%s324 + $0x13c] sm:$0xff] %v383
                  %v385 = vld [vmem:[%s323 + $0x4c4] sm:$0xff]
                  %386 = vst [vmem:[%s324 + $0x144] sm:$0xff] %v385
                  %v387 = vld [vmem:[%s323 + $0x4cc] sm:$0xff]
                  %388 = vst [vmem:[%s324 + $0x14c] sm:$0xff] %v387
                  %s389 = sadd.s32 1, %s322
                  %p390 = scmp.ge.s32.totalorder %s389, %s315
                  %s391 = scalar_select %p390, 0, %s389
                  %s392 = smul.u32 %s391, 32
                  %s393 = smul.u32 %s391, 32
                  %s394 = scalar_lea.vmem %s142, %s392
                  %s395 = scalar_lea.vmem %s134, %s393 [#allocation2]
                $region74: #{resvesselnet_pallas.4} parent=68 // loop_footer
                  %s319 = sadd.s32 %s317, 1
                $region75: #{resvesselnet_pallas.4} parent=68 // loop_footer_branch
                  %316 = sbr.rel target = $region71
                $region76: #{resvesselnet_pallas.4} parent=68 // loop_exit
                  _
                %s396 = sshrl.u32 %s314, 2
                %s397 = sand.u32 %s314, 3
                %s398 = smul.u32 %s396, 4
                %s399 = smul.u32 8, %s398
                %s400 = scalar_lea.vmem %s142, %s399
                %s401 = smul.u32 8, %s398
                %s402 = scalar_lea.vmem %s134, %s401 [#allocation2]
                // While loop
                $region77: #{resvesselnet_pallas.4} parent=68 // loop_pre_header
                  _
                $region78: #{resvesselnet_pallas.4} parent=68 // loop_header
                  %s404 = sphi 0, %s406
                  %p405 = scmp.ge.s32.totalorder %s404, %s397
                  %s409 = sphi 0, %s430
                  %s410 = sphi %s400, %s433
                  %s411 = sphi %s402, %s434
                $region79: #{resvesselnet_pallas.4} parent=68 // loop_header_branch
                  %408 = sbr.rel (%p405) target = $region83
                $region80: #{resvesselnet_pallas.4} parent=68 // loop_body
                  %v412 = vld [vmem:[%s410] sm:$0xff]
                  %413 = vst [vmem:[%s411] sm:$0xff] %v412
                  %v414 = vld [vmem:[%s410 + $0xac] sm:$0xff]
                  %415 = vst [vmem:[%s411 + $0x2c] sm:$0xff] %v414
                  %v416 = vld [vmem:[%s410 + $0x158] sm:$0xff]
                  %417 = vst [vmem:[%s411 + $0x58] sm:$0xff] %v416
                  %v418 = vld [vmem:[%s410 + $0x204] sm:$0xff]
                  %419 = vst [vmem:[%s411 + $0x84] sm:$0xff] %v418
                  %v420 = vld [vmem:[%s410 + $0x2b0] sm:$0xff]
                  %421 = vst [vmem:[%s411 + $0xb0] sm:$0xff] %v420
                  %v422 = vld [vmem:[%s410 + $0x35c] sm:$0xff]
                  %423 = vst [vmem:[%s411 + $0xdc] sm:$0xff] %v422
                  %v424 = vld [vmem:[%s410 + $0x408] sm:$0xff]
                  %425 = vst [vmem:[%s411 + $0x108] sm:$0xff] %v424
                  %v426 = vld [vmem:[%s410 + $0x4b4] sm:$0xff]
                  %427 = vst [vmem:[%s411 + $0x134] sm:$0xff] %v426
                  %s428 = sadd.s32 1, %s409
                  %p429 = scmp.ge.s32.totalorder %s428, %s397
                  %s430 = scalar_select %p429, 0, %s428
                  %s431 = smul.u32 %s430, 8
                  %s432 = smul.u32 %s430, 8
                  %s433 = scalar_lea.vmem %s400, %s431
                  %s434 = scalar_lea.vmem %s402, %s432 [#allocation2]
                $region81: #{resvesselnet_pallas.4} parent=68 // loop_footer
                  %s406 = sadd.s32 %s404, 1
                $region82: #{resvesselnet_pallas.4} parent=68 // loop_footer_branch
                  %403 = sbr.rel target = $region78
                $region83: #{resvesselnet_pallas.4} parent=68 // loop_exit
                  _
                %s435 = sshll.u32 1, %s309
                %s436 = ssub.s32 %s435, 1
                loop: start=0, step=1, limit=1
                $region84: #{resvesselnet_pallas.4} parent=68 // loop_pre_header
                  _
                $region85: #{resvesselnet_pallas.4} parent=68 // loop_header
                  %s438 = sphi 0, %s442
                  %p439 = scmp.ge.s32.totalorder %s438, 1
                  %s443 = sphi %s311, %s311
                  %s444 = sphi %s313, %s313
                $region86: #{resvesselnet_pallas.4} parent=68 // loop_header_branch
                  %441 = sbr.rel (%p439) target = $region90
                $region87: #{resvesselnet_pallas.4} parent=68 // loop_body
                  %v445 = vld [vmem:[%s443] sm:%s436]
                  %446 = vst [vmem:[%s444] sm:%s436] %v445
                  %v447 = vld [vmem:[%s443 + $0xac] sm:%s436]
                  %448 = vst [vmem:[%s444 + $0x2c] sm:%s436] %v447
                  %v449 = vld [vmem:[%s443 + $0x158] sm:%s436]
                  %450 = vst [vmem:[%s444 + $0x58] sm:%s436] %v449
                  %v451 = vld [vmem:[%s443 + $0x204] sm:%s436]
                  %452 = vst [vmem:[%s444 + $0x84] sm:%s436] %v451
                  %v453 = vld [vmem:[%s443 + $0x2b0] sm:%s436]
                  %454 = vst [vmem:[%s444 + $0xb0] sm:%s436] %v453
                  %v455 = vld [vmem:[%s443 + $0x35c] sm:%s436]
                  %456 = vst [vmem:[%s444 + $0xdc] sm:%s436] %v455
                  %v457 = vld [vmem:[%s443 + $0x408] sm:%s436]
                  %458 = vst [vmem:[%s444 + $0x108] sm:%s436] %v457
                  %v459 = vld [vmem:[%s443 + $0x4b4] sm:%s436]
                  %460 = vst [vmem:[%s444 + $0x134] sm:%s436] %v459
                $region88: #{resvesselnet_pallas.4} parent=68 // loop_footer
                  %s442 = sadd.s32 1, %s438
                $region89: #{resvesselnet_pallas.4} parent=68 // loop_footer_branch
                  %437 = sbr.rel target = $region85
                $region90: #{resvesselnet_pallas.4} parent=68 // loop_exit
                  _
              $region69: #{resvesselnet_pallas.4} parent=35 // pred_fallthru
                _
            $region36: #{resvesselnet_pallas.4} parent=31 // pred_fallthru
              _
            // Predicated region
            $region37: #{resvesselnet_pallas.4} parent=31 // pred_check
              %p151 = pneg %p147
            $region38: #{resvesselnet_pallas.4} parent=31 // pred_check_branch
              %153 = sbr.rel (%p151) target = $region40
            $region39: #{resvesselnet_pallas.4} parent=31 // pred_region
              %s154 = sshll.u32 1, %s143
              %s155 = ssub.s32 %s154, 1
              loop: start=0, step=1, limit=1
              $region41: #{resvesselnet_pallas.4} parent=39 // loop_pre_header
                _
              $region42: #{resvesselnet_pallas.4} parent=39 // loop_header
                %s157 = sphi 0, %s161
                %p158 = scmp.ge.s32.totalorder %s157, 1
                %s162 = sphi %s142, %s142
                %s163 = sphi %s134, %s134
              $region43: #{resvesselnet_pallas.4} parent=39 // loop_header_branch
                %160 = sbr.rel (%p158) target = $region47
              $region44: #{resvesselnet_pallas.4} parent=39 // loop_body
                %v164 = vld [vmem:[%s162] sm:%s155]
                %165 = vst [vmem:[%s163] sm:%s155] %v164
                %v166 = vld [vmem:[%s162 + $0xac] sm:%s155]
                %167 = vst [vmem:[%s163 + $0x2c] sm:%s155] %v166
                %v168 = vld [vmem:[%s162 + $0x158] sm:%s155]
                %169 = vst [vmem:[%s163 + $0x58] sm:%s155] %v168
                %v170 = vld [vmem:[%s162 + $0x204] sm:%s155]
                %171 = vst [vmem:[%s163 + $0x84] sm:%s155] %v170
                %v172 = vld [vmem:[%s162 + $0x2b0] sm:%s155]
                %173 = vst [vmem:[%s163 + $0xb0] sm:%s155] %v172
                %v174 = vld [vmem:[%s162 + $0x35c] sm:%s155]
                %175 = vst [vmem:[%s163 + $0xdc] sm:%s155] %v174
                %v176 = vld [vmem:[%s162 + $0x408] sm:%s155]
                %177 = vst [vmem:[%s163 + $0x108] sm:%s155] %v176
                %v178 = vld [vmem:[%s162 + $0x4b4] sm:%s155]
                %179 = vst [vmem:[%s163 + $0x134] sm:%s155] %v178
              $region45: #{resvesselnet_pallas.4} parent=39 // loop_footer
                %s161 = sadd.s32 1, %s157
              $region46: #{resvesselnet_pallas.4} parent=39 // loop_footer_branch
                %156 = sbr.rel target = $region42
              $region47: #{resvesselnet_pallas.4} parent=39 // loop_exit
                _
            $region40: #{resvesselnet_pallas.4} parent=31 // pred_fallthru
              _
          $region32: #{resvesselnet_pallas.4} parent=27 // pred_fallthru
            _
          %461 = vnop
        $region28: #{resvesselnet_pallas.4} parent=23 // pred_fallthru
          _
      $region24: #{resvesselnet_pallas.4} parent=5 // pred_fallthru
        _
      %p462 = scmp.le.s32.totalorder 1, %s9
      %p463 = scmp.lt.s32.totalorder %s9, 5
      %p464 = pnand %p462, %p463
      %p465 = pneg %p464
      // Predicated region
      $region91: #{resvesselnet_pallas.4} parent=5 // pred_check
        _
      $region92: #{resvesselnet_pallas.4} parent=5 // pred_check_branch
        %467 = sbr.rel (%p464) target = $region94
      $region93: #{resvesselnet_pallas.4} parent=5 // pred_region
        %s468 = ssub.s32 %s9, 1
        %s469 = sand.u32 %s22, 1
        %s470 = sand.u32 %s22, 1
        %s471 = smul.addr %s470, 352
        %s472 = scalar_lea.vmem [#allocation2], %s471
        // Predicated region
        $region95: #{resvesselnet_pallas.4} parent=93 // pred_check
          %p473 = pneg %p35
        $region96: #{resvesselnet_pallas.4} parent=93 // pred_check_branch
          %475 = sbr.rel (%p473) target = $region98
        $region97: #{resvesselnet_pallas.4} parent=93 // pred_region
          _
        $region98: #{resvesselnet_pallas.4} parent=93 // pred_fallthru
          _
        %s476 = sand.u32 %s22, 1
        %s477 = sand.u32 %s22, 1
        %s478 = smul.addr %s477, 352
        %s479 = scalar_lea.vmem [#allocation2], %s478
        %p480 = pneg %p35
        %p481 = pneg %p32
        %p482 = pneg %p56
        %p483 = pneg %p53
        %p484 = pneg %p77
        %p485 = pneg %p74
        %p486 = pneg %p103
        %p487 = pneg %p100
        %s488 = sand.u32 %s90, 1
        %s489 = sand.u32 %s90, 1
        %s490 = smul.addr %s489, 88
        %s491 = scalar_lea.vmem [#allocation3], %s490
        %s492 = smul.u32 11, %s14
        %s493 = ssub.s32 43, %s492
        %p494 = scmp.lt.s32.totalorder %s493, 11
        %s495 = scalar_select %p494, %s493, 11
        %s496 = smul.u32 32, %s495
        %s497 = smul.u32 11, %s14
        %v499 = vld [vmem:[%s472] sm:$0xff]
        %v500 = vld [vmem:[%s472 + $0x8] sm:$0xff]
        %v501 = vld [vmem:[%s472 + $0x10] sm:$0xff]
        %v502 = vld [vmem:[%s472 + $0x18] sm:$0xff]
        %v503 = vld [vmem:[%s472 + $0x20] sm:$0xff]
        %v504 = vld [vmem:[%s472 + $0x28] sm:$0xf]
        %v505 = vld [vmem:[%s472 + $0x2c] sm:$0xff]
        %v506 = vld [vmem:[%s472 + $0x34] sm:$0xff]
        %v507 = vld [vmem:[%s472 + $0x3c] sm:$0xff]
        %v508 = vld [vmem:[%s472 + $0x44] sm:$0xff]
        %v509 = vld [vmem:[%s472 + $0x4c] sm:$0xff]
        %v510 = vld [vmem:[%s472 + $0x54] sm:$0xf]
        %v511 = vld [vmem:[%s472 + $0x58] sm:$0xff]
        %v512 = vld [vmem:[%s472 + $0x60] sm:$0xff]
        %v513 = vld [vmem:[%s472 + $0x68] sm:$0xff]
        %v514 = vld [vmem:[%s472 + $0x70] sm:$0xff]
        %v515 = vld [vmem:[%s472 + $0x78] sm:$0xff]
        %v516 = vld [vmem:[%s472 + $0x80] sm:$0xf]
        %v517 = vld [vmem:[%s472 + $0x84] sm:$0xff]
        %v518 = vld [vmem:[%s472 + $0x8c] sm:$0xff]
        %v519 = vld [vmem:[%s472 + $0x94] sm:$0xff]
        %v520 = vld [vmem:[%s472 + $0x9c] sm:$0xff]
        %v521 = vld [vmem:[%s472 + $0xa4] sm:$0xff]
        %v522 = vld [vmem:[%s472 + $0xac] sm:$0xf]
        %v523 = vld [vmem:[%s472 + $0xb0] sm:$0xff]
        %v524 = vld [vmem:[%s472 + $0xb8] sm:$0xff]
        %v525 = vld [vmem:[%s472 + $0xc0] sm:$0xff]
        %v526 = vld [vmem:[%s472 + $0xc8] sm:$0xff]
        %v527 = vld [vmem:[%s472 + $0xd0] sm:$0xff]
        %v528 = vld [vmem:[%s472 + $0xd8] sm:$0xf]
        %v529 = vld [vmem:[%s472 + $0xdc] sm:$0xff]
        %v530 = vld [vmem:[%s472 + $0xe4] sm:$0xff]
        %v531 = vld [vmem:[%s472 + $0xec] sm:$0xff]
        %v532 = vld [vmem:[%s472 + $0xf4] sm:$0xff]
        %v533 = vld [vmem:[%s472 + $0xfc] sm:$0xff]
        %v534 = vld [vmem:[%s472 + $0x104] sm:$0xf]
        %v535 = vld [vmem:[%s472 + $0x108] sm:$0xff]
        %v536 = vld [vmem:[%s472 + $0x110] sm:$0xff]
        %v537 = vld [vmem:[%s472 + $0x118] sm:$0xff]
        %v538 = vld [vmem:[%s472 + $0x120] sm:$0xff]
        %v539 = vld [vmem:[%s472 + $0x128] sm:$0xff]
        %v540 = vld [vmem:[%s472 + $0x130] sm:$0xf]
        %v541 = vld [vmem:[%s472 + $0x134] sm:$0xff]
        %v542 = vld [vmem:[%s472 + $0x13c] sm:$0xff]
        %v543 = vld [vmem:[%s472 + $0x144] sm:$0xff]
        %v544 = vld [vmem:[%s472 + $0x14c] sm:$0xff]
        %v545 = vld [vmem:[%s472 + $0x154] sm:$0xff]
        %v546 = vld [vmem:[%s472 + $0x15c] sm:$0xf]
        %v547 = vld [vmem:[%s1] sm:$0xf]
        %v548 = vld [vmem:[%s1 + $0x4] sm:$0xf]
        %v549 = vld [vmem:[%s2] sm:$0xff]
        %v550 = vld [vmem:[%s2 + $0x8] sm:$0xff]
        %552 = vset.pattern.permute.xlu0 0
        %553 = vperm.xlu0 %552, %v549
        %v554 = vpop.permute.xlu0 %553
        %557 = vset.pattern.permute.xlu0 0
        %558 = vperm.xlu0 %557, %v550
        %v559 = vpop.permute.xlu0 %558
        %v563 = vunpack.c.l.b16 %v547
        %v564 = vunpack.c.l.b16 %v548
        %v565 = vpack.c.b16 %v564, %v563
        %v614 = vunpack.c.l.b16 %v499
        %v615 = vunpack.c.h.b16 %v499
        %v616 = vunpack.c.l.b16 %v500
        %v617 = vunpack.c.h.b16 %v500
        %v618 = vunpack.c.l.b16 %v501
        %v619 = vunpack.c.h.b16 %v501
        %v620 = vunpack.c.l.b16 %v502
        %v621 = vunpack.c.h.b16 %v502
        %v622 = vunpack.c.l.b16 %v503
        %v623 = vunpack.c.h.b16 %v503
        %v624 = vunpack.c.l.b16 %v504
        %v625 = vunpack.c.l.b16 %v505
        %v626 = vunpack.c.h.b16 %v505
        %v627 = vunpack.c.l.b16 %v506
        %v628 = vunpack.c.h.b16 %v506
        %v629 = vunpack.c.l.b16 %v507
        %v630 = vunpack.c.h.b16 %v507
        %v631 = vunpack.c.l.b16 %v508
        %v632 = vunpack.c.h.b16 %v508
        %v633 = vunpack.c.l.b16 %v509
        %v634 = vunpack.c.h.b16 %v509
        %v635 = vunpack.c.l.b16 %v510
        %v636 = vunpack.c.l.b16 %v511
        %v637 = vunpack.c.h.b16 %v511
        %v638 = vunpack.c.l.b16 %v512
        %v639 = vunpack.c.h.b16 %v512
        %v640 = vunpack.c.l.b16 %v513
        %v641 = vunpack.c.h.b16 %v513
        %v642 = vunpack.c.l.b16 %v514
        %v643 = vunpack.c.h.b16 %v514
        %v644 = vunpack.c.l.b16 %v515
        %v645 = vunpack.c.h.b16 %v515
        %v646 = vunpack.c.l.b16 %v516
        %v647 = vunpack.c.l.b16 %v517
        %v648 = vunpack.c.h.b16 %v517
        %v649 = vunpack.c.l.b16 %v518
        %v650 = vunpack.c.h.b16 %v518
        %v651 = vunpack.c.l.b16 %v519
        %v652 = vunpack.c.h.b16 %v519
        %v653 = vunpack.c.l.b16 %v520
        %v654 = vunpack.c.h.b16 %v520
        %v655 = vunpack.c.l.b16 %v521
        %v656 = vunpack.c.h.b16 %v521
        %v657 = vunpack.c.l.b16 %v522
        %v658 = vunpack.c.l.b16 %v523
        %v659 = vunpack.c.h.b16 %v523
        %v660 = vunpack.c.l.b16 %v524
        %v661 = vunpack.c.h.b16 %v524
        %v662 = vunpack.c.l.b16 %v525
        %v663 = vunpack.c.h.b16 %v525
        %v664 = vunpack.c.l.b16 %v526
        %v665 = vunpack.c.h.b16 %v526
        %v666 = vunpack.c.l.b16 %v527
        %v667 = vunpack.c.h.b16 %v527
        %v668 = vunpack.c.l.b16 %v528
        %v669 = vunpack.c.l.b16 %v529
        %v670 = vunpack.c.h.b16 %v529
        %v671 = vunpack.c.l.b16 %v530
        %v672 = vunpack.c.h.b16 %v530
        %v673 = vunpack.c.l.b16 %v531
        %v674 = vunpack.c.h.b16 %v531
        %v675 = vunpack.c.l.b16 %v532
        %v676 = vunpack.c.h.b16 %v532
        %v677 = vunpack.c.l.b16 %v533
        %v678 = vunpack.c.h.b16 %v533
        %v679 = vunpack.c.l.b16 %v534
        %v680 = vunpack.c.l.b16 %v535
        %v681 = vunpack.c.h.b16 %v535
        %v682 = vunpack.c.l.b16 %v536
        %v683 = vunpack.c.h.b16 %v536
        %v684 = vunpack.c.l.b16 %v537
        %v685 = vunpack.c.h.b16 %v537
        %v686 = vunpack.c.l.b16 %v538
        %v687 = vunpack.c.h.b16 %v538
        %v688 = vunpack.c.l.b16 %v539
        %v689 = vunpack.c.h.b16 %v539
        %v690 = vunpack.c.l.b16 %v540
        %v691 = vunpack.c.l.b16 %v541
        %v692 = vunpack.c.h.b16 %v541
        %v693 = vunpack.c.l.b16 %v542
        %v694 = vunpack.c.h.b16 %v542
        %v695 = vunpack.c.l.b16 %v543
        %v696 = vunpack.c.h.b16 %v543
        %v697 = vunpack.c.l.b16 %v544
        %v698 = vunpack.c.h.b16 %v544
        %v699 = vunpack.c.l.b16 %v545
        %v700 = vunpack.c.h.b16 %v545
        %v701 = vunpack.c.l.b16 %v546
        %v702 = vpack.c.b16 %v625, %v614
        %v703 = vpack.c.b16 %v626, %v615
        %v704 = vpack.c.b16 %v627, %v616
        %v705 = vpack.c.b16 %v628, %v617
        %v706 = vpack.c.b16 %v629, %v618
        %v707 = vpack.c.b16 %v630, %v619
        %v708 = vpack.c.b16 %v631, %v620
        %v709 = vpack.c.b16 %v632, %v621
        %v710 = vpack.c.b16 %v633, %v622
        %v711 = vpack.c.b16 %v634, %v623
        %v712 = vpack.c.b16 %v635, %v624
        %v713 = vpack.c.b16 %v647, %v636
        %v714 = vpack.c.b16 %v648, %v637
        %v715 = vpack.c.b16 %v649, %v638
        %v716 = vpack.c.b16 %v650, %v639
        %v717 = vpack.c.b16 %v651, %v640
        %v718 = vpack.c.b16 %v652, %v641
        %v719 = vpack.c.b16 %v653, %v642
        %v720 = vpack.c.b16 %v654, %v643
        %v721 = vpack.c.b16 %v655, %v644
        %v722 = vpack.c.b16 %v656, %v645
        %v723 = vpack.c.b16 %v657, %v646
        %v724 = vpack.c.b16 %v669, %v658
        %v725 = vpack.c.b16 %v670, %v659
        %v726 = vpack.c.b16 %v671, %v660
        %v727 = vpack.c.b16 %v672, %v661
        %v728 = vpack.c.b16 %v673, %v662
        %v729 = vpack.c.b16 %v674, %v663
        %v730 = vpack.c.b16 %v675, %v664
        %v731 = vpack.c.b16 %v676, %v665
        %v732 = vpack.c.b16 %v677, %v666
        %v733 = vpack.c.b16 %v678, %v667
        %v734 = vpack.c.b16 %v679, %v668
        %v735 = vpack.c.b16 %v691, %v680
        %v736 = vpack.c.b16 %v692, %v681
        %v737 = vpack.c.b16 %v693, %v682
        %v738 = vpack.c.b16 %v694, %v683
        %v739 = vpack.c.b16 %v695, %v684
        %v740 = vpack.c.b16 %v696, %v685
        %v741 = vpack.c.b16 %v697, %v686
        %v742 = vpack.c.b16 %v698, %v687
        %v743 = vpack.c.b16 %v699, %v688
        %v744 = vpack.c.b16 %v700, %v689
        %v745 = vpack.c.b16 %v701, %v690
        %vm790 = vcmask 523264
        %v792 = vsel %vm790, %v565, 0
        %794 = vmatpush.bf16.msra.mxu0 0
        %795 = vmatpush.bf16.msra.mxu0 0
        %796 = vmatpush.bf16.msra.mxu0 0
        %797 = vmatpush.bf16.msra.mxu0 0
        %798 = vmatpush.bf16.msra.mxu0 %v735
        %799 = vmatpush.bf16.msra.mxu0 %v724
        %800 = vmatpush.bf16.msra.mxu0 %v713
        %801 = vmatpush.bf16.msra.mxu0 %v702
        %802 = vmatmul.bf16.gmra.mxu0 %v792
        %v803 = vpop.f32.mrf.mxu0
        %v804 = vadd.f32 %v554, %v803
        %v805 = vpop.f32.mrf.mxu0
        %v806 = vadd.f32 %v559, %v805
        %807 = vdwg.mxu0
        %808 = vmatpush.bf16.msra.mxu0 0
        %809 = vmatpush.bf16.msra.mxu0 0
        %810 = vmatpush.bf16.msra.mxu0 0
        %811 = vmatpush.bf16.msra.mxu0 0
        %812 = vmatpush.bf16.msra.mxu0 %v736
        %813 = vmatpush.bf16.msra.mxu0 %v725
        %814 = vmatpush.bf16.msra.mxu0 %v714
        %815 = vmatpush.bf16.msra.mxu0 %v703
        %816 = vmatmul.bf16.gmra.mxu0 %v792
        %v817 = vpop.f32.mrf.mxu0
        %v818 = vadd.f32 %v554, %v817
        %v819 = vpop.f32.mrf.mxu0
        %v820 = vadd.f32 %v559, %v819
        %821 = vdwg.mxu0
        %822 = vmatpush.bf16.msra.mxu0 0
        %823 = vmatpush.bf16.msra.mxu0 0
        %824 = vmatpush.bf16.msra.mxu0 0
        %825 = vmatpush.bf16.msra.mxu0 0
        %826 = vmatpush.bf16.msra.mxu0 %v737
        %827 = vmatpush.bf16.msra.mxu0 %v726
        %828 = vmatpush.bf16.msra.mxu0 %v715
        %829 = vmatpush.bf16.msra.mxu0 %v704
        %830 = vmatmul.bf16.gmra.mxu0 %v792
        %v831 = vpop.f32.mrf.mxu0
        %v832 = vadd.f32 %v554, %v831
        %v833 = vpop.f32.mrf.mxu0
        %v834 = vadd.f32 %v559, %v833
        %835 = vdwg.mxu0
        %836 = vmatpush.bf16.msra.mxu0 0
        %837 = vmatpush.bf16.msra.mxu0 0
        %838 = vmatpush.bf16.msra.mxu0 0
        %839 = vmatpush.bf16.msra.mxu0 0
        %840 = vmatpush.bf16.msra.mxu0 %v738
        %841 = vmatpush.bf16.msra.mxu0 %v727
        %842 = vmatpush.bf16.msra.mxu0 %v716
        %843 = vmatpush.bf16.msra.mxu0 %v705
        %844 = vmatmul.bf16.gmra.mxu0 %v792
        %v845 = vpop.f32.mrf.mxu0
        %v846 = vadd.f32 %v554, %v845
        %v847 = vpop.f32.mrf.mxu0
        %v848 = vadd.f32 %v559, %v847
        %849 = vdwg.mxu0
        %850 = vmatpush.bf16.msra.mxu0 0
        %851 = vmatpush.bf16.msra.mxu0 0
        %852 = vmatpush.bf16.msra.mxu0 0
        %853 = vmatpush.bf16.msra.mxu0 0
        %854 = vmatpush.bf16.msra.mxu0 %v739
        %855 = vmatpush.bf16.msra.mxu0 %v728
        %856 = vmatpush.bf16.msra.mxu0 %v717
        %857 = vmatpush.bf16.msra.mxu0 %v706
        %858 = vmatmul.bf16.gmra.mxu0 %v792
        %v859 = vpop.f32.mrf.mxu0
        %v860 = vadd.f32 %v554, %v859
        %v861 = vpop.f32.mrf.mxu0
        %v862 = vadd.f32 %v559, %v861
        %863 = vdwg.mxu0
        %864 = vmatpush.bf16.msra.mxu0 0
        %865 = vmatpush.bf16.msra.mxu0 0
        %866 = vmatpush.bf16.msra.mxu0 0
        %867 = vmatpush.bf16.msra.mxu0 0
        %868 = vmatpush.bf16.msra.mxu0 %v740
        %869 = vmatpush.bf16.msra.mxu0 %v729
        %870 = vmatpush.bf16.msra.mxu0 %v718
        %871 = vmatpush.bf16.msra.mxu0 %v707
        %872 = vmatmul.bf16.gmra.mxu0 %v792
        %v873 = vpop.f32.mrf.mxu0
        %v874 = vadd.f32 %v554, %v873
        %v875 = vpop.f32.mrf.mxu0
        %v876 = vadd.f32 %v559, %v875
        %877 = vdwg.mxu0
        %878 = vmatpush.bf16.msra.mxu0 0
        %879 = vmatpush.bf16.msra.mxu0 0
        %880 = vmatpush.bf16.msra.mxu0 0
        %881 = vmatpush.bf16.msra.mxu0 0
        %882 = vmatpush.bf16.msra.mxu0 %v741
        %883 = vmatpush.bf16.msra.mxu0 %v730
        %884 = vmatpush.bf16.msra.mxu0 %v719
        %885 = vmatpush.bf16.msra.mxu0 %v708
        %886 = vmatmul.bf16.gmra.mxu0 %v792
        %v887 = vpop.f32.mrf.mxu0
        %v888 = vadd.f32 %v554, %v887
        %v889 = vpop.f32.mrf.mxu0
        %v890 = vadd.f32 %v559, %v889
        %891 = vdwg.mxu0
        %892 = vmatpush.bf16.msra.mxu0 0
        %893 = vmatpush.bf16.msra.mxu0 0
        %894 = vmatpush.bf16.msra.mxu0 0
        %895 = vmatpush.bf16.msra.mxu0 0
        %896 = vmatpush.bf16.msra.mxu0 %v742
        %897 = vmatpush.bf16.msra.mxu0 %v731
        %898 = vmatpush.bf16.msra.mxu0 %v720
        %899 = vmatpush.bf16.msra.mxu0 %v709
        %900 = vmatmul.bf16.gmra.mxu0 %v792
        %v901 = vpop.f32.mrf.mxu0
        %v902 = vadd.f32 %v554, %v901
        %v903 = vpop.f32.mrf.mxu0
        %v904 = vadd.f32 %v559, %v903
        %905 = vdwg.mxu0
        %906 = vmatpush.bf16.msra.mxu0 0
        %907 = vmatpush.bf16.msra.mxu0 0
        %908 = vmatpush.bf16.msra.mxu0 0
        %909 = vmatpush.bf16.msra.mxu0 0
        %910 = vmatpush.bf16.msra.mxu0 %v743
        %911 = vmatpush.bf16.msra.mxu0 %v732
        %912 = vmatpush.bf16.msra.mxu0 %v721
        %913 = vmatpush.bf16.msra.mxu0 %v710
        %914 = vmatmul.bf16.gmra.mxu0 %v792
        %v915 = vpop.f32.mrf.mxu0
        %v916 = vadd.f32 %v554, %v915
        %v917 = vpop.f32.mrf.mxu0
        %v918 = vadd.f32 %v559, %v917
        %919 = vdwg.mxu0
        %920 = vmatpush.bf16.msra.mxu0 0
        %921 = vmatpush.bf16.msra.mxu0 0
        %922 = vmatpush.bf16.msra.mxu0 0
        %923 = vmatpush.bf16.msra.mxu0 0
        %924 = vmatpush.bf16.msra.mxu0 %v744
        %925 = vmatpush.bf16.msra.mxu0 %v733
        %926 = vmatpush.bf16.msra.mxu0 %v722
        %927 = vmatpush.bf16.msra.mxu0 %v711
        %928 = vmatmul.bf16.gmra.mxu0 %v792
        %v929 = vpop.f32.mrf.mxu0
        %v930 = vadd.f32 %v554, %v929
        %v931 = vpop.f32.mrf.mxu0
        %v932 = vadd.f32 %v559, %v931
        %933 = vdwg.mxu0
        %934 = vmatpush.bf16.msra.mxu0 0
        %935 = vmatpush.bf16.msra.mxu0 0
        %936 = vmatpush.bf16.msra.mxu0 0
        %937 = vmatpush.bf16.msra.mxu0 0
        %938 = vmatpush.bf16.msra.mxu0 %v745
        %939 = vmatpush.bf16.msra.mxu0 %v734
        %940 = vmatpush.bf16.msra.mxu0 %v723
        %941 = vmatpush.bf16.msra.mxu0 %v712
        %942 = vmatmul.bf16.gmra.mxu0 %v792
        %v943 = vpop.f32.mrf.mxu0
        %v944 = vadd.f32 %v554, %v943
        %v945 = vpop.f32.mrf.mxu0
        %v946 = vadd.f32 %v559, %v945
        %947 = vdwg.mxu0
        %v948 = vpack.c.bf16 %v818, %v804
        %v949 = vpack.c.bf16 %v846, %v832
        %v950 = vpack.c.bf16 %v874, %v860
        %v951 = vpack.c.bf16 %v902, %v888
        %v952 = vpack.c.bf16 %v930, %v916
        %v953 = vpack.c.bf16 %v944, %v944
        %v954 = vpack.c.bf16 %v820, %v806
        %v955 = vpack.c.bf16 %v848, %v834
        %v956 = vpack.c.bf16 %v876, %v862
        %v957 = vpack.c.bf16 %v904, %v890
        %v958 = vpack.c.bf16 %v932, %v918
        %v959 = vpack.c.bf16 %v946, %v946
        %960 = vst [vmem:[%s491] sm:$0xff] %v948
        %961 = vst [vmem:[%s491 + $0x8] sm:$0xff] %v949
        %962 = vst [vmem:[%s491 + $0x10] sm:$0xff] %v950
        %963 = vst [vmem:[%s491 + $0x18] sm:$0xff] %v951
        %964 = vst [vmem:[%s491 + $0x20] sm:$0xff] %v952
        %965 = vst [vmem:[%s491 + $0x28] sm:$0xf] %v953
        %966 = vst [vmem:[%s491 + $0x2c] sm:$0xff] %v954
        %967 = vst [vmem:[%s491 + $0x34] sm:$0xff] %v955
        %968 = vst [vmem:[%s491 + $0x3c] sm:$0xff] %v956
        %969 = vst [vmem:[%s491 + $0x44] sm:$0xff] %v957
        %970 = vst [vmem:[%s491 + $0x4c] sm:$0xff] %v958
        %971 = vst [vmem:[%s491 + $0x54] sm:$0xf] %v959
        %s972 = sand.u32 %s90, 1
        %s973 = sand.u32 %s90, 1
        %s974 = smul.addr %s973, 88
        %s975 = scalar_lea.vmem [#allocation3], %s974
        // Predicated region
        $region99: #{resvesselnet_pallas.4} parent=93 // pred_check
          %p976 = pneg %p100
        $region100: #{resvesselnet_pallas.4} parent=93 // pred_check_branch
          %978 = sbr.rel (%p976) target = $region102
        $region101: #{resvesselnet_pallas.4} parent=93 // pred_region
          %s979 = smul.u32 11, %s14
          %s980 = smul.addr %s979, 4
          %s981 = scalar_lea.vmem %s3, %s980
          // Predicated region
          $region103: #{resvesselnet_pallas.4} parent=101 // pred_check
            _
          $region104: #{resvesselnet_pallas.4} parent=101 // pred_check_branch
            %983 = sbr.rel (0) target = $region106
          $region105: #{resvesselnet_pallas.4} parent=101 // pred_region
            // Predicated region
            $region107: #{resvesselnet_pallas.4} parent=105 // pred_check
              _
            $region108: #{resvesselnet_pallas.4} parent=105 // pred_check_branch
              %985 = sbr.rel (0) target = $region110
            $region109: #{resvesselnet_pallas.4} parent=105 // pred_region
              %s986 = scalar_lea.vmem %s975, 40 [#allocation3]
              %s987 = scalar_lea.vmem %s981, 40
              loop: start=0, step=1, limit=1
              $region111: #{resvesselnet_pallas.4} parent=109 // loop_pre_header
                _
              $region112: #{resvesselnet_pallas.4} parent=109 // loop_header
                %s989 = sphi 0, %s993
                %p990 = scmp.ge.s32.totalorder %s989, 1
                %s994 = sphi %s975, %s975
                %s995 = sphi %s981, %s981
              $region113: #{resvesselnet_pallas.4} parent=109 // loop_header_branch
                %992 = sbr.rel (%p990) target = $region117
              $region114: #{resvesselnet_pallas.4} parent=109 // loop_body
                %v996 = vld [vmem:[%s994] sm:$0xff]
                %997 = vst [vmem:[%s995] sm:$0xff] %v996
                %v998 = vld [vmem:[%s994 + $0x8] sm:$0xff]
                %999 = vst [vmem:[%s995 + $0x8] sm:$0xff] %v998
                %v1000 = vld [vmem:[%s994 + $0x10] sm:$0xff]
                %1001 = vst [vmem:[%s995 + $0x10] sm:$0xff] %v1000
                %v1002 = vld [vmem:[%s994 + $0x18] sm:$0xff]
                %1003 = vst [vmem:[%s995 + $0x18] sm:$0xff] %v1002
                %v1004 = vld [vmem:[%s994 + $0x20] sm:$0xff]
                %1005 = vst [vmem:[%s995 + $0x20] sm:$0xff] %v1004
                %v1006 = vld [vmem:[%s994 + $0x2c] sm:$0xff]
                %1007 = vst [vmem:[%s995 + $0xb0] sm:$0xff] %v1006
                %v1008 = vld [vmem:[%s994 + $0x34] sm:$0xff]
                %1009 = vst [vmem:[%s995 + $0xb8] sm:$0xff] %v1008
                %v1010 = vld [vmem:[%s994 + $0x3c] sm:$0xff]
                %1011 = vst [vmem:[%s995 + $0xc0] sm:$0xff] %v1010
                %v1012 = vld [vmem:[%s994 + $0x44] sm:$0xff]
                %1013 = vst [vmem:[%s995 + $0xc8] sm:$0xff] %v1012
                %v1014 = vld [vmem:[%s994 + $0x4c] sm:$0xff]
                %1015 = vst [vmem:[%s995 + $0xd0] sm:$0xff] %v1014
              $region115: #{resvesselnet_pallas.4} parent=109 // loop_footer
                %s993 = sadd.s32 1, %s989
              $region116: #{resvesselnet_pallas.4} parent=109 // loop_footer_branch
                %988 = sbr.rel target = $region112
              $region117: #{resvesselnet_pallas.4} parent=109 // loop_exit
                _
              %s1017 = ssub.s32 16, 1
              loop: start=0, step=1, limit=1
              $region118: #{resvesselnet_pallas.4} parent=109 // loop_pre_header
                _
              $region119: #{resvesselnet_pallas.4} parent=109 // loop_header
                %s1019 = sphi 0, %s1023
                %p1020 = scmp.ge.s32.totalorder %s1019, 1
                %s1024 = sphi %s986, %s986
                %s1025 = sphi %s987, %s987
              $region120: #{resvesselnet_pallas.4} parent=109 // loop_header_branch
                %1022 = sbr.rel (%p1020) target = $region124
              $region121: #{resvesselnet_pallas.4} parent=109 // loop_body
                %v1026 = vld [vmem:[%s1024] sm:%s1017]
                %1027 = vst [vmem:[%s1025] sm:%s1017] %v1026
                %v1028 = vld [vmem:[%s1024 + $0x2c] sm:%s1017]
                %1029 = vst [vmem:[%s1025 + $0xb0] sm:%s1017] %v1028
              $region122: #{resvesselnet_pallas.4} parent=109 // loop_footer
                %s1023 = sadd.s32 1, %s1019
              $region123: #{resvesselnet_pallas.4} parent=109 // loop_footer_branch
                %1018 = sbr.rel target = $region119
              $region124: #{resvesselnet_pallas.4} parent=109 // loop_exit
                _
            $region110: #{resvesselnet_pallas.4} parent=105 // pred_fallthru
              _
          $region106: #{resvesselnet_pallas.4} parent=101 // pred_fallthru
            _
          %1030 = vnop
        $region102: #{resvesselnet_pallas.4} parent=93 // pred_fallthru
          _
      $region94: #{resvesselnet_pallas.4} parent=5 // pred_fallthru
        _
      %p1031 = scmp.le.s32.totalorder 2, %s9
      // Predicated region
      $region125: #{resvesselnet_pallas.4} parent=5 // pred_check
        %p1032 = pneg %p1031
      $region126: #{resvesselnet_pallas.4} parent=5 // pred_check_branch
        %1034 = sbr.rel (%p1032) target = $region128
      $region127: #{resvesselnet_pallas.4} parent=5 // pred_region
        %s1035 = ssub.s32 %s9, 2
        // Predicated region
        $region129: #{resvesselnet_pallas.4} parent=127 // pred_check
          %p1036 = pneg %p106
        $region130: #{resvesselnet_pallas.4} parent=127 // pred_check_branch
          %1038 = sbr.rel (%p1036) target = $region132
        $region131: #{resvesselnet_pallas.4} parent=127 // pred_region
          %s1039 = sand.u32 %s91, 1
          %s1040 = sand.u32 %s91, 1
          %s1041 = smul.addr %s1040, 88
          %s1042 = scalar_lea.vmem [#allocation3], %s1041
        $region132: #{resvesselnet_pallas.4} parent=127 // pred_fallthru
          _
      $region128: #{resvesselnet_pallas.4} parent=5 // pred_fallthru
        _
    $region6: #{resvesselnet_pallas.4} parent=1 // loop_footer
      %s13 = sadd.s32 1, %s9
    $region7: #{resvesselnet_pallas.4} parent=1 // loop_footer_branch
      %8 = sbr.rel target = $region3
    $region8: #{resvesselnet_pallas.4} parent=1 // loop_exit
      _

// kernel: resvesselnet_pallas.5
$region0: #{resvesselnet_pallas.5}
  #allocation0 [shape = 'u32[]', space=smem, size = 0x4, offset = 0x4, fixed_abs, tag = 'smem constant byte address 0x4 - core index']
  #allocation1 [shape = 'u32[72,128]{1,0:T(1,128)}', space=vmem, size = 0x9000, scoped, tag = 'internal scratch']
  %s0 = inlined_call_operand.vmem [shape: bf16[640,2000], index: 0, kind: input, shape index: {}]
  %s1 = inlined_call_operand.vmem [shape: bf16[16,640], index: 1, kind: input, shape index: {}]
  %s2 = inlined_call_operand.vmem [shape: f32[16,1], index: 2, kind: input, shape index: {}]
  %s3 = inlined_call_operand.vmem [shape: bf16[16,5], index: 3, kind: input, shape index: {}]
  %s4 = inlined_call_operand.vmem [shape: bf16[16,2048], index: 4, kind: output, shape index: {}]
  %s5 = sld [smem:[#allocation0]]
  $region91: #{resvesselnet_pallas.5} parent=0
    _
  %s7 = ssub.s32 1, %s5
  %s8 = scalar_select 0, %s7, %s5
  $region1: #{resvesselnet_pallas.5} parent=0
    #allocation2 [shape = 'u8[1310720]{0}', space=vmem, size = 0x140000, scoped, tag = 'input window, operand 0']
    #allocation3 [shape = 'u8[32768]{0}', space=vmem, size = 0x8000, scoped, tag = 'output window, operand 0']
    loop: start=0, step=1, limit=6
    $region2: #{resvesselnet_pallas.5} parent=1 // loop_pre_header
      _
    $region3: #{resvesselnet_pallas.5} parent=1 // loop_header
      %s10 = sphi 0, %s14
      %p11 = scmp.ge.s32.totalorder %s10, 6
      %s20 = sphi 0, %s22
      %s23 = sphi 0, %s20
      %s24 = sphi 0, %s23
      %s40 = sphi 0, %s24
      %s44 = sphi 0, %s44
      %s46 = sphi 0, %s44
      %s47 = sphi 0, %s46
      %s61 = sphi 0, %s47
      %s65 = sphi 0, %s65
      %s67 = sphi 0, %s65
      %s68 = sphi 0, %s67
      %s82 = sphi 0, %s68
      %s86 = sphi 0, %s86
      %s88 = sphi 0, %s86
      %s89 = sphi 0, %s88
      %s103 = sphi 0, %s89
      %s109 = sphi 0, %s111
      %s112 = sphi 0, %s109
      %s113 = sphi 0, %s112
      %s129 = sphi 0, %s113
    $region4: #{resvesselnet_pallas.5} parent=1 // loop_header_branch
      %13 = sbr.rel (%p11) target = $region8
    $region5: #{resvesselnet_pallas.5} parent=1 // loop_body
      %s15 = ssub.s32 %s10, 1
      %s16 = ssub.s32 %s10, 2
      %s17 = sadd.s32 %s10, 1
      %s18 = ssub.s32 %s10, %s17
      %p19 = scmp.eq.s32.totalorder %s18, 0
      %s21 = sadd.s32 %s20, 1
      %s22 = scalar_select %p19, %s20, %s21
      %p25 = pneg %p19
      %p26 = scmp.eq.s32.totalorder %s10, 3
      %p27 = por %p25, %p26
      %p28 = scmp.ne.s32.totalorder %s20, %s23
      %p29 = scmp.eq.s32.totalorder %s10, 0
      %p30 = por %p28, %p29
      %p31 = scmp.ne.s32.totalorder %s20, %s23
      %p32 = scmp.eq.s32.totalorder %s15, 3
      %p33 = por %p31, %p32
      %p34 = scmp.ne.s32.totalorder %s23, %s24
      %p35 = scmp.eq.s32.totalorder %s15, 0
      %p36 = por %p34, %p35
      %p37 = scmp.ne.s32.totalorder %s23, %s24
      %p38 = scmp.eq.s32.totalorder %s16, 3
      %p39 = por %p37, %p38
      %p41 = scmp.ne.s32.totalorder %s24, %s40
      %p42 = scmp.eq.s32.totalorder %s16, 0
      %p43 = por %p41, %p42
      %s45 = sadd.s32 %s44, 1
      %p48 = scmp.eq.s32.totalorder %s10, 3
      %p49 = scmp.ne.s32.totalorder %s44, %s46
      %p50 = scmp.eq.s32.totalorder %s10, 0
      %p51 = por %p49, %p50
      %p52 = scmp.ne.s32.totalorder %s44, %s46
      %p53 = scmp.eq.s32.totalorder %s15, 3
      %p54 = por %p52, %p53
      %p55 = scmp.ne.s32.totalorder %s46, %s47
      %p56 = scmp.eq.s32.totalorder %s15, 0
      %p57 = por %p55, %p56
      %p58 = scmp.ne.s32.totalorder %s46, %s47
      %p59 = scmp.eq.s32.totalorder %s16, 3
      %p60 = por %p58, %p59
      %p62 = scmp.ne.s32.totalorder %s47, %s61
      %p63 = scmp.eq.s32.totalorder %s16, 0
      %p64 = por %p62, %p63
      %s66 = sadd.s32 %s65, 1
      %p69 = scmp.eq.s32.totalorder %s10, 3
      %p70 = scmp.ne.s32.totalorder %s65, %s67
      %p71 = scmp.eq.s32.totalorder %s10, 0
      %p72 = por %p70, %p71
      %p73 = scmp.ne.s32.totalorder %s65, %s67
      %p74 = scmp.eq.s32.totalorder %s15, 3
      %p75 = por %p73, %p74
      %p76 = scmp.ne.s32.totalorder %s67, %s68
      %p77 = scmp.eq.s32.totalorder %s15, 0
      %p78 = por %p76, %p77
      %p79 = scmp.ne.s32.totalorder %s67, %s68
      %p80 = scmp.eq.s32.totalorder %s16, 3
      %p81 = por %p79, %p80
      %p83 = scmp.ne.s32.totalorder %s68, %s82
      %p84 = scmp.eq.s32.totalorder %s16, 0
      %p85 = por %p83, %p84
      %s87 = sadd.s32 %s86, 1
      %p90 = scmp.eq.s32.totalorder %s10, 3
      %p91 = scmp.ne.s32.totalorder %s86, %s88
      %p92 = scmp.eq.s32.totalorder %s10, 0
      %p93 = por %p91, %p92
      %p94 = scmp.ne.s32.totalorder %s86, %s88
      %p95 = scmp.eq.s32.totalorder %s15, 3
      %p96 = por %p94, %p95
      %p97 = scmp.ne.s32.totalorder %s88, %s89
      %p98 = scmp.eq.s32.totalorder %s15, 0
      %p99 = por %p97, %p98
      %p100 = scmp.ne.s32.totalorder %s88, %s89
      %p101 = scmp.eq.s32.totalorder %s16, 3
      %p102 = por %p100, %p101
      %p104 = scmp.ne.s32.totalorder %s89, %s103
      %p105 = scmp.eq.s32.totalorder %s16, 0
      %p106 = por %p104, %p105
      %s107 = ssub.s32 %s10, %s17
      %p108 = scmp.eq.s32.totalorder %s107, 0
      %s110 = sadd.s32 %s109, 1
      %s111 = scalar_select %p108, %s109, %s110
      %p114 = pneg %p108
      %p115 = scmp.eq.s32.totalorder %s10, 3
      %p116 = por %p114, %p115
      %p117 = scmp.ne.s32.totalorder %s109, %s112
      %p118 = scmp.eq.s32.totalorder %s10, 0
      %p119 = por %p117, %p118
      %p120 = scmp.ne.s32.totalorder %s109, %s112
      %p121 = scmp.eq.s32.totalorder %s15, 3
      %p122 = por %p120, %p121
      %p123 = scmp.ne.s32.totalorder %s112, %s113
      %p124 = scmp.eq.s32.totalorder %s15, 0
      %p125 = por %p123, %p124
      %p126 = scmp.ne.s32.totalorder %s112, %s113
      %p127 = scmp.eq.s32.totalorder %s16, 3
      %p128 = por %p126, %p127
      %p130 = scmp.ne.s32.totalorder %s113, %s129
      %p131 = scmp.eq.s32.totalorder %s16, 0
      %p132 = por %p130, %p131
      %p133 = scmp.le.s32.totalorder 1, %s10
      %p134 = scmp.lt.s32.totalorder %s10, 5
      %p135 = pnand %p133, %p134
      %p136 = pneg %p135
      // Predicated region
      $region9: #{resvesselnet_pallas.5} parent=5 // pred_check
        _
      $region10: #{resvesselnet_pallas.5} parent=5 // pred_check_branch
        %138 = sbr.rel (%p135) target = $region12
      $region11: #{resvesselnet_pallas.5} parent=5 // pred_region
        %s139 = ssub.s32 %s10, 1
        // Predicated region
        $region13: #{resvesselnet_pallas.5} parent=11 // pred_check
          %p140 = pneg %p57
        $region14: #{resvesselnet_pallas.5} parent=11 // pred_check_branch
          %142 = sbr.rel (%p140) target = $region16
        $region15: #{resvesselnet_pallas.5} parent=11 // pred_region
          _
        $region16: #{resvesselnet_pallas.5} parent=11 // pred_fallthru
          _
        // Predicated region
        $region17: #{resvesselnet_pallas.5} parent=11 // pred_check
          %p143 = pneg %p78
        $region18: #{resvesselnet_pallas.5} parent=11 // pred_check_branch
          %145 = sbr.rel (%p143) target = $region20
        $region19: #{resvesselnet_pallas.5} parent=11 // pred_region
          _
        $region20: #{resvesselnet_pallas.5} parent=11 // pred_fallthru
          _
        // Predicated region
        $region21: #{resvesselnet_pallas.5} parent=11 // pred_check
          %p146 = pneg %p99
        $region22: #{resvesselnet_pallas.5} parent=11 // pred_check_branch
          %148 = sbr.rel (%p146) target = $region24
        $region23: #{resvesselnet_pallas.5} parent=11 // pred_region
          _
        $region24: #{resvesselnet_pallas.5} parent=11 // pred_fallthru
          _
      $region12: #{resvesselnet_pallas.5} parent=5 // pred_fallthru
        _
      %p149 = scmp.lt.s32.totalorder %s10, 4
      // Predicated region
      $region25: #{resvesselnet_pallas.5} parent=5 // pred_check
        %p150 = pneg %p149
      $region26: #{resvesselnet_pallas.5} parent=5 // pred_check_branch
        %152 = sbr.rel (%p150) target = $region28
      $region27: #{resvesselnet_pallas.5} parent=5 // pred_region
        // Predicated region
        $region29: #{resvesselnet_pallas.5} parent=27 // pred_check
          %p153 = pneg %p30
        $region30: #{resvesselnet_pallas.5} parent=27 // pred_check_branch
          %155 = sbr.rel (%p153) target = $region32
        $region31: #{resvesselnet_pallas.5} parent=27 // pred_region
          %s156 = sand.u32 %s20, 1
          %s157 = sand.u32 %s20, 1
          %s158 = smul.addr %s157, 1280
          %s159 = scalar_lea.vmem [#allocation2], %s158
          %s160 = smul.u32 4, %s10
          %s161 = smul.addr %s160, 4
          %s162 = scalar_lea.vmem %s0, %s161
          // Predicated region
          $region33: #{resvesselnet_pallas.5} parent=31 // pred_check
            _
          $region34: #{resvesselnet_pallas.5} parent=31 // pred_check_branch
            %164 = sbr.rel (0) target = $region36
          $region35: #{resvesselnet_pallas.5} parent=31 // pred_region
            // Predicated region
            $region37: #{resvesselnet_pallas.5} parent=35 // pred_check
              _
            $region38: #{resvesselnet_pallas.5} parent=35 // pred_check_branch
              %166 = sbr.rel (0) target = $region40
            $region39: #{resvesselnet_pallas.5} parent=35 // pred_region
              loop: start=0, step=1, limit=1
              $region41: #{resvesselnet_pallas.5} parent=39 // loop_pre_header
                _
              $region42: #{resvesselnet_pallas.5} parent=39 // loop_header
                %s168 = sphi 0, %s172
                %p169 = scmp.ge.s32.totalorder %s168, 1
                %s173 = sphi %s162, %s162
                %s174 = sphi %s159, %s159
              $region43: #{resvesselnet_pallas.5} parent=39 // loop_header_branch
                %171 = sbr.rel (%p169) target = $region47
              $region44: #{resvesselnet_pallas.5} parent=39 // loop_body
                %v175 = vld [vmem:[%s173] sm:$0xff]
                %176 = vst [vmem:[%s174] sm:$0xff] %v175
                %v177 = vld [vmem:[%s173 + $0x8] sm:$0xff]
                %178 = vst [vmem:[%s174 + $0x8] sm:$0xff] %v177
                %v179 = vld [vmem:[%s173 + $0x40] sm:$0xff]
                %180 = vst [vmem:[%s174 + $0x10] sm:$0xff] %v179
                %v181 = vld [vmem:[%s173 + $0x48] sm:$0xff]
                %182 = vst [vmem:[%s174 + $0x18] sm:$0xff] %v181
                %v183 = vld [vmem:[%s173 + $0x80] sm:$0xff]
                %184 = vst [vmem:[%s174 + $0x20] sm:$0xff] %v183
                %v185 = vld [vmem:[%s173 + $0x88] sm:$0xff]
                %186 = vst [vmem:[%s174 + $0x28] sm:$0xff] %v185
                %v187 = vld [vmem:[%s173 + $0xc0] sm:$0xff]
                %188 = vst [vmem:[%s174 + $0x30] sm:$0xff] %v187
                %v189 = vld [vmem:[%s173 + $0xc8] sm:$0xff]
                %190 = vst [vmem:[%s174 + $0x38] sm:$0xff] %v189
                %v191 = vld [vmem:[%s173 + $0x100] sm:$0xff]
                %192 = vst [vmem:[%s174 + $0x40] sm:$0xff] %v191
                %v193 = vld [vmem:[%s173 + $0x108] sm:$0xff]
                %194 = vst [vmem:[%s174 + $0x48] sm:$0xff] %v193
                %v195 = vld [vmem:[%s173 + $0x140] sm:$0xff]
                %196 = vst [vmem:[%s174 + $0x50] sm:$0xff] %v195
                %v197 = vld [vmem:[%s173 + $0x148] sm:$0xff]
                %198 = vst [vmem:[%s174 + $0x58] sm:$0xff] %v197
                %v199 = vld [vmem:[%s173 + $0x180] sm:$0xff]
                %200 = vst [vmem:[%s174 + $0x60] sm:$0xff] %v199
                %v201 = vld [vmem:[%s173 + $0x188] sm:$0xff]
                %202 = vst [vmem:[%s174 + $0x68] sm:$0xff] %v201
                %v203 = vld [vmem:[%s173 + $0x1c0] sm:$0xff]
                %204 = vst [vmem:[%s174 + $0x70] sm:$0xff] %v203
                %v205 = vld [vmem:[%s173 + $0x1c8] sm:$0xff]
                %206 = vst [vmem:[%s174 + $0x78] sm:$0xff] %v205
                %v207 = vld [vmem:[%s173 + $0x200] sm:$0xff]
                %208 = vst [vmem:[%s174 + $0x80] sm:$0xff] %v207
                %v209 = vld [vmem:[%s173 + $0x208] sm:$0xff]
                %210 = vst [vmem:[%s174 + $0x88] sm:$0xff] %v209
                %v211 = vld [vmem:[%s173 + $0x240] sm:$0xff]
                %212 = vst [vmem:[%s174 + $0x90] sm:$0xff] %v211
                %v213 = vld [vmem:[%s173 + $0x248] sm:$0xff]
                %214 = vst [vmem:[%s174 + $0x98] sm:$0xff] %v213
                %v215 = vld [vmem:[%s173 + $0x280] sm:$0xff]
                %216 = vst [vmem:[%s174 + $0xa0] sm:$0xff] %v215
                %v217 = vld [vmem:[%s173 + $0x288] sm:$0xff]
                %218 = vst [vmem:[%s174 + $0xa8] sm:$0xff] %v217
                %v219 = vld [vmem:[%s173 + $0x2c0] sm:$0xff]
                %220 = vst [vmem:[%s174 + $0xb0] sm:$0xff] %v219
                %v221 = vld [vmem:[%s173 + $0x2c8] sm:$0xff]
                %222 = vst [vmem:[%s174 + $0xb8] sm:$0xff] %v221
                %v223 = vld [vmem:[%s173 + $0x300] sm:$0xff]
                %224 = vst [vmem:[%s174 + $0xc0] sm:$0xff] %v223
                %v225 = vld [vmem:[%s173 + $0x308] sm:$0xff]
                %226 = vst [vmem:[%s174 + $0xc8] sm:$0xff] %v225
                %v227 = vld [vmem:[%s173 + $0x340] sm:$0xff]
                %228 = vst [vmem:[%s174 + $0xd0] sm:$0xff] %v227
                %v229 = vld [vmem:[%s173 + $0x348] sm:$0xff]
                %230 = vst [vmem:[%s174 + $0xd8] sm:$0xff] %v229
                %v231 = vld [vmem:[%s173 + $0x380] sm:$0xff]
                %232 = vst [vmem:[%s174 + $0xe0] sm:$0xff] %v231
                %v233 = vld [vmem:[%s173 + $0x388] sm:$0xff]
                %234 = vst [vmem:[%s174 + $0xe8] sm:$0xff] %v233
                %v235 = vld [vmem:[%s173 + $0x3c0] sm:$0xff]
                %236 = vst [vmem:[%s174 + $0xf0] sm:$0xff] %v235
                %v237 = vld [vmem:[%s173 + $0x3c8] sm:$0xff]
                %238 = vst [vmem:[%s174 + $0xf8] sm:$0xff] %v237
                %v239 = vld [vmem:[%s173 + $0x400] sm:$0xff]
                %240 = vst [vmem:[%s174 + $0x100] sm:$0xff] %v239
                %v241 = vld [vmem:[%s173 + $0x408] sm:$0xff]
                %242 = vst [vmem:[%s174 + $0x108] sm:$0xff] %v241
                %v243 = vld [vmem:[%s173 + $0x440] sm:$0xff]
                %244 = vst [vmem:[%s174 + $0x110] sm:$0xff] %v243
                %v245 = vld [vmem:[%s173 + $0x448] sm:$0xff]
                %246 = vst [vmem:[%s174 + $0x118] sm:$0xff] %v245
                %v247 = vld [vmem:[%s173 + $0x480] sm:$0xff]
                %248 = vst [vmem:[%s174 + $0x120] sm:$0xff] %v247
                %v249 = vld [vmem:[%s173 + $0x488] sm:$0xff]
                %250 = vst [vmem:[%s174 + $0x128] sm:$0xff] %v249
                %v251 = vld [vmem:[%s173 + $0x4c0] sm:$0xff]
                %252 = vst [vmem:[%s174 + $0x130] sm:$0xff] %v251
                %v253 = vld [vmem:[%s173 + $0x4c8] sm:$0xff]
                %254 = vst [vmem:[%s174 + $0x138] sm:$0xff] %v253
                %v255 = vld [vmem:[%s173 + $0x500] sm:$0xff]
                %256 = vst [vmem:[%s174 + $0x140] sm:$0xff] %v255
                %v257 = vld [vmem:[%s173 + $0x508] sm:$0xff]
                %258 = vst [vmem:[%s174 + $0x148] sm:$0xff] %v257
                %v259 = vld [vmem:[%s173 + $0x540] sm:$0xff]
                %260 = vst [vmem:[%s174 + $0x150] sm:$0xff] %v259
                %v261 = vld [vmem:[%s173 + $0x548] sm:$0xff]
                %262 = vst [vmem:[%s174 + $0x158] sm:$0xff] %v261
                %v263 = vld [vmem:[%s173 + $0x580] sm:$0xff]
                %264 = vst [vmem:[%s174 + $0x160] sm:$0xff] %v263
                %v265 = vld [vmem:[%s173 + $0x588] sm:$0xff]
                %266 = vst [vmem:[%s174 + $0x168] sm:$0xff] %v265
                %v267 = vld [vmem:[%s173 + $0x5c0] sm:$0xff]
                %268 = vst [vmem:[%s174 + $0x170] sm:$0xff] %v267
                %v269 = vld [vmem:[%s173 + $0x5c8] sm:$0xff]
                %270 = vst [vmem:[%s174 + $0x178] sm:$0xff] %v269
                %v271 = vld [vmem:[%s173 + $0x600] sm:$0xff]
                %272 = vst [vmem:[%s174 + $0x180] sm:$0xff] %v271
                %v273 = vld [vmem:[%s173 + $0x608] sm:$0xff]
                %274 = vst [vmem:[%s174 + $0x188] sm:$0xff] %v273
                %v275 = vld [vmem:[%s173 + $0x640] sm:$0xff]
                %276 = vst [vmem:[%s174 + $0x190] sm:$0xff] %v275
                %v277 = vld [vmem:[%s173 + $0x648] sm:$0xff]
                %278 = vst [vmem:[%s174 + $0x198] sm:$0xff] %v277
                %v279 = vld [vmem:[%s173 + $0x680] sm:$0xff]
                %280 = vst [vmem:[%s174 + $0x1a0] sm:$0xff] %v279
                %v281 = vld [vmem:[%s173 + $0x688] sm:$0xff]
                %282 = vst [vmem:[%s174 + $0x1a8] sm:$0xff] %v281
                %v283 = vld [vmem:[%s173 + $0x6c0] sm:$0xff]
                %284 = vst [vmem:[%s174 + $0x1b0] sm:$0xff] %v283
                %v285 = vld [vmem:[%s173 + $0x6c8] sm:$0xff]
                %286 = vst [vmem:[%s174 + $0x1b8] sm:$0xff] %v285
                %v287 = vld [vmem:[%s173 + $0x700] sm:$0xff]
                %288 = vst [vmem:[%s174 + $0x1c0] sm:$0xff] %v287
                %v289 = vld [vmem:[%s173 + $0x708] sm:$0xff]
                %290 = vst [vmem:[%s174 + $0x1c8] sm:$0xff] %v289
                %v291 = vld [vmem:[%s173 + $0x740] sm:$0xff]
                %292 = vst [vmem:[%s174 + $0x1d0] sm:$0xff] %v291
                %v293 = vld [vmem:[%s173 + $0x748] sm:$0xff]
                %294 = vst [vmem:[%s174 + $0x1d8] sm:$0xff] %v293
                %v295 = vld [vmem:[%s173 + $0x780] sm:$0xff]
                %296 = vst [vmem:[%s174 + $0x1e0] sm:$0xff] %v295
                %v297 = vld [vmem:[%s173 + $0x788] sm:$0xff]
                %298 = vst [vmem:[%s174 + $0x1e8] sm:$0xff] %v297
                %v299 = vld [vmem:[%s173 + $0x7c0] sm:$0xff]
                %300 = vst [vmem:[%s174 + $0x1f0] sm:$0xff] %v299
                %v301 = vld [vmem:[%s173 + $0x7c8] sm:$0xff]
                %302 = vst [vmem:[%s174 + $0x1f8] sm:$0xff] %v301
                %v303 = vld [vmem:[%s173 + $0x800] sm:$0xff]
                %304 = vst [vmem:[%s174 + $0x200] sm:$0xff] %v303
                %v305 = vld [vmem:[%s173 + $0x808] sm:$0xff]
                %306 = vst [vmem:[%s174 + $0x208] sm:$0xff] %v305
                %v307 = vld [vmem:[%s173 + $0x840] sm:$0xff]
                %308 = vst [vmem:[%s174 + $0x210] sm:$0xff] %v307
                %v309 = vld [vmem:[%s173 + $0x848] sm:$0xff]
                %310 = vst [vmem:[%s174 + $0x218] sm:$0xff] %v309
                %v311 = vld [vmem:[%s173 + $0x880] sm:$0xff]
                %312 = vst [vmem:[%s174 + $0x220] sm:$0xff] %v311
                %v313 = vld [vmem:[%s173 + $0x888] sm:$0xff]
                %314 = vst [vmem:[%s174 + $0x228] sm:$0xff] %v313
                %v315 = vld [vmem:[%s173 + $0x8c0] sm:$0xff]
                %316 = vst [vmem:[%s174 + $0x230] sm:$0xff] %v315
                %v317 = vld [vmem:[%s173 + $0x8c8] sm:$0xff]
                %318 = vst [vmem:[%s174 + $0x238] sm:$0xff] %v317
                %v319 = vld [vmem:[%s173 + $0x900] sm:$0xff]
                %320 = vst [vmem:[%s174 + $0x240] sm:$0xff] %v319
                %v321 = vld [vmem:[%s173 + $0x908] sm:$0xff]
                %322 = vst [vmem:[%s174 + $0x248] sm:$0xff] %v321
                %v323 = vld [vmem:[%s173 + $0x940] sm:$0xff]
                %324 = vst [vmem:[%s174 + $0x250] sm:$0xff] %v323
                %v325 = vld [vmem:[%s173 + $0x948] sm:$0xff]
                %326 = vst [vmem:[%s174 + $0x258] sm:$0xff] %v325
                %v327 = vld [vmem:[%s173 + $0x980] sm:$0xff]
                %328 = vst [vmem:[%s174 + $0x260] sm:$0xff] %v327
                %v329 = vld [vmem:[%s173 + $0x988] sm:$0xff]
                %330 = vst [vmem:[%s174 + $0x268] sm:$0xff] %v329
                %v331 = vld [vmem:[%s173 + $0x9c0] sm:$0xff]
                %332 = vst [vmem:[%s174 + $0x270] sm:$0xff] %v331
                %v333 = vld [vmem:[%s173 + $0x9c8] sm:$0xff]
                %334 = vst [vmem:[%s174 + $0x278] sm:$0xff] %v333
                %v335 = vld [vmem:[%s173 + $0xa00] sm:$0xff]
                %336 = vst [vmem:[%s174 + $0x280] sm:$0xff] %v335
                %v337 = vld [vmem:[%s173 + $0xa08] sm:$0xff]
                %338 = vst [vmem:[%s174 + $0x288] sm:$0xff] %v337
                %v339 = vld [vmem:[%s173 + $0xa40] sm:$0xff]
                %340 = vst [vmem:[%s174 + $0x290] sm:$0xff] %v339
                %v341 = vld [vmem:[%s173 + $0xa48] sm:$0xff]
                %342 = vst [vmem:[%s174 + $0x298] sm:$0xff] %v341
                %v343 = vld [vmem:[%s173 + $0xa80] sm:$0xff]
                %344 = vst [vmem:[%s174 + $0x2a0] sm:$0xff] %v343
                %v345 = vld [vmem:[%s173 + $0xa88] sm:$0xff]
                %346 = vst [vmem:[%s174 + $0x2a8] sm:$0xff] %v345
                %v347 = vld [vmem:[%s173 + $0xac0] sm:$0xff]
                %348 = vst [vmem:[%s174 + $0x2b0] sm:$0xff] %v347
                %v349 = vld [vmem:[%s173 + $0xac8] sm:$0xff]
                %350 = vst [vmem:[%s174 + $0x2b8] sm:$0xff] %v349
                %v351 = vld [vmem:[%s173 + $0xb00] sm:$0xff]
                %352 = vst [vmem:[%s174 + $0x2c0] sm:$0xff] %v351
                %v353 = vld [vmem:[%s173 + $0xb08] sm:$0xff]
                %354 = vst [vmem:[%s174 + $0x2c8] sm:$0xff] %v353
                %v355 = vld [vmem:[%s173 + $0xb40] sm:$0xff]
                %356 = vst [vmem:[%s174 + $0x2d0] sm:$0xff] %v355
                %v357 = vld [vmem:[%s173 + $0xb48] sm:$0xff]
                %358 = vst [vmem:[%s174 + $0x2d8] sm:$0xff] %v357
                %v359 = vld [vmem:[%s173 + $0xb80] sm:$0xff]
                %360 = vst [vmem:[%s174 + $0x2e0] sm:$0xff] %v359
                %v361 = vld [vmem:[%s173 + $0xb88] sm:$0xff]
                %362 = vst [vmem:[%s174 + $0x2e8] sm:$0xff] %v361
                %v363 = vld [vmem:[%s173 + $0xbc0] sm:$0xff]
                %364 = vst [vmem:[%s174 + $0x2f0] sm:$0xff] %v363
                %v365 = vld [vmem:[%s173 + $0xbc8] sm:$0xff]
                %366 = vst [vmem:[%s174 + $0x2f8] sm:$0xff] %v365
                %v367 = vld [vmem:[%s173 + $0xc00] sm:$0xff]
                %368 = vst [vmem:[%s174 + $0x300] sm:$0xff] %v367
                %v369 = vld [vmem:[%s173 + $0xc08] sm:$0xff]
                %370 = vst [vmem:[%s174 + $0x308] sm:$0xff] %v369
                %v371 = vld [vmem:[%s173 + $0xc40] sm:$0xff]
                %372 = vst [vmem:[%s174 + $0x310] sm:$0xff] %v371
                %v373 = vld [vmem:[%s173 + $0xc48] sm:$0xff]
                %374 = vst [vmem:[%s174 + $0x318] sm:$0xff] %v373
                %v375 = vld [vmem:[%s173 + $0xc80] sm:$0xff]
                %376 = vst [vmem:[%s174 + $0x320] sm:$0xff] %v375
                %v377 = vld [vmem:[%s173 + $0xc88] sm:$0xff]
                %378 = vst [vmem:[%s174 + $0x328] sm:$0xff] %v377
                %v379 = vld [vmem:[%s173 + $0xcc0] sm:$0xff]
                %380 = vst [vmem:[%s174 + $0x330] sm:$0xff] %v379
                %v381 = vld [vmem:[%s173 + $0xcc8] sm:$0xff]
                %382 = vst [vmem:[%s174 + $0x338] sm:$0xff] %v381
                %v383 = vld [vmem:[%s173 + $0xd00] sm:$0xff]
                %384 = vst [vmem:[%s174 + $0x340] sm:$0xff] %v383
                %v385 = vld [vmem:[%s173 + $0xd08] sm:$0xff]
                %386 = vst [vmem:[%s174 + $0x348] sm:$0xff] %v385
                %v387 = vld [vmem:[%s173 + $0xd40] sm:$0xff]
                %388 = vst [vmem:[%s174 + $0x350] sm:$0xff] %v387
                %v389 = vld [vmem:[%s173 + $0xd48] sm:$0xff]
                %390 = vst [vmem:[%s174 + $0x358] sm:$0xff] %v389
                %v391 = vld [vmem:[%s173 + $0xd80] sm:$0xff]
                %392 = vst [vmem:[%s174 + $0x360] sm:$0xff] %v391
                %v393 = vld [vmem:[%s173 + $0xd88] sm:$0xff]
                %394 = vst [vmem:[%s174 + $0x368] sm:$0xff] %v393
                %v395 = vld [vmem:[%s173 + $0xdc0] sm:$0xff]
                %396 = vst [vmem:[%s174 + $0x370] sm:$0xff] %v395
                %v397 = vld [vmem:[%s173 + $0xdc8] sm:$0xff]
                %398 = vst [vmem:[%s174 + $0x378] sm:$0xff] %v397
                %v399 = vld [vmem:[%s173 + $0xe00] sm:$0xff]
                %400 = vst [vmem:[%s174 + $0x380] sm:$0xff] %v399
                %v401 = vld [vmem:[%s173 + $0xe08] sm:$0xff]
                %402 = vst [vmem:[%s174 + $0x388] sm:$0xff] %v401
                %v403 = vld [vmem:[%s173 + $0xe40] sm:$0xff]
                %404 = vst [vmem:[%s174 + $0x390] sm:$0xff] %v403
                %v405 = vld [vmem:[%s173 + $0xe48] sm:$0xff]
                %406 = vst [vmem:[%s174 + $0x398] sm:$0xff] %v405
                %v407 = vld [vmem:[%s173 + $0xe80] sm:$0xff]
                %408 = vst [vmem:[%s174 + $0x3a0] sm:$0xff] %v407
                %v409 = vld [vmem:[%s173 + $0xe88] sm:$0xff]
                %410 = vst [vmem:[%s174 + $0x3a8] sm:$0xff] %v409
                %v411 = vld [vmem:[%s173 + $0xec0] sm:$0xff]
                %412 = vst [vmem:[%s174 + $0x3b0] sm:$0xff] %v411
                %v413 = vld [vmem:[%s173 + $0xec8] sm:$0xff]
                %414 = vst [vmem:[%s174 + $0x3b8] sm:$0xff] %v413
                %v415 = vld [vmem:[%s173 + $0xf00] sm:$0xff]
                %416 = vst [vmem:[%s174 + $0x3c0] sm:$0xff] %v415
                %v417 = vld [vmem:[%s173 + $0xf08] sm:$0xff]
                %418 = vst [vmem:[%s174 + $0x3c8] sm:$0xff] %v417
                %v419 = vld [vmem:[%s173 + $0xf40] sm:$0xff]
                %420 = vst [vmem:[%s174 + $0x3d0] sm:$0xff] %v419
                %v421 = vld [vmem:[%s173 + $0xf48] sm:$0xff]
                %422 = vst [vmem:[%s174 + $0x3d8] sm:$0xff] %v421
                %v423 = vld [vmem:[%s173 + $0xf80] sm:$0xff]
                %424 = vst [vmem:[%s174 + $0x3e0] sm:$0xff] %v423
                %v425 = vld [vmem:[%s173 + $0xf88] sm:$0xff]
                %426 = vst [vmem:[%s174 + $0x3e8] sm:$0xff] %v425
                %v427 = vld [vmem:[%s173 + $0xfc0] sm:$0xff]
                %428 = vst [vmem:[%s174 + $0x3f0] sm:$0xff] %v427
                %v429 = vld [vmem:[%s173 + $0xfc8] sm:$0xff]
                %430 = vst [vmem:[%s174 + $0x3f8] sm:$0xff] %v429
                %v431 = vld [vmem:[%s173 + $0x1000] sm:$0xff]
                %432 = vst [vmem:[%s174 + $0x400] sm:$0xff] %v431
                %v433 = vld [vmem:[%s173 + $0x1008] sm:$0xff]
                %434 = vst [vmem:[%s174 + $0x408] sm:$0xff] %v433
                %v435 = vld [vmem:[%s173 + $0x1040] sm:$0xff]
                %436 = vst [vmem:[%s174 + $0x410] sm:$0xff] %v435
                %v437 = vld [vmem:[%s173 + $0x1048] sm:$0xff]
                %438 = vst [vmem:[%s174 + $0x418] sm:$0xff] %v437
                %v439 = vld [vmem:[%s173 + $0x1080] sm:$0xff]
                %440 = vst [vmem:[%s174 + $0x420] sm:$0xff] %v439
                %v441 = vld [vmem:[%s173 + $0x1088] sm:$0xff]
                %442 = vst [vmem:[%s174 + $0x428] sm:$0xff] %v441
                %v443 = vld [vmem:[%s173 + $0x10c0] sm:$0xff]
                %444 = vst [vmem:[%s174 + $0x430] sm:$0xff] %v443
                %v445 = vld [vmem:[%s173 + $0x10c8] sm:$0xff]
                %446 = vst [vmem:[%s174 + $0x438] sm:$0xff] %v445
                %v447 = vld [vmem:[%s173 + $0x1100] sm:$0xff]
                %448 = vst [vmem:[%s174 + $0x440] sm:$0xff] %v447
                %v449 = vld [vmem:[%s173 + $0x1108] sm:$0xff]
                %450 = vst [vmem:[%s174 + $0x448] sm:$0xff] %v449
                %v451 = vld [vmem:[%s173 + $0x1140] sm:$0xff]
                %452 = vst [vmem:[%s174 + $0x450] sm:$0xff] %v451
                %v453 = vld [vmem:[%s173 + $0x1148] sm:$0xff]
                %454 = vst [vmem:[%s174 + $0x458] sm:$0xff] %v453
                %v455 = vld [vmem:[%s173 + $0x1180] sm:$0xff]
                %456 = vst [vmem:[%s174 + $0x460] sm:$0xff] %v455
                %v457 = vld [vmem:[%s173 + $0x1188] sm:$0xff]
                %458 = vst [vmem:[%s174 + $0x468] sm:$0xff] %v457
                %v459 = vld [vmem:[%s173 + $0x11c0] sm:$0xff]
                %460 = vst [vmem:[%s174 + $0x470] sm:$0xff] %v459
                %v461 = vld [vmem:[%s173 + $0x11c8] sm:$0xff]
                %462 = vst [vmem:[%s174 + $0x478] sm:$0xff] %v461
                %v463 = vld [vmem:[%s173 + $0x1200] sm:$0xff]
                %464 = vst [vmem:[%s174 + $0x480] sm:$0xff] %v463
                %v465 = vld [vmem:[%s173 + $0x1208] sm:$0xff]
                %466 = vst [vmem:[%s174 + $0x488] sm:$0xff] %v465
                %v467 = vld [vmem:[%s173 + $0x1240] sm:$0xff]
                %468 = vst [vmem:[%s174 + $0x490] sm:$0xff] %v467
                %v469 = vld [vmem:[%s173 + $0x1248] sm:$0xff]
                %470 = vst [vmem:[%s174 + $0x498] sm:$0xff] %v469
                %v471 = vld [vmem:[%s173 + $0x1280] sm:$0xff]
                %472 = vst [vmem:[%s174 + $0x4a0] sm:$0xff] %v471
                %v473 = vld [vmem:[%s173 + $0x1288] sm:$0xff]
                %474 = vst [vmem:[%s174 + $0x4a8] sm:$0xff] %v473
                %v475 = vld [vmem:[%s173 + $0x12c0] sm:$0xff]
                %476 = vst [vmem:[%s174 + $0x4b0] sm:$0xff] %v475
                %v477 = vld [vmem:[%s173 + $0x12c8] sm:$0xff]
                %478 = vst [vmem:[%s174 + $0x4b8] sm:$0xff] %v477
                %v479 = vld [vmem:[%s173 + $0x1300] sm:$0xff]
                %480 = vst [vmem:[%s174 + $0x4c0] sm:$0xff] %v479
                %v481 = vld [vmem:[%s173 + $0x1308] sm:$0xff]
                %482 = vst [vmem:[%s174 + $0x4c8] sm:$0xff] %v481
                %v483 = vld [vmem:[%s173 + $0x1340] sm:$0xff]
                %484 = vst [vmem:[%s174 + $0x4d0] sm:$0xff] %v483
                %v485 = vld [vmem:[%s173 + $0x1348] sm:$0xff]
                %486 = vst [vmem:[%s174 + $0x4d8] sm:$0xff] %v485
                %v487 = vld [vmem:[%s173 + $0x1380] sm:$0xff]
                %488 = vst [vmem:[%s174 + $0x4e0] sm:$0xff] %v487
                %v489 = vld [vmem:[%s173 + $0x1388] sm:$0xff]
                %490 = vst [vmem:[%s174 + $0x4e8] sm:$0xff] %v489
                %v491 = vld [vmem:[%s173 + $0x13c0] sm:$0xff]
                %492 = vst [vmem:[%s174 + $0x4f0] sm:$0xff] %v491
                %v493 = vld [vmem:[%s173 + $0x13c8] sm:$0xff]
                %494 = vst [vmem:[%s174 + $0x4f8] sm:$0xff] %v493
              $region45: #{resvesselnet_pallas.5} parent=39 // loop_footer
                %s172 = sadd.s32 1, %s168
              $region46: #{resvesselnet_pallas.5} parent=39 // loop_footer_branch
                %167 = sbr.rel target = $region42
              $region47: #{resvesselnet_pallas.5} parent=39 // loop_exit
                _
            $region40: #{resvesselnet_pallas.5} parent=35 // pred_fallthru
              _
            // Predicated region
            $region48: #{resvesselnet_pallas.5} parent=35 // pred_check
              _
            $region49: #{resvesselnet_pallas.5} parent=35 // pred_check_branch
              %496 = sbr.rel target = $region51
            $region50: #{resvesselnet_pallas.5} parent=35 // pred_region
              _
            $region51: #{resvesselnet_pallas.5} parent=35 // pred_fallthru
              _
          $region36: #{resvesselnet_pallas.5} parent=31 // pred_fallthru
            _
          %497 = vnop
        $region32: #{resvesselnet_pallas.5} parent=27 // pred_fallthru
          _
      $region28: #{resvesselnet_pallas.5} parent=5 // pred_fallthru
        _
      %p498 = scmp.le.s32.totalorder 1, %s10
      %p499 = scmp.lt.s32.totalorder %s10, 5
      %p500 = pnand %p498, %p499
      %p501 = pneg %p500
      // Predicated region
      $region52: #{resvesselnet_pallas.5} parent=5 // pred_check
        _
      $region53: #{resvesselnet_pallas.5} parent=5 // pred_check_branch
        %503 = sbr.rel (%p500) target = $region55
      $region54: #{resvesselnet_pallas.5} parent=5 // pred_region
        %s504 = ssub.s32 %s10, 1
        %s505 = sand.u32 %s23, 1
        %s506 = sand.u32 %s23, 1
        %s507 = smul.addr %s506, 1280
        %s508 = scalar_lea.vmem [#allocation2], %s507
        // Predicated region
        $region56: #{resvesselnet_pallas.5} parent=54 // pred_check
          %p509 = pneg %p36
        $region57: #{resvesselnet_pallas.5} parent=54 // pred_check_branch
          %511 = sbr.rel (%p509) target = $region59
        $region58: #{resvesselnet_pallas.5} parent=54 // pred_region
          _
        $region59: #{resvesselnet_pallas.5} parent=54 // pred_fallthru
          _
        %s512 = sand.u32 %s23, 1
        %s513 = sand.u32 %s23, 1
        %s514 = smul.addr %s513, 1280
        %s515 = scalar_lea.vmem [#allocation2], %s514
        %p516 = pneg %p36
        %p517 = pneg %p33
        %p518 = pneg %p57
        %p519 = pneg %p54
        %p520 = pneg %p78
        %p521 = pneg %p75
        %p522 = pneg %p99
        %p523 = pneg %p96
        %p524 = pneg %p125
        %p525 = pneg %p122
        %s526 = sand.u32 %s112, 1
        %s527 = sand.u32 %s112, 1
        %s528 = smul.addr %s527, 32
        %s529 = scalar_lea.vmem [#allocation3], %s528
        %s530 = smul.u32 4, %s15
        %s531 = smul.u32 4, %s15
        %v533 = vld [vmem:[%s3] sm:$0xf]
        %v534 = vld [vmem:[%s3 + $0x4] sm:$0xf]
        %v535 = vld [vmem:[%s508] sm:$0x77]
        %v536 = vld [vmem:[%s508 + $0x8] sm:$0x77]
        %v539 = vunpack.c.l.b16 %v533
        %v540 = vunpack.c.l.b16 %v534
        %v541 = vpack.c.b16 %v540, %v539
        %v544 = vunpack.c.l.b16 %v535
        %v545 = vunpack.c.h.b16 %v535
        %v546 = vunpack.c.l.b16 %v536
        %v547 = vunpack.c.h.b16 %v536
        %v548 = vpack.c.b16 %v544, %v544
        %v549 = vpack.c.b16 %v545, %v545
        %v550 = vpack.c.b16 %v546, %v546
        %v551 = vpack.c.b16 %v547, %v547
        %vm552 = vcmask 39936
        %v554 = vsel %vm552, %v541, 0
        %vm556 = vcmask 1041408
        %vm557 = vcmask 1042432
        %v558 = vsel %vm556, 4294967295, 65535
        %v559 = vsel %vm557, %v558, 0
        %v561 = vand.u32 %v548, %v559
        %v564 = vand.u32 %v549, %v559
        %v567 = vand.u32 %v550, %v559
        %v570 = vand.u32 %v551, %v559
        %572 = vmatpush.bf16.msra.mxu0 0
        %573 = vmatpush.bf16.msra.mxu0 0
        %574 = vmatpush.bf16.msra.mxu0 0
        %575 = vmatpush.bf16.msra.mxu0 0
        %576 = vmatpush.bf16.msra.mxu0 0
        %577 = vmatpush.bf16.msra.mxu0 0
        %578 = vmatpush.bf16.msra.mxu0 0
        %579 = vmatpush.bf16.msra.mxu0 %v561
        %580 = vmatmul.bf16.gmra.mxu0 %v554
        %v581 = vpop.f32.mrf.mxu0
        %v582 = vadd.f32 0.0, %v581
        %v583 = vpop.f32.mrf.mxu0
        %v584 = vadd.f32 0.0, %v583
        %585 = vdwg.mxu0
        %586 = vmatpush.bf16.msra.mxu0 0
        %587 = vmatpush.bf16.msra.mxu0 0
        %588 = vmatpush.bf16.msra.mxu0 0
        %589 = vmatpush.bf16.msra.mxu0 0
        %590 = vmatpush.bf16.msra.mxu0 0
        %591 = vmatpush.bf16.msra.mxu0 0
        %592 = vmatpush.bf16.msra.mxu0 0
        %593 = vmatpush.bf16.msra.mxu0 %v564
        %594 = vmatmul.bf16.gmra.mxu0 %v554
        %v595 = vpop.f32.mrf.mxu0
        %v596 = vadd.f32 0.0, %v595
        %v597 = vpop.f32.mrf.mxu0
        %v598 = vadd.f32 0.0, %v597
        %599 = vdwg.mxu0
        %600 = vmatpush.bf16.msra.mxu0 0
        %601 = vmatpush.bf16.msra.mxu0 0
        %602 = vmatpush.bf16.msra.mxu0 0
        %603 = vmatpush.bf16.msra.mxu0 0
        %604 = vmatpush.bf16.msra.mxu0 0
        %605 = vmatpush.bf16.msra.mxu0 0
        %606 = vmatpush.bf16.msra.mxu0 0
        %607 = vmatpush.bf16.msra.mxu0 %v567
        %608 = vmatmul.bf16.gmra.mxu0 %v554
        %v609 = vpop.f32.mrf.mxu0
        %v610 = vadd.f32 0.0, %v609
        %v611 = vpop.f32.mrf.mxu0
        %v612 = vadd.f32 0.0, %v611
        %613 = vdwg.mxu0
        %614 = vmatpush.bf16.msra.mxu0 0
        %615 = vmatpush.bf16.msra.mxu0 0
        %616 = vmatpush.bf16.msra.mxu0 0
        %617 = vmatpush.bf16.msra.mxu0 0
        %618 = vmatpush.bf16.msra.mxu0 0
        %619 = vmatpush.bf16.msra.mxu0 0
        %620 = vmatpush.bf16.msra.mxu0 0
        %621 = vmatpush.bf16.msra.mxu0 %v570
        %622 = vmatmul.bf16.gmra.mxu0 %v554
        %v623 = vpop.f32.mrf.mxu0
        %v624 = vadd.f32 0.0, %v623
        %v625 = vpop.f32.mrf.mxu0
        %v626 = vadd.f32 0.0, %v625
        %627 = vdwg.mxu0
        %v628 = vld [vmem:[%s1] sm:$0xff]
        %v629 = vld [vmem:[%s1 + $0x8] sm:$0xff]
        %v630 = vld [vmem:[%s1 + $0x10] sm:$0xf]
        %v631 = vld [vmem:[%s1 + $0x14] sm:$0xff]
        %v632 = vld [vmem:[%s1 + $0x1c] sm:$0xff]
        %v633 = vld [vmem:[%s1 + $0x24] sm:$0xf]
        %v634 = vld [vmem:[%s508] sm:$0xff]
        %v635 = vld [vmem:[%s508 + $0x8] sm:$0xff]
        %v636 = vld [vmem:[%s508 + $0x10] sm:$0xff]
        %v637 = vld [vmem:[%s508 + $0x18] sm:$0xff]
        %v638 = vld [vmem:[%s508 + $0x20] sm:$0xff]
        %v639 = vld [vmem:[%s508 + $0x28] sm:$0xff]
        %v640 = vld [vmem:[%s508 + $0x30] sm:$0xff]
        %v641 = vld [vmem:[%s508 + $0x38] sm:$0xff]
        %v642 = vld [vmem:[%s508 + $0x40] sm:$0xff]
        %v643 = vld [vmem:[%s508 + $0x48] sm:$0xff]
        %v644 = vld [vmem:[%s508 + $0x50] sm:$0xff]
        %v645 = vld [vmem:[%s508 + $0x58] sm:$0xff]
        %v646 = vld [vmem:[%s508 + $0x60] sm:$0xff]
        %v647 = vld [vmem:[%s508 + $0x68] sm:$0xff]
        %v648 = vld [vmem:[%s508 + $0x70] sm:$0xff]
        %v649 = vld [vmem:[%s508 + $0x78] sm:$0xff]
        %v650 = vld [vmem:[%s508 + $0x80] sm:$0xff]
        %v651 = vld [vmem:[%s508 + $0x88] sm:$0xff]
        %v652 = vld [vmem:[%s508 + $0x90] sm:$0xff]
        %v653 = vld [vmem:[%s508 + $0x98] sm:$0xff]
        %v654 = vld [vmem:[%s508 + $0xa0] sm:$0xff]
        %v655 = vld [vmem:[%s508 + $0xa8] sm:$0xff]
        %v656 = vld [vmem:[%s508 + $0xb0] sm:$0xff]
        %v657 = vld [vmem:[%s508 + $0xb8] sm:$0xff]
        %v658 = vld [vmem:[%s508 + $0xc0] sm:$0xff]
        %v659 = vld [vmem:[%s508 + $0xc8] sm:$0xff]
        %v660 = vld [vmem:[%s508 + $0xd0] sm:$0xff]
        %v661 = vld [vmem:[%s508 + $0xd8] sm:$0xff]
        %v662 = vld [vmem:[%s508 + $0xe0] sm:$0xff]
        %v663 = vld [vmem:[%s508 + $0xe8] sm:$0xff]
        %v664 = vld [vmem:[%s508 + $0xf0] sm:$0xff]
        %v665 = vld [vmem:[%s508 + $0xf8] sm:$0xff]
        %v666 = vld [vmem:[%s508 + $0x100] sm:$0xff]
        %v667 = vld [vmem:[%s508 + $0x108] sm:$0xff]
        %v668 = vld [vmem:[%s508 + $0x110] sm:$0xff]
        %v669 = vld [vmem:[%s508 + $0x118] sm:$0xff]
        %v670 = vld [vmem:[%s508 + $0x120] sm:$0xff]
        %v671 = vld [vmem:[%s508 + $0x128] sm:$0xff]
        %v672 = vld [vmem:[%s508 + $0x130] sm:$0xff]
        %v673 = vld [vmem:[%s508 + $0x138] sm:$0xff]
        %v674 = vld [vmem:[%s508 + $0x140] sm:$0xff]
        %v675 = vld [vmem:[%s508 + $0x148] sm:$0xff]
        %v676 = vld [vmem:[%s508 + $0x150] sm:$0xff]
        %v677 = vld [vmem:[%s508 + $0x158] sm:$0xff]
        %v678 = vld [vmem:[%s508 + $0x160] sm:$0xff]
        %v679 = vld [vmem:[%s508 + $0x168] sm:$0xff]
        %v680 = vld [vmem:[%s508 + $0x170] sm:$0xff]
        %v681 = vld [vmem:[%s508 + $0x178] sm:$0xff]
        %v682 = vld [vmem:[%s508 + $0x180] sm:$0xff]
        %v683 = vld [vmem:[%s508 + $0x188] sm:$0xff]
        %v684 = vld [vmem:[%s508 + $0x190] sm:$0xff]
        %v685 = vld [vmem:[%s508 + $0x198] sm:$0xff]
        %v686 = vld [vmem:[%s508 + $0x1a0] sm:$0xff]
        %v687 = vld [vmem:[%s508 + $0x1a8] sm:$0xff]
        %v688 = vld [vmem:[%s508 + $0x1b0] sm:$0xff]
        %v689 = vld [vmem:[%s508 + $0x1b8] sm:$0xff]
        %v690 = vld [vmem:[%s508 + $0x1c0] sm:$0xff]
        %v691 = vld [vmem:[%s508 + $0x1c8] sm:$0xff]
        %v692 = vld [vmem:[%s508 + $0x1d0] sm:$0xff]
        %v693 = vld [vmem:[%s508 + $0x1d8] sm:$0xff]
        %v694 = vld [vmem:[%s508 + $0x1e0] sm:$0xff]
        %v695 = vld [vmem:[%s508 + $0x1e8] sm:$0xff]
        %v696 = vld [vmem:[%s508 + $0x1f0] sm:$0xff]
        %v697 = vld [vmem:[%s508 + $0x1f8] sm:$0xff]
        %v698 = vld [vmem:[%s508 + $0x200] sm:$0xff]
        %v699 = vld [vmem:[%s508 + $0x208] sm:$0xff]
        %v700 = vld [vmem:[%s508 + $0x210] sm:$0xff]
        %v701 = vld [vmem:[%s508 + $0x218] sm:$0xff]
        %v702 = vld [vmem:[%s508 + $0x220] sm:$0xff]
        %v703 = vld [vmem:[%s508 + $0x228] sm:$0xff]
        %v704 = vld [vmem:[%s508 + $0x230] sm:$0xff]
        %v705 = vld [vmem:[%s508 + $0x238] sm:$0xff]
        %v706 = vld [vmem:[%s508 + $0x240] sm:$0xff]
        %v707 = vld [vmem:[%s508 + $0x248] sm:$0xff]
        %v708 = vld [vmem:[%s508 + $0x250] sm:$0xff]
        %v709 = vld [vmem:[%s508 + $0x258] sm:$0xff]
        %v710 = vld [vmem:[%s508 + $0x260] sm:$0xff]
        %v711 = vld [vmem:[%s508 + $0x268] sm:$0xff]
        %v712 = vld [vmem:[%s508 + $0x270] sm:$0xff]
        %v713 = vld [vmem:[%s508 + $0x278] sm:$0xff]
        %v714 = vld [vmem:[%s508 + $0x280] sm:$0xff]
        %v715 = vld [vmem:[%s508 + $0x288] sm:$0xff]
        %v716 = vld [vmem:[%s508 + $0x290] sm:$0xff]
        %v717 = vld [vmem:[%s508 + $0x298] sm:$0xff]
        %v718 = vld [vmem:[%s508 + $0x2a0] sm:$0xff]
        %v719 = vld [vmem:[%s508 + $0x2a8] sm:$0xff]
        %v720 = vld [vmem:[%s508 + $0x2b0] sm:$0xff]
        %v721 = vld [vmem:[%s508 + $0x2b8] sm:$0xff]
        %v722 = vld [vmem:[%s508 + $0x2c0] sm:$0xff]
        %v723 = vld [vmem:[%s508 + $0x2c8] sm:$0xff]
        %v724 = vld [vmem:[%s508 + $0x2d0] sm:$0xff]
        %v725 = vld [vmem:[%s508 + $0x2d8] sm:$0xff]
        %v726 = vld [vmem:[%s508 + $0x2e0] sm:$0xff]
        %v727 = vld [vmem:[%s508 + $0x2e8] sm:$0xff]
        %v728 = vld [vmem:[%s508 + $0x2f0] sm:$0xff]
        %v729 = vld [vmem:[%s508 + $0x2f8] sm:$0xff]
        %v730 = vld [vmem:[%s508 + $0x300] sm:$0xff]
        %v731 = vld [vmem:[%s508 + $0x308] sm:$0xff]
        %v732 = vld [vmem:[%s508 + $0x310] sm:$0xff]
        %v733 = vld [vmem:[%s508 + $0x318] sm:$0xff]
        %v734 = vld [vmem:[%s508 + $0x320] sm:$0xff]
        %v735 = vld [vmem:[%s508 + $0x328] sm:$0xff]
        %v736 = vld [vmem:[%s508 + $0x330] sm:$0xff]
        %v737 = vld [vmem:[%s508 + $0x338] sm:$0xff]
        %v738 = vld [vmem:[%s508 + $0x340] sm:$0xff]
        %v739 = vld [vmem:[%s508 + $0x348] sm:$0xff]
        %v740 = vld [vmem:[%s508 + $0x350] sm:$0xff]
        %v741 = vld [vmem:[%s508 + $0x358] sm:$0xff]
        %v742 = vld [vmem:[%s508 + $0x360] sm:$0xff]
        %v743 = vld [vmem:[%s508 + $0x368] sm:$0xff]
        %v744 = vld [vmem:[%s508 + $0x370] sm:$0xff]
        %v745 = vld [vmem:[%s508 + $0x378] sm:$0xff]
        %v746 = vld [vmem:[%s508 + $0x380] sm:$0xff]
        %v747 = vld [vmem:[%s508 + $0x388] sm:$0xff]
        %v748 = vld [vmem:[%s508 + $0x390] sm:$0xff]
        %v749 = vld [vmem:[%s508 + $0x398] sm:$0xff]
        %v750 = vld [vmem:[%s508 + $0x3a0] sm:$0xff]
        %v751 = vld [vmem:[%s508 + $0x3a8] sm:$0xff]
        %v752 = vld [vmem:[%s508 + $0x3b0] sm:$0xff]
        %v753 = vld [vmem:[%s508 + $0x3b8] sm:$0xff]
        %v754 = vld [vmem:[%s508 + $0x3c0] sm:$0xff]
        %v755 = vld [vmem:[%s508 + $0x3c8] sm:$0xff]
        %v756 = vld [vmem:[%s508 + $0x3d0] sm:$0xff]
        %v757 = vld [vmem:[%s508 + $0x3d8] sm:$0xff]
        %v758 = vld [vmem:[%s508 + $0x3e0] sm:$0xff]
        %v759 = vld [vmem:[%s508 + $0x3e8] sm:$0xff]
        %v760 = vld [vmem:[%s508 + $0x3f0] sm:$0xff]
        %v761 = vld [vmem:[%s508 + $0x3f8] sm:$0xff]
        %v762 = vld [vmem:[%s508 + $0x400] sm:$0xff]
        %v763 = vld [vmem:[%s508 + $0x408] sm:$0xff]
        %v764 = vld [vmem:[%s508 + $0x410] sm:$0xff]
        %v765 = vld [vmem:[%s508 + $0x418] sm:$0xff]
        %v766 = vld [vmem:[%s508 + $0x420] sm:$0xff]
        %v767 = vld [vmem:[%s508 + $0x428] sm:$0xff]
        %v768 = vld [vmem:[%s508 + $0x430] sm:$0xff]
        %v769 = vld [vmem:[%s508 + $0x438] sm:$0xff]
        %v770 = vld [vmem:[%s508 + $0x440] sm:$0xff]
        %v771 = vld [vmem:[%s508 + $0x448] sm:$0xff]
        %v772 = vld [vmem:[%s508 + $0x450] sm:$0xff]
        %v773 = vld [vmem:[%s508 + $0x458] sm:$0xff]
        %v774 = vld [vmem:[%s508 + $0x460] sm:$0xff]
        %v775 = vld [vmem:[%s508 + $0x468] sm:$0xff]
        %v776 = vld [vmem:[%s508 + $0x470] sm:$0xff]
        %v777 = vld [vmem:[%s508 + $0x478] sm:$0xff]
        %v778 = vld [vmem:[%s508 + $0x480] sm:$0xff]
        %v779 = vld [vmem:[%s508 + $0x488] sm:$0xff]
        %v780 = vld [vmem:[%s508 + $0x490] sm:$0xff]
        %v781 = vld [vmem:[%s508 + $0x498] sm:$0xff]
        %v782 = vld [vmem:[%s508 + $0x4a0] sm:$0xff]
        %v783 = vld [vmem:[%s508 + $0x4a8] sm:$0xff]
        %v784 = vld [vmem:[%s508 + $0x4b0] sm:$0xff]
        %v785 = vld [vmem:[%s508 + $0x4b8] sm:$0xff]
        %v786 = vld [vmem:[%s508 + $0x4c0] sm:$0xff]
        %v787 = vld [vmem:[%s508 + $0x4c8] sm:$0xff]
        %v788 = vld [vmem:[%s508 + $0x4d0] sm:$0xff]
        %v789 = vld [vmem:[%s508 + $0x4d8] sm:$0xff]
        %v790 = vld [vmem:[%s508 + $0x4e0] sm:$0xff]
        %v791 = vld [vmem:[%s508 + $0x4e8] sm:$0xff]
        %v792 = vld [vmem:[%s508 + $0x4f0] sm:$0xff]
        %v793 = vld [vmem:[%s508 + $0x4f8] sm:$0xff]
        %v794 = vunpack.c.l.bf16 %v634
        %v795 = vunpack.c.h.bf16 %v634
        %v796 = vunpack.c.l.bf16 %v635
        %v797 = vunpack.c.h.bf16 %v635
        %v798 = vunpack.c.l.bf16 %v636
        %v799 = vunpack.c.h.bf16 %v636
        %v800 = vunpack.c.l.bf16 %v637
        %v801 = vunpack.c.h.bf16 %v637
        %v802 = vunpack.c.l.bf16 %v638
        %v803 = vunpack.c.h.bf16 %v638
        %v804 = vunpack.c.l.bf16 %v639
        %v805 = vunpack.c.h.bf16 %v639
        %v806 = vunpack.c.l.bf16 %v640
        %v807 = vunpack.c.h.bf16 %v640
        %v808 = vunpack.c.l.bf16 %v641
        %v809 = vunpack.c.h.bf16 %v641
        %v810 = vunpack.c.l.bf16 %v642
        %v811 = vunpack.c.h.bf16 %v642
        %v812 = vunpack.c.l.bf16 %v643
        %v813 = vunpack.c.h.bf16 %v643
        %v814 = vunpack.c.l.bf16 %v644
        %v815 = vunpack.c.h.bf16 %v644
        %v816 = vunpack.c.l.bf16 %v645
        %v817 = vunpack.c.h.bf16 %v645
        %v818 = vunpack.c.l.bf16 %v646
        %v819 = vunpack.c.h.bf16 %v646
        %v820 = vunpack.c.l.bf16 %v647
        %v821 = vunpack.c.h.bf16 %v647
        %v822 = vunpack.c.l.bf16 %v648
        %v823 = vunpack.c.h.bf16 %v648
        %v824 = vunpack.c.l.bf16 %v649
        %v825 = vunpack.c.h.bf16 %v649
        %v826 = vunpack.c.l.bf16 %v650
        %v827 = vunpack.c.h.bf16 %v650
        %v828 = vunpack.c.l.bf16 %v651
        %v829 = vunpack.c.h.bf16 %v651
        %v830 = vunpack.c.l.bf16 %v652
        %v831 = vunpack.c.h.bf16 %v652
        %v832 = vunpack.c.l.bf16 %v653
        %v833 = vunpack.c.h.bf16 %v653
        %v834 = vunpack.c.l.bf16 %v654
        %v835 = vunpack.c.h.bf16 %v654
        %v836 = vunpack.c.l.bf16 %v655
        %v837 = vunpack.c.h.bf16 %v655
        %v838 = vunpack.c.l.bf16 %v656
        %v839 = vunpack.c.h.bf16 %v656
        %v840 = vunpack.c.l.bf16 %v657
        %v841 = vunpack.c.h.bf16 %v657
        %v842 = vunpack.c.l.bf16 %v658
        %v843 = vunpack.c.h.bf16 %v658
        %v844 = vunpack.c.l.bf16 %v659
        %v845 = vunpack.c.h.bf16 %v659
        %v846 = vunpack.c.l.bf16 %v660
        %v847 = vunpack.c.h.bf16 %v660
        %v848 = vunpack.c.l.bf16 %v661
        %v849 = vunpack.c.h.bf16 %v661
        %v850 = vunpack.c.l.bf16 %v662
        %v851 = vunpack.c.h.bf16 %v662
        %v852 = vunpack.c.l.bf16 %v663
        %v853 = vunpack.c.h.bf16 %v663
        %v854 = vunpack.c.l.bf16 %v664
        %v855 = vunpack.c.h.bf16 %v664
        %v856 = vunpack.c.l.bf16 %v665
        %v857 = vunpack.c.h.bf16 %v665
        %v858 = vunpack.c.l.bf16 %v666
        %v859 = vunpack.c.h.bf16 %v666
        %v860 = vunpack.c.l.bf16 %v667
        %v861 = vunpack.c.h.bf16 %v667
        %v862 = vunpack.c.l.bf16 %v668
        %v863 = vunpack.c.h.bf16 %v668
        %v864 = vunpack.c.l.bf16 %v669
        %v865 = vunpack.c.h.bf16 %v669
        %v866 = vunpack.c.l.bf16 %v670
        %v867 = vunpack.c.h.bf16 %v670
        %v868 = vunpack.c.l.bf16 %v671
        %v869 = vunpack.c.h.bf16 %v671
        %v870 = vunpack.c.l.bf16 %v672
        %v871 = vunpack.c.h.bf16 %v672
        %v872 = vunpack.c.l.bf16 %v673
        %v873 = vunpack.c.h.bf16 %v673
        %v874 = vunpack.c.l.bf16 %v674
        %v875 = vunpack.c.h.bf16 %v674
        %v876 = vunpack.c.l.bf16 %v675
        %v877 = vunpack.c.h.bf16 %v675
        %v878 = vunpack.c.l.bf16 %v676
        %v879 = vunpack.c.h.bf16 %v676
        %v880 = vunpack.c.l.bf16 %v677
        %v881 = vunpack.c.h.bf16 %v677
        %v882 = vunpack.c.l.bf16 %v678
        %v883 = vunpack.c.h.bf16 %v678
        %v884 = vunpack.c.l.bf16 %v679
        %v885 = vunpack.c.h.bf16 %v679
        %v886 = vunpack.c.l.bf16 %v680
        %v887 = vunpack.c.h.bf16 %v680
        %v888 = vunpack.c.l.bf16 %v681
        %v889 = vunpack.c.h.bf16 %v681
        %v890 = vunpack.c.l.bf16 %v682
        %v891 = vunpack.c.h.bf16 %v682
        %v892 = vunpack.c.l.bf16 %v683
        %v893 = vunpack.c.h.bf16 %v683
        %v894 = vunpack.c.l.bf16 %v684
        %v895 = vunpack.c.h.bf16 %v684
        %v896 = vunpack.c.l.bf16 %v685
        %v897 = vunpack.c.h.bf16 %v685
        %v898 = vunpack.c.l.bf16 %v686
        %v899 = vunpack.c.h.bf16 %v686
        %v900 = vunpack.c.l.bf16 %v687
        %v901 = vunpack.c.h.bf16 %v687
        %v902 = vunpack.c.l.bf16 %v688
        %v903 = vunpack.c.h.bf16 %v688
        %v904 = vunpack.c.l.bf16 %v689
        %v905 = vunpack.c.h.bf16 %v689
        %v906 = vunpack.c.l.bf16 %v690
        %v907 = vunpack.c.h.bf16 %v690
        %v908 = vunpack.c.l.bf16 %v691
        %v909 = vunpack.c.h.bf16 %v691
        %v910 = vunpack.c.l.bf16 %v692
        %v911 = vunpack.c.h.bf16 %v692
        %v912 = vunpack.c.l.bf16 %v693
        %v913 = vunpack.c.h.bf16 %v693
        %v914 = vunpack.c.l.bf16 %v694
        %v915 = vunpack.c.h.bf16 %v694
        %v916 = vunpack.c.l.bf16 %v695
        %v917 = vunpack.c.h.bf16 %v695
        %v918 = vunpack.c.l.bf16 %v696
        %v919 = vunpack.c.h.bf16 %v696
        %v920 = vunpack.c.l.bf16 %v697
        %v921 = vunpack.c.h.bf16 %v697
        %v922 = vunpack.c.l.bf16 %v698
        %v923 = vunpack.c.h.bf16 %v698
        %v924 = vunpack.c.l.bf16 %v699
        %v925 = vunpack.c.h.bf16 %v699
        %v926 = vunpack.c.l.bf16 %v700
        %v927 = vunpack.c.h.bf16 %v700
        %v928 = vunpack.c.l.bf16 %v701
        %v929 = vunpack.c.h.bf16 %v701
        %v930 = vunpack.c.l.bf16 %v702
        %v931 = vunpack.c.h.bf16 %v702
        %v932 = vunpack.c.l.bf16 %v703
        %v933 = vunpack.c.h.bf16 %v703
        %v934 = vunpack.c.l.bf16 %v704
        %v935 = vunpack.c.h.bf16 %v704
        %v936 = vunpack.c.l.bf16 %v705
        %v937 = vunpack.c.h.bf16 %v705
        %v938 = vunpack.c.l.bf16 %v706
        %v939 = vunpack.c.h.bf16 %v706
        %v940 = vunpack.c.l.bf16 %v707
        %v941 = vunpack.c.h.bf16 %v707
        %v942 = vunpack.c.l.bf16 %v708
        %v943 = vunpack.c.h.bf16 %v708
        %v944 = vunpack.c.l.bf16 %v709
        %v945 = vunpack.c.h.bf16 %v709
        %v946 = vunpack.c.l.bf16 %v710
        %v947 = vunpack.c.h.bf16 %v710
        %v948 = vunpack.c.l.bf16 %v711
        %v949 = vunpack.c.h.bf16 %v711
        %v950 = vunpack.c.l.bf16 %v712
        %v951 = vunpack.c.h.bf16 %v712
        %v952 = vunpack.c.l.bf16 %v713
        %v953 = vunpack.c.h.bf16 %v713
        %v954 = vunpack.c.l.bf16 %v714
        %v955 = vunpack.c.h.bf16 %v714
        %v956 = vunpack.c.l.bf16 %v715
        %v957 = vunpack.c.h.bf16 %v715
        %v958 = vunpack.c.l.bf16 %v716
        %v959 = vunpack.c.h.bf16 %v716
        %v960 = vunpack.c.l.bf16 %v717
        %v961 = vunpack.c.h.bf16 %v717
        %v962 = vunpack.c.l.bf16 %v718
        %v963 = vunpack.c.h.bf16 %v718
        %v964 = vunpack.c.l.bf16 %v719
        %v965 = vunpack.c.h.bf16 %v719
        %v966 = vunpack.c.l.bf16 %v720
        %v967 = vunpack.c.h.bf16 %v720
        %v968 = vunpack.c.l.bf16 %v721
        %v969 = vunpack.c.h.bf16 %v721
        %v970 = vunpack.c.l.bf16 %v722
        %v971 = vunpack.c.h.bf16 %v722
        %v972 = vunpack.c.l.bf16 %v723
        %v973 = vunpack.c.h.bf16 %v723
        %v974 = vunpack.c.l.bf16 %v724
        %v975 = vunpack.c.h.bf16 %v724
        %v976 = vunpack.c.l.bf16 %v725
        %v977 = vunpack.c.h.bf16 %v725
        %v978 = vunpack.c.l.bf16 %v726
        %v979 = vunpack.c.h.bf16 %v726
        %v980 = vunpack.c.l.bf16 %v727
        %v981 = vunpack.c.h.bf16 %v727
        %v982 = vunpack.c.l.bf16 %v728
        %v983 = vunpack.c.h.bf16 %v728
        %v984 = vunpack.c.l.bf16 %v729
        %v985 = vunpack.c.h.bf16 %v729
        %v986 = vunpack.c.l.bf16 %v730
        %v987 = vunpack.c.h.bf16 %v730
        %v988 = vunpack.c.l.bf16 %v731
        %v989 = vunpack.c.h.bf16 %v731
        %v990 = vunpack.c.l.bf16 %v732
        %v991 = vunpack.c.h.bf16 %v732
        %v992 = vunpack.c.l.bf16 %v733
        %v993 = vunpack.c.h.bf16 %v733
        %v994 = vunpack.c.l.bf16 %v734
        %v995 = vunpack.c.h.bf16 %v734
        %v996 = vunpack.c.l.bf16 %v735
        %v997 = vunpack.c.h.bf16 %v735
        %v998 = vunpack.c.l.bf16 %v736
        %v999 = vunpack.c.h.bf16 %v736
        %v1000 = vunpack.c.l.bf16 %v737
        %v1001 = vunpack.c.h.bf16 %v737
        %v1002 = vunpack.c.l.bf16 %v738
        %v1003 = vunpack.c.h.bf16 %v738
        %v1004 = vunpack.c.l.bf16 %v739
        %v1005 = vunpack.c.h.bf16 %v739
        %v1006 = vunpack.c.l.bf16 %v740
        %v1007 = vunpack.c.h.bf16 %v740
        %v1008 = vunpack.c.l.bf16 %v741
        %v1009 = vunpack.c.h.bf16 %v741
        %v1010 = vunpack.c.l.bf16 %v742
        %v1011 = vunpack.c.h.bf16 %v742
        %v1012 = vunpack.c.l.bf16 %v743
        %v1013 = vunpack.c.h.bf16 %v743
        %v1014 = vunpack.c.l.bf16 %v744
        %v1015 = vunpack.c.h.bf16 %v744
        %v1016 = vunpack.c.l.bf16 %v745
        %v1017 = vunpack.c.h.bf16 %v745
        %v1018 = vunpack.c.l.bf16 %v746
        %v1019 = vunpack.c.h.bf16 %v746
        %v1020 = vunpack.c.l.bf16 %v747
        %v1021 = vunpack.c.h.bf16 %v747
        %v1022 = vunpack.c.l.bf16 %v748
        %v1023 = vunpack.c.h.bf16 %v748
        %v1024 = vunpack.c.l.bf16 %v749
        %v1025 = vunpack.c.h.bf16 %v749
        %v1026 = vunpack.c.l.bf16 %v750
        %v1027 = vunpack.c.h.bf16 %v750
        %v1028 = vunpack.c.l.bf16 %v751
        %v1029 = vunpack.c.h.bf16 %v751
        %v1030 = vunpack.c.l.bf16 %v752
        %v1031 = vunpack.c.h.bf16 %v752
        %v1032 = vunpack.c.l.bf16 %v753
        %v1033 = vunpack.c.h.bf16 %v753
        %v1034 = vunpack.c.l.bf16 %v754
        %v1035 = vunpack.c.h.bf16 %v754
        %v1036 = vunpack.c.l.bf16 %v755
        %v1037 = vunpack.c.h.bf16 %v755
        %v1038 = vunpack.c.l.bf16 %v756
        %v1039 = vunpack.c.h.bf16 %v756
        %v1040 = vunpack.c.l.bf16 %v757
        %v1041 = vunpack.c.h.bf16 %v757
        %v1042 = vunpack.c.l.bf16 %v758
        %v1043 = vunpack.c.h.bf16 %v758
        %v1044 = vunpack.c.l.bf16 %v759
        %v1045 = vunpack.c.h.bf16 %v759
        %v1046 = vunpack.c.l.bf16 %v760
        %v1047 = vunpack.c.h.bf16 %v760
        %v1048 = vunpack.c.l.bf16 %v761
        %v1049 = vunpack.c.h.bf16 %v761
        %v1050 = vunpack.c.l.bf16 %v762
        %v1051 = vunpack.c.h.bf16 %v762
        %v1052 = vunpack.c.l.bf16 %v763
        %v1053 = vunpack.c.h.bf16 %v763
        %v1054 = vunpack.c.l.bf16 %v764
        %v1055 = vunpack.c.h.bf16 %v764
        %v1056 = vunpack.c.l.bf16 %v765
        %v1057 = vunpack.c.h.bf16 %v765
        %v1058 = vunpack.c.l.bf16 %v766
        %v1059 = vunpack.c.h.bf16 %v766
        %v1060 = vunpack.c.l.bf16 %v767
        %v1061 = vunpack.c.h.bf16 %v767
        %v1062 = vunpack.c.l.bf16 %v768
        %v1063 = vunpack.c.h.bf16 %v768
        %v1064 = vunpack.c.l.bf16 %v769
        %v1065 = vunpack.c.h.bf16 %v769
        %v1066 = vunpack.c.l.bf16 %v770
        %v1067 = vunpack.c.h.bf16 %v770
        %v1068 = vunpack.c.l.bf16 %v771
        %v1069 = vunpack.c.h.bf16 %v771
        %v1070 = vunpack.c.l.bf16 %v772
        %v1071 = vunpack.c.h.bf16 %v772
        %v1072 = vunpack.c.l.bf16 %v773
        %v1073 = vunpack.c.h.bf16 %v773
        %v1074 = vunpack.c.l.bf16 %v774
        %v1075 = vunpack.c.h.bf16 %v774
        %v1076 = vunpack.c.l.bf16 %v775
        %v1077 = vunpack.c.h.bf16 %v775
        %v1078 = vunpack.c.l.bf16 %v776
        %v1079 = vunpack.c.h.bf16 %v776
        %v1080 = vunpack.c.l.bf16 %v777
        %v1081 = vunpack.c.h.bf16 %v777
        %v1082 = vunpack.c.l.bf16 %v778
        %v1083 = vunpack.c.h.bf16 %v778
        %v1084 = vunpack.c.l.bf16 %v779
        %v1085 = vunpack.c.h.bf16 %v779
        %v1086 = vunpack.c.l.bf16 %v780
        %v1087 = vunpack.c.h.bf16 %v780
        %v1088 = vunpack.c.l.bf16 %v781
        %v1089 = vunpack.c.h.bf16 %v781
        %v1090 = vunpack.c.l.bf16 %v782
        %v1091 = vunpack.c.h.bf16 %v782
        %v1092 = vunpack.c.l.bf16 %v783
        %v1093 = vunpack.c.h.bf16 %v783
        %v1094 = vunpack.c.l.bf16 %v784
        %v1095 = vunpack.c.h.bf16 %v784
        %v1096 = vunpack.c.l.bf16 %v785
        %v1097 = vunpack.c.h.bf16 %v785
        %v1098 = vunpack.c.l.bf16 %v786
        %v1099 = vunpack.c.h.bf16 %v786
        %v1100 = vunpack.c.l.bf16 %v787
        %v1101 = vunpack.c.h.bf16 %v787
        %v1102 = vunpack.c.l.bf16 %v788
        %v1103 = vunpack.c.h.bf16 %v788
        %v1104 = vunpack.c.l.bf16 %v789
        %v1105 = vunpack.c.h.bf16 %v789
        %v1106 = vunpack.c.l.bf16 %v790
        %v1107 = vunpack.c.h.bf16 %v790
        %v1108 = vunpack.c.l.bf16 %v791
        %v1109 = vunpack.c.h.bf16 %v791
        %v1110 = vunpack.c.l.bf16 %v792
        %v1111 = vunpack.c.h.bf16 %v792
        %v1112 = vunpack.c.l.bf16 %v793
        %v1113 = vunpack.c.h.bf16 %v793
        %v1114 = vmax.f32 %v794, 0.0
        %v1115 = vmax.f32 %v795, 0.0
        %v1116 = vmax.f32 %v796, 0.0
        %v1117 = vmax.f32 %v797, 0.0
        %v1118 = vmax.f32 %v798, 0.0
        %v1119 = vmax.f32 %v799, 0.0
        %v1120 = vmax.f32 %v800, 0.0
        %v1121 = vmax.f32 %v801, 0.0
        %v1122 = vmax.f32 %v802, 0.0
        %v1123 = vmax.f32 %v803, 0.0
        %v1124 = vmax.f32 %v804, 0.0
        %v1125 = vmax.f32 %v805, 0.0
        %v1126 = vmax.f32 %v806, 0.0
        %v1127 = vmax.f32 %v807, 0.0
        %v1128 = vmax.f32 %v808, 0.0
        %v1129 = vmax.f32 %v809, 0.0
        %v1130 = vmax.f32 %v810, 0.0
        %v1131 = vmax.f32 %v811, 0.0
        %v1132 = vmax.f32 %v812, 0.0
        %v1133 = vmax.f32 %v813, 0.0
        %v1134 = vmax.f32 %v814, 0.0
        %v1135 = vmax.f32 %v815, 0.0
        %v1136 = vmax.f32 %v816, 0.0
        %v1137 = vmax.f32 %v817, 0.0
        %v1138 = vmax.f32 %v818, 0.0
        %v1139 = vmax.f32 %v819, 0.0
        %v1140 = vmax.f32 %v820, 0.0
        %v1141 = vmax.f32 %v821, 0.0
        %v1142 = vmax.f32 %v822, 0.0
        %v1143 = vmax.f32 %v823, 0.0
        %v1144 = vmax.f32 %v824, 0.0
        %v1145 = vmax.f32 %v825, 0.0
        %v1146 = vmax.f32 %v826, 0.0
        %v1147 = vmax.f32 %v827, 0.0
        %v1148 = vmax.f32 %v828, 0.0
        %v1149 = vmax.f32 %v829, 0.0
        %v1150 = vmax.f32 %v830, 0.0
        %v1151 = vmax.f32 %v831, 0.0
        %v1152 = vmax.f32 %v832, 0.0
        %v1153 = vmax.f32 %v833, 0.0
        %v1154 = vmax.f32 %v834, 0.0
        %v1155 = vmax.f32 %v835, 0.0
        %v1156 = vmax.f32 %v836, 0.0
        %v1157 = vmax.f32 %v837, 0.0
        %v1158 = vmax.f32 %v838, 0.0
        %v1159 = vmax.f32 %v839, 0.0
        %v1160 = vmax.f32 %v840, 0.0
        %v1161 = vmax.f32 %v841, 0.0
        %v1162 = vmax.f32 %v842, 0.0
        %v1163 = vmax.f32 %v843, 0.0
        %v1164 = vmax.f32 %v844, 0.0
        %v1165 = vmax.f32 %v845, 0.0
        %v1166 = vmax.f32 %v846, 0.0
        %v1167 = vmax.f32 %v847, 0.0
        %v1168 = vmax.f32 %v848, 0.0
        %v1169 = vmax.f32 %v849, 0.0
        %v1170 = vmax.f32 %v850, 0.0
        %v1171 = vmax.f32 %v851, 0.0
        %v1172 = vmax.f32 %v852, 0.0
        %v1173 = vmax.f32 %v853, 0.0
        %v1174 = vmax.f32 %v854, 0.0
        %v1175 = vmax.f32 %v855, 0.0
        %v1176 = vmax.f32 %v856, 0.0
        %v1177 = vmax.f32 %v857, 0.0
        %v1178 = vmax.f32 %v858, 0.0
        %v1179 = vmax.f32 %v859, 0.0
        %v1180 = vmax.f32 %v860, 0.0
        %v1181 = vmax.f32 %v861, 0.0
        %v1182 = vmax.f32 %v862, 0.0
        %v1183 = vmax.f32 %v863, 0.0
        %v1184 = vmax.f32 %v864, 0.0
        %v1185 = vmax.f32 %v865, 0.0
        %v1186 = vmax.f32 %v866, 0.0
        %v1187 = vmax.f32 %v867, 0.0
        %v1188 = vmax.f32 %v868, 0.0
        %v1189 = vmax.f32 %v869, 0.0
        %v1190 = vmax.f32 %v870, 0.0
        %v1191 = vmax.f32 %v871, 0.0
        %v1192 = vmax.f32 %v872, 0.0
        %v1193 = vmax.f32 %v873, 0.0
        %v1194 = vmax.f32 %v874, 0.0
        %v1195 = vmax.f32 %v875, 0.0
        %v1196 = vmax.f32 %v876, 0.0
        %v1197 = vmax.f32 %v877, 0.0
        %v1198 = vmax.f32 %v878, 0.0
        %v1199 = vmax.f32 %v879, 0.0
        %v1200 = vmax.f32 %v880, 0.0
        %v1201 = vmax.f32 %v881, 0.0
        %v1202 = vmax.f32 %v882, 0.0
        %v1203 = vmax.f32 %v883, 0.0
        %v1204 = vmax.f32 %v884, 0.0
        %v1205 = vmax.f32 %v885, 0.0
        %v1206 = vmax.f32 %v886, 0.0
        %v1207 = vmax.f32 %v887, 0.0
        %v1208 = vmax.f32 %v888, 0.0
        %v1209 = vmax.f32 %v889, 0.0
        %v1210 = vmax.f32 %v890, 0.0
        %v1211 = vmax.f32 %v891, 0.0
        %v1212 = vmax.f32 %v892, 0.0
        %v1213 = vmax.f32 %v893, 0.0
        %v1214 = vmax.f32 %v894, 0.0
        %v1215 = vmax.f32 %v895, 0.0
        %v1216 = vmax.f32 %v896, 0.0
        %v1217 = vmax.f32 %v897, 0.0
        %v1218 = vmax.f32 %v898, 0.0
        %v1219 = vmax.f32 %v899, 0.0
        %v1220 = vmax.f32 %v900, 0.0
        %v1221 = vmax.f32 %v901, 0.0
        %v1222 = vmax.f32 %v902, 0.0
        %v1223 = vmax.f32 %v903, 0.0
        %v1224 = vmax.f32 %v904, 0.0
        %v1225 = vmax.f32 %v905, 0.0
        %v1226 = vmax.f32 %v906, 0.0
        %v1227 = vmax.f32 %v907, 0.0
        %v1228 = vmax.f32 %v908, 0.0
        %v1229 = vmax.f32 %v909, 0.0
        %v1230 = vmax.f32 %v910, 0.0
        %v1231 = vmax.f32 %v911, 0.0
        %v1232 = vmax.f32 %v912, 0.0
        %v1233 = vmax.f32 %v913, 0.0
        %v1234 = vmax.f32 %v914, 0.0
        %v1235 = vmax.f32 %v915, 0.0
        %v1236 = vmax.f32 %v916, 0.0
        %v1237 = vmax.f32 %v917, 0.0
        %v1238 = vmax.f32 %v918, 0.0
        %v1239 = vmax.f32 %v919, 0.0
        %v1240 = vmax.f32 %v920, 0.0
        %v1241 = vmax.f32 %v921, 0.0
        %v1242 = vmax.f32 %v922, 0.0
        %v1243 = vmax.f32 %v923, 0.0
        %v1244 = vmax.f32 %v924, 0.0
        %v1245 = vmax.f32 %v925, 0.0
        %v1246 = vmax.f32 %v926, 0.0
        %v1247 = vmax.f32 %v927, 0.0
        %v1248 = vmax.f32 %v928, 0.0
        %v1249 = vmax.f32 %v929, 0.0
        %v1250 = vmax.f32 %v930, 0.0
        %v1251 = vmax.f32 %v931, 0.0
        %v1252 = vmax.f32 %v932, 0.0
        %v1253 = vmax.f32 %v933, 0.0
        %v1254 = vmax.f32 %v934, 0.0
        %v1255 = vmax.f32 %v935, 0.0
        %v1256 = vmax.f32 %v936, 0.0
        %v1257 = vmax.f32 %v937, 0.0
        %v1258 = vmax.f32 %v938, 0.0
        %v1259 = vmax.f32 %v939, 0.0
        %v1260 = vmax.f32 %v940, 0.0
        %v1261 = vmax.f32 %v941, 0.0
        %v1262 = vmax.f32 %v942, 0.0
        %v1263 = vmax.f32 %v943, 0.0
        %v1264 = vmax.f32 %v944, 0.0
        %v1265 = vmax.f32 %v945, 0.0
        %v1266 = vmax.f32 %v946, 0.0
        %v1267 = vmax.f32 %v947, 0.0
        %v1268 = vmax.f32 %v948, 0.0
        %v1269 = vmax.f32 %v949, 0.0
        %v1270 = vmax.f32 %v950, 0.0
        %v1271 = vmax.f32 %v951, 0.0
        %v1272 = vmax.f32 %v952, 0.0
        %v1273 = vmax.f32 %v953, 0.0
        %v1274 = vmax.f32 %v954, 0.0
        %v1275 = vmax.f32 %v955, 0.0
        %v1276 = vmax.f32 %v956, 0.0
        %v1277 = vmax.f32 %v957, 0.0
        %v1278 = vmax.f32 %v958, 0.0
        %v1279 = vmax.f32 %v959, 0.0
        %v1280 = vmax.f32 %v960, 0.0
        %v1281 = vmax.f32 %v961, 0.0
        %v1282 = vmax.f32 %v962, 0.0
        %v1283 = vmax.f32 %v963, 0.0
        %v1284 = vmax.f32 %v964, 0.0
        %v1285 = vmax.f32 %v965, 0.0
        %v1286 = vmax.f32 %v966, 0.0
        %v1287 = vmax.f32 %v967, 0.0
        %v1288 = vmax.f32 %v968, 0.0
        %v1289 = vmax.f32 %v969, 0.0
        %v1290 = vmax.f32 %v970, 0.0
        %v1291 = vmax.f32 %v971, 0.0
        %v1292 = vmax.f32 %v972, 0.0
        %v1293 = vmax.f32 %v973, 0.0
        %v1294 = vmax.f32 %v974, 0.0
        %v1295 = vmax.f32 %v975, 0.0
        %v1296 = vmax.f32 %v976, 0.0
        %v1297 = vmax.f32 %v977, 0.0
        %v1298 = vmax.f32 %v978, 0.0
        %v1299 = vmax.f32 %v979, 0.0
        %v1300 = vmax.f32 %v980, 0.0
        %v1301 = vmax.f32 %v981, 0.0
        %v1302 = vmax.f32 %v982, 0.0
        %v1303 = vmax.f32 %v983, 0.0
        %v1304 = vmax.f32 %v984, 0.0
        %v1305 = vmax.f32 %v985, 0.0
        %v1306 = vmax.f32 %v986, 0.0
        %v1307 = vmax.f32 %v987, 0.0
        %v1308 = vmax.f32 %v988, 0.0
        %v1309 = vmax.f32 %v989, 0.0
        %v1310 = vmax.f32 %v990, 0.0
        %v1311 = vmax.f32 %v991, 0.0
        %v1312 = vmax.f32 %v992, 0.0
        %v1313 = vmax.f32 %v993, 0.0
        %v1314 = vmax.f32 %v994, 0.0
        %v1315 = vmax.f32 %v995, 0.0
        %v1316 = vmax.f32 %v996, 0.0
        %v1317 = vmax.f32 %v997, 0.0
        %v1318 = vmax.f32 %v998, 0.0
        %v1319 = vmax.f32 %v999, 0.0
        %v1320 = vmax.f32 %v1000, 0.0
        %v1321 = vmax.f32 %v1001, 0.0
        %v1322 = vmax.f32 %v1002, 0.0
        %v1323 = vmax.f32 %v1003, 0.0
        %v1324 = vmax.f32 %v1004, 0.0
        %v1325 = vmax.f32 %v1005, 0.0
        %v1326 = vmax.f32 %v1006, 0.0
        %v1327 = vmax.f32 %v1007, 0.0
        %v1328 = vmax.f32 %v1008, 0.0
        %v1329 = vmax.f32 %v1009, 0.0
        %v1330 = vmax.f32 %v1010, 0.0
        %v1331 = vmax.f32 %v1011, 0.0
        %v1332 = vmax.f32 %v1012, 0.0
        %v1333 = vmax.f32 %v1013, 0.0
        %v1334 = vmax.f32 %v1014, 0.0
        %v1335 = vmax.f32 %v1015, 0.0
        %v1336 = vmax.f32 %v1016, 0.0
        %v1337 = vmax.f32 %v1017, 0.0
        %v1338 = vmax.f32 %v1018, 0.0
        %v1339 = vmax.f32 %v1019, 0.0
        %v1340 = vmax.f32 %v1020, 0.0
        %v1341 = vmax.f32 %v1021, 0.0
        %v1342 = vmax.f32 %v1022, 0.0
        %v1343 = vmax.f32 %v1023, 0.0
        %v1344 = vmax.f32 %v1024, 0.0
        %v1345 = vmax.f32 %v1025, 0.0
        %v1346 = vmax.f32 %v1026, 0.0
        %v1347 = vmax.f32 %v1027, 0.0
        %v1348 = vmax.f32 %v1028, 0.0
        %v1349 = vmax.f32 %v1029, 0.0
        %v1350 = vmax.f32 %v1030, 0.0
        %v1351 = vmax.f32 %v1031, 0.0
        %v1352 = vmax.f32 %v1032, 0.0
        %v1353 = vmax.f32 %v1033, 0.0
        %v1354 = vmax.f32 %v1034, 0.0
        %v1355 = vmax.f32 %v1035, 0.0
        %v1356 = vmax.f32 %v1036, 0.0
        %v1357 = vmax.f32 %v1037, 0.0
        %v1358 = vmax.f32 %v1038, 0.0
        %v1359 = vmax.f32 %v1039, 0.0
        %v1360 = vmax.f32 %v1040, 0.0
        %v1361 = vmax.f32 %v1041, 0.0
        %v1362 = vmax.f32 %v1042, 0.0
        %v1363 = vmax.f32 %v1043, 0.0
        %v1364 = vmax.f32 %v1044, 0.0
        %v1365 = vmax.f32 %v1045, 0.0
        %v1366 = vmax.f32 %v1046, 0.0
        %v1367 = vmax.f32 %v1047, 0.0
        %v1368 = vmax.f32 %v1048, 0.0
        %v1369 = vmax.f32 %v1049, 0.0
        %v1370 = vmax.f32 %v1050, 0.0
        %v1371 = vmax.f32 %v1051, 0.0
        %v1372 = vmax.f32 %v1052, 0.0
        %v1373 = vmax.f32 %v1053, 0.0
        %v1374 = vmax.f32 %v1054, 0.0
        %v1375 = vmax.f32 %v1055, 0.0
        %v1376 = vmax.f32 %v1056, 0.0
        %v1377 = vmax.f32 %v1057, 0.0
        %v1378 = vmax.f32 %v1058, 0.0
        %v1379 = vmax.f32 %v1059, 0.0
        %v1380 = vmax.f32 %v1060, 0.0
        %v1381 = vmax.f32 %v1061, 0.0
        %v1382 = vmax.f32 %v1062, 0.0
        %v1383 = vmax.f32 %v1063, 0.0
        %v1384 = vmax.f32 %v1064, 0.0
        %v1385 = vmax.f32 %v1065, 0.0
        %v1386 = vmax.f32 %v1066, 0.0
        %v1387 = vmax.f32 %v1067, 0.0
        %v1388 = vmax.f32 %v1068, 0.0
        %v1389 = vmax.f32 %v1069, 0.0
        %v1390 = vmax.f32 %v1070, 0.0
        %v1391 = vmax.f32 %v1071, 0.0
        %v1392 = vmax.f32 %v1072, 0.0
        %v1393 = vmax.f32 %v1073, 0.0
        %v1394 = vmax.f32 %v1074, 0.0
        %v1395 = vmax.f32 %v1075, 0.0
        %v1396 = vmax.f32 %v1076, 0.0
        %v1397 = vmax.f32 %v1077, 0.0
        %v1398 = vmax.f32 %v1078, 0.0
        %v1399 = vmax.f32 %v1079, 0.0
        %v1400 = vmax.f32 %v1080, 0.0
        %v1401 = vmax.f32 %v1081, 0.0
        %v1402 = vmax.f32 %v1082, 0.0
        %v1403 = vmax.f32 %v1083, 0.0
        %v1404 = vmax.f32 %v1084, 0.0
        %v1405 = vmax.f32 %v1085, 0.0
        %v1406 = vmax.f32 %v1086, 0.0
        %v1407 = vmax.f32 %v1087, 0.0
        %v1408 = vmax.f32 %v1088, 0.0
        %v1409 = vmax.f32 %v1089, 0.0
        %v1410 = vmax.f32 %v1090, 0.0
        %v1411 = vmax.f32 %v1091, 0.0
        %v1412 = vmax.f32 %v1092, 0.0
        %v1413 = vmax.f32 %v1093, 0.0
        %v1414 = vmax.f32 %v1094, 0.0
        %v1415 = vmax.f32 %v1095, 0.0
        %v1416 = vmax.f32 %v1096, 0.0
        %v1417 = vmax.f32 %v1097, 0.0
        %v1418 = vmax.f32 %v1098, 0.0
        %v1419 = vmax.f32 %v1099, 0.0
        %v1420 = vmax.f32 %v1100, 0.0
        %v1421 = vmax.f32 %v1101, 0.0
        %v1422 = vmax.f32 %v1102, 0.0
        %v1423 = vmax.f32 %v1103, 0.0
        %v1424 = vmax.f32 %v1104, 0.0
        %v1425 = vmax.f32 %v1105, 0.0
        %v1426 = vmax.f32 %v1106, 0.0
        %v1427 = vmax.f32 %v1107, 0.0
        %v1428 = vmax.f32 %v1108, 0.0
        %v1429 = vmax.f32 %v1109, 0.0
        %v1430 = vmax.f32 %v1110, 0.0
        %v1431 = vmax.f32 %v1111, 0.0
        %v1432 = vmax.f32 %v1112, 0.0
        %v1433 = vmax.f32 %v1113, 0.0
        %v1434 = vpack.c.bf16 %v1118, %v1114
        %v1435 = vpack.c.bf16 %v1119, %v1115
        %v1436 = vpack.c.bf16 %v1120, %v1116
        %v1437 = vpack.c.bf16 %v1121, %v1117
        %v1438 = vpack.c.bf16 %v1126, %v1122
        %v1439 = vpack.c.bf16 %v1127, %v1123
        %v1440 = vpack.c.bf16 %v1128, %v1124
        %v1441 = vpack.c.bf16 %v1129, %v1125
        %v1442 = vpack.c.bf16 %v1134, %v1130
        %v1443 = vpack.c.bf16 %v1135, %v1131
        %v1444 = vpack.c.bf16 %v1136, %v1132
        %v1445 = vpack.c.bf16 %v1137, %v1133
        %v1446 = vpack.c.bf16 %v1142, %v1138
        %v1447 = vpack.c.bf16 %v1143, %v1139
        %v1448 = vpack.c.bf16 %v1144, %v1140
        %v1449 = vpack.c.bf16 %v1145, %v1141
        %v1450 = vpack.c.bf16 %v1150, %v1146
        %v1451 = vpack.c.bf16 %v1151, %v1147
        %v1452 = vpack.c.bf16 %v1152, %v1148
        %v1453 = vpack.c.bf16 %v1153, %v1149
        %v1454 = vpack.c.bf16 %v1158, %v1154
        %v1455 = vpack.c.bf16 %v1159, %v1155
        %v1456 = vpack.c.bf16 %v1160, %v1156
        %v1457 = vpack.c.bf16 %v1161, %v1157
        %v1458 = vpack.c.bf16 %v1166, %v1162
        %v1459 = vpack.c.bf16 %v1167, %v1163
        %v1460 = vpack.c.bf16 %v1168, %v1164
        %v1461 = vpack.c.bf16 %v1169, %v1165
        %v1462 = vpack.c.bf16 %v1174, %v1170
        %v1463 = vpack.c.bf16 %v1175, %v1171
        %v1464 = vpack.c.bf16 %v1176, %v1172
        %v1465 = vpack.c.bf16 %v1177, %v1173
        %v1466 = vpack.c.bf16 %v1182, %v1178
        %v1467 = vpack.c.bf16 %v1183, %v1179
        %v1468 = vpack.c.bf16 %v1184, %v1180
        %v1469 = vpack.c.bf16 %v1185, %v1181
        %v1470 = vpack.c.bf16 %v1190, %v1186
        %v1471 = vpack.c.bf16 %v1191, %v1187
        %v1472 = vpack.c.bf16 %v1192, %v1188
        %v1473 = vpack.c.bf16 %v1193, %v1189
        %v1474 = vpack.c.bf16 %v1198, %v1194
        %v1475 = vpack.c.bf16 %v1199, %v1195
        %v1476 = vpack.c.bf16 %v1200, %v1196
        %v1477 = vpack.c.bf16 %v1201, %v1197
        %v1478 = vpack.c.bf16 %v1206, %v1202
        %v1479 = vpack.c.bf16 %v1207, %v1203
        %v1480 = vpack.c.bf16 %v1208, %v1204
        %v1481 = vpack.c.bf16 %v1209, %v1205
        %v1482 = vpack.c.bf16 %v1214, %v1210
        %v1483 = vpack.c.bf16 %v1215, %v1211
        %v1484 = vpack.c.bf16 %v1216, %v1212
        %v1485 = vpack.c.bf16 %v1217, %v1213
        %v1486 = vpack.c.bf16 %v1222, %v1218
        %v1487 = vpack.c.bf16 %v1223, %v1219
        %v1488 = vpack.c.bf16 %v1224, %v1220
        %v1489 = vpack.c.bf16 %v1225, %v1221
        %v1490 = vpack.c.bf16 %v1230, %v1226
        %v1491 = vpack.c.bf16 %v1231, %v1227
        %v1492 = vpack.c.bf16 %v1232, %v1228
        %v1493 = vpack.c.bf16 %v1233, %v1229
        %v1494 = vpack.c.bf16 %v1238, %v1234
        %v1495 = vpack.c.bf16 %v1239, %v1235
        %v1496 = vpack.c.bf16 %v1240, %v1236
        %v1497 = vpack.c.bf16 %v1241, %v1237
        %v1498 = vpack.c.bf16 %v1246, %v1242
        %v1499 = vpack.c.bf16 %v1247, %v1243
        %v1500 = vpack.c.bf16 %v1248, %v1244
        %v1501 = vpack.c.bf16 %v1249, %v1245
        %v1502 = vpack.c.bf16 %v1254, %v1250
        %v1503 = vpack.c.bf16 %v1255, %v1251
        %v1504 = vpack.c.bf16 %v1256, %v1252
        %v1505 = vpack.c.bf16 %v1257, %v1253
        %v1506 = vpack.c.bf16 %v1262, %v1258
        %v1507 = vpack.c.bf16 %v1263, %v1259
        %v1508 = vpack.c.bf16 %v1264, %v1260
        %v1509 = vpack.c.bf16 %v1265, %v1261
        %v1510 = vpack.c.bf16 %v1270, %v1266
        %v1511 = vpack.c.bf16 %v1271, %v1267
        %v1512 = vpack.c.bf16 %v1272, %v1268
        %v1513 = vpack.c.bf16 %v1273, %v1269
        %v1514 = vpack.c.bf16 %v1278, %v1274
        %v1515 = vpack.c.bf16 %v1279, %v1275
        %v1516 = vpack.c.bf16 %v1280, %v1276
        %v1517 = vpack.c.bf16 %v1281, %v1277
        %v1518 = vpack.c.bf16 %v1286, %v1282
        %v1519 = vpack.c.bf16 %v1287, %v1283
        %v1520 = vpack.c.bf16 %v1288, %v1284
        %v1521 = vpack.c.bf16 %v1289, %v1285
        %v1522 = vpack.c.bf16 %v1294, %v1290
        %v1523 = vpack.c.bf16 %v1295, %v1291
        %v1524 = vpack.c.bf16 %v1296, %v1292
        %v1525 = vpack.c.bf16 %v1297, %v1293
        %v1526 = vpack.c.bf16 %v1302, %v1298
        %v1527 = vpack.c.bf16 %v1303, %v1299
        %v1528 = vpack.c.bf16 %v1304, %v1300
        %v1529 = vpack.c.bf16 %v1305, %v1301
        %v1530 = vpack.c.bf16 %v1310, %v1306
        %v1531 = vpack.c.bf16 %v1311, %v1307
        %v1532 = vpack.c.bf16 %v1312, %v1308
        %v1533 = vpack.c.bf16 %v1313, %v1309
        %v1534 = vpack.c.bf16 %v1318, %v1314
        %v1535 = vpack.c.bf16 %v1319, %v1315
        %v1536 = vpack.c.bf16 %v1320, %v1316
        %v1537 = vpack.c.bf16 %v1321, %v1317
        %v1538 = vpack.c.bf16 %v1326, %v1322
        %v1539 = vpack.c.bf16 %v1327, %v1323
        %v1540 = vpack.c.bf16 %v1328, %v1324
        %v1541 = vpack.c.bf16 %v1329, %v1325
        %v1542 = vpack.c.bf16 %v1334, %v1330
        %v1543 = vpack.c.bf16 %v1335, %v1331
        %v1544 = vpack.c.bf16 %v1336, %v1332
        %v1545 = vpack.c.bf16 %v1337, %v1333
        %v1546 = vpack.c.bf16 %v1342, %v1338
        %v1547 = vpack.c.bf16 %v1343, %v1339
        %v1548 = vpack.c.bf16 %v1344, %v1340
        %v1549 = vpack.c.bf16 %v1345, %v1341
        %v1550 = vpack.c.bf16 %v1350, %v1346
        %v1551 = vpack.c.bf16 %v1351, %v1347
        %v1552 = vpack.c.bf16 %v1352, %v1348
        %v1553 = vpack.c.bf16 %v1353, %v1349
        %v1554 = vpack.c.bf16 %v1358, %v1354
        %v1555 = vpack.c.bf16 %v1359, %v1355
        %v1556 = vpack.c.bf16 %v1360, %v1356
        %v1557 = vpack.c.bf16 %v1361, %v1357
        %v1558 = vpack.c.bf16 %v1366, %v1362
        %v1559 = vpack.c.bf16 %v1367, %v1363
        %v1560 = vpack.c.bf16 %v1368, %v1364
        %v1561 = vpack.c.bf16 %v1369, %v1365
        %v1562 = vpack.c.bf16 %v1374, %v1370
        %v1563 = vpack.c.bf16 %v1375, %v1371
        %v1564 = vpack.c.bf16 %v1376, %v1372
        %v1565 = vpack.c.bf16 %v1377, %v1373
        %v1566 = vpack.c.bf16 %v1382, %v1378
        %v1567 = vpack.c.bf16 %v1383, %v1379
        %v1568 = vpack.c.bf16 %v1384, %v1380
        %v1569 = vpack.c.bf16 %v1385, %v1381
        %v1570 = vpack.c.bf16 %v1390, %v1386
        %v1571 = vpack.c.bf16 %v1391, %v1387
        %v1572 = vpack.c.bf16 %v1392, %v1388
        %v1573 = vpack.c.bf16 %v1393, %v1389
        %v1574 = vpack.c.bf16 %v1398, %v1394
        %v1575 = vpack.c.bf16 %v1399, %v1395
        %v1576 = vpack.c.bf16 %v1400, %v1396
        %v1577 = vpack.c.bf16 %v1401, %v1397
        %v1578 = vpack.c.bf16 %v1406, %v1402
        %v1579 = vpack.c.bf16 %v1407, %v1403
        %v1580 = vpack.c.bf16 %v1408, %v1404
        %v1581 = vpack.c.bf16 %v1409, %v1405
        %v1582 = vpack.c.bf16 %v1414, %v1410
        %v1583 = vpack.c.bf16 %v1415, %v1411
        %v1584 = vpack.c.bf16 %v1416, %v1412
        %v1585 = vpack.c.bf16 %v1417, %v1413
        %v1586 = vpack.c.bf16 %v1422, %v1418
        %v1587 = vpack.c.bf16 %v1423, %v1419
        %v1588 = vpack.c.bf16 %v1424, %v1420
        %v1589 = vpack.c.bf16 %v1425, %v1421
        %v1590 = vpack.c.bf16 %v1430, %v1426
        %v1591 = vpack.c.bf16 %v1431, %v1427
        %v1592 = vpack.c.bf16 %v1432, %v1428
        %v1593 = vpack.c.bf16 %v1433, %v1429
        %v1594 = vld [vmem:[%s2] sm:$0xff]
        %v1595 = vld [vmem:[%s2 + $0x8] sm:$0xff]
        %1597 = vset.pattern.permute.xlu0 0
        %1598 = vperm.xlu0 %1597, %v1594
        %v1599 = vpop.permute.xlu0 %1598
        %1602 = vset.pattern.permute.xlu0 0
        %1603 = vperm.xlu0 %1602, %v1595
        %v1604 = vpop.permute.xlu0 %1603
        %v1612 = vunpack.c.l.b16 %v628
        %v1613 = vunpack.c.h.b16 %v628
        %v1614 = vunpack.c.l.b16 %v629
        %v1615 = vunpack.c.h.b16 %v629
        %v1616 = vunpack.c.l.b16 %v630
        %v1617 = vunpack.c.l.b16 %v631
        %v1618 = vunpack.c.h.b16 %v631
        %v1619 = vunpack.c.l.b16 %v632
        %v1620 = vunpack.c.h.b16 %v632
        %v1621 = vunpack.c.l.b16 %v633
        %v1622 = vpack.c.b16 %v1617, %v1612
        %v1623 = vpack.c.b16 %v1618, %v1613
        %v1624 = vpack.c.b16 %v1619, %v1614
        %v1625 = vpack.c.b16 %v1620, %v1615
        %v1626 = vpack.c.b16 %v1621, %v1616
        %1632 = vmatpush.bf16.msra.mxu0 %v1462
        %1633 = vmatpush.bf16.msra.mxu0 %v1458
        %1634 = vmatpush.bf16.msra.mxu0 %v1454
        %1635 = vmatpush.bf16.msra.mxu0 %v1450
        %1636 = vmatpush.bf16.msra.mxu0 %v1446
        %1637 = vmatpush.bf16.msra.mxu0 %v1442
        %1638 = vmatpush.bf16.msra.mxu0 %v1438
        %1639 = vmatpush.bf16.msra.mxu0 %v1434
        %1640 = vmatmul.bf16.gmra.mxu0 %v1622
        %v1641 = vpop.f32.mrf.mxu0
        %v1642 = vadd.f32 %v1599, %v1641
        %v1643 = vpop.f32.mrf.mxu0
        %v1644 = vadd.f32 %v1604, %v1643
        %1645 = vdwg.mxu0
        %1646 = vmatpush.bf16.msra.mxu0 %v1494
        %1647 = vmatpush.bf16.msra.mxu0 %v1490
        %1648 = vmatpush.bf16.msra.mxu0 %v1486
        %1649 = vmatpush.bf16.msra.mxu0 %v1482
        %1650 = vmatpush.bf16.msra.mxu0 %v1478
        %1651 = vmatpush.bf16.msra.mxu0 %v1474
        %1652 = vmatpush.bf16.msra.mxu0 %v1470
        %1653 = vmatpush.bf16.msra.mxu0 %v1466
        %1654 = vmatmul.bf16.gmra.mxu0 %v1623
        %v1655 = vpop.f32.mrf.mxu0
        %v1656 = vadd.f32 %v1642, %v1655
        %v1657 = vpop.f32.mrf.mxu0
        %v1658 = vadd.f32 %v1644, %v1657
        %1659 = vdwg.mxu0
        %1660 = vmatpush.bf16.msra.mxu0 %v1526
        %1661 = vmatpush.bf16.msra.mxu0 %v1522
        %1662 = vmatpush.bf16.msra.mxu0 %v1518
        %1663 = vmatpush.bf16.msra.mxu0 %v1514
        %1664 = vmatpush.bf16.msra.mxu0 %v1510
        %1665 = vmatpush.bf16.msra.mxu0 %v1506
        %1666 = vmatpush.bf16.msra.mxu0 %v1502
        %1667 = vmatpush.bf16.msra.mxu0 %v1498
        %1668 = vmatmul.bf16.gmra.mxu0 %v1624
        %v1669 = vpop.f32.mrf.mxu0
        %v1670 = vadd.f32 %v1656, %v1669
        %v1671 = vpop.f32.mrf.mxu0
        %v1672 = vadd.f32 %v1658, %v1671
        %1673 = vdwg.mxu0
        %1674 = vmatpush.bf16.msra.mxu0 %v1558
        %1675 = vmatpush.bf16.msra.mxu0 %v1554
        %1676 = vmatpush.bf16.msra.mxu0 %v1550
        %1677 = vmatpush.bf16.msra.mxu0 %v1546
        %1678 = vmatpush.bf16.msra.mxu0 %v1542
        %1679 = vmatpush.bf16.msra.mxu0 %v1538
        %1680 = vmatpush.bf16.msra.mxu0 %v1534
        %1681 = vmatpush.bf16.msra.mxu0 %v1530
        %1682 = vmatmul.bf16.gmra.mxu0 %v1625
        %v1683 = vpop.f32.mrf.mxu0
        %v1684 = vadd.f32 %v1670, %v1683
        %v1685 = vpop.f32.mrf.mxu0
        %v1686 = vadd.f32 %v1672, %v1685
        %1687 = vdwg.mxu0
        %1688 = vmatpush.bf16.msra.mxu0 %v1590
        %1689 = vmatpush.bf16.msra.mxu0 %v1586
        %1690 = vmatpush.bf16.msra.mxu0 %v1582
        %1691 = vmatpush.bf16.msra.mxu0 %v1578
        %1692 = vmatpush.bf16.msra.mxu0 %v1574
        %1693 = vmatpush.bf16.msra.mxu0 %v1570
        %1694 = vmatpush.bf16.msra.mxu0 %v1566
        %1695 = vmatpush.bf16.msra.mxu0 %v1562
        %1696 = vmatmul.bf16.gmra.mxu0 %v1626
        %v1697 = vpop.f32.mrf.mxu0
        %v1698 = vadd.f32 %v1684, %v1697
        %v1699 = vpop.f32.mrf.mxu0
        %v1700 = vadd.f32 %v1686, %v1699
        %1701 = vdwg.mxu0
        %1702 = vmatpush.bf16.msra.mxu0 %v1463
        %1703 = vmatpush.bf16.msra.mxu0 %v1459
        %1704 = vmatpush.bf16.msra.mxu0 %v1455
        %1705 = vmatpush.bf16.msra.mxu0 %v1451
        %1706 = vmatpush.bf16.msra.mxu0 %v1447
        %1707 = vmatpush.bf16.msra.mxu0 %v1443
        %1708 = vmatpush.bf16.msra.mxu0 %v1439
        %1709 = vmatpush.bf16.msra.mxu0 %v1435
        %1710 = vmatmul.bf16.gmra.mxu0 %v1622
        %v1711 = vpop.f32.mrf.mxu0
        %v1712 = vadd.f32 %v1599, %v1711
        %v1713 = vpop.f32.mrf.mxu0
        %v1714 = vadd.f32 %v1604, %v1713
        %1715 = vdwg.mxu0
        %1716 = vmatpush.bf16.msra.mxu0 %v1495
        %1717 = vmatpush.bf16.msra.mxu0 %v1491
        %1718 = vmatpush.bf16.msra.mxu0 %v1487
        %1719 = vmatpush.bf16.msra.mxu0 %v1483
        %1720 = vmatpush.bf16.msra.mxu0 %v1479
        %1721 = vmatpush.bf16.msra.mxu0 %v1475
        %1722 = vmatpush.bf16.msra.mxu0 %v1471
        %1723 = vmatpush.bf16.msra.mxu0 %v1467
        %1724 = vmatmul.bf16.gmra.mxu0 %v1623
        %v1725 = vpop.f32.mrf.mxu0
        %v1726 = vadd.f32 %v1712, %v1725
        %v1727 = vpop.f32.mrf.mxu0
        %v1728 = vadd.f32 %v1714, %v1727
        %1729 = vdwg.mxu0
        %1730 = vmatpush.bf16.msra.mxu0 %v1527
        %1731 = vmatpush.bf16.msra.mxu0 %v1523
        %1732 = vmatpush.bf16.msra.mxu0 %v1519
        %1733 = vmatpush.bf16.msra.mxu0 %v1515
        %1734 = vmatpush.bf16.msra.mxu0 %v1511
        %1735 = vmatpush.bf16.msra.mxu0 %v1507
        %1736 = vmatpush.bf16.msra.mxu0 %v1503
        %1737 = vmatpush.bf16.msra.mxu0 %v1499
        %1738 = vmatmul.bf16.gmra.mxu0 %v1624
        %v1739 = vpop.f32.mrf.mxu0
        %v1740 = vadd.f32 %v1726, %v1739
        %v1741 = vpop.f32.mrf.mxu0
        %v1742 = vadd.f32 %v1728, %v1741
        %1743 = vdwg.mxu0
        %1744 = vmatpush.bf16.msra.mxu0 %v1559
        %1745 = vmatpush.bf16.msra.mxu0 %v1555
        %1746 = vmatpush.bf16.msra.mxu0 %v1551
        %1747 = vmatpush.bf16.msra.mxu0 %v1547
        %1748 = vmatpush.bf16.msra.mxu0 %v1543
        %1749 = vmatpush.bf16.msra.mxu0 %v1539
        %1750 = vmatpush.bf16.msra.mxu0 %v1535
        %1751 = vmatpush.bf16.msra.mxu0 %v1531
        %1752 = vmatmul.bf16.gmra.mxu0 %v1625
        %v1753 = vpop.f32.mrf.mxu0
        %v1754 = vadd.f32 %v1740, %v1753
        %v1755 = vpop.f32.mrf.mxu0
        %v1756 = vadd.f32 %v1742, %v1755
        %1757 = vdwg.mxu0
        %1758 = vmatpush.bf16.msra.mxu0 %v1591
        %1759 = vmatpush.bf16.msra.mxu0 %v1587
        %1760 = vmatpush.bf16.msra.mxu0 %v1583
        %1761 = vmatpush.bf16.msra.mxu0 %v1579
        %1762 = vmatpush.bf16.msra.mxu0 %v1575
        %1763 = vmatpush.bf16.msra.mxu0 %v1571
        %1764 = vmatpush.bf16.msra.mxu0 %v1567
        %1765 = vmatpush.bf16.msra.mxu0 %v1563
        %1766 = vmatmul.bf16.gmra.mxu0 %v1626
        %v1767 = vpop.f32.mrf.mxu0
        %v1768 = vadd.f32 %v1754, %v1767
        %v1769 = vpop.f32.mrf.mxu0
        %v1770 = vadd.f32 %v1756, %v1769
        %1771 = vdwg.mxu0
        %1772 = vmatpush.bf16.msra.mxu0 %v1464
        %1773 = vmatpush.bf16.msra.mxu0 %v1460
        %1774 = vmatpush.bf16.msra.mxu0 %v1456
        %1775 = vmatpush.bf16.msra.mxu0 %v1452
        %1776 = vmatpush.bf16.msra.mxu0 %v1448
        %1777 = vmatpush.bf16.msra.mxu0 %v1444
        %1778 = vmatpush.bf16.msra.mxu0 %v1440
        %1779 = vmatpush.bf16.msra.mxu0 %v1436
        %1780 = vmatmul.bf16.gmra.mxu0 %v1622
        %v1781 = vpop.f32.mrf.mxu0
        %v1782 = vadd.f32 %v1599, %v1781
        %v1783 = vpop.f32.mrf.mxu0
        %v1784 = vadd.f32 %v1604, %v1783
        %1785 = vdwg.mxu0
        %1786 = vmatpush.bf16.msra.mxu0 %v1496
        %1787 = vmatpush.bf16.msra.mxu0 %v1492
        %1788 = vmatpush.bf16.msra.mxu0 %v1488
        %1789 = vmatpush.bf16.msra.mxu0 %v1484
        %1790 = vmatpush.bf16.msra.mxu0 %v1480
        %1791 = vmatpush.bf16.msra.mxu0 %v1476
        %1792 = vmatpush.bf16.msra.mxu0 %v1472
        %1793 = vmatpush.bf16.msra.mxu0 %v1468
        %1794 = vmatmul.bf16.gmra.mxu0 %v1623
        %v1795 = vpop.f32.mrf.mxu0
        %v1796 = vadd.f32 %v1782, %v1795
        %v1797 = vpop.f32.mrf.mxu0
        %v1798 = vadd.f32 %v1784, %v1797
        %1799 = vdwg.mxu0
        %1800 = vmatpush.bf16.msra.mxu0 %v1528
        %1801 = vmatpush.bf16.msra.mxu0 %v1524
        %1802 = vmatpush.bf16.msra.mxu0 %v1520
        %1803 = vmatpush.bf16.msra.mxu0 %v1516
        %1804 = vmatpush.bf16.msra.mxu0 %v1512
        %1805 = vmatpush.bf16.msra.mxu0 %v1508
        %1806 = vmatpush.bf16.msra.mxu0 %v1504
        %1807 = vmatpush.bf16.msra.mxu0 %v1500
        %1808 = vmatmul.bf16.gmra.mxu0 %v1624
        %v1809 = vpop.f32.mrf.mxu0
        %v1810 = vadd.f32 %v1796, %v1809
        %v1811 = vpop.f32.mrf.mxu0
        %v1812 = vadd.f32 %v1798, %v1811
        %1813 = vdwg.mxu0
        %1814 = vmatpush.bf16.msra.mxu0 %v1560
        %1815 = vmatpush.bf16.msra.mxu0 %v1556
        %1816 = vmatpush.bf16.msra.mxu0 %v1552
        %1817 = vmatpush.bf16.msra.mxu0 %v1548
        %1818 = vmatpush.bf16.msra.mxu0 %v1544
        %1819 = vmatpush.bf16.msra.mxu0 %v1540
        %1820 = vmatpush.bf16.msra.mxu0 %v1536
        %1821 = vmatpush.bf16.msra.mxu0 %v1532
        %1822 = vmatmul.bf16.gmra.mxu0 %v1625
        %v1823 = vpop.f32.mrf.mxu0
        %v1824 = vadd.f32 %v1810, %v1823
        %v1825 = vpop.f32.mrf.mxu0
        %v1826 = vadd.f32 %v1812, %v1825
        %1827 = vdwg.mxu0
        %1828 = vmatpush.bf16.msra.mxu0 %v1592
        %1829 = vmatpush.bf16.msra.mxu0 %v1588
        %1830 = vmatpush.bf16.msra.mxu0 %v1584
        %1831 = vmatpush.bf16.msra.mxu0 %v1580
        %1832 = vmatpush.bf16.msra.mxu0 %v1576
        %1833 = vmatpush.bf16.msra.mxu0 %v1572
        %1834 = vmatpush.bf16.msra.mxu0 %v1568
        %1835 = vmatpush.bf16.msra.mxu0 %v1564
        %1836 = vmatmul.bf16.gmra.mxu0 %v1626
        %v1837 = vpop.f32.mrf.mxu0
        %v1838 = vadd.f32 %v1824, %v1837
        %v1839 = vpop.f32.mrf.mxu0
        %v1840 = vadd.f32 %v1826, %v1839
        %1841 = vdwg.mxu0
        %1842 = vmatpush.bf16.msra.mxu0 %v1465
        %1843 = vmatpush.bf16.msra.mxu0 %v1461
        %1844 = vmatpush.bf16.msra.mxu0 %v1457
        %1845 = vmatpush.bf16.msra.mxu0 %v1453
        %1846 = vmatpush.bf16.msra.mxu0 %v1449
        %1847 = vmatpush.bf16.msra.mxu0 %v1445
        %1848 = vmatpush.bf16.msra.mxu0 %v1441
        %1849 = vmatpush.bf16.msra.mxu0 %v1437
        %1850 = vmatmul.bf16.gmra.mxu0 %v1622
        %v1851 = vpop.f32.mrf.mxu0
        %v1852 = vadd.f32 %v1599, %v1851
        %v1853 = vpop.f32.mrf.mxu0
        %v1854 = vadd.f32 %v1604, %v1853
        %1855 = vdwg.mxu0
        %1856 = vmatpush.bf16.msra.mxu0 %v1497
        %1857 = vmatpush.bf16.msra.mxu0 %v1493
        %1858 = vmatpush.bf16.msra.mxu0 %v1489
        %1859 = vmatpush.bf16.msra.mxu0 %v1485
        %1860 = vmatpush.bf16.msra.mxu0 %v1481
        %1861 = vmatpush.bf16.msra.mxu0 %v1477
        %1862 = vmatpush.bf16.msra.mxu0 %v1473
        %1863 = vmatpush.bf16.msra.mxu0 %v1469
        %1864 = vmatmul.bf16.gmra.mxu0 %v1623
        %v1865 = vpop.f32.mrf.mxu0
        %v1866 = vadd.f32 %v1852, %v1865
        %v1867 = vpop.f32.mrf.mxu0
        %v1868 = vadd.f32 %v1854, %v1867
        %1869 = vdwg.mxu0
        %1870 = vmatpush.bf16.msra.mxu0 %v1529
        %1871 = vmatpush.bf16.msra.mxu0 %v1525
        %1872 = vmatpush.bf16.msra.mxu0 %v1521
        %1873 = vmatpush.bf16.msra.mxu0 %v1517
        %1874 = vmatpush.bf16.msra.mxu0 %v1513
        %1875 = vmatpush.bf16.msra.mxu0 %v1509
        %1876 = vmatpush.bf16.msra.mxu0 %v1505
        %1877 = vmatpush.bf16.msra.mxu0 %v1501
        %1878 = vmatmul.bf16.gmra.mxu0 %v1624
        %v1879 = vpop.f32.mrf.mxu0
        %v1880 = vadd.f32 %v1866, %v1879
        %v1881 = vpop.f32.mrf.mxu0
        %v1882 = vadd.f32 %v1868, %v1881
        %1883 = vdwg.mxu0
        %1884 = vmatpush.bf16.msra.mxu0 %v1561
        %1885 = vmatpush.bf16.msra.mxu0 %v1557
        %1886 = vmatpush.bf16.msra.mxu0 %v1553
        %1887 = vmatpush.bf16.msra.mxu0 %v1549
        %1888 = vmatpush.bf16.msra.mxu0 %v1545
        %1889 = vmatpush.bf16.msra.mxu0 %v1541
        %1890 = vmatpush.bf16.msra.mxu0 %v1537
        %1891 = vmatpush.bf16.msra.mxu0 %v1533
        %1892 = vmatmul.bf16.gmra.mxu0 %v1625
        %v1893 = vpop.f32.mrf.mxu0
        %v1894 = vadd.f32 %v1880, %v1893
        %v1895 = vpop.f32.mrf.mxu0
        %v1896 = vadd.f32 %v1882, %v1895
        %1897 = vdwg.mxu0
        %1898 = vmatpush.bf16.msra.mxu0 %v1593
        %1899 = vmatpush.bf16.msra.mxu0 %v1589
        %1900 = vmatpush.bf16.msra.mxu0 %v1585
        %1901 = vmatpush.bf16.msra.mxu0 %v1581
        %1902 = vmatpush.bf16.msra.mxu0 %v1577
        %1903 = vmatpush.bf16.msra.mxu0 %v1573
        %1904 = vmatpush.bf16.msra.mxu0 %v1569
        %1905 = vmatpush.bf16.msra.mxu0 %v1565
        %1906 = vmatmul.bf16.gmra.mxu0 %v1626
        %v1907 = vpop.f32.mrf.mxu0
        %v1908 = vadd.f32 %v1894, %v1907
        %v1909 = vpop.f32.mrf.mxu0
        %v1910 = vadd.f32 %v1896, %v1909
        %1911 = vdwg.mxu0
        %v1912 = vadd.f32 %v1698, %v582
        %v1913 = vadd.f32 %v1768, %v596
        %v1914 = vadd.f32 %v1838, %v610
        %v1915 = vadd.f32 %v1908, %v624
        %v1916 = vadd.f32 %v1700, %v584
        %v1917 = vadd.f32 %v1770, %v598
        %v1918 = vadd.f32 %v1840, %v612
        %v1919 = vadd.f32 %v1910, %v626
        %v1920 = vpack.c.bf16 %v1913, %v1912
        %v1921 = vpack.c.bf16 %v1915, %v1914
        %v1922 = vpack.c.bf16 %v1917, %v1916
        %v1923 = vpack.c.bf16 %v1919, %v1918
        %1924 = vst [vmem:[%s529] sm:$0xff] %v1920
        %1925 = vst [vmem:[%s529 + $0x8] sm:$0xff] %v1921
        %1926 = vst [vmem:[%s529 + $0x10] sm:$0xff] %v1922
        %1927 = vst [vmem:[%s529 + $0x18] sm:$0xff] %v1923
        %s1928 = sand.u32 %s112, 1
        %s1929 = sand.u32 %s112, 1
        %s1930 = smul.addr %s1929, 32
        %s1931 = scalar_lea.vmem [#allocation3], %s1930
        // Predicated region
        $region60: #{resvesselnet_pallas.5} parent=54 // pred_check
          %p1932 = pneg %p122
        $region61: #{resvesselnet_pallas.5} parent=54 // pred_check_branch
          %1934 = sbr.rel (%p1932) target = $region63
        $region62: #{resvesselnet_pallas.5} parent=54 // pred_region
          %s1935 = smul.u32 4, %s15
          %s1936 = smul.addr %s1935, 4
          %s1937 = scalar_lea.vmem %s4, %s1936
          // Predicated region
          $region64: #{resvesselnet_pallas.5} parent=62 // pred_check
            _
          $region65: #{resvesselnet_pallas.5} parent=62 // pred_check_branch
            %1939 = sbr.rel (0) target = $region67
          $region66: #{resvesselnet_pallas.5} parent=62 // pred_region
            // Predicated region
            $region68: #{resvesselnet_pallas.5} parent=66 // pred_check
              _
            $region69: #{resvesselnet_pallas.5} parent=66 // pred_check_branch
              %1941 = sbr.rel (0) target = $region71
            $region70: #{resvesselnet_pallas.5} parent=66 // pred_region
              loop: start=0, step=1, limit=1
              $region72: #{resvesselnet_pallas.5} parent=70 // loop_pre_header
                _
              $region73: #{resvesselnet_pallas.5} parent=70 // loop_header
                %s1943 = sphi 0, %s1947
                %p1944 = scmp.ge.s32.totalorder %s1943, 1
                %s1948 = sphi %s1931, %s1931
                %s1949 = sphi %s1937, %s1937
              $region74: #{resvesselnet_pallas.5} parent=70 // loop_header_branch
                %1946 = sbr.rel (%p1944) target = $region78
              $region75: #{resvesselnet_pallas.5} parent=70 // loop_body
                %v1950 = vld [vmem:[%s1948] sm:$0xff]
                %1951 = vst [vmem:[%s1949] sm:$0xff] %v1950
                %v1952 = vld [vmem:[%s1948 + $0x8] sm:$0xff]
                %1953 = vst [vmem:[%s1949 + $0x8] sm:$0xff] %v1952
                %v1954 = vld [vmem:[%s1948 + $0x10] sm:$0xff]
                %1955 = vst [vmem:[%s1949 + $0x40] sm:$0xff] %v1954
                %v1956 = vld [vmem:[%s1948 + $0x18] sm:$0xff]
                %1957 = vst [vmem:[%s1949 + $0x48] sm:$0xff] %v1956
              $region76: #{resvesselnet_pallas.5} parent=70 // loop_footer
                %s1947 = sadd.s32 1, %s1943
              $region77: #{resvesselnet_pallas.5} parent=70 // loop_footer_branch
                %1942 = sbr.rel target = $region73
              $region78: #{resvesselnet_pallas.5} parent=70 // loop_exit
                _
            $region71: #{resvesselnet_pallas.5} parent=66 // pred_fallthru
              _
            // Predicated region
            $region79: #{resvesselnet_pallas.5} parent=66 // pred_check
              _
            $region80: #{resvesselnet_pallas.5} parent=66 // pred_check_branch
              %1959 = sbr.rel target = $region82
            $region81: #{resvesselnet_pallas.5} parent=66 // pred_region
              _
            $region82: #{resvesselnet_pallas.5} parent=66 // pred_fallthru
              _
          $region67: #{resvesselnet_pallas.5} parent=62 // pred_fallthru
            _
          %1960 = vnop
        $region63: #{resvesselnet_pallas.5} parent=54 // pred_fallthru
          _
      $region55: #{resvesselnet_pallas.5} parent=5 // pred_fallthru
        _
      %p1961 = scmp.le.s32.totalorder 2, %s10
      // Predicated region
      $region83: #{resvesselnet_pallas.5} parent=5 // pred_check
        %p1962 = pneg %p1961
      $region84: #{resvesselnet_pallas.5} parent=5 // pred_check_branch
        %1964 = sbr.rel (%p1962) target = $region86
      $region85: #{resvesselnet_pallas.5} parent=5 // pred_region
        %s1965 = ssub.s32 %s10, 2
        // Predicated region
        $region87: #{resvesselnet_pallas.5} parent=85 // pred_check
          %p1966 = pneg %p128
        $region88: #{resvesselnet_pallas.5} parent=85 // pred_check_branch
          %1968 = sbr.rel (%p1966) target = $region90
        $region89: #{resvesselnet_pallas.5} parent=85 // pred_region
          %s1969 = sand.u32 %s113, 1
          %s1970 = sand.u32 %s113, 1
          %s1971 = smul.addr %s1970, 32
          %s1972 = scalar_lea.vmem [#allocation3], %s1971
        $region90: #{resvesselnet_pallas.5} parent=85 // pred_fallthru
          _
      $region86: #{resvesselnet_pallas.5} parent=5 // pred_fallthru
        _
    $region6: #{resvesselnet_pallas.5} parent=1 // loop_footer
      %s14 = sadd.s32 1, %s10
    $region7: #{resvesselnet_pallas.5} parent=1 // loop_footer_branch
      %9 = sbr.rel target = $region3
    $region8: #{resvesselnet_pallas.5} parent=1 // loop_exit
      _

// kernel: resvesselnet_pallas.6
$region0: #{resvesselnet_pallas.6}
  #allocation0 [shape = 'u32[]', space=smem, size = 0x4, offset = 0x4, fixed_abs, tag = 'smem constant byte address 0x4 - core index']
  #allocation1 [shape = 'u32[72,128]{1,0:T(1,128)}', space=vmem, size = 0x9000, scoped, tag = 'internal scratch']
  %s0 = inlined_call_operand.vmem [shape: bf16[1264,432], index: 0, kind: input, shape index: {}]
  %s1 = inlined_call_operand.vmem [shape: bf16[32,1264], index: 1, kind: input, shape index: {}]
  %s2 = inlined_call_operand.vmem [shape: f32[32,1], index: 2, kind: input, shape index: {}]
  %s3 = inlined_call_operand.vmem [shape: bf16[32,10], index: 3, kind: input, shape index: {}]
  %s4 = inlined_call_operand.vmem [shape: bf16[32,512], index: 4, kind: output, shape index: {}]
  %s5 = sld [smem:[#allocation0]]
  $region127: #{resvesselnet_pallas.6} parent=0
    _
  %s7 = ssub.s32 1, %s5
  %s8 = scalar_select 0, %s7, %s5
  $region1: #{resvesselnet_pallas.6} parent=0
    #allocation2 [shape = 'u8[647168]{0}', space=vmem, size = 0x9e000, scoped, tag = 'input window, operand 0']
    #allocation3 [shape = 'u8[16384]{0}', space=vmem, size = 0x4000, scoped, tag = 'output window, operand 0']
    loop: start=0, step=1, limit=6
    $region2: #{resvesselnet_pallas.6} parent=1 // loop_pre_header
      _
    $region3: #{resvesselnet_pallas.6} parent=1 // loop_header
      %s10 = sphi 0, %s14
      %p11 = scmp.ge.s32.totalorder %s10, 6
      %s20 = sphi 0, %s22
      %s23 = sphi 0, %s20
      %s24 = sphi 0, %s23
      %s40 = sphi 0, %s24
      %s44 = sphi 0, %s44
      %s46 = sphi 0, %s44
      %s47 = sphi 0, %s46
      %s61 = sphi 0, %s47
      %s65 = sphi 0, %s65
      %s67 = sphi 0, %s65
      %s68 = sphi 0, %s67
      %s82 = sphi 0, %s68
      %s86 = sphi 0, %s86
      %s88 = sphi 0, %s86
      %s89 = sphi 0, %s88
      %s103 = sphi 0, %s89
      %s109 = sphi 0, %s111
      %s112 = sphi 0, %s109
      %s113 = sphi 0, %s112
      %s129 = sphi 0, %s113
    $region4: #{resvesselnet_pallas.6} parent=1 // loop_header_branch
      %13 = sbr.rel (%p11) target = $region8
    $region5: #{resvesselnet_pallas.6} parent=1 // loop_body
      %s15 = ssub.s32 %s10, 1
      %s16 = ssub.s32 %s10, 2
      %s17 = sadd.s32 %s10, 1
      %s18 = ssub.s32 %s10, %s17
      %p19 = scmp.eq.s32.totalorder %s18, 0
      %s21 = sadd.s32 %s20, 1
      %s22 = scalar_select %p19, %s20, %s21
      %p25 = pneg %p19
      %p26 = scmp.eq.s32.totalorder %s10, 3
      %p27 = por %p25, %p26
      %p28 = scmp.ne.s32.totalorder %s20, %s23
      %p29 = scmp.eq.s32.totalorder %s10, 0
      %p30 = por %p28, %p29
      %p31 = scmp.ne.s32.totalorder %s20, %s23
      %p32 = scmp.eq.s32.totalorder %s15, 3
      %p33 = por %p31, %p32
      %p34 = scmp.ne.s32.totalorder %s23, %s24
      %p35 = scmp.eq.s32.totalorder %s15, 0
      %p36 = por %p34, %p35
      %p37 = scmp.ne.s32.totalorder %s23, %s24
      %p38 = scmp.eq.s32.totalorder %s16, 3
      %p39 = por %p37, %p38
      %p41 = scmp.ne.s32.totalorder %s24, %s40
      %p42 = scmp.eq.s32.totalorder %s16, 0
      %p43 = por %p41, %p42
      %s45 = sadd.s32 %s44, 1
      %p48 = scmp.eq.s32.totalorder %s10, 3
      %p49 = scmp.ne.s32.totalorder %s44, %s46
      %p50 = scmp.eq.s32.totalorder %s10, 0
      %p51 = por %p49, %p50
      %p52 = scmp.ne.s32.totalorder %s44, %s46
      %p53 = scmp.eq.s32.totalorder %s15, 3
      %p54 = por %p52, %p53
      %p55 = scmp.ne.s32.totalorder %s46, %s47
      %p56 = scmp.eq.s32.totalorder %s15, 0
      %p57 = por %p55, %p56
      %p58 = scmp.ne.s32.totalorder %s46, %s47
      %p59 = scmp.eq.s32.totalorder %s16, 3
      %p60 = por %p58, %p59
      %p62 = scmp.ne.s32.totalorder %s47, %s61
      %p63 = scmp.eq.s32.totalorder %s16, 0
      %p64 = por %p62, %p63
      %s66 = sadd.s32 %s65, 1
      %p69 = scmp.eq.s32.totalorder %s10, 3
      %p70 = scmp.ne.s32.totalorder %s65, %s67
      %p71 = scmp.eq.s32.totalorder %s10, 0
      %p72 = por %p70, %p71
      %p73 = scmp.ne.s32.totalorder %s65, %s67
      %p74 = scmp.eq.s32.totalorder %s15, 3
      %p75 = por %p73, %p74
      %p76 = scmp.ne.s32.totalorder %s67, %s68
      %p77 = scmp.eq.s32.totalorder %s15, 0
      %p78 = por %p76, %p77
      %p79 = scmp.ne.s32.totalorder %s67, %s68
      %p80 = scmp.eq.s32.totalorder %s16, 3
      %p81 = por %p79, %p80
      %p83 = scmp.ne.s32.totalorder %s68, %s82
      %p84 = scmp.eq.s32.totalorder %s16, 0
      %p85 = por %p83, %p84
      %s87 = sadd.s32 %s86, 1
      %p90 = scmp.eq.s32.totalorder %s10, 3
      %p91 = scmp.ne.s32.totalorder %s86, %s88
      %p92 = scmp.eq.s32.totalorder %s10, 0
      %p93 = por %p91, %p92
      %p94 = scmp.ne.s32.totalorder %s86, %s88
      %p95 = scmp.eq.s32.totalorder %s15, 3
      %p96 = por %p94, %p95
      %p97 = scmp.ne.s32.totalorder %s88, %s89
      %p98 = scmp.eq.s32.totalorder %s15, 0
      %p99 = por %p97, %p98
      %p100 = scmp.ne.s32.totalorder %s88, %s89
      %p101 = scmp.eq.s32.totalorder %s16, 3
      %p102 = por %p100, %p101
      %p104 = scmp.ne.s32.totalorder %s89, %s103
      %p105 = scmp.eq.s32.totalorder %s16, 0
      %p106 = por %p104, %p105
      %s107 = ssub.s32 %s10, %s17
      %p108 = scmp.eq.s32.totalorder %s107, 0
      %s110 = sadd.s32 %s109, 1
      %s111 = scalar_select %p108, %s109, %s110
      %p114 = pneg %p108
      %p115 = scmp.eq.s32.totalorder %s10, 3
      %p116 = por %p114, %p115
      %p117 = scmp.ne.s32.totalorder %s109, %s112
      %p118 = scmp.eq.s32.totalorder %s10, 0
      %p119 = por %p117, %p118
      %p120 = scmp.ne.s32.totalorder %s109, %s112
      %p121 = scmp.eq.s32.totalorder %s15, 3
      %p122 = por %p120, %p121
      %p123 = scmp.ne.s32.totalorder %s112, %s113
      %p124 = scmp.eq.s32.totalorder %s15, 0
      %p125 = por %p123, %p124
      %p126 = scmp.ne.s32.totalorder %s112, %s113
      %p127 = scmp.eq.s32.totalorder %s16, 3
      %p128 = por %p126, %p127
      %p130 = scmp.ne.s32.totalorder %s113, %s129
      %p131 = scmp.eq.s32.totalorder %s16, 0
      %p132 = por %p130, %p131
      %p133 = scmp.le.s32.totalorder 1, %s10
      %p134 = scmp.lt.s32.totalorder %s10, 5
      %p135 = pnand %p133, %p134
      %p136 = pneg %p135
      // Predicated region
      $region9: #{resvesselnet_pallas.6} parent=5 // pred_check
        _
      $region10: #{resvesselnet_pallas.6} parent=5 // pred_check_branch
        %138 = sbr.rel (%p135) target = $region12
      $region11: #{resvesselnet_pallas.6} parent=5 // pred_region
        %s139 = ssub.s32 %s10, 1
        // Predicated region
        $region13: #{resvesselnet_pallas.6} parent=11 // pred_check
          %p140 = pneg %p57
        $region14: #{resvesselnet_pallas.6} parent=11 // pred_check_branch
          %142 = sbr.rel (%p140) target = $region16
        $region15: #{resvesselnet_pallas.6} parent=11 // pred_region
          _
        $region16: #{resvesselnet_pallas.6} parent=11 // pred_fallthru
          _
        // Predicated region
        $region17: #{resvesselnet_pallas.6} parent=11 // pred_check
          %p143 = pneg %p78
        $region18: #{resvesselnet_pallas.6} parent=11 // pred_check_branch
          %145 = sbr.rel (%p143) target = $region20
        $region19: #{resvesselnet_pallas.6} parent=11 // pred_region
          _
        $region20: #{resvesselnet_pallas.6} parent=11 // pred_fallthru
          _
        // Predicated region
        $region21: #{resvesselnet_pallas.6} parent=11 // pred_check
          %p146 = pneg %p99
        $region22: #{resvesselnet_pallas.6} parent=11 // pred_check_branch
          %148 = sbr.rel (%p146) target = $region24
        $region23: #{resvesselnet_pallas.6} parent=11 // pred_region
          _
        $region24: #{resvesselnet_pallas.6} parent=11 // pred_fallthru
          _
      $region12: #{resvesselnet_pallas.6} parent=5 // pred_fallthru
        _
      %p149 = scmp.lt.s32.totalorder %s10, 4
      // Predicated region
      $region25: #{resvesselnet_pallas.6} parent=5 // pred_check
        %p150 = pneg %p149
      $region26: #{resvesselnet_pallas.6} parent=5 // pred_check_branch
        %152 = sbr.rel (%p150) target = $region28
      $region27: #{resvesselnet_pallas.6} parent=5 // pred_region
        // Predicated region
        $region29: #{resvesselnet_pallas.6} parent=27 // pred_check
          %p153 = pneg %p30
        $region30: #{resvesselnet_pallas.6} parent=27 // pred_check_branch
          %155 = sbr.rel (%p153) target = $region32
        $region31: #{resvesselnet_pallas.6} parent=27 // pred_region
          %s156 = sand.u32 %s20, 1
          %s157 = sand.u32 %s20, 1
          %s158 = smul.addr %s157, 632
          %s159 = scalar_lea.vmem [#allocation2], %s158
          %s160 = smul.addr %s10, 4
          %s161 = scalar_lea.vmem %s0, %s160
          // Predicated region
          $region33: #{resvesselnet_pallas.6} parent=31 // pred_check
            _
          $region34: #{resvesselnet_pallas.6} parent=31 // pred_check_branch
            %163 = sbr.rel (0) target = $region36
          $region35: #{resvesselnet_pallas.6} parent=31 // pred_region
            // Predicated region
            $region37: #{resvesselnet_pallas.6} parent=35 // pred_check
              _
            $region38: #{resvesselnet_pallas.6} parent=35 // pred_check_branch
              %165 = sbr.rel target = $region40
            $region39: #{resvesselnet_pallas.6} parent=35 // pred_region
              // Predicated region
              $region52: #{resvesselnet_pallas.6} parent=39 // pred_check
                _
              $region53: #{resvesselnet_pallas.6} parent=39 // pred_check_branch
                %495 = sbr.rel (0) target = $region55
              $region54: #{resvesselnet_pallas.6} parent=39 // pred_region
                loop: start=0, step=1, limit=1
                $region56: #{resvesselnet_pallas.6} parent=54 // loop_pre_header
                  _
                $region57: #{resvesselnet_pallas.6} parent=54 // loop_header
                  %s497 = sphi 0, %s501
                  %p498 = scmp.ge.s32.totalorder %s497, 1
                  %s502 = sphi %s161, %s161
                  %s503 = sphi %s159, %s159
                $region58: #{resvesselnet_pallas.6} parent=54 // loop_header_branch
                  %500 = sbr.rel (%p498) target = $region62
                $region59: #{resvesselnet_pallas.6} parent=54 // loop_body
                  _
                $region60: #{resvesselnet_pallas.6} parent=54 // loop_footer
                  %s501 = sadd.s32 1, %s497
                $region61: #{resvesselnet_pallas.6} parent=54 // loop_footer_branch
                  %496 = sbr.rel target = $region57
                $region62: #{resvesselnet_pallas.6} parent=54 // loop_exit
                  _
                %s505 = ssub.s32 16, 1
                loop: start=0, step=1, limit=1
                $region63: #{resvesselnet_pallas.6} parent=54 // loop_pre_header
                  _
                $region64: #{resvesselnet_pallas.6} parent=54 // loop_header
                  %s507 = sphi 0, %s511
                  %p508 = scmp.ge.s32.totalorder %s507, 1
                  %s512 = sphi %s161, %s161
                  %s513 = sphi %s159, %s159
                $region65: #{resvesselnet_pallas.6} parent=54 // loop_header_branch
                  %510 = sbr.rel (%p508) target = $region69
                $region66: #{resvesselnet_pallas.6} parent=54 // loop_body
                  %v514 = vld [vmem:[%s512] sm:%s505]
                  %515 = vst [vmem:[%s513] sm:%s505] %v514
                  %v516 = vld [vmem:[%s512 + $0x10] sm:%s505]
                  %517 = vst [vmem:[%s513 + $0x4] sm:%s505] %v516
                  %v518 = vld [vmem:[%s512 + $0x20] sm:%s505]
                  %519 = vst [vmem:[%s513 + $0x8] sm:%s505] %v518
                  %v520 = vld [vmem:[%s512 + $0x30] sm:%s505]
                  %521 = vst [vmem:[%s513 + $0xc] sm:%s505] %v520
                  %v522 = vld [vmem:[%s512 + $0x40] sm:%s505]
                  %523 = vst [vmem:[%s513 + $0x10] sm:%s505] %v522
                  %v524 = vld [vmem:[%s512 + $0x50] sm:%s505]
                  %525 = vst [vmem:[%s513 + $0x14] sm:%s505] %v524
                  %v526 = vld [vmem:[%s512 + $0x60] sm:%s505]
                  %527 = vst [vmem:[%s513 + $0x18] sm:%s505] %v526
                  %v528 = vld [vmem:[%s512 + $0x70] sm:%s505]
                  %529 = vst [vmem:[%s513 + $0x1c] sm:%s505] %v528
                  %v530 = vld [vmem:[%s512 + $0x80] sm:%s505]
                  %531 = vst [vmem:[%s513 + $0x20] sm:%s505] %v530
                  %v532 = vld [vmem:[%s512 + $0x90] sm:%s505]
                  %533 = vst [vmem:[%s513 + $0x24] sm:%s505] %v532
                  %v534 = vld [vmem:[%s512 + $0xa0] sm:%s505]
                  %535 = vst [vmem:[%s513 + $0x28] sm:%s505] %v534
                  %v536 = vld [vmem:[%s512 + $0xb0] sm:%s505]
                  %537 = vst [vmem:[%s513 + $0x2c] sm:%s505] %v536
                  %v538 = vld [vmem:[%s512 + $0xc0] sm:%s505]
                  %539 = vst [vmem:[%s513 + $0x30] sm:%s505] %v538
                  %v540 = vld [vmem:[%s512 + $0xd0] sm:%s505]
                  %541 = vst [vmem:[%s513 + $0x34] sm:%s505] %v540
                  %v542 = vld [vmem:[%s512 + $0xe0] sm:%s505]
                  %543 = vst [vmem:[%s513 + $0x38] sm:%s505] %v542
                  %v544 = vld [vmem:[%s512 + $0xf0] sm:%s505]
                  %545 = vst [vmem:[%s513 + $0x3c] sm:%s505] %v544
                  %v546 = vld [vmem:[%s512 + $0x100] sm:%s505]
                  %547 = vst [vmem:[%s513 + $0x40] sm:%s505] %v546
                  %v548 = vld [vmem:[%s512 + $0x110] sm:%s505]
                  %549 = vst [vmem:[%s513 + $0x44] sm:%s505] %v548
                  %v550 = vld [vmem:[%s512 + $0x120] sm:%s505]
                  %551 = vst [vmem:[%s513 + $0x48] sm:%s505] %v550
                  %v552 = vld [vmem:[%s512 + $0x130] sm:%s505]
                  %553 = vst [vmem:[%s513 + $0x4c] sm:%s505] %v552
                  %v554 = vld [vmem:[%s512 + $0x140] sm:%s505]
                  %555 = vst [vmem:[%s513 + $0x50] sm:%s505] %v554
                  %v556 = vld [vmem:[%s512 + $0x150] sm:%s505]
                  %557 = vst [vmem:[%s513 + $0x54] sm:%s505] %v556
                  %v558 = vld [vmem:[%s512 + $0x160] sm:%s505]
                  %559 = vst [vmem:[%s513 + $0x58] sm:%s505] %v558
                  %v560 = vld [vmem:[%s512 + $0x170] sm:%s505]
                  %561 = vst [vmem:[%s513 + $0x5c] sm:%s505] %v560
                  %v562 = vld [vmem:[%s512 + $0x180] sm:%s505]
                  %563 = vst [vmem:[%s513 + $0x60] sm:%s505] %v562
                  %v564 = vld [vmem:[%s512 + $0x190] sm:%s505]
                  %565 = vst [vmem:[%s513 + $0x64] sm:%s505] %v564
                  %v566 = vld [vmem:[%s512 + $0x1a0] sm:%s505]
                  %567 = vst [vmem:[%s513 + $0x68] sm:%s505] %v566
                  %v568 = vld [vmem:[%s512 + $0x1b0] sm:%s505]
                  %569 = vst [vmem:[%s513 + $0x6c] sm:%s505] %v568
                  %v570 = vld [vmem:[%s512 + $0x1c0] sm:%s505]
                  %571 = vst [vmem:[%s513 + $0x70] sm:%s505] %v570
                  %v572 = vld [vmem:[%s512 + $0x1d0] sm:%s505]
                  %573 = vst [vmem:[%s513 + $0x74] sm:%s505] %v572
                  %v574 = vld [vmem:[%s512 + $0x1e0] sm:%s505]
                  %575 = vst [vmem:[%s513 + $0x78] sm:%s505] %v574
                  %v576 = vld [vmem:[%s512 + $0x1f0] sm:%s505]
                  %577 = vst [vmem:[%s513 + $0x7c] sm:%s505] %v576
                  %v578 = vld [vmem:[%s512 + $0x200] sm:%s505]
                  %579 = vst [vmem:[%s513 + $0x80] sm:%s505] %v578
                  %v580 = vld [vmem:[%s512 + $0x210] sm:%s505]
                  %581 = vst [vmem:[%s513 + $0x84] sm:%s505] %v580
                  %v582 = vld [vmem:[%s512 + $0x220] sm:%s505]
                  %583 = vst [vmem:[%s513 + $0x88] sm:%s505] %v582
                  %v584 = vld [vmem:[%s512 + $0x230] sm:%s505]
                  %585 = vst [vmem:[%s513 + $0x8c] sm:%s505] %v584
                  %v586 = vld [vmem:[%s512 + $0x240] sm:%s505]
                  %587 = vst [vmem:[%s513 + $0x90] sm:%s505] %v586
                  %v588 = vld [vmem:[%s512 + $0x250] sm:%s505]
                  %589 = vst [vmem:[%s513 + $0x94] sm:%s505] %v588
                  %v590 = vld [vmem:[%s512 + $0x260] sm:%s505]
                  %591 = vst [vmem:[%s513 + $0x98] sm:%s505] %v590
                  %v592 = vld [vmem:[%s512 + $0x270] sm:%s505]
                  %593 = vst [vmem:[%s513 + $0x9c] sm:%s505] %v592
                  %v594 = vld [vmem:[%s512 + $0x280] sm:%s505]
                  %595 = vst [vmem:[%s513 + $0xa0] sm:%s505] %v594
                  %v596 = vld [vmem:[%s512 + $0x290] sm:%s505]
                  %597 = vst [vmem:[%s513 + $0xa4] sm:%s505] %v596
                  %v598 = vld [vmem:[%s512 + $0x2a0] sm:%s505]
                  %599 = vst [vmem:[%s513 + $0xa8] sm:%s505] %v598
                  %v600 = vld [vmem:[%s512 + $0x2b0] sm:%s505]
                  %601 = vst [vmem:[%s513 + $0xac] sm:%s505] %v600
                  %v602 = vld [vmem:[%s512 + $0x2c0] sm:%s505]
                  %603 = vst [vmem:[%s513 + $0xb0] sm:%s505] %v602
                  %v604 = vld [vmem:[%s512 + $0x2d0] sm:%s505]
                  %605 = vst [vmem:[%s513 + $0xb4] sm:%s505] %v604
                  %v606 = vld [vmem:[%s512 + $0x2e0] sm:%s505]
                  %607 = vst [vmem:[%s513 + $0xb8] sm:%s505] %v606
                  %v608 = vld [vmem:[%s512 + $0x2f0] sm:%s505]
                  %609 = vst [vmem:[%s513 + $0xbc] sm:%s505] %v608
                  %v610 = vld [vmem:[%s512 + $0x300] sm:%s505]
                  %611 = vst [vmem:[%s513 + $0xc0] sm:%s505] %v610
                  %v612 = vld [vmem:[%s512 + $0x310] sm:%s505]
                  %613 = vst [vmem:[%s513 + $0xc4] sm:%s505] %v612
                  %v614 = vld [vmem:[%s512 + $0x320] sm:%s505]
                  %615 = vst [vmem:[%s513 + $0xc8] sm:%s505] %v614
                  %v616 = vld [vmem:[%s512 + $0x330] sm:%s505]
                  %617 = vst [vmem:[%s513 + $0xcc] sm:%s505] %v616
                  %v618 = vld [vmem:[%s512 + $0x340] sm:%s505]
                  %619 = vst [vmem:[%s513 + $0xd0] sm:%s505] %v618
                  %v620 = vld [vmem:[%s512 + $0x350] sm:%s505]
                  %621 = vst [vmem:[%s513 + $0xd4] sm:%s505] %v620
                  %v622 = vld [vmem:[%s512 + $0x360] sm:%s505]
                  %623 = vst [vmem:[%s513 + $0xd8] sm:%s505] %v622
                  %v624 = vld [vmem:[%s512 + $0x370] sm:%s505]
                  %625 = vst [vmem:[%s513 + $0xdc] sm:%s505] %v624
                  %v626 = vld [vmem:[%s512 + $0x380] sm:%s505]
                  %627 = vst [vmem:[%s513 + $0xe0] sm:%s505] %v626
                  %v628 = vld [vmem:[%s512 + $0x390] sm:%s505]
                  %629 = vst [vmem:[%s513 + $0xe4] sm:%s505] %v628
                  %v630 = vld [vmem:[%s512 + $0x3a0] sm:%s505]
                  %631 = vst [vmem:[%s513 + $0xe8] sm:%s505] %v630
                  %v632 = vld [vmem:[%s512 + $0x3b0] sm:%s505]
                  %633 = vst [vmem:[%s513 + $0xec] sm:%s505] %v632
                  %v634 = vld [vmem:[%s512 + $0x3c0] sm:%s505]
                  %635 = vst [vmem:[%s513 + $0xf0] sm:%s505] %v634
                  %v636 = vld [vmem:[%s512 + $0x3d0] sm:%s505]
                  %637 = vst [vmem:[%s513 + $0xf4] sm:%s505] %v636
                  %v638 = vld [vmem:[%s512 + $0x3e0] sm:%s505]
                  %639 = vst [vmem:[%s513 + $0xf8] sm:%s505] %v638
                  %v640 = vld [vmem:[%s512 + $0x3f0] sm:%s505]
                  %641 = vst [vmem:[%s513 + $0xfc] sm:%s505] %v640
                  %v642 = vld [vmem:[%s512 + $0x400] sm:%s505]
                  %643 = vst [vmem:[%s513 + $0x100] sm:%s505] %v642
                  %v644 = vld [vmem:[%s512 + $0x410] sm:%s505]
                  %645 = vst [vmem:[%s513 + $0x104] sm:%s505] %v644
                  %v646 = vld [vmem:[%s512 + $0x420] sm:%s505]
                  %647 = vst [vmem:[%s513 + $0x108] sm:%s505] %v646
                  %v648 = vld [vmem:[%s512 + $0x430] sm:%s505]
                  %649 = vst [vmem:[%s513 + $0x10c] sm:%s505] %v648
                  %v650 = vld [vmem:[%s512 + $0x440] sm:%s505]
                  %651 = vst [vmem:[%s513 + $0x110] sm:%s505] %v650
                  %v652 = vld [vmem:[%s512 + $0x450] sm:%s505]
                  %653 = vst [vmem:[%s513 + $0x114] sm:%s505] %v652
                  %v654 = vld [vmem:[%s512 + $0x460] sm:%s505]
                  %655 = vst [vmem:[%s513 + $0x118] sm:%s505] %v654
                  %v656 = vld [vmem:[%s512 + $0x470] sm:%s505]
                  %657 = vst [vmem:[%s513 + $0x11c] sm:%s505] %v656
                  %v658 = vld [vmem:[%s512 + $0x480] sm:%s505]
                  %659 = vst [vmem:[%s513 + $0x120] sm:%s505] %v658
                  %v660 = vld [vmem:[%s512 + $0x490] sm:%s505]
                  %661 = vst [vmem:[%s513 + $0x124] sm:%s505] %v660
                  %v662 = vld [vmem:[%s512 + $0x4a0] sm:%s505]
                  %663 = vst [vmem:[%s513 + $0x128] sm:%s505] %v662
                  %v664 = vld [vmem:[%s512 + $0x4b0] sm:%s505]
                  %665 = vst [vmem:[%s513 + $0x12c] sm:%s505] %v664
                  %v666 = vld [vmem:[%s512 + $0x4c0] sm:%s505]
                  %667 = vst [vmem:[%s513 + $0x130] sm:%s505] %v666
                  %v668 = vld [vmem:[%s512 + $0x4d0] sm:%s505]
                  %669 = vst [vmem:[%s513 + $0x134] sm:%s505] %v668
                  %v670 = vld [vmem:[%s512 + $0x4e0] sm:%s505]
                  %671 = vst [vmem:[%s513 + $0x138] sm:%s505] %v670
                  %v672 = vld [vmem:[%s512 + $0x4f0] sm:%s505]
                  %673 = vst [vmem:[%s513 + $0x13c] sm:%s505] %v672
                  %v674 = vld [vmem:[%s512 + $0x500] sm:%s505]
                  %675 = vst [vmem:[%s513 + $0x140] sm:%s505] %v674
                  %v676 = vld [vmem:[%s512 + $0x510] sm:%s505]
                  %677 = vst [vmem:[%s513 + $0x144] sm:%s505] %v676
                  %v678 = vld [vmem:[%s512 + $0x520] sm:%s505]
                  %679 = vst [vmem:[%s513 + $0x148] sm:%s505] %v678
                  %v680 = vld [vmem:[%s512 + $0x530] sm:%s505]
                  %681 = vst [vmem:[%s513 + $0x14c] sm:%s505] %v680
                  %v682 = vld [vmem:[%s512 + $0x540] sm:%s505]
                  %683 = vst [vmem:[%s513 + $0x150] sm:%s505] %v682
                  %v684 = vld [vmem:[%s512 + $0x550] sm:%s505]
                  %685 = vst [vmem:[%s513 + $0x154] sm:%s505] %v684
                  %v686 = vld [vmem:[%s512 + $0x560] sm:%s505]
                  %687 = vst [vmem:[%s513 + $0x158] sm:%s505] %v686
                  %v688 = vld [vmem:[%s512 + $0x570] sm:%s505]
                  %689 = vst [vmem:[%s513 + $0x15c] sm:%s505] %v688
                  %v690 = vld [vmem:[%s512 + $0x580] sm:%s505]
                  %691 = vst [vmem:[%s513 + $0x160] sm:%s505] %v690
                  %v692 = vld [vmem:[%s512 + $0x590] sm:%s505]
                  %693 = vst [vmem:[%s513 + $0x164] sm:%s505] %v692
                  %v694 = vld [vmem:[%s512 + $0x5a0] sm:%s505]
                  %695 = vst [vmem:[%s513 + $0x168] sm:%s505] %v694
                  %v696 = vld [vmem:[%s512 + $0x5b0] sm:%s505]
                  %697 = vst [vmem:[%s513 + $0x16c] sm:%s505] %v696
                  %v698 = vld [vmem:[%s512 + $0x5c0] sm:%s505]
                  %699 = vst [vmem:[%s513 + $0x170] sm:%s505] %v698
                  %v700 = vld [vmem:[%s512 + $0x5d0] sm:%s505]
                  %701 = vst [vmem:[%s513 + $0x174] sm:%s505] %v700
                  %v702 = vld [vmem:[%s512 + $0x5e0] sm:%s505]
                  %703 = vst [vmem:[%s513 + $0x178] sm:%s505] %v702
                  %v704 = vld [vmem:[%s512 + $0x5f0] sm:%s505]
                  %705 = vst [vmem:[%s513 + $0x17c] sm:%s505] %v704
                  %v706 = vld [vmem:[%s512 + $0x600] sm:%s505]
                  %707 = vst [vmem:[%s513 + $0x180] sm:%s505] %v706
                  %v708 = vld [vmem:[%s512 + $0x610] sm:%s505]
                  %709 = vst [vmem:[%s513 + $0x184] sm:%s505] %v708
                  %v710 = vld [vmem:[%s512 + $0x620] sm:%s505]
                  %711 = vst [vmem:[%s513 + $0x188] sm:%s505] %v710
                  %v712 = vld [vmem:[%s512 + $0x630] sm:%s505]
                  %713 = vst [vmem:[%s513 + $0x18c] sm:%s505] %v712
                  %v714 = vld [vmem:[%s512 + $0x640] sm:%s505]
                  %715 = vst [vmem:[%s513 + $0x190] sm:%s505] %v714
                  %v716 = vld [vmem:[%s512 + $0x650] sm:%s505]
                  %717 = vst [vmem:[%s513 + $0x194] sm:%s505] %v716
                  %v718 = vld [vmem:[%s512 + $0x660] sm:%s505]
                  %719 = vst [vmem:[%s513 + $0x198] sm:%s505] %v718
                  %v720 = vld [vmem:[%s512 + $0x670] sm:%s505]
                  %721 = vst [vmem:[%s513 + $0x19c] sm:%s505] %v720
                  %v722 = vld [vmem:[%s512 + $0x680] sm:%s505]
                  %723 = vst [vmem:[%s513 + $0x1a0] sm:%s505] %v722
                  %v724 = vld [vmem:[%s512 + $0x690] sm:%s505]
                  %725 = vst [vmem:[%s513 + $0x1a4] sm:%s505] %v724
                  %v726 = vld [vmem:[%s512 + $0x6a0] sm:%s505]
                  %727 = vst [vmem:[%s513 + $0x1a8] sm:%s505] %v726
                  %v728 = vld [vmem:[%s512 + $0x6b0] sm:%s505]
                  %729 = vst [vmem:[%s513 + $0x1ac] sm:%s505] %v728
                  %v730 = vld [vmem:[%s512 + $0x6c0] sm:%s505]
                  %731 = vst [vmem:[%s513 + $0x1b0] sm:%s505] %v730
                  %v732 = vld [vmem:[%s512 + $0x6d0] sm:%s505]
                  %733 = vst [vmem:[%s513 + $0x1b4] sm:%s505] %v732
                  %v734 = vld [vmem:[%s512 + $0x6e0] sm:%s505]
                  %735 = vst [vmem:[%s513 + $0x1b8] sm:%s505] %v734
                  %v736 = vld [vmem:[%s512 + $0x6f0] sm:%s505]
                  %737 = vst [vmem:[%s513 + $0x1bc] sm:%s505] %v736
                  %v738 = vld [vmem:[%s512 + $0x700] sm:%s505]
                  %739 = vst [vmem:[%s513 + $0x1c0] sm:%s505] %v738
                  %v740 = vld [vmem:[%s512 + $0x710] sm:%s505]
                  %741 = vst [vmem:[%s513 + $0x1c4] sm:%s505] %v740
                  %v742 = vld [vmem:[%s512 + $0x720] sm:%s505]
                  %743 = vst [vmem:[%s513 + $0x1c8] sm:%s505] %v742
                  %v744 = vld [vmem:[%s512 + $0x730] sm:%s505]
                  %745 = vst [vmem:[%s513 + $0x1cc] sm:%s505] %v744
                  %v746 = vld [vmem:[%s512 + $0x740] sm:%s505]
                  %747 = vst [vmem:[%s513 + $0x1d0] sm:%s505] %v746
                  %v748 = vld [vmem:[%s512 + $0x750] sm:%s505]
                  %749 = vst [vmem:[%s513 + $0x1d4] sm:%s505] %v748
                  %v750 = vld [vmem:[%s512 + $0x760] sm:%s505]
                  %751 = vst [vmem:[%s513 + $0x1d8] sm:%s505] %v750
                  %v752 = vld [vmem:[%s512 + $0x770] sm:%s505]
                  %753 = vst [vmem:[%s513 + $0x1dc] sm:%s505] %v752
                  %v754 = vld [vmem:[%s512 + $0x780] sm:%s505]
                  %755 = vst [vmem:[%s513 + $0x1e0] sm:%s505] %v754
                  %v756 = vld [vmem:[%s512 + $0x790] sm:%s505]
                  %757 = vst [vmem:[%s513 + $0x1e4] sm:%s505] %v756
                  %v758 = vld [vmem:[%s512 + $0x7a0] sm:%s505]
                  %759 = vst [vmem:[%s513 + $0x1e8] sm:%s505] %v758
                  %v760 = vld [vmem:[%s512 + $0x7b0] sm:%s505]
                  %761 = vst [vmem:[%s513 + $0x1ec] sm:%s505] %v760
                  %v762 = vld [vmem:[%s512 + $0x7c0] sm:%s505]
                  %763 = vst [vmem:[%s513 + $0x1f0] sm:%s505] %v762
                  %v764 = vld [vmem:[%s512 + $0x7d0] sm:%s505]
                  %765 = vst [vmem:[%s513 + $0x1f4] sm:%s505] %v764
                  %v766 = vld [vmem:[%s512 + $0x7e0] sm:%s505]
                  %767 = vst [vmem:[%s513 + $0x1f8] sm:%s505] %v766
                  %v768 = vld [vmem:[%s512 + $0x7f0] sm:%s505]
                  %769 = vst [vmem:[%s513 + $0x1fc] sm:%s505] %v768
                  %v770 = vld [vmem:[%s512 + $0x800] sm:%s505]
                  %771 = vst [vmem:[%s513 + $0x200] sm:%s505] %v770
                  %v772 = vld [vmem:[%s512 + $0x810] sm:%s505]
                  %773 = vst [vmem:[%s513 + $0x204] sm:%s505] %v772
                  %v774 = vld [vmem:[%s512 + $0x820] sm:%s505]
                  %775 = vst [vmem:[%s513 + $0x208] sm:%s505] %v774
                  %v776 = vld [vmem:[%s512 + $0x830] sm:%s505]
                  %777 = vst [vmem:[%s513 + $0x20c] sm:%s505] %v776
                  %v778 = vld [vmem:[%s512 + $0x840] sm:%s505]
                  %779 = vst [vmem:[%s513 + $0x210] sm:%s505] %v778
                  %v780 = vld [vmem:[%s512 + $0x850] sm:%s505]
                  %781 = vst [vmem:[%s513 + $0x214] sm:%s505] %v780
                  %v782 = vld [vmem:[%s512 + $0x860] sm:%s505]
                  %783 = vst [vmem:[%s513 + $0x218] sm:%s505] %v782
                  %v784 = vld [vmem:[%s512 + $0x870] sm:%s505]
                  %785 = vst [vmem:[%s513 + $0x21c] sm:%s505] %v784
                  %v786 = vld [vmem:[%s512 + $0x880] sm:%s505]
                  %787 = vst [vmem:[%s513 + $0x220] sm:%s505] %v786
                  %v788 = vld [vmem:[%s512 + $0x890] sm:%s505]
                  %789 = vst [vmem:[%s513 + $0x224] sm:%s505] %v788
                  %v790 = vld [vmem:[%s512 + $0x8a0] sm:%s505]
                  %791 = vst [vmem:[%s513 + $0x228] sm:%s505] %v790
                  %v792 = vld [vmem:[%s512 + $0x8b0] sm:%s505]
                  %793 = vst [vmem:[%s513 + $0x22c] sm:%s505] %v792
                  %v794 = vld [vmem:[%s512 + $0x8c0] sm:%s505]
                  %795 = vst [vmem:[%s513 + $0x230] sm:%s505] %v794
                  %v796 = vld [vmem:[%s512 + $0x8d0] sm:%s505]
                  %797 = vst [vmem:[%s513 + $0x234] sm:%s505] %v796
                  %v798 = vld [vmem:[%s512 + $0x8e0] sm:%s505]
                  %799 = vst [vmem:[%s513 + $0x238] sm:%s505] %v798
                  %v800 = vld [vmem:[%s512 + $0x8f0] sm:%s505]
                  %801 = vst [vmem:[%s513 + $0x23c] sm:%s505] %v800
                  %v802 = vld [vmem:[%s512 + $0x900] sm:%s505]
                  %803 = vst [vmem:[%s513 + $0x240] sm:%s505] %v802
                  %v804 = vld [vmem:[%s512 + $0x910] sm:%s505]
                  %805 = vst [vmem:[%s513 + $0x244] sm:%s505] %v804
                  %v806 = vld [vmem:[%s512 + $0x920] sm:%s505]
                  %807 = vst [vmem:[%s513 + $0x248] sm:%s505] %v806
                  %v808 = vld [vmem:[%s512 + $0x930] sm:%s505]
                  %809 = vst [vmem:[%s513 + $0x24c] sm:%s505] %v808
                  %v810 = vld [vmem:[%s512 + $0x940] sm:%s505]
                  %811 = vst [vmem:[%s513 + $0x250] sm:%s505] %v810
                  %v812 = vld [vmem:[%s512 + $0x950] sm:%s505]
                  %813 = vst [vmem:[%s513 + $0x254] sm:%s505] %v812
                  %v814 = vld [vmem:[%s512 + $0x960] sm:%s505]
                  %815 = vst [vmem:[%s513 + $0x258] sm:%s505] %v814
                  %v816 = vld [vmem:[%s512 + $0x970] sm:%s505]
                  %817 = vst [vmem:[%s513 + $0x25c] sm:%s505] %v816
                  %v818 = vld [vmem:[%s512 + $0x980] sm:%s505]
                  %819 = vst [vmem:[%s513 + $0x260] sm:%s505] %v818
                  %v820 = vld [vmem:[%s512 + $0x990] sm:%s505]
                  %821 = vst [vmem:[%s513 + $0x264] sm:%s505] %v820
                  %v822 = vld [vmem:[%s512 + $0x9a0] sm:%s505]
                  %823 = vst [vmem:[%s513 + $0x268] sm:%s505] %v822
                  %v824 = vld [vmem:[%s512 + $0x9b0] sm:%s505]
                  %825 = vst [vmem:[%s513 + $0x26c] sm:%s505] %v824
                  %v826 = vld [vmem:[%s512 + $0x9c0] sm:%s505]
                  %827 = vst [vmem:[%s513 + $0x270] sm:%s505] %v826
                  %v828 = vld [vmem:[%s512 + $0x9d0] sm:%s505]
                  %829 = vst [vmem:[%s513 + $0x274] sm:%s505] %v828
                $region67: #{resvesselnet_pallas.6} parent=54 // loop_footer
                  %s511 = sadd.s32 1, %s507
                $region68: #{resvesselnet_pallas.6} parent=54 // loop_footer_branch
                  %506 = sbr.rel target = $region64
                $region69: #{resvesselnet_pallas.6} parent=54 // loop_exit
                  _
              $region55: #{resvesselnet_pallas.6} parent=39 // pred_fallthru
                _
            $region40: #{resvesselnet_pallas.6} parent=35 // pred_fallthru
              _
            // Predicated region
            $region41: #{resvesselnet_pallas.6} parent=35 // pred_check
              _
            $region42: #{resvesselnet_pallas.6} parent=35 // pred_check_branch
              %167 = sbr.rel (0) target = $region44
            $region43: #{resvesselnet_pallas.6} parent=35 // pred_region
              %s169 = ssub.s32 16, 1
              loop: start=0, step=1, limit=1
              $region45: #{resvesselnet_pallas.6} parent=43 // loop_pre_header
                _
              $region46: #{resvesselnet_pallas.6} parent=43 // loop_header
                %s171 = sphi 0, %s175
                %p172 = scmp.ge.s32.totalorder %s171, 1
                %s176 = sphi %s161, %s161
                %s177 = sphi %s159, %s159
              $region47: #{resvesselnet_pallas.6} parent=43 // loop_header_branch
                %174 = sbr.rel (%p172) target = $region51
              $region48: #{resvesselnet_pallas.6} parent=43 // loop_body
                %v178 = vld [vmem:[%s176] sm:%s169]
                %179 = vst [vmem:[%s177] sm:%s169] %v178
                %v180 = vld [vmem:[%s176 + $0x10] sm:%s169]
                %181 = vst [vmem:[%s177 + $0x4] sm:%s169] %v180
                %v182 = vld [vmem:[%s176 + $0x20] sm:%s169]
                %183 = vst [vmem:[%s177 + $0x8] sm:%s169] %v182
                %v184 = vld [vmem:[%s176 + $0x30] sm:%s169]
                %185 = vst [vmem:[%s177 + $0xc] sm:%s169] %v184
                %v186 = vld [vmem:[%s176 + $0x40] sm:%s169]
                %187 = vst [vmem:[%s177 + $0x10] sm:%s169] %v186
                %v188 = vld [vmem:[%s176 + $0x50] sm:%s169]
                %189 = vst [vmem:[%s177 + $0x14] sm:%s169] %v188
                %v190 = vld [vmem:[%s176 + $0x60] sm:%s169]
                %191 = vst [vmem:[%s177 + $0x18] sm:%s169] %v190
                %v192 = vld [vmem:[%s176 + $0x70] sm:%s169]
                %193 = vst [vmem:[%s177 + $0x1c] sm:%s169] %v192
                %v194 = vld [vmem:[%s176 + $0x80] sm:%s169]
                %195 = vst [vmem:[%s177 + $0x20] sm:%s169] %v194
                %v196 = vld [vmem:[%s176 + $0x90] sm:%s169]
                %197 = vst [vmem:[%s177 + $0x24] sm:%s169] %v196
                %v198 = vld [vmem:[%s176 + $0xa0] sm:%s169]
                %199 = vst [vmem:[%s177 + $0x28] sm:%s169] %v198
                %v200 = vld [vmem:[%s176 + $0xb0] sm:%s169]
                %201 = vst [vmem:[%s177 + $0x2c] sm:%s169] %v200
                %v202 = vld [vmem:[%s176 + $0xc0] sm:%s169]
                %203 = vst [vmem:[%s177 + $0x30] sm:%s169] %v202
                %v204 = vld [vmem:[%s176 + $0xd0] sm:%s169]
                %205 = vst [vmem:[%s177 + $0x34] sm:%s169] %v204
                %v206 = vld [vmem:[%s176 + $0xe0] sm:%s169]
                %207 = vst [vmem:[%s177 + $0x38] sm:%s169] %v206
                %v208 = vld [vmem:[%s176 + $0xf0] sm:%s169]
                %209 = vst [vmem:[%s177 + $0x3c] sm:%s169] %v208
                %v210 = vld [vmem:[%s176 + $0x100] sm:%s169]
                %211 = vst [vmem:[%s177 + $0x40] sm:%s169] %v210
                %v212 = vld [vmem:[%s176 + $0x110] sm:%s169]
                %213 = vst [vmem:[%s177 + $0x44] sm:%s169] %v212
                %v214 = vld [vmem:[%s176 + $0x120] sm:%s169]
                %215 = vst [vmem:[%s177 + $0x48] sm:%s169] %v214
                %v216 = vld [vmem:[%s176 + $0x130] sm:%s169]
                %217 = vst [vmem:[%s177 + $0x4c] sm:%s169] %v216
                %v218 = vld [vmem:[%s176 + $0x140] sm:%s169]
                %219 = vst [vmem:[%s177 + $0x50] sm:%s169] %v218
                %v220 = vld [vmem:[%s176 + $0x150] sm:%s169]
                %221 = vst [vmem:[%s177 + $0x54] sm:%s169] %v220
                %v222 = vld [vmem:[%s176 + $0x160] sm:%s169]
                %223 = vst [vmem:[%s177 + $0x58] sm:%s169] %v222
                %v224 = vld [vmem:[%s176 + $0x170] sm:%s169]
                %225 = vst [vmem:[%s177 + $0x5c] sm:%s169] %v224
                %v226 = vld [vmem:[%s176 + $0x180] sm:%s169]
                %227 = vst [vmem:[%s177 + $0x60] sm:%s169] %v226
                %v228 = vld [vmem:[%s176 + $0x190] sm:%s169]
                %229 = vst [vmem:[%s177 + $0x64] sm:%s169] %v228
                %v230 = vld [vmem:[%s176 + $0x1a0] sm:%s169]
                %231 = vst [vmem:[%s177 + $0x68] sm:%s169] %v230
                %v232 = vld [vmem:[%s176 + $0x1b0] sm:%s169]
                %233 = vst [vmem:[%s177 + $0x6c] sm:%s169] %v232
                %v234 = vld [vmem:[%s176 + $0x1c0] sm:%s169]
                %235 = vst [vmem:[%s177 + $0x70] sm:%s169] %v234
                %v236 = vld [vmem:[%s176 + $0x1d0] sm:%s169]
                %237 = vst [vmem:[%s177 + $0x74] sm:%s169] %v236
                %v238 = vld [vmem:[%s176 + $0x1e0] sm:%s169]
                %239 = vst [vmem:[%s177 + $0x78] sm:%s169] %v238
                %v240 = vld [vmem:[%s176 + $0x1f0] sm:%s169]
                %241 = vst [vmem:[%s177 + $0x7c] sm:%s169] %v240
                %v242 = vld [vmem:[%s176 + $0x200] sm:%s169]
                %243 = vst [vmem:[%s177 + $0x80] sm:%s169] %v242
                %v244 = vld [vmem:[%s176 + $0x210] sm:%s169]
                %245 = vst [vmem:[%s177 + $0x84] sm:%s169] %v244
                %v246 = vld [vmem:[%s176 + $0x220] sm:%s169]
                %247 = vst [vmem:[%s177 + $0x88] sm:%s169] %v246
                %v248 = vld [vmem:[%s176 + $0x230] sm:%s169]
                %249 = vst [vmem:[%s177 + $0x8c] sm:%s169] %v248
                %v250 = vld [vmem:[%s176 + $0x240] sm:%s169]
                %251 = vst [vmem:[%s177 + $0x90] sm:%s169] %v250
                %v252 = vld [vmem:[%s176 + $0x250] sm:%s169]
                %253 = vst [vmem:[%s177 + $0x94] sm:%s169] %v252
                %v254 = vld [vmem:[%s176 + $0x260] sm:%s169]
                %255 = vst [vmem:[%s177 + $0x98] sm:%s169] %v254
                %v256 = vld [vmem:[%s176 + $0x270] sm:%s169]
                %257 = vst [vmem:[%s177 + $0x9c] sm:%s169] %v256
                %v258 = vld [vmem:[%s176 + $0x280] sm:%s169]
                %259 = vst [vmem:[%s177 + $0xa0] sm:%s169] %v258
                %v260 = vld [vmem:[%s176 + $0x290] sm:%s169]
                %261 = vst [vmem:[%s177 + $0xa4] sm:%s169] %v260
                %v262 = vld [vmem:[%s176 + $0x2a0] sm:%s169]
                %263 = vst [vmem:[%s177 + $0xa8] sm:%s169] %v262
                %v264 = vld [vmem:[%s176 + $0x2b0] sm:%s169]
                %265 = vst [vmem:[%s177 + $0xac] sm:%s169] %v264
                %v266 = vld [vmem:[%s176 + $0x2c0] sm:%s169]
                %267 = vst [vmem:[%s177 + $0xb0] sm:%s169] %v266
                %v268 = vld [vmem:[%s176 + $0x2d0] sm:%s169]
                %269 = vst [vmem:[%s177 + $0xb4] sm:%s169] %v268
                %v270 = vld [vmem:[%s176 + $0x2e0] sm:%s169]
                %271 = vst [vmem:[%s177 + $0xb8] sm:%s169] %v270
                %v272 = vld [vmem:[%s176 + $0x2f0] sm:%s169]
                %273 = vst [vmem:[%s177 + $0xbc] sm:%s169] %v272
                %v274 = vld [vmem:[%s176 + $0x300] sm:%s169]
                %275 = vst [vmem:[%s177 + $0xc0] sm:%s169] %v274
                %v276 = vld [vmem:[%s176 + $0x310] sm:%s169]
                %277 = vst [vmem:[%s177 + $0xc4] sm:%s169] %v276
                %v278 = vld [vmem:[%s176 + $0x320] sm:%s169]
                %279 = vst [vmem:[%s177 + $0xc8] sm:%s169] %v278
                %v280 = vld [vmem:[%s176 + $0x330] sm:%s169]
                %281 = vst [vmem:[%s177 + $0xcc] sm:%s169] %v280
                %v282 = vld [vmem:[%s176 + $0x340] sm:%s169]
                %283 = vst [vmem:[%s177 + $0xd0] sm:%s169] %v282
                %v284 = vld [vmem:[%s176 + $0x350] sm:%s169]
                %285 = vst [vmem:[%s177 + $0xd4] sm:%s169] %v284
                %v286 = vld [vmem:[%s176 + $0x360] sm:%s169]
                %287 = vst [vmem:[%s177 + $0xd8] sm:%s169] %v286
                %v288 = vld [vmem:[%s176 + $0x370] sm:%s169]
                %289 = vst [vmem:[%s177 + $0xdc] sm:%s169] %v288
                %v290 = vld [vmem:[%s176 + $0x380] sm:%s169]
                %291 = vst [vmem:[%s177 + $0xe0] sm:%s169] %v290
                %v292 = vld [vmem:[%s176 + $0x390] sm:%s169]
                %293 = vst [vmem:[%s177 + $0xe4] sm:%s169] %v292
                %v294 = vld [vmem:[%s176 + $0x3a0] sm:%s169]
                %295 = vst [vmem:[%s177 + $0xe8] sm:%s169] %v294
                %v296 = vld [vmem:[%s176 + $0x3b0] sm:%s169]
                %297 = vst [vmem:[%s177 + $0xec] sm:%s169] %v296
                %v298 = vld [vmem:[%s176 + $0x3c0] sm:%s169]
                %299 = vst [vmem:[%s177 + $0xf0] sm:%s169] %v298
                %v300 = vld [vmem:[%s176 + $0x3d0] sm:%s169]
                %301 = vst [vmem:[%s177 + $0xf4] sm:%s169] %v300
                %v302 = vld [vmem:[%s176 + $0x3e0] sm:%s169]
                %303 = vst [vmem:[%s177 + $0xf8] sm:%s169] %v302
                %v304 = vld [vmem:[%s176 + $0x3f0] sm:%s169]
                %305 = vst [vmem:[%s177 + $0xfc] sm:%s169] %v304
                %v306 = vld [vmem:[%s176 + $0x400] sm:%s169]
                %307 = vst [vmem:[%s177 + $0x100] sm:%s169] %v306
                %v308 = vld [vmem:[%s176 + $0x410] sm:%s169]
                %309 = vst [vmem:[%s177 + $0x104] sm:%s169] %v308
                %v310 = vld [vmem:[%s176 + $0x420] sm:%s169]
                %311 = vst [vmem:[%s177 + $0x108] sm:%s169] %v310
                %v312 = vld [vmem:[%s176 + $0x430] sm:%s169]
                %313 = vst [vmem:[%s177 + $0x10c] sm:%s169] %v312
                %v314 = vld [vmem:[%s176 + $0x440] sm:%s169]
                %315 = vst [vmem:[%s177 + $0x110] sm:%s169] %v314
                %v316 = vld [vmem:[%s176 + $0x450] sm:%s169]
                %317 = vst [vmem:[%s177 + $0x114] sm:%s169] %v316
                %v318 = vld [vmem:[%s176 + $0x460] sm:%s169]
                %319 = vst [vmem:[%s177 + $0x118] sm:%s169] %v318
                %v320 = vld [vmem:[%s176 + $0x470] sm:%s169]
                %321 = vst [vmem:[%s177 + $0x11c] sm:%s169] %v320
                %v322 = vld [vmem:[%s176 + $0x480] sm:%s169]
                %323 = vst [vmem:[%s177 + $0x120] sm:%s169] %v322
                %v324 = vld [vmem:[%s176 + $0x490] sm:%s169]
                %325 = vst [vmem:[%s177 + $0x124] sm:%s169] %v324
                %v326 = vld [vmem:[%s176 + $0x4a0] sm:%s169]
                %327 = vst [vmem:[%s177 + $0x128] sm:%s169] %v326
                %v328 = vld [vmem:[%s176 + $0x4b0] sm:%s169]
                %329 = vst [vmem:[%s177 + $0x12c] sm:%s169] %v328
                %v330 = vld [vmem:[%s176 + $0x4c0] sm:%s169]
                %331 = vst [vmem:[%s177 + $0x130] sm:%s169] %v330
                %v332 = vld [vmem:[%s176 + $0x4d0] sm:%s169]
                %333 = vst [vmem:[%s177 + $0x134] sm:%s169] %v332
                %v334 = vld [vmem:[%s176 + $0x4e0] sm:%s169]
                %335 = vst [vmem:[%s177 + $0x138] sm:%s169] %v334
                %v336 = vld [vmem:[%s176 + $0x4f0] sm:%s169]
                %337 = vst [vmem:[%s177 + $0x13c] sm:%s169] %v336
                %v338 = vld [vmem:[%s176 + $0x500] sm:%s169]
                %339 = vst [vmem:[%s177 + $0x140] sm:%s169] %v338
                %v340 = vld [vmem:[%s176 + $0x510] sm:%s169]
                %341 = vst [vmem:[%s177 + $0x144] sm:%s169] %v340
                %v342 = vld [vmem:[%s176 + $0x520] sm:%s169]
                %343 = vst [vmem:[%s177 + $0x148] sm:%s169] %v342
                %v344 = vld [vmem:[%s176 + $0x530] sm:%s169]
                %345 = vst [vmem:[%s177 + $0x14c] sm:%s169] %v344
                %v346 = vld [vmem:[%s176 + $0x540] sm:%s169]
                %347 = vst [vmem:[%s177 + $0x150] sm:%s169] %v346
                %v348 = vld [vmem:[%s176 + $0x550] sm:%s169]
                %349 = vst [vmem:[%s177 + $0x154] sm:%s169] %v348
                %v350 = vld [vmem:[%s176 + $0x560] sm:%s169]
                %351 = vst [vmem:[%s177 + $0x158] sm:%s169] %v350
                %v352 = vld [vmem:[%s176 + $0x570] sm:%s169]
                %353 = vst [vmem:[%s177 + $0x15c] sm:%s169] %v352
                %v354 = vld [vmem:[%s176 + $0x580] sm:%s169]
                %355 = vst [vmem:[%s177 + $0x160] sm:%s169] %v354
                %v356 = vld [vmem:[%s176 + $0x590] sm:%s169]
                %357 = vst [vmem:[%s177 + $0x164] sm:%s169] %v356
                %v358 = vld [vmem:[%s176 + $0x5a0] sm:%s169]
                %359 = vst [vmem:[%s177 + $0x168] sm:%s169] %v358
                %v360 = vld [vmem:[%s176 + $0x5b0] sm:%s169]
                %361 = vst [vmem:[%s177 + $0x16c] sm:%s169] %v360
                %v362 = vld [vmem:[%s176 + $0x5c0] sm:%s169]
                %363 = vst [vmem:[%s177 + $0x170] sm:%s169] %v362
                %v364 = vld [vmem:[%s176 + $0x5d0] sm:%s169]
                %365 = vst [vmem:[%s177 + $0x174] sm:%s169] %v364
                %v366 = vld [vmem:[%s176 + $0x5e0] sm:%s169]
                %367 = vst [vmem:[%s177 + $0x178] sm:%s169] %v366
                %v368 = vld [vmem:[%s176 + $0x5f0] sm:%s169]
                %369 = vst [vmem:[%s177 + $0x17c] sm:%s169] %v368
                %v370 = vld [vmem:[%s176 + $0x600] sm:%s169]
                %371 = vst [vmem:[%s177 + $0x180] sm:%s169] %v370
                %v372 = vld [vmem:[%s176 + $0x610] sm:%s169]
                %373 = vst [vmem:[%s177 + $0x184] sm:%s169] %v372
                %v374 = vld [vmem:[%s176 + $0x620] sm:%s169]
                %375 = vst [vmem:[%s177 + $0x188] sm:%s169] %v374
                %v376 = vld [vmem:[%s176 + $0x630] sm:%s169]
                %377 = vst [vmem:[%s177 + $0x18c] sm:%s169] %v376
                %v378 = vld [vmem:[%s176 + $0x640] sm:%s169]
                %379 = vst [vmem:[%s177 + $0x190] sm:%s169] %v378
                %v380 = vld [vmem:[%s176 + $0x650] sm:%s169]
                %381 = vst [vmem:[%s177 + $0x194] sm:%s169] %v380
                %v382 = vld [vmem:[%s176 + $0x660] sm:%s169]
                %383 = vst [vmem:[%s177 + $0x198] sm:%s169] %v382
                %v384 = vld [vmem:[%s176 + $0x670] sm:%s169]
                %385 = vst [vmem:[%s177 + $0x19c] sm:%s169] %v384
                %v386 = vld [vmem:[%s176 + $0x680] sm:%s169]
                %387 = vst [vmem:[%s177 + $0x1a0] sm:%s169] %v386
                %v388 = vld [vmem:[%s176 + $0x690] sm:%s169]
                %389 = vst [vmem:[%s177 + $0x1a4] sm:%s169] %v388
                %v390 = vld [vmem:[%s176 + $0x6a0] sm:%s169]
                %391 = vst [vmem:[%s177 + $0x1a8] sm:%s169] %v390
                %v392 = vld [vmem:[%s176 + $0x6b0] sm:%s169]
                %393 = vst [vmem:[%s177 + $0x1ac] sm:%s169] %v392
                %v394 = vld [vmem:[%s176 + $0x6c0] sm:%s169]
                %395 = vst [vmem:[%s177 + $0x1b0] sm:%s169] %v394
                %v396 = vld [vmem:[%s176 + $0x6d0] sm:%s169]
                %397 = vst [vmem:[%s177 + $0x1b4] sm:%s169] %v396
                %v398 = vld [vmem:[%s176 + $0x6e0] sm:%s169]
                %399 = vst [vmem:[%s177 + $0x1b8] sm:%s169] %v398
                %v400 = vld [vmem:[%s176 + $0x6f0] sm:%s169]
                %401 = vst [vmem:[%s177 + $0x1bc] sm:%s169] %v400
                %v402 = vld [vmem:[%s176 + $0x700] sm:%s169]
                %403 = vst [vmem:[%s177 + $0x1c0] sm:%s169] %v402
                %v404 = vld [vmem:[%s176 + $0x710] sm:%s169]
                %405 = vst [vmem:[%s177 + $0x1c4] sm:%s169] %v404
                %v406 = vld [vmem:[%s176 + $0x720] sm:%s169]
                %407 = vst [vmem:[%s177 + $0x1c8] sm:%s169] %v406
                %v408 = vld [vmem:[%s176 + $0x730] sm:%s169]
                %409 = vst [vmem:[%s177 + $0x1cc] sm:%s169] %v408
                %v410 = vld [vmem:[%s176 + $0x740] sm:%s169]
                %411 = vst [vmem:[%s177 + $0x1d0] sm:%s169] %v410
                %v412 = vld [vmem:[%s176 + $0x750] sm:%s169]
                %413 = vst [vmem:[%s177 + $0x1d4] sm:%s169] %v412
                %v414 = vld [vmem:[%s176 + $0x760] sm:%s169]
                %415 = vst [vmem:[%s177 + $0x1d8] sm:%s169] %v414
                %v416 = vld [vmem:[%s176 + $0x770] sm:%s169]
                %417 = vst [vmem:[%s177 + $0x1dc] sm:%s169] %v416
                %v418 = vld [vmem:[%s176 + $0x780] sm:%s169]
                %419 = vst [vmem:[%s177 + $0x1e0] sm:%s169] %v418
                %v420 = vld [vmem:[%s176 + $0x790] sm:%s169]
                %421 = vst [vmem:[%s177 + $0x1e4] sm:%s169] %v420
                %v422 = vld [vmem:[%s176 + $0x7a0] sm:%s169]
                %423 = vst [vmem:[%s177 + $0x1e8] sm:%s169] %v422
                %v424 = vld [vmem:[%s176 + $0x7b0] sm:%s169]
                %425 = vst [vmem:[%s177 + $0x1ec] sm:%s169] %v424
                %v426 = vld [vmem:[%s176 + $0x7c0] sm:%s169]
                %427 = vst [vmem:[%s177 + $0x1f0] sm:%s169] %v426
                %v428 = vld [vmem:[%s176 + $0x7d0] sm:%s169]
                %429 = vst [vmem:[%s177 + $0x1f4] sm:%s169] %v428
                %v430 = vld [vmem:[%s176 + $0x7e0] sm:%s169]
                %431 = vst [vmem:[%s177 + $0x1f8] sm:%s169] %v430
                %v432 = vld [vmem:[%s176 + $0x7f0] sm:%s169]
                %433 = vst [vmem:[%s177 + $0x1fc] sm:%s169] %v432
                %v434 = vld [vmem:[%s176 + $0x800] sm:%s169]
                %435 = vst [vmem:[%s177 + $0x200] sm:%s169] %v434
                %v436 = vld [vmem:[%s176 + $0x810] sm:%s169]
                %437 = vst [vmem:[%s177 + $0x204] sm:%s169] %v436
                %v438 = vld [vmem:[%s176 + $0x820] sm:%s169]
                %439 = vst [vmem:[%s177 + $0x208] sm:%s169] %v438
                %v440 = vld [vmem:[%s176 + $0x830] sm:%s169]
                %441 = vst [vmem:[%s177 + $0x20c] sm:%s169] %v440
                %v442 = vld [vmem:[%s176 + $0x840] sm:%s169]
                %443 = vst [vmem:[%s177 + $0x210] sm:%s169] %v442
                %v444 = vld [vmem:[%s176 + $0x850] sm:%s169]
                %445 = vst [vmem:[%s177 + $0x214] sm:%s169] %v444
                %v446 = vld [vmem:[%s176 + $0x860] sm:%s169]
                %447 = vst [vmem:[%s177 + $0x218] sm:%s169] %v446
                %v448 = vld [vmem:[%s176 + $0x870] sm:%s169]
                %449 = vst [vmem:[%s177 + $0x21c] sm:%s169] %v448
                %v450 = vld [vmem:[%s176 + $0x880] sm:%s169]
                %451 = vst [vmem:[%s177 + $0x220] sm:%s169] %v450
                %v452 = vld [vmem:[%s176 + $0x890] sm:%s169]
                %453 = vst [vmem:[%s177 + $0x224] sm:%s169] %v452
                %v454 = vld [vmem:[%s176 + $0x8a0] sm:%s169]
                %455 = vst [vmem:[%s177 + $0x228] sm:%s169] %v454
                %v456 = vld [vmem:[%s176 + $0x8b0] sm:%s169]
                %457 = vst [vmem:[%s177 + $0x22c] sm:%s169] %v456
                %v458 = vld [vmem:[%s176 + $0x8c0] sm:%s169]
                %459 = vst [vmem:[%s177 + $0x230] sm:%s169] %v458
                %v460 = vld [vmem:[%s176 + $0x8d0] sm:%s169]
                %461 = vst [vmem:[%s177 + $0x234] sm:%s169] %v460
                %v462 = vld [vmem:[%s176 + $0x8e0] sm:%s169]
                %463 = vst [vmem:[%s177 + $0x238] sm:%s169] %v462
                %v464 = vld [vmem:[%s176 + $0x8f0] sm:%s169]
                %465 = vst [vmem:[%s177 + $0x23c] sm:%s169] %v464
                %v466 = vld [vmem:[%s176 + $0x900] sm:%s169]
                %467 = vst [vmem:[%s177 + $0x240] sm:%s169] %v466
                %v468 = vld [vmem:[%s176 + $0x910] sm:%s169]
                %469 = vst [vmem:[%s177 + $0x244] sm:%s169] %v468
                %v470 = vld [vmem:[%s176 + $0x920] sm:%s169]
                %471 = vst [vmem:[%s177 + $0x248] sm:%s169] %v470
                %v472 = vld [vmem:[%s176 + $0x930] sm:%s169]
                %473 = vst [vmem:[%s177 + $0x24c] sm:%s169] %v472
                %v474 = vld [vmem:[%s176 + $0x940] sm:%s169]
                %475 = vst [vmem:[%s177 + $0x250] sm:%s169] %v474
                %v476 = vld [vmem:[%s176 + $0x950] sm:%s169]
                %477 = vst [vmem:[%s177 + $0x254] sm:%s169] %v476
                %v478 = vld [vmem:[%s176 + $0x960] sm:%s169]
                %479 = vst [vmem:[%s177 + $0x258] sm:%s169] %v478
                %v480 = vld [vmem:[%s176 + $0x970] sm:%s169]
                %481 = vst [vmem:[%s177 + $0x25c] sm:%s169] %v480
                %v482 = vld [vmem:[%s176 + $0x980] sm:%s169]
                %483 = vst [vmem:[%s177 + $0x260] sm:%s169] %v482
                %v484 = vld [vmem:[%s176 + $0x990] sm:%s169]
                %485 = vst [vmem:[%s177 + $0x264] sm:%s169] %v484
                %v486 = vld [vmem:[%s176 + $0x9a0] sm:%s169]
                %487 = vst [vmem:[%s177 + $0x268] sm:%s169] %v486
                %v488 = vld [vmem:[%s176 + $0x9b0] sm:%s169]
                %489 = vst [vmem:[%s177 + $0x26c] sm:%s169] %v488
                %v490 = vld [vmem:[%s176 + $0x9c0] sm:%s169]
                %491 = vst [vmem:[%s177 + $0x270] sm:%s169] %v490
                %v492 = vld [vmem:[%s176 + $0x9d0] sm:%s169]
                %493 = vst [vmem:[%s177 + $0x274] sm:%s169] %v492
              $region49: #{resvesselnet_pallas.6} parent=43 // loop_footer
                %s175 = sadd.s32 1, %s171
              $region50: #{resvesselnet_pallas.6} parent=43 // loop_footer_branch
                %170 = sbr.rel target = $region46
              $region51: #{resvesselnet_pallas.6} parent=43 // loop_exit
                _
            $region44: #{resvesselnet_pallas.6} parent=35 // pred_fallthru
              _
          $region36: #{resvesselnet_pallas.6} parent=31 // pred_fallthru
            _
          %830 = vnop
        $region32: #{resvesselnet_pallas.6} parent=27 // pred_fallthru
          _
      $region28: #{resvesselnet_pallas.6} parent=5 // pred_fallthru
        _
      %p831 = scmp.le.s32.totalorder 1, %s10
      %p832 = scmp.lt.s32.totalorder %s10, 5
      %p833 = pnand %p831, %p832
      %p834 = pneg %p833
      // Predicated region
      $region70: #{resvesselnet_pallas.6} parent=5 // pred_check
        _
      $region71: #{resvesselnet_pallas.6} parent=5 // pred_check_branch
        %836 = sbr.rel (%p833) target = $region73
      $region72: #{resvesselnet_pallas.6} parent=5 // pred_region
        %s837 = ssub.s32 %s10, 1
        %s838 = sand.u32 %s23, 1
        %s839 = sand.u32 %s23, 1
        %s840 = smul.addr %s839, 632
        %s841 = scalar_lea.vmem [#allocation2], %s840
        // Predicated region
        $region74: #{resvesselnet_pallas.6} parent=72 // pred_check
          %p842 = pneg %p36
        $region75: #{resvesselnet_pallas.6} parent=72 // pred_check_branch
          %844 = sbr.rel (%p842) target = $region77
        $region76: #{resvesselnet_pallas.6} parent=72 // pred_region
          _
        $region77: #{resvesselnet_pallas.6} parent=72 // pred_fallthru
          _
        %s845 = sand.u32 %s23, 1
        %s846 = sand.u32 %s23, 1
        %s847 = smul.addr %s846, 632
        %s848 = scalar_lea.vmem [#allocation2], %s847
        %p849 = pneg %p36
        %p850 = pneg %p33
        %p851 = pneg %p57
        %p852 = pneg %p54
        %p853 = pneg %p78
        %p854 = pneg %p75
        %p855 = pneg %p99
        %p856 = pneg %p96
        %p857 = pneg %p125
        %p858 = pneg %p122
        %s859 = sand.u32 %s112, 1
        %s860 = sand.u32 %s112, 1
        %s861 = smul.addr %s860, 16
        %s862 = scalar_lea.vmem [#allocation3], %s861
        %v864 = vld [vmem:[%s3] sm:$0xf]
        %v865 = vld [vmem:[%s3 + $0x4] sm:$0xf]
        %v866 = vld [vmem:[%s3 + $0x8] sm:$0xf]
        %v867 = vld [vmem:[%s3 + $0xc] sm:$0xf]
        %v868 = vld [vmem:[%s841] sm:$0xf]
        %v869 = vld [vmem:[%s841 + $0x4] sm:$0x1]
        %v874 = vunpack.c.l.b16 %v864
        %v875 = vunpack.c.l.b16 %v865
        %v876 = vunpack.c.l.b16 %v866
        %v877 = vunpack.c.l.b16 %v867
        %v878 = vpack.c.b16 %v875, %v874
        %v879 = vpack.c.b16 %v877, %v876
        %v882 = vunpack.c.l.b16 %v868
        %v883 = vunpack.c.l.b16 %v869
        %v884 = vpack.c.b16 %v883, %v882
        %vm885 = vcmask 80896
        %v887 = vsel %vm885, %v878, 0
        %v890 = vsel %vm885, %v879, 0
        %vm892 = vcmask 1044480
        %v894 = vsel %vm892, %v884, 0
        %896 = vmatpush.bf16.msra.mxu0 0
        %897 = vmatpush.bf16.msra.mxu0 0
        %898 = vmatpush.bf16.msra.mxu0 0
        %899 = vmatpush.bf16.msra.mxu0 0
        %900 = vmatpush.bf16.msra.mxu0 0
        %901 = vmatpush.bf16.msra.mxu0 0
        %902 = vmatpush.bf16.msra.mxu0 0
        %903 = vmatpush.bf16.msra.mxu0 %v894
        %904 = vmatmul.bf16.gmra.mxu0 %v887
        %v905 = vpop.f32.mrf.mxu0
        %v906 = vadd.f32 0.0, %v905
        %v907 = vpop.f32.mrf.mxu0
        %v908 = vadd.f32 0.0, %v907
        %909 = vmatmul.bf16.gmra.mxu0 %v890
        %v910 = vpop.f32.mrf.mxu0
        %v911 = vadd.f32 0.0, %v910
        %v912 = vpop.f32.mrf.mxu0
        %v913 = vadd.f32 0.0, %v912
        %914 = vdwg.mxu0
        %v915 = vld [vmem:[%s1] sm:$0xff]
        %v916 = vld [vmem:[%s1 + $0x8] sm:$0xff]
        %v917 = vld [vmem:[%s1 + $0x10] sm:$0xff]
        %v918 = vld [vmem:[%s1 + $0x18] sm:$0xff]
        %v919 = vld [vmem:[%s1 + $0x20] sm:$0xff]
        %v920 = vld [vmem:[%s1 + $0x28] sm:$0xff]
        %v921 = vld [vmem:[%s1 + $0x30] sm:$0xff]
        %v922 = vld [vmem:[%s1 + $0x38] sm:$0xff]
        %v923 = vld [vmem:[%s1 + $0x40] sm:$0xff]
        %v924 = vld [vmem:[%s1 + $0x48] sm:$0xff]
        %v925 = vld [vmem:[%s1 + $0x50] sm:$0xff]
        %v926 = vld [vmem:[%s1 + $0x58] sm:$0xff]
        %v927 = vld [vmem:[%s1 + $0x60] sm:$0xff]
        %v928 = vld [vmem:[%s1 + $0x68] sm:$0xff]
        %v929 = vld [vmem:[%s1 + $0x70] sm:$0xff]
        %v930 = vld [vmem:[%s1 + $0x78] sm:$0xff]
        %v931 = vld [vmem:[%s1 + $0x80] sm:$0xff]
        %v932 = vld [vmem:[%s1 + $0x88] sm:$0xff]
        %v933 = vld [vmem:[%s1 + $0x90] sm:$0xff]
        %v934 = vld [vmem:[%s1 + $0x98] sm:$0xff]
        %v935 = vld [vmem:[%s841] sm:$0xf]
        %v936 = vld [vmem:[%s841 + $0x4] sm:$0xf]
        %v937 = vld [vmem:[%s841 + $0x8] sm:$0xf]
        %v938 = vld [vmem:[%s841 + $0xc] sm:$0xf]
        %v939 = vld [vmem:[%s841 + $0x10] sm:$0xf]
        %v940 = vld [vmem:[%s841 + $0x14] sm:$0xf]
        %v941 = vld [vmem:[%s841 + $0x18] sm:$0xf]
        %v942 = vld [vmem:[%s841 + $0x1c] sm:$0xf]
        %v943 = vld [vmem:[%s841 + $0x20] sm:$0xf]
        %v944 = vld [vmem:[%s841 + $0x24] sm:$0xf]
        %v945 = vld [vmem:[%s841 + $0x28] sm:$0xf]
        %v946 = vld [vmem:[%s841 + $0x2c] sm:$0xf]
        %v947 = vld [vmem:[%s841 + $0x30] sm:$0xf]
        %v948 = vld [vmem:[%s841 + $0x34] sm:$0xf]
        %v949 = vld [vmem:[%s841 + $0x38] sm:$0xf]
        %v950 = vld [vmem:[%s841 + $0x3c] sm:$0xf]
        %v951 = vld [vmem:[%s841 + $0x40] sm:$0xf]
        %v952 = vld [vmem:[%s841 + $0x44] sm:$0xf]
        %v953 = vld [vmem:[%s841 + $0x48] sm:$0xf]
        %v954 = vld [vmem:[%s841 + $0x4c] sm:$0xf]
        %v955 = vld [vmem:[%s841 + $0x50] sm:$0xf]
        %v956 = vld [vmem:[%s841 + $0x54] sm:$0xf]
        %v957 = vld [vmem:[%s841 + $0x58] sm:$0xf]
        %v958 = vld [vmem:[%s841 + $0x5c] sm:$0xf]
        %v959 = vld [vmem:[%s841 + $0x60] sm:$0xf]
        %v960 = vld [vmem:[%s841 + $0x64] sm:$0xf]
        %v961 = vld [vmem:[%s841 + $0x68] sm:$0xf]
        %v962 = vld [vmem:[%s841 + $0x6c] sm:$0xf]
        %v963 = vld [vmem:[%s841 + $0x70] sm:$0xf]
        %v964 = vld [vmem:[%s841 + $0x74] sm:$0xf]
        %v965 = vld [vmem:[%s841 + $0x78] sm:$0xf]
        %v966 = vld [vmem:[%s841 + $0x7c] sm:$0xf]
        %v967 = vld [vmem:[%s841 + $0x80] sm:$0xf]
        %v968 = vld [vmem:[%s841 + $0x84] sm:$0xf]
        %v969 = vld [vmem:[%s841 + $0x88] sm:$0xf]
        %v970 = vld [vmem:[%s841 + $0x8c] sm:$0xf]
        %v971 = vld [vmem:[%s841 + $0x90] sm:$0xf]
        %v972 = vld [vmem:[%s841 + $0x94] sm:$0xf]
        %v973 = vld [vmem:[%s841 + $0x98] sm:$0xf]
        %v974 = vld [vmem:[%s841 + $0x9c] sm:$0xf]
        %v975 = vld [vmem:[%s841 + $0xa0] sm:$0xf]
        %v976 = vld [vmem:[%s841 + $0xa4] sm:$0xf]
        %v977 = vld [vmem:[%s841 + $0xa8] sm:$0xf]
        %v978 = vld [vmem:[%s841 + $0xac] sm:$0xf]
        %v979 = vld [vmem:[%s841 + $0xb0] sm:$0xf]
        %v980 = vld [vmem:[%s841 + $0xb4] sm:$0xf]
        %v981 = vld [vmem:[%s841 + $0xb8] sm:$0xf]
        %v982 = vld [vmem:[%s841 + $0xbc] sm:$0xf]
        %v983 = vld [vmem:[%s841 + $0xc0] sm:$0xf]
        %v984 = vld [vmem:[%s841 + $0xc4] sm:$0xf]
        %v985 = vld [vmem:[%s841 + $0xc8] sm:$0xf]
        %v986 = vld [vmem:[%s841 + $0xcc] sm:$0xf]
        %v987 = vld [vmem:[%s841 + $0xd0] sm:$0xf]
        %v988 = vld [vmem:[%s841 + $0xd4] sm:$0xf]
        %v989 = vld [vmem:[%s841 + $0xd8] sm:$0xf]
        %v990 = vld [vmem:[%s841 + $0xdc] sm:$0xf]
        %v991 = vld [vmem:[%s841 + $0xe0] sm:$0xf]
        %v992 = vld [vmem:[%s841 + $0xe4] sm:$0xf]
        %v993 = vld [vmem:[%s841 + $0xe8] sm:$0xf]
        %v994 = vld [vmem:[%s841 + $0xec] sm:$0xf]
        %v995 = vld [vmem:[%s841 + $0xf0] sm:$0xf]
        %v996 = vld [vmem:[%s841 + $0xf4] sm:$0xf]
        %v997 = vld [vmem:[%s841 + $0xf8] sm:$0xf]
        %v998 = vld [vmem:[%s841 + $0xfc] sm:$0xf]
        %v999 = vld [vmem:[%s841 + $0x100] sm:$0xf]
        %v1000 = vld [vmem:[%s841 + $0x104] sm:$0xf]
        %v1001 = vld [vmem:[%s841 + $0x108] sm:$0xf]
        %v1002 = vld [vmem:[%s841 + $0x10c] sm:$0xf]
        %v1003 = vld [vmem:[%s841 + $0x110] sm:$0xf]
        %v1004 = vld [vmem:[%s841 + $0x114] sm:$0xf]
        %v1005 = vld [vmem:[%s841 + $0x118] sm:$0xf]
        %v1006 = vld [vmem:[%s841 + $0x11c] sm:$0xf]
        %v1007 = vld [vmem:[%s841 + $0x120] sm:$0xf]
        %v1008 = vld [vmem:[%s841 + $0x124] sm:$0xf]
        %v1009 = vld [vmem:[%s841 + $0x128] sm:$0xf]
        %v1010 = vld [vmem:[%s841 + $0x12c] sm:$0xf]
        %v1011 = vld [vmem:[%s841 + $0x130] sm:$0xf]
        %v1012 = vld [vmem:[%s841 + $0x134] sm:$0xf]
        %v1013 = vld [vmem:[%s841 + $0x138] sm:$0xf]
        %v1014 = vld [vmem:[%s841 + $0x13c] sm:$0xf]
        %v1015 = vld [vmem:[%s841 + $0x140] sm:$0xf]
        %v1016 = vld [vmem:[%s841 + $0x144] sm:$0xf]
        %v1017 = vld [vmem:[%s841 + $0x148] sm:$0xf]
        %v1018 = vld [vmem:[%s841 + $0x14c] sm:$0xf]
        %v1019 = vld [vmem:[%s841 + $0x150] sm:$0xf]
        %v1020 = vld [vmem:[%s841 + $0x154] sm:$0xf]
        %v1021 = vld [vmem:[%s841 + $0x158] sm:$0xf]
        %v1022 = vld [vmem:[%s841 + $0x15c] sm:$0xf]
        %v1023 = vld [vmem:[%s841 + $0x160] sm:$0xf]
        %v1024 = vld [vmem:[%s841 + $0x164] sm:$0xf]
        %v1025 = vld [vmem:[%s841 + $0x168] sm:$0xf]
        %v1026 = vld [vmem:[%s841 + $0x16c] sm:$0xf]
        %v1027 = vld [vmem:[%s841 + $0x170] sm:$0xf]
        %v1028 = vld [vmem:[%s841 + $0x174] sm:$0xf]
        %v1029 = vld [vmem:[%s841 + $0x178] sm:$0xf]
        %v1030 = vld [vmem:[%s841 + $0x17c] sm:$0xf]
        %v1031 = vld [vmem:[%s841 + $0x180] sm:$0xf]
        %v1032 = vld [vmem:[%s841 + $0x184] sm:$0xf]
        %v1033 = vld [vmem:[%s841 + $0x188] sm:$0xf]
        %v1034 = vld [vmem:[%s841 + $0x18c] sm:$0xf]
        %v1035 = vld [vmem:[%s841 + $0x190] sm:$0xf]
        %v1036 = vld [vmem:[%s841 + $0x194] sm:$0xf]
        %v1037 = vld [vmem:[%s841 + $0x198] sm:$0xf]
        %v1038 = vld [vmem:[%s841 + $0x19c] sm:$0xf]
        %v1039 = vld [vmem:[%s841 + $0x1a0] sm:$0xf]
        %v1040 = vld [vmem:[%s841 + $0x1a4] sm:$0xf]
        %v1041 = vld [vmem:[%s841 + $0x1a8] sm:$0xf]
        %v1042 = vld [vmem:[%s841 + $0x1ac] sm:$0xf]
        %v1043 = vld [vmem:[%s841 + $0x1b0] sm:$0xf]
        %v1044 = vld [vmem:[%s841 + $0x1b4] sm:$0xf]
        %v1045 = vld [vmem:[%s841 + $0x1b8] sm:$0xf]
        %v1046 = vld [vmem:[%s841 + $0x1bc] sm:$0xf]
        %v1047 = vld [vmem:[%s841 + $0x1c0] sm:$0xf]
        %v1048 = vld [vmem:[%s841 + $0x1c4] sm:$0xf]
        %v1049 = vld [vmem:[%s841 + $0x1c8] sm:$0xf]
        %v1050 = vld [vmem:[%s841 + $0x1cc] sm:$0xf]
        %v1051 = vld [vmem:[%s841 + $0x1d0] sm:$0xf]
        %v1052 = vld [vmem:[%s841 + $0x1d4] sm:$0xf]
        %v1053 = vld [vmem:[%s841 + $0x1d8] sm:$0xf]
        %v1054 = vld [vmem:[%s841 + $0x1dc] sm:$0xf]
        %v1055 = vld [vmem:[%s841 + $0x1e0] sm:$0xf]
        %v1056 = vld [vmem:[%s841 + $0x1e4] sm:$0xf]
        %v1057 = vld [vmem:[%s841 + $0x1e8] sm:$0xf]
        %v1058 = vld [vmem:[%s841 + $0x1ec] sm:$0xf]
        %v1059 = vld [vmem:[%s841 + $0x1f0] sm:$0xf]
        %v1060 = vld [vmem:[%s841 + $0x1f4] sm:$0xf]
        %v1061 = vld [vmem:[%s841 + $0x1f8] sm:$0xf]
        %v1062 = vld [vmem:[%s841 + $0x1fc] sm:$0xf]
        %v1063 = vld [vmem:[%s841 + $0x200] sm:$0xf]
        %v1064 = vld [vmem:[%s841 + $0x204] sm:$0xf]
        %v1065 = vld [vmem:[%s841 + $0x208] sm:$0xf]
        %v1066 = vld [vmem:[%s841 + $0x20c] sm:$0xf]
        %v1067 = vld [vmem:[%s841 + $0x210] sm:$0xf]
        %v1068 = vld [vmem:[%s841 + $0x214] sm:$0xf]
        %v1069 = vld [vmem:[%s841 + $0x218] sm:$0xf]
        %v1070 = vld [vmem:[%s841 + $0x21c] sm:$0xf]
        %v1071 = vld [vmem:[%s841 + $0x220] sm:$0xf]
        %v1072 = vld [vmem:[%s841 + $0x224] sm:$0xf]
        %v1073 = vld [vmem:[%s841 + $0x228] sm:$0xf]
        %v1074 = vld [vmem:[%s841 + $0x22c] sm:$0xf]
        %v1075 = vld [vmem:[%s841 + $0x230] sm:$0xf]
        %v1076 = vld [vmem:[%s841 + $0x234] sm:$0xf]
        %v1077 = vld [vmem:[%s841 + $0x238] sm:$0xf]
        %v1078 = vld [vmem:[%s841 + $0x23c] sm:$0xf]
        %v1079 = vld [vmem:[%s841 + $0x240] sm:$0xf]
        %v1080 = vld [vmem:[%s841 + $0x244] sm:$0xf]
        %v1081 = vld [vmem:[%s841 + $0x248] sm:$0xf]
        %v1082 = vld [vmem:[%s841 + $0x24c] sm:$0xf]
        %v1083 = vld [vmem:[%s841 + $0x250] sm:$0xf]
        %v1084 = vld [vmem:[%s841 + $0x254] sm:$0xf]
        %v1085 = vld [vmem:[%s841 + $0x258] sm:$0xf]
        %v1086 = vld [vmem:[%s841 + $0x25c] sm:$0xf]
        %v1087 = vld [vmem:[%s841 + $0x260] sm:$0xf]
        %v1088 = vld [vmem:[%s841 + $0x264] sm:$0xf]
        %v1089 = vld [vmem:[%s841 + $0x268] sm:$0xf]
        %v1090 = vld [vmem:[%s841 + $0x26c] sm:$0xf]
        %v1091 = vld [vmem:[%s841 + $0x270] sm:$0xf]
        %v1092 = vld [vmem:[%s841 + $0x274] sm:$0xf]
        %v1093 = vunpack.c.l.bf16 %v935
        %v1094 = vunpack.c.l.bf16 %v936
        %v1095 = vunpack.c.l.bf16 %v937
        %v1096 = vunpack.c.l.bf16 %v938
        %v1097 = vunpack.c.l.bf16 %v939
        %v1098 = vunpack.c.l.bf16 %v940
        %v1099 = vunpack.c.l.bf16 %v941
        %v1100 = vunpack.c.l.bf16 %v942
        %v1101 = vunpack.c.l.bf16 %v943
        %v1102 = vunpack.c.l.bf16 %v944
        %v1103 = vunpack.c.l.bf16 %v945
        %v1104 = vunpack.c.l.bf16 %v946
        %v1105 = vunpack.c.l.bf16 %v947
        %v1106 = vunpack.c.l.bf16 %v948
        %v1107 = vunpack.c.l.bf16 %v949
        %v1108 = vunpack.c.l.bf16 %v950
        %v1109 = vunpack.c.l.bf16 %v951
        %v1110 = vunpack.c.l.bf16 %v952
        %v1111 = vunpack.c.l.bf16 %v953
        %v1112 = vunpack.c.l.bf16 %v954
        %v1113 = vunpack.c.l.bf16 %v955
        %v1114 = vunpack.c.l.bf16 %v956
        %v1115 = vunpack.c.l.bf16 %v957
        %v1116 = vunpack.c.l.bf16 %v958
        %v1117 = vunpack.c.l.bf16 %v959
        %v1118 = vunpack.c.l.bf16 %v960
        %v1119 = vunpack.c.l.bf16 %v961
        %v1120 = vunpack.c.l.bf16 %v962
        %v1121 = vunpack.c.l.bf16 %v963
        %v1122 = vunpack.c.l.bf16 %v964
        %v1123 = vunpack.c.l.bf16 %v965
        %v1124 = vunpack.c.l.bf16 %v966
        %v1125 = vunpack.c.l.bf16 %v967
        %v1126 = vunpack.c.l.bf16 %v968
        %v1127 = vunpack.c.l.bf16 %v969
        %v1128 = vunpack.c.l.bf16 %v970
        %v1129 = vunpack.c.l.bf16 %v971
        %v1130 = vunpack.c.l.bf16 %v972
        %v1131 = vunpack.c.l.bf16 %v973
        %v1132 = vunpack.c.l.bf16 %v974
        %v1133 = vunpack.c.l.bf16 %v975
        %v1134 = vunpack.c.l.bf16 %v976
        %v1135 = vunpack.c.l.bf16 %v977
        %v1136 = vunpack.c.l.bf16 %v978
        %v1137 = vunpack.c.l.bf16 %v979
        %v1138 = vunpack.c.l.bf16 %v980
        %v1139 = vunpack.c.l.bf16 %v981
        %v1140 = vunpack.c.l.bf16 %v982
        %v1141 = vunpack.c.l.bf16 %v983
        %v1142 = vunpack.c.l.bf16 %v984
        %v1143 = vunpack.c.l.bf16 %v985
        %v1144 = vunpack.c.l.bf16 %v986
        %v1145 = vunpack.c.l.bf16 %v987
        %v1146 = vunpack.c.l.bf16 %v988
        %v1147 = vunpack.c.l.bf16 %v989
        %v1148 = vunpack.c.l.bf16 %v990
        %v1149 = vunpack.c.l.bf16 %v991
        %v1150 = vunpack.c.l.bf16 %v992
        %v1151 = vunpack.c.l.bf16 %v993
        %v1152 = vunpack.c.l.bf16 %v994
        %v1153 = vunpack.c.l.bf16 %v995
        %v1154 = vunpack.c.l.bf16 %v996
        %v1155 = vunpack.c.l.bf16 %v997
        %v1156 = vunpack.c.l.bf16 %v998
        %v1157 = vunpack.c.l.bf16 %v999
        %v1158 = vunpack.c.l.bf16 %v1000
        %v1159 = vunpack.c.l.bf16 %v1001
        %v1160 = vunpack.c.l.bf16 %v1002
        %v1161 = vunpack.c.l.bf16 %v1003
        %v1162 = vunpack.c.l.bf16 %v1004
        %v1163 = vunpack.c.l.bf16 %v1005
        %v1164 = vunpack.c.l.bf16 %v1006
        %v1165 = vunpack.c.l.bf16 %v1007
        %v1166 = vunpack.c.l.bf16 %v1008
        %v1167 = vunpack.c.l.bf16 %v1009
        %v1168 = vunpack.c.l.bf16 %v1010
        %v1169 = vunpack.c.l.bf16 %v1011
        %v1170 = vunpack.c.l.bf16 %v1012
        %v1171 = vunpack.c.l.bf16 %v1013
        %v1172 = vunpack.c.l.bf16 %v1014
        %v1173 = vunpack.c.l.bf16 %v1015
        %v1174 = vunpack.c.l.bf16 %v1016
        %v1175 = vunpack.c.l.bf16 %v1017
        %v1176 = vunpack.c.l.bf16 %v1018
        %v1177 = vunpack.c.l.bf16 %v1019
        %v1178 = vunpack.c.l.bf16 %v1020
        %v1179 = vunpack.c.l.bf16 %v1021
        %v1180 = vunpack.c.l.bf16 %v1022
        %v1181 = vunpack.c.l.bf16 %v1023
        %v1182 = vunpack.c.l.bf16 %v1024
        %v1183 = vunpack.c.l.bf16 %v1025
        %v1184 = vunpack.c.l.bf16 %v1026
        %v1185 = vunpack.c.l.bf16 %v1027
        %v1186 = vunpack.c.l.bf16 %v1028
        %v1187 = vunpack.c.l.bf16 %v1029
        %v1188 = vunpack.c.l.bf16 %v1030
        %v1189 = vunpack.c.l.bf16 %v1031
        %v1190 = vunpack.c.l.bf16 %v1032
        %v1191 = vunpack.c.l.bf16 %v1033
        %v1192 = vunpack.c.l.bf16 %v1034
        %v1193 = vunpack.c.l.bf16 %v1035
        %v1194 = vunpack.c.l.bf16 %v1036
        %v1195 = vunpack.c.l.bf16 %v1037
        %v1196 = vunpack.c.l.bf16 %v1038
        %v1197 = vunpack.c.l.bf16 %v1039
        %v1198 = vunpack.c.l.bf16 %v1040
        %v1199 = vunpack.c.l.bf16 %v1041
        %v1200 = vunpack.c.l.bf16 %v1042
        %v1201 = vunpack.c.l.bf16 %v1043
        %v1202 = vunpack.c.l.bf16 %v1044
        %v1203 = vunpack.c.l.bf16 %v1045
        %v1204 = vunpack.c.l.bf16 %v1046
        %v1205 = vunpack.c.l.bf16 %v1047
        %v1206 = vunpack.c.l.bf16 %v1048
        %v1207 = vunpack.c.l.bf16 %v1049
        %v1208 = vunpack.c.l.bf16 %v1050
        %v1209 = vunpack.c.l.bf16 %v1051
        %v1210 = vunpack.c.l.bf16 %v1052
        %v1211 = vunpack.c.l.bf16 %v1053
        %v1212 = vunpack.c.l.bf16 %v1054
        %v1213 = vunpack.c.l.bf16 %v1055
        %v1214 = vunpack.c.l.bf16 %v1056
        %v1215 = vunpack.c.l.bf16 %v1057
        %v1216 = vunpack.c.l.bf16 %v1058
        %v1217 = vunpack.c.l.bf16 %v1059
        %v1218 = vunpack.c.l.bf16 %v1060
        %v1219 = vunpack.c.l.bf16 %v1061
        %v1220 = vunpack.c.l.bf16 %v1062
        %v1221 = vunpack.c.l.bf16 %v1063
        %v1222 = vunpack.c.l.bf16 %v1064
        %v1223 = vunpack.c.l.bf16 %v1065
        %v1224 = vunpack.c.l.bf16 %v1066
        %v1225 = vunpack.c.l.bf16 %v1067
        %v1226 = vunpack.c.l.bf16 %v1068
        %v1227 = vunpack.c.l.bf16 %v1069
        %v1228 = vunpack.c.l.bf16 %v1070
        %v1229 = vunpack.c.l.bf16 %v1071
        %v1230 = vunpack.c.l.bf16 %v1072
        %v1231 = vunpack.c.l.bf16 %v1073
        %v1232 = vunpack.c.l.bf16 %v1074
        %v1233 = vunpack.c.l.bf16 %v1075
        %v1234 = vunpack.c.l.bf16 %v1076
        %v1235 = vunpack.c.l.bf16 %v1077
        %v1236 = vunpack.c.l.bf16 %v1078
        %v1237 = vunpack.c.l.bf16 %v1079
        %v1238 = vunpack.c.l.bf16 %v1080
        %v1239 = vunpack.c.l.bf16 %v1081
        %v1240 = vunpack.c.l.bf16 %v1082
        %v1241 = vunpack.c.l.bf16 %v1083
        %v1242 = vunpack.c.l.bf16 %v1084
        %v1243 = vunpack.c.l.bf16 %v1085
        %v1244 = vunpack.c.l.bf16 %v1086
        %v1245 = vunpack.c.l.bf16 %v1087
        %v1246 = vunpack.c.l.bf16 %v1088
        %v1247 = vunpack.c.l.bf16 %v1089
        %v1248 = vunpack.c.l.bf16 %v1090
        %v1249 = vunpack.c.l.bf16 %v1091
        %v1250 = vunpack.c.l.bf16 %v1092
        %v1251 = vmax.f32 %v1093, 0.0
        %v1252 = vmax.f32 %v1094, 0.0
        %v1253 = vmax.f32 %v1095, 0.0
        %v1254 = vmax.f32 %v1096, 0.0
        %v1255 = vmax.f32 %v1097, 0.0
        %v1256 = vmax.f32 %v1098, 0.0
        %v1257 = vmax.f32 %v1099, 0.0
        %v1258 = vmax.f32 %v1100, 0.0
        %v1259 = vmax.f32 %v1101, 0.0
        %v1260 = vmax.f32 %v1102, 0.0
        %v1261 = vmax.f32 %v1103, 0.0
        %v1262 = vmax.f32 %v1104, 0.0
        %v1263 = vmax.f32 %v1105, 0.0
        %v1264 = vmax.f32 %v1106, 0.0
        %v1265 = vmax.f32 %v1107, 0.0
        %v1266 = vmax.f32 %v1108, 0.0
        %v1267 = vmax.f32 %v1109, 0.0
        %v1268 = vmax.f32 %v1110, 0.0
        %v1269 = vmax.f32 %v1111, 0.0
        %v1270 = vmax.f32 %v1112, 0.0
        %v1271 = vmax.f32 %v1113, 0.0
        %v1272 = vmax.f32 %v1114, 0.0
        %v1273 = vmax.f32 %v1115, 0.0
        %v1274 = vmax.f32 %v1116, 0.0
        %v1275 = vmax.f32 %v1117, 0.0
        %v1276 = vmax.f32 %v1118, 0.0
        %v1277 = vmax.f32 %v1119, 0.0
        %v1278 = vmax.f32 %v1120, 0.0
        %v1279 = vmax.f32 %v1121, 0.0
        %v1280 = vmax.f32 %v1122, 0.0
        %v1281 = vmax.f32 %v1123, 0.0
        %v1282 = vmax.f32 %v1124, 0.0
        %v1283 = vmax.f32 %v1125, 0.0
        %v1284 = vmax.f32 %v1126, 0.0
        %v1285 = vmax.f32 %v1127, 0.0
        %v1286 = vmax.f32 %v1128, 0.0
        %v1287 = vmax.f32 %v1129, 0.0
        %v1288 = vmax.f32 %v1130, 0.0
        %v1289 = vmax.f32 %v1131, 0.0
        %v1290 = vmax.f32 %v1132, 0.0
        %v1291 = vmax.f32 %v1133, 0.0
        %v1292 = vmax.f32 %v1134, 0.0
        %v1293 = vmax.f32 %v1135, 0.0
        %v1294 = vmax.f32 %v1136, 0.0
        %v1295 = vmax.f32 %v1137, 0.0
        %v1296 = vmax.f32 %v1138, 0.0
        %v1297 = vmax.f32 %v1139, 0.0
        %v1298 = vmax.f32 %v1140, 0.0
        %v1299 = vmax.f32 %v1141, 0.0
        %v1300 = vmax.f32 %v1142, 0.0
        %v1301 = vmax.f32 %v1143, 0.0
        %v1302 = vmax.f32 %v1144, 0.0
        %v1303 = vmax.f32 %v1145, 0.0
        %v1304 = vmax.f32 %v1146, 0.0
        %v1305 = vmax.f32 %v1147, 0.0
        %v1306 = vmax.f32 %v1148, 0.0
        %v1307 = vmax.f32 %v1149, 0.0
        %v1308 = vmax.f32 %v1150, 0.0
        %v1309 = vmax.f32 %v1151, 0.0
        %v1310 = vmax.f32 %v1152, 0.0
        %v1311 = vmax.f32 %v1153, 0.0
        %v1312 = vmax.f32 %v1154, 0.0
        %v1313 = vmax.f32 %v1155, 0.0
        %v1314 = vmax.f32 %v1156, 0.0
        %v1315 = vmax.f32 %v1157, 0.0
        %v1316 = vmax.f32 %v1158, 0.0
        %v1317 = vmax.f32 %v1159, 0.0
        %v1318 = vmax.f32 %v1160, 0.0
        %v1319 = vmax.f32 %v1161, 0.0
        %v1320 = vmax.f32 %v1162, 0.0
        %v1321 = vmax.f32 %v1163, 0.0
        %v1322 = vmax.f32 %v1164, 0.0
        %v1323 = vmax.f32 %v1165, 0.0
        %v1324 = vmax.f32 %v1166, 0.0
        %v1325 = vmax.f32 %v1167, 0.0
        %v1326 = vmax.f32 %v1168, 0.0
        %v1327 = vmax.f32 %v1169, 0.0
        %v1328 = vmax.f32 %v1170, 0.0
        %v1329 = vmax.f32 %v1171, 0.0
        %v1330 = vmax.f32 %v1172, 0.0
        %v1331 = vmax.f32 %v1173, 0.0
        %v1332 = vmax.f32 %v1174, 0.0
        %v1333 = vmax.f32 %v1175, 0.0
        %v1334 = vmax.f32 %v1176, 0.0
        %v1335 = vmax.f32 %v1177, 0.0
        %v1336 = vmax.f32 %v1178, 0.0
        %v1337 = vmax.f32 %v1179, 0.0
        %v1338 = vmax.f32 %v1180, 0.0
        %v1339 = vmax.f32 %v1181, 0.0
        %v1340 = vmax.f32 %v1182, 0.0
        %v1341 = vmax.f32 %v1183, 0.0
        %v1342 = vmax.f32 %v1184, 0.0
        %v1343 = vmax.f32 %v1185, 0.0
        %v1344 = vmax.f32 %v1186, 0.0
        %v1345 = vmax.f32 %v1187, 0.0
        %v1346 = vmax.f32 %v1188, 0.0
        %v1347 = vmax.f32 %v1189, 0.0
        %v1348 = vmax.f32 %v1190, 0.0
        %v1349 = vmax.f32 %v1191, 0.0
        %v1350 = vmax.f32 %v1192, 0.0
        %v1351 = vmax.f32 %v1193, 0.0
        %v1352 = vmax.f32 %v1194, 0.0
        %v1353 = vmax.f32 %v1195, 0.0
        %v1354 = vmax.f32 %v1196, 0.0
        %v1355 = vmax.f32 %v1197, 0.0
        %v1356 = vmax.f32 %v1198, 0.0
        %v1357 = vmax.f32 %v1199, 0.0
        %v1358 = vmax.f32 %v1200, 0.0
        %v1359 = vmax.f32 %v1201, 0.0
        %v1360 = vmax.f32 %v1202, 0.0
        %v1361 = vmax.f32 %v1203, 0.0
        %v1362 = vmax.f32 %v1204, 0.0
        %v1363 = vmax.f32 %v1205, 0.0
        %v1364 = vmax.f32 %v1206, 0.0
        %v1365 = vmax.f32 %v1207, 0.0
        %v1366 = vmax.f32 %v1208, 0.0
        %v1367 = vmax.f32 %v1209, 0.0
        %v1368 = vmax.f32 %v1210, 0.0
        %v1369 = vmax.f32 %v1211, 0.0
        %v1370 = vmax.f32 %v1212, 0.0
        %v1371 = vmax.f32 %v1213, 0.0
        %v1372 = vmax.f32 %v1214, 0.0
        %v1373 = vmax.f32 %v1215, 0.0
        %v1374 = vmax.f32 %v1216, 0.0
        %v1375 = vmax.f32 %v1217, 0.0
        %v1376 = vmax.f32 %v1218, 0.0
        %v1377 = vmax.f32 %v1219, 0.0
        %v1378 = vmax.f32 %v1220, 0.0
        %v1379 = vmax.f32 %v1221, 0.0
        %v1380 = vmax.f32 %v1222, 0.0
        %v1381 = vmax.f32 %v1223, 0.0
        %v1382 = vmax.f32 %v1224, 0.0
        %v1383 = vmax.f32 %v1225, 0.0
        %v1384 = vmax.f32 %v1226, 0.0
        %v1385 = vmax.f32 %v1227, 0.0
        %v1386 = vmax.f32 %v1228, 0.0
        %v1387 = vmax.f32 %v1229, 0.0
        %v1388 = vmax.f32 %v1230, 0.0
        %v1389 = vmax.f32 %v1231, 0.0
        %v1390 = vmax.f32 %v1232, 0.0
        %v1391 = vmax.f32 %v1233, 0.0
        %v1392 = vmax.f32 %v1234, 0.0
        %v1393 = vmax.f32 %v1235, 0.0
        %v1394 = vmax.f32 %v1236, 0.0
        %v1395 = vmax.f32 %v1237, 0.0
        %v1396 = vmax.f32 %v1238, 0.0
        %v1397 = vmax.f32 %v1239, 0.0
        %v1398 = vmax.f32 %v1240, 0.0
        %v1399 = vmax.f32 %v1241, 0.0
        %v1400 = vmax.f32 %v1242, 0.0
        %v1401 = vmax.f32 %v1243, 0.0
        %v1402 = vmax.f32 %v1244, 0.0
        %v1403 = vmax.f32 %v1245, 0.0
        %v1404 = vmax.f32 %v1246, 0.0
        %v1405 = vmax.f32 %v1247, 0.0
        %v1406 = vmax.f32 %v1248, 0.0
        %v1407 = vmax.f32 %v1249, 0.0
        %v1408 = vmax.f32 %v1250, 0.0
        %v1409 = vpack.c.bf16 %v1252, %v1251
        %v1410 = vpack.c.bf16 %v1254, %v1253
        %v1411 = vpack.c.bf16 %v1256, %v1255
        %v1412 = vpack.c.bf16 %v1258, %v1257
        %v1413 = vpack.c.bf16 %v1260, %v1259
        %v1414 = vpack.c.bf16 %v1262, %v1261
        %v1415 = vpack.c.bf16 %v1264, %v1263
        %v1416 = vpack.c.bf16 %v1266, %v1265
        %v1417 = vpack.c.bf16 %v1268, %v1267
        %v1418 = vpack.c.bf16 %v1270, %v1269
        %v1419 = vpack.c.bf16 %v1272, %v1271
        %v1420 = vpack.c.bf16 %v1274, %v1273
        %v1421 = vpack.c.bf16 %v1276, %v1275
        %v1422 = vpack.c.bf16 %v1278, %v1277
        %v1423 = vpack.c.bf16 %v1280, %v1279
        %v1424 = vpack.c.bf16 %v1282, %v1281
        %v1425 = vpack.c.bf16 %v1284, %v1283
        %v1426 = vpack.c.bf16 %v1286, %v1285
        %v1427 = vpack.c.bf16 %v1288, %v1287
        %v1428 = vpack.c.bf16 %v1290, %v1289
        %v1429 = vpack.c.bf16 %v1292, %v1291
        %v1430 = vpack.c.bf16 %v1294, %v1293
        %v1431 = vpack.c.bf16 %v1296, %v1295
        %v1432 = vpack.c.bf16 %v1298, %v1297
        %v1433 = vpack.c.bf16 %v1300, %v1299
        %v1434 = vpack.c.bf16 %v1302, %v1301
        %v1435 = vpack.c.bf16 %v1304, %v1303
        %v1436 = vpack.c.bf16 %v1306, %v1305
        %v1437 = vpack.c.bf16 %v1308, %v1307
        %v1438 = vpack.c.bf16 %v1310, %v1309
        %v1439 = vpack.c.bf16 %v1312, %v1311
        %v1440 = vpack.c.bf16 %v1314, %v1313
        %v1441 = vpack.c.bf16 %v1316, %v1315
        %v1442 = vpack.c.bf16 %v1318, %v1317
        %v1443 = vpack.c.bf16 %v1320, %v1319
        %v1444 = vpack.c.bf16 %v1322, %v1321
        %v1445 = vpack.c.bf16 %v1324, %v1323
        %v1446 = vpack.c.bf16 %v1326, %v1325
        %v1447 = vpack.c.bf16 %v1328, %v1327
        %v1448 = vpack.c.bf16 %v1330, %v1329
        %v1449 = vpack.c.bf16 %v1332, %v1331
        %v1450 = vpack.c.bf16 %v1334, %v1333
        %v1451 = vpack.c.bf16 %v1336, %v1335
        %v1452 = vpack.c.bf16 %v1338, %v1337
        %v1453 = vpack.c.bf16 %v1340, %v1339
        %v1454 = vpack.c.bf16 %v1342, %v1341
        %v1455 = vpack.c.bf16 %v1344, %v1343
        %v1456 = vpack.c.bf16 %v1346, %v1345
        %v1457 = vpack.c.bf16 %v1348, %v1347
        %v1458 = vpack.c.bf16 %v1350, %v1349
        %v1459 = vpack.c.bf16 %v1352, %v1351
        %v1460 = vpack.c.bf16 %v1354, %v1353
        %v1461 = vpack.c.bf16 %v1356, %v1355
        %v1462 = vpack.c.bf16 %v1358, %v1357
        %v1463 = vpack.c.bf16 %v1360, %v1359
        %v1464 = vpack.c.bf16 %v1362, %v1361
        %v1465 = vpack.c.bf16 %v1364, %v1363
        %v1466 = vpack.c.bf16 %v1366, %v1365
        %v1467 = vpack.c.bf16 %v1368, %v1367
        %v1468 = vpack.c.bf16 %v1370, %v1369
        %v1469 = vpack.c.bf16 %v1372, %v1371
        %v1470 = vpack.c.bf16 %v1374, %v1373
        %v1471 = vpack.c.bf16 %v1376, %v1375
        %v1472 = vpack.c.bf16 %v1378, %v1377
        %v1473 = vpack.c.bf16 %v1380, %v1379
        %v1474 = vpack.c.bf16 %v1382, %v1381
        %v1475 = vpack.c.bf16 %v1384, %v1383
        %v1476 = vpack.c.bf16 %v1386, %v1385
        %v1477 = vpack.c.bf16 %v1388, %v1387
        %v1478 = vpack.c.bf16 %v1390, %v1389
        %v1479 = vpack.c.bf16 %v1392, %v1391
        %v1480 = vpack.c.bf16 %v1394, %v1393
        %v1481 = vpack.c.bf16 %v1396, %v1395
        %v1482 = vpack.c.bf16 %v1398, %v1397
        %v1483 = vpack.c.bf16 %v1400, %v1399
        %v1484 = vpack.c.bf16 %v1402, %v1401
        %v1485 = vpack.c.bf16 %v1404, %v1403
        %v1486 = vpack.c.bf16 %v1406, %v1405
        %v1487 = vpack.c.bf16 %v1408, %v1407
        %v1488 = vld [vmem:[%s2] sm:$0xff]
        %v1489 = vld [vmem:[%s2 + $0x8] sm:$0xff]
        %v1490 = vld [vmem:[%s2 + $0x10] sm:$0xff]
        %v1491 = vld [vmem:[%s2 + $0x18] sm:$0xff]
        %1493 = vset.pattern.permute.xlu0 0
        %1494 = vperm.xlu0 %1493, %v1488
        %v1495 = vpop.permute.xlu0 %1494
        %1498 = vset.pattern.permute.xlu0 0
        %1499 = vperm.xlu0 %1498, %v1489
        %v1500 = vpop.permute.xlu0 %1499
        %1503 = vset.pattern.permute.xlu0 0
        %1504 = vperm.xlu0 %1503, %v1490
        %v1505 = vpop.permute.xlu0 %1504
        %1508 = vset.pattern.permute.xlu0 0
        %1509 = vperm.xlu0 %1508, %v1491
        %v1510 = vpop.permute.xlu0 %1509
        %v1532 = vunpack.c.l.b16 %v915
        %v1533 = vunpack.c.h.b16 %v915
        %v1534 = vunpack.c.l.b16 %v916
        %v1535 = vunpack.c.h.b16 %v916
        %v1536 = vunpack.c.l.b16 %v917
        %v1537 = vunpack.c.h.b16 %v917
        %v1538 = vunpack.c.l.b16 %v918
        %v1539 = vunpack.c.h.b16 %v918
        %v1540 = vunpack.c.l.b16 %v919
        %v1541 = vunpack.c.h.b16 %v919
        %v1542 = vunpack.c.l.b16 %v920
        %v1543 = vunpack.c.h.b16 %v920
        %v1544 = vunpack.c.l.b16 %v921
        %v1545 = vunpack.c.h.b16 %v921
        %v1546 = vunpack.c.l.b16 %v922
        %v1547 = vunpack.c.h.b16 %v922
        %v1548 = vunpack.c.l.b16 %v923
        %v1549 = vunpack.c.h.b16 %v923
        %v1550 = vunpack.c.l.b16 %v924
        %v1551 = vunpack.c.h.b16 %v924
        %v1552 = vunpack.c.l.b16 %v925
        %v1553 = vunpack.c.h.b16 %v925
        %v1554 = vunpack.c.l.b16 %v926
        %v1555 = vunpack.c.h.b16 %v926
        %v1556 = vunpack.c.l.b16 %v927
        %v1557 = vunpack.c.h.b16 %v927
        %v1558 = vunpack.c.l.b16 %v928
        %v1559 = vunpack.c.h.b16 %v928
        %v1560 = vunpack.c.l.b16 %v929
        %v1561 = vunpack.c.h.b16 %v929
        %v1562 = vunpack.c.l.b16 %v930
        %v1563 = vunpack.c.h.b16 %v930
        %v1564 = vunpack.c.l.b16 %v931
        %v1565 = vunpack.c.h.b16 %v931
        %v1566 = vunpack.c.l.b16 %v932
        %v1567 = vunpack.c.h.b16 %v932
        %v1568 = vunpack.c.l.b16 %v933
        %v1569 = vunpack.c.h.b16 %v933
        %v1570 = vunpack.c.l.b16 %v934
        %v1571 = vunpack.c.h.b16 %v934
        %v1572 = vpack.c.b16 %v1542, %v1532
        %v1573 = vpack.c.b16 %v1543, %v1533
        %v1574 = vpack.c.b16 %v1544, %v1534
        %v1575 = vpack.c.b16 %v1545, %v1535
        %v1576 = vpack.c.b16 %v1546, %v1536
        %v1577 = vpack.c.b16 %v1547, %v1537
        %v1578 = vpack.c.b16 %v1548, %v1538
        %v1579 = vpack.c.b16 %v1549, %v1539
        %v1580 = vpack.c.b16 %v1550, %v1540
        %v1581 = vpack.c.b16 %v1551, %v1541
        %v1582 = vpack.c.b16 %v1562, %v1552
        %v1583 = vpack.c.b16 %v1563, %v1553
        %v1584 = vpack.c.b16 %v1564, %v1554
        %v1585 = vpack.c.b16 %v1565, %v1555
        %v1586 = vpack.c.b16 %v1566, %v1556
        %v1587 = vpack.c.b16 %v1567, %v1557
        %v1588 = vpack.c.b16 %v1568, %v1558
        %v1589 = vpack.c.b16 %v1569, %v1559
        %v1590 = vpack.c.b16 %v1570, %v1560
        %v1591 = vpack.c.b16 %v1571, %v1561
        %vm1610 = vcmask 916480
        %v1612 = vsel %vm1610, %v1581, 0
        %v1615 = vsel %vm1610, %v1591, 0
        %1617 = vmatpush.bf16.msra.mxu0 %v1416
        %1618 = vmatpush.bf16.msra.mxu0 %v1415
        %1619 = vmatpush.bf16.msra.mxu0 %v1414
        %1620 = vmatpush.bf16.msra.mxu0 %v1413
        %1621 = vmatpush.bf16.msra.mxu0 %v1412
        %1622 = vmatpush.bf16.msra.mxu0 %v1411
        %1623 = vmatpush.bf16.msra.mxu0 %v1410
        %1624 = vmatpush.bf16.msra.mxu0 %v1409
        %1625 = vmatmul.bf16.gmra.mxu0 %v1572
        %v1626 = vpop.f32.mrf.mxu0
        %v1627 = vadd.f32 %v1495, %v1626
        %v1628 = vpop.f32.mrf.mxu0
        %v1629 = vadd.f32 %v1500, %v1628
        %1630 = vmatmul.bf16.gmra.mxu0 %v1582
        %v1631 = vpop.f32.mrf.mxu0
        %v1632 = vadd.f32 %v1505, %v1631
        %v1633 = vpop.f32.mrf.mxu0
        %v1634 = vadd.f32 %v1510, %v1633
        %1635 = vdwg.mxu0
        %1636 = vmatpush.bf16.msra.mxu0 %v1424
        %1637 = vmatpush.bf16.msra.mxu0 %v1423
        %1638 = vmatpush.bf16.msra.mxu0 %v1422
        %1639 = vmatpush.bf16.msra.mxu0 %v1421
        %1640 = vmatpush.bf16.msra.mxu0 %v1420
        %1641 = vmatpush.bf16.msra.mxu0 %v1419
        %1642 = vmatpush.bf16.msra.mxu0 %v1418
        %1643 = vmatpush.bf16.msra.mxu0 %v1417
        %1644 = vmatmul.bf16.gmra.mxu0 %v1573
        %v1645 = vpop.f32.mrf.mxu0
        %v1646 = vadd.f32 %v1627, %v1645
        %v1647 = vpop.f32.mrf.mxu0
        %v1648 = vadd.f32 %v1629, %v1647
        %1649 = vmatmul.bf16.gmra.mxu0 %v1583
        %v1650 = vpop.f32.mrf.mxu0
        %v1651 = vadd.f32 %v1632, %v1650
        %v1652 = vpop.f32.mrf.mxu0
        %v1653 = vadd.f32 %v1634, %v1652
        %1654 = vdwg.mxu0
        %1655 = vmatpush.bf16.msra.mxu0 %v1432
        %1656 = vmatpush.bf16.msra.mxu0 %v1431
        %1657 = vmatpush.bf16.msra.mxu0 %v1430
        %1658 = vmatpush.bf16.msra.mxu0 %v1429
        %1659 = vmatpush.bf16.msra.mxu0 %v1428
        %1660 = vmatpush.bf16.msra.mxu0 %v1427
        %1661 = vmatpush.bf16.msra.mxu0 %v1426
        %1662 = vmatpush.bf16.msra.mxu0 %v1425
        %1663 = vmatmul.bf16.gmra.mxu0 %v1574
        %v1664 = vpop.f32.mrf.mxu0
        %v1665 = vadd.f32 %v1646, %v1664
        %v1666 = vpop.f32.mrf.mxu0
        %v1667 = vadd.f32 %v1648, %v1666
        %1668 = vmatmul.bf16.gmra.mxu0 %v1584
        %v1669 = vpop.f32.mrf.mxu0
        %v1670 = vadd.f32 %v1651, %v1669
        %v1671 = vpop.f32.mrf.mxu0
        %v1672 = vadd.f32 %v1653, %v1671
        %1673 = vdwg.mxu0
        %1674 = vmatpush.bf16.msra.mxu0 %v1440
        %1675 = vmatpush.bf16.msra.mxu0 %v1439
        %1676 = vmatpush.bf16.msra.mxu0 %v1438
        %1677 = vmatpush.bf16.msra.mxu0 %v1437
        %1678 = vmatpush.bf16.msra.mxu0 %v1436
        %1679 = vmatpush.bf16.msra.mxu0 %v1435
        %1680 = vmatpush.bf16.msra.mxu0 %v1434
        %1681 = vmatpush.bf16.msra.mxu0 %v1433
        %1682 = vmatmul.bf16.gmra.mxu0 %v1575
        %v1683 = vpop.f32.mrf.mxu0
        %v1684 = vadd.f32 %v1665, %v1683
        %v1685 = vpop.f32.mrf.mxu0
        %v1686 = vadd.f32 %v1667, %v1685
        %1687 = vmatmul.bf16.gmra.mxu0 %v1585
        %v1688 = vpop.f32.mrf.mxu0
        %v1689 = vadd.f32 %v1670, %v1688
        %v1690 = vpop.f32.mrf.mxu0
        %v1691 = vadd.f32 %v1672, %v1690
        %1692 = vdwg.mxu0
        %1693 = vmatpush.bf16.msra.mxu0 %v1448
        %1694 = vmatpush.bf16.msra.mxu0 %v1447
        %1695 = vmatpush.bf16.msra.mxu0 %v1446
        %1696 = vmatpush.bf16.msra.mxu0 %v1445
        %1697 = vmatpush.bf16.msra.mxu0 %v1444
        %1698 = vmatpush.bf16.msra.mxu0 %v1443
        %1699 = vmatpush.bf16.msra.mxu0 %v1442
        %1700 = vmatpush.bf16.msra.mxu0 %v1441
        %1701 = vmatmul.bf16.gmra.mxu0 %v1576
        %v1702 = vpop.f32.mrf.mxu0
        %v1703 = vadd.f32 %v1684, %v1702
        %v1704 = vpop.f32.mrf.mxu0
        %v1705 = vadd.f32 %v1686, %v1704
        %1706 = vmatmul.bf16.gmra.mxu0 %v1586
        %v1707 = vpop.f32.mrf.mxu0
        %v1708 = vadd.f32 %v1689, %v1707
        %v1709 = vpop.f32.mrf.mxu0
        %v1710 = vadd.f32 %v1691, %v1709
        %1711 = vdwg.mxu0
        %1712 = vmatpush.bf16.msra.mxu0 %v1456
        %1713 = vmatpush.bf16.msra.mxu0 %v1455
        %1714 = vmatpush.bf16.msra.mxu0 %v1454
        %1715 = vmatpush.bf16.msra.mxu0 %v1453
        %1716 = vmatpush.bf16.msra.mxu0 %v1452
        %1717 = vmatpush.bf16.msra.mxu0 %v1451
        %1718 = vmatpush.bf16.msra.mxu0 %v1450
        %1719 = vmatpush.bf16.msra.mxu0 %v1449
        %1720 = vmatmul.bf16.gmra.mxu0 %v1577
        %v1721 = vpop.f32.mrf.mxu0
        %v1722 = vadd.f32 %v1703, %v1721
        %v1723 = vpop.f32.mrf.mxu0
        %v1724 = vadd.f32 %v1705, %v1723
        %1725 = vmatmul.bf16.gmra.mxu0 %v1587
        %v1726 = vpop.f32.mrf.mxu0
        %v1727 = vadd.f32 %v1708, %v1726
        %v1728 = vpop.f32.mrf.mxu0
        %v1729 = vadd.f32 %v1710, %v1728
        %1730 = vdwg.mxu0
        %1731 = vmatpush.bf16.msra.mxu0 %v1464
        %1732 = vmatpush.bf16.msra.mxu0 %v1463
        %1733 = vmatpush.bf16.msra.mxu0 %v1462
        %1734 = vmatpush.bf16.msra.mxu0 %v1461
        %1735 = vmatpush.bf16.msra.mxu0 %v1460
        %1736 = vmatpush.bf16.msra.mxu0 %v1459
        %1737 = vmatpush.bf16.msra.mxu0 %v1458
        %1738 = vmatpush.bf16.msra.mxu0 %v1457
        %1739 = vmatmul.bf16.gmra.mxu0 %v1578
        %v1740 = vpop.f32.mrf.mxu0
        %v1741 = vadd.f32 %v1722, %v1740
        %v1742 = vpop.f32.mrf.mxu0
        %v1743 = vadd.f32 %v1724, %v1742
        %1744 = vmatmul.bf16.gmra.mxu0 %v1588
        %v1745 = vpop.f32.mrf.mxu0
        %v1746 = vadd.f32 %v1727, %v1745
        %v1747 = vpop.f32.mrf.mxu0
        %v1748 = vadd.f32 %v1729, %v1747
        %1749 = vdwg.mxu0
        %1750 = vmatpush.bf16.msra.mxu0 %v1472
        %1751 = vmatpush.bf16.msra.mxu0 %v1471
        %1752 = vmatpush.bf16.msra.mxu0 %v1470
        %1753 = vmatpush.bf16.msra.mxu0 %v1469
        %1754 = vmatpush.bf16.msra.mxu0 %v1468
        %1755 = vmatpush.bf16.msra.mxu0 %v1467
        %1756 = vmatpush.bf16.msra.mxu0 %v1466
        %1757 = vmatpush.bf16.msra.mxu0 %v1465
        %1758 = vmatmul.bf16.gmra.mxu0 %v1579
        %v1759 = vpop.f32.mrf.mxu0
        %v1760 = vadd.f32 %v1741, %v1759
        %v1761 = vpop.f32.mrf.mxu0
        %v1762 = vadd.f32 %v1743, %v1761
        %1763 = vmatmul.bf16.gmra.mxu0 %v1589
        %v1764 = vpop.f32.mrf.mxu0
        %v1765 = vadd.f32 %v1746, %v1764
        %v1766 = vpop.f32.mrf.mxu0
        %v1767 = vadd.f32 %v1748, %v1766
        %1768 = vdwg.mxu0
        %1769 = vmatpush.bf16.msra.mxu0 %v1480
        %1770 = vmatpush.bf16.msra.mxu0 %v1479
        %1771 = vmatpush.bf16.msra.mxu0 %v1478
        %1772 = vmatpush.bf16.msra.mxu0 %v1477
        %1773 = vmatpush.bf16.msra.mxu0 %v1476
        %1774 = vmatpush.bf16.msra.mxu0 %v1475
        %1775 = vmatpush.bf16.msra.mxu0 %v1474
        %1776 = vmatpush.bf16.msra.mxu0 %v1473
        %1777 = vmatmul.bf16.gmra.mxu0 %v1580
        %v1778 = vpop.f32.mrf.mxu0
        %v1779 = vadd.f32 %v1760, %v1778
        %v1780 = vpop.f32.mrf.mxu0
        %v1781 = vadd.f32 %v1762, %v1780
        %1782 = vmatmul.bf16.gmra.mxu0 %v1590
        %v1783 = vpop.f32.mrf.mxu0
        %v1784 = vadd.f32 %v1765, %v1783
        %v1785 = vpop.f32.mrf.mxu0
        %v1786 = vadd.f32 %v1767, %v1785
        %1787 = vdwg.mxu0
        %1788 = vmatpush.bf16.msra.mxu0 0
        %1789 = vmatpush.bf16.msra.mxu0 %v1487
        %1790 = vmatpush.bf16.msra.mxu0 %v1486
        %1791 = vmatpush.bf16.msra.mxu0 %v1485
        %1792 = vmatpush.bf16.msra.mxu0 %v1484
        %1793 = vmatpush.bf16.msra.mxu0 %v1483
        %1794 = vmatpush.bf16.msra.mxu0 %v1482
        %1795 = vmatpush.bf16.msra.mxu0 %v1481
        %1796 = vmatmul.bf16.gmra.mxu0 %v1612
        %v1797 = vpop.f32.mrf.mxu0
        %v1798 = vadd.f32 %v1779, %v1797
        %v1799 = vpop.f32.mrf.mxu0
        %v1800 = vadd.f32 %v1781, %v1799
        %1801 = vmatmul.bf16.gmra.mxu0 %v1615
        %v1802 = vpop.f32.mrf.mxu0
        %v1803 = vadd.f32 %v1784, %v1802
        %v1804 = vpop.f32.mrf.mxu0
        %v1805 = vadd.f32 %v1786, %v1804
        %1806 = vdwg.mxu0
        %v1807 = vadd.f32 %v1798, %v906
        %v1808 = vadd.f32 %v1800, %v908
        %v1809 = vadd.f32 %v1803, %v911
        %v1810 = vadd.f32 %v1805, %v913
        %v1811 = vpack.c.bf16 %v1807, %v1807
        %v1812 = vpack.c.bf16 %v1808, %v1808
        %v1813 = vpack.c.bf16 %v1809, %v1809
        %v1814 = vpack.c.bf16 %v1810, %v1810
        %1815 = vst [vmem:[%s862] sm:$0xf] %v1811
        %1816 = vst [vmem:[%s862 + $0x4] sm:$0xf] %v1812
        %1817 = vst [vmem:[%s862 + $0x8] sm:$0xf] %v1813
        %1818 = vst [vmem:[%s862 + $0xc] sm:$0xf] %v1814
        %s1819 = sand.u32 %s112, 1
        %s1820 = sand.u32 %s112, 1
        %s1821 = smul.addr %s1820, 16
        %s1822 = scalar_lea.vmem [#allocation3], %s1821
        // Predicated region
        $region78: #{resvesselnet_pallas.6} parent=72 // pred_check
          %p1823 = pneg %p122
        $region79: #{resvesselnet_pallas.6} parent=72 // pred_check_branch
          %1825 = sbr.rel (%p1823) target = $region81
        $region80: #{resvesselnet_pallas.6} parent=72 // pred_region
          %s1826 = smul.addr %s15, 4
          %s1827 = scalar_lea.vmem %s4, %s1826
          // Predicated region
          $region82: #{resvesselnet_pallas.6} parent=80 // pred_check
            _
          $region83: #{resvesselnet_pallas.6} parent=80 // pred_check_branch
            %1829 = sbr.rel (0) target = $region85
          $region84: #{resvesselnet_pallas.6} parent=80 // pred_region
            // Predicated region
            $region86: #{resvesselnet_pallas.6} parent=84 // pred_check
              _
            $region87: #{resvesselnet_pallas.6} parent=84 // pred_check_branch
              %1831 = sbr.rel target = $region89
            $region88: #{resvesselnet_pallas.6} parent=84 // pred_region
              // Predicated region
              $region101: #{resvesselnet_pallas.6} parent=88 // pred_check
                _
              $region102: #{resvesselnet_pallas.6} parent=88 // pred_check_branch
                %1853 = sbr.rel (0) target = $region104
              $region103: #{resvesselnet_pallas.6} parent=88 // pred_region
                loop: start=0, step=1, limit=1
                $region105: #{resvesselnet_pallas.6} parent=103 // loop_pre_header
                  _
                $region106: #{resvesselnet_pallas.6} parent=103 // loop_header
                  %s1855 = sphi 0, %s1859
                  %p1856 = scmp.ge.s32.totalorder %s1855, 1
                  %s1860 = sphi %s1822, %s1822
                  %s1861 = sphi %s1827, %s1827
                $region107: #{resvesselnet_pallas.6} parent=103 // loop_header_branch
                  %1858 = sbr.rel (%p1856) target = $region111
                $region108: #{resvesselnet_pallas.6} parent=103 // loop_body
                  _
                $region109: #{resvesselnet_pallas.6} parent=103 // loop_footer
                  %s1859 = sadd.s32 1, %s1855
                $region110: #{resvesselnet_pallas.6} parent=103 // loop_footer_branch
                  %1854 = sbr.rel target = $region106
                $region111: #{resvesselnet_pallas.6} parent=103 // loop_exit
                  _
                %s1863 = ssub.s32 16, 1
                loop: start=0, step=1, limit=1
                $region112: #{resvesselnet_pallas.6} parent=103 // loop_pre_header
                  _
                $region113: #{resvesselnet_pallas.6} parent=103 // loop_header
                  %s1865 = sphi 0, %s1869
                  %p1866 = scmp.ge.s32.totalorder %s1865, 1
                  %s1870 = sphi %s1822, %s1822
                  %s1871 = sphi %s1827, %s1827
                $region114: #{resvesselnet_pallas.6} parent=103 // loop_header_branch
                  %1868 = sbr.rel (%p1866) target = $region118
                $region115: #{resvesselnet_pallas.6} parent=103 // loop_body
                  %v1872 = vld [vmem:[%s1870] sm:%s1863]
                  %1873 = vst [vmem:[%s1871] sm:%s1863] %v1872
                  %v1874 = vld [vmem:[%s1870 + $0x4] sm:%s1863]
                  %1875 = vst [vmem:[%s1871 + $0x10] sm:%s1863] %v1874
                  %v1876 = vld [vmem:[%s1870 + $0x8] sm:%s1863]
                  %1877 = vst [vmem:[%s1871 + $0x20] sm:%s1863] %v1876
                  %v1878 = vld [vmem:[%s1870 + $0xc] sm:%s1863]
                  %1879 = vst [vmem:[%s1871 + $0x30] sm:%s1863] %v1878
                $region116: #{resvesselnet_pallas.6} parent=103 // loop_footer
                  %s1869 = sadd.s32 1, %s1865
                $region117: #{resvesselnet_pallas.6} parent=103 // loop_footer_branch
                  %1864 = sbr.rel target = $region113
                $region118: #{resvesselnet_pallas.6} parent=103 // loop_exit
                  _
              $region104: #{resvesselnet_pallas.6} parent=88 // pred_fallthru
                _
            $region89: #{resvesselnet_pallas.6} parent=84 // pred_fallthru
              _
            // Predicated region
            $region90: #{resvesselnet_pallas.6} parent=84 // pred_check
              _
            $region91: #{resvesselnet_pallas.6} parent=84 // pred_check_branch
              %1833 = sbr.rel (0) target = $region93
            $region92: #{resvesselnet_pallas.6} parent=84 // pred_region
              %s1835 = ssub.s32 16, 1
              loop: start=0, step=1, limit=1
              $region94: #{resvesselnet_pallas.6} parent=92 // loop_pre_header
                _
              $region95: #{resvesselnet_pallas.6} parent=92 // loop_header
                %s1837 = sphi 0, %s1841
                %p1838 = scmp.ge.s32.totalorder %s1837, 1
                %s1842 = sphi %s1822, %s1822
                %s1843 = sphi %s1827, %s1827
              $region96: #{resvesselnet_pallas.6} parent=92 // loop_header_branch
                %1840 = sbr.rel (%p1838) target = $region100
              $region97: #{resvesselnet_pallas.6} parent=92 // loop_body
                %v1844 = vld [vmem:[%s1842] sm:%s1835]
                %1845 = vst [vmem:[%s1843] sm:%s1835] %v1844
                %v1846 = vld [vmem:[%s1842 + $0x4] sm:%s1835]
                %1847 = vst [vmem:[%s1843 + $0x10] sm:%s1835] %v1846
                %v1848 = vld [vmem:[%s1842 + $0x8] sm:%s1835]
                %1849 = vst [vmem:[%s1843 + $0x20] sm:%s1835] %v1848
                %v1850 = vld [vmem:[%s1842 + $0xc] sm:%s1835]
                %1851 = vst [vmem:[%s1843 + $0x30] sm:%s1835] %v1850
              $region98: #{resvesselnet_pallas.6} parent=92 // loop_footer
                %s1841 = sadd.s32 1, %s1837
              $region99: #{resvesselnet_pallas.6} parent=92 // loop_footer_branch
                %1836 = sbr.rel target = $region95
              $region100: #{resvesselnet_pallas.6} parent=92 // loop_exit
                _
            $region93: #{resvesselnet_pallas.6} parent=84 // pred_fallthru
              _
          $region85: #{resvesselnet_pallas.6} parent=80 // pred_fallthru
            _
          %1880 = vnop
        $region81: #{resvesselnet_pallas.6} parent=72 // pred_fallthru
          _
      $region73: #{resvesselnet_pallas.6} parent=5 // pred_fallthru
        _
      %p1881 = scmp.le.s32.totalorder 2, %s10
      // Predicated region
      $region119: #{resvesselnet_pallas.6} parent=5 // pred_check
        %p1882 = pneg %p1881
      $region120: #{resvesselnet_pallas.6} parent=5 // pred_check_branch
        %1884 = sbr.rel (%p1882) target = $region122
      $region121: #{resvesselnet_pallas.6} parent=5 // pred_region
        %s1885 = ssub.s32 %s10, 2
        // Predicated region
        $region123: #{resvesselnet_pallas.6} parent=121 // pred_check
          %p1886 = pneg %p128
        $region124: #{resvesselnet_pallas.6} parent=121 // pred_check_branch
          %1888 = sbr.rel (%p1886) target = $region126
        $region125: #{resvesselnet_pallas.6} parent=121 // pred_region
          %s1889 = sand.u32 %s113, 1
          %s1890 = sand.u32 %s113, 1
          %s1891 = smul.addr %s1890, 16
          %s1892 = scalar_lea.vmem [#allocation3], %s1891
        $region126: #{resvesselnet_pallas.6} parent=121 // pred_fallthru
          _
      $region122: #{resvesselnet_pallas.6} parent=5 // pred_fallthru
        _
    $region6: #{resvesselnet_pallas.6} parent=1 // loop_footer
      %s14 = sadd.s32 1, %s10
    $region7: #{resvesselnet_pallas.6} parent=1 // loop_footer_branch
      %9 = sbr.rel target = $region3
    $region8: #{resvesselnet_pallas.6} parent=1 // loop_exit
      _

// kernel: resvesselnet_pallas.7
$region0: #{resvesselnet_pallas.7}
  #allocation0 [shape = 'u32[]', space=smem, size = 0x4, offset = 0x4, fixed_abs, tag = 'smem constant byte address 0x4 - core index']
  #allocation1 [shape = 'u32[72,128]{1,0:T(1,128)}', space=vmem, size = 0x9000, scoped, tag = 'internal scratch']
  %s0 = inlined_call_operand.vmem [shape: bf16[544,128], index: 0, kind: input, shape index: {}]
  %s1 = inlined_call_operand.vmem [shape: bf16[56,544], index: 1, kind: input, shape index: {}]
  %s2 = inlined_call_operand.vmem [shape: f32[56,1], index: 2, kind: input, shape index: {}]
  %s3 = inlined_call_operand.vmem [shape: bf16[56,20], index: 3, kind: input, shape index: {}]
  %s4 = inlined_call_operand.vmem [shape: bf16[8,56], index: 4, kind: input, shape index: {}]
  %s5 = inlined_call_operand.vmem [shape: f32[8,1], index: 5, kind: input, shape index: {}]
  %s6 = inlined_call_operand.vmem [shape: f32[8,128], index: 6, kind: output, shape index: {}]
  %s7 = sld [smem:[#allocation0]]
  $region34: #{resvesselnet_pallas.7} parent=0
    _
  %s9 = ssub.s32 1, %s7
  %s10 = scalar_select 0, %s9, %s7
  // Predicated region
  $region2: #{resvesselnet_pallas.7} parent=0 // pred_check
    _
  $region3: #{resvesselnet_pallas.7} parent=0 // pred_check_branch
    %12 = sbr.rel (0) target = $region5
  $region4: #{resvesselnet_pallas.7} parent=0 // pred_region
    _
  $region5: #{resvesselnet_pallas.7} parent=0 // pred_fallthru
    _
  // Predicated region
  $region6: #{resvesselnet_pallas.7} parent=0 // pred_check
    _
  $region7: #{resvesselnet_pallas.7} parent=0 // pred_check_branch
    %14 = sbr.rel (0) target = $region9
  $region8: #{resvesselnet_pallas.7} parent=0 // pred_region
    _
  $region9: #{resvesselnet_pallas.7} parent=0 // pred_fallthru
    _
  // Predicated region
  $region10: #{resvesselnet_pallas.7} parent=0 // pred_check
    _
  $region11: #{resvesselnet_pallas.7} parent=0 // pred_check_branch
    %16 = sbr.rel (0) target = $region13
  $region12: #{resvesselnet_pallas.7} parent=0 // pred_region
    _
  $region13: #{resvesselnet_pallas.7} parent=0 // pred_fallthru
    _
  // Predicated region
  $region14: #{resvesselnet_pallas.7} parent=0 // pred_check
    _
  $region15: #{resvesselnet_pallas.7} parent=0 // pred_check_branch
    %18 = sbr.rel (0) target = $region17
  $region16: #{resvesselnet_pallas.7} parent=0 // pred_region
    _
  $region17: #{resvesselnet_pallas.7} parent=0 // pred_fallthru
    _
  // Predicated region
  $region18: #{resvesselnet_pallas.7} parent=0 // pred_check
    _
  $region19: #{resvesselnet_pallas.7} parent=0 // pred_check_branch
    %20 = sbr.rel (0) target = $region21
  $region20: #{resvesselnet_pallas.7} parent=0 // pred_region
    _
  $region21: #{resvesselnet_pallas.7} parent=0 // pred_fallthru
    _
  // Predicated region
  $region22: #{resvesselnet_pallas.7} parent=0 // pred_check
    _
  $region23: #{resvesselnet_pallas.7} parent=0 // pred_check_branch
    %22 = sbr.rel (0) target = $region25
  $region24: #{resvesselnet_pallas.7} parent=0 // pred_region
    _
  $region25: #{resvesselnet_pallas.7} parent=0 // pred_fallthru
    _
  %v24 = vld [vmem:[%s3] sm:$0xf]
  %v25 = vld [vmem:[%s3 + $0x4] sm:$0xf]
  %v26 = vld [vmem:[%s3 + $0x8] sm:$0xf]
  %v27 = vld [vmem:[%s3 + $0xc] sm:$0xf]
  %v28 = vld [vmem:[%s3 + $0x10] sm:$0xf]
  %v29 = vld [vmem:[%s3 + $0x14] sm:$0xf]
  %v30 = vld [vmem:[%s3 + $0x18] sm:$0xf]
  %v31 = vld [vmem:[%s0] sm:$0xf]
  %v32 = vld [vmem:[%s0 + $0x4] sm:$0xf]
  %v33 = vld [vmem:[%s0 + $0x8] sm:$0x3]
  %v41 = vunpack.c.l.b16 %v24
  %v42 = vunpack.c.l.b16 %v25
  %v43 = vunpack.c.l.b16 %v26
  %v44 = vunpack.c.l.b16 %v27
  %v45 = vunpack.c.l.b16 %v28
  %v46 = vunpack.c.l.b16 %v29
  %v47 = vunpack.c.l.b16 %v30
  %v48 = vpack.c.b16 %v42, %v41
  %v49 = vpack.c.b16 %v44, %v43
  %v50 = vpack.c.b16 %v46, %v45
  %v51 = vpack.c.b16 %v47, %v47
  %v55 = vunpack.c.l.b16 %v31
  %v56 = vunpack.c.l.b16 %v32
  %v57 = vunpack.c.l.b16 %v33
  %v58 = vpack.c.b16 %v56, %v55
  %v59 = vpack.c.b16 %v57, %v57
  %vm61 = vcmask 162816
  %v63 = vsel %vm61, %v48, 0
  %v66 = vsel %vm61, %v49, 0
  %v69 = vsel %vm61, %v50, 0
  %v72 = vsel %vm61, %v51, 0
  %vm74 = vcmask 1041408
  %v76 = vsel %vm74, %v59, 0
  %78 = vmatpush.bf16.msra.mxu0 0
  %79 = vmatpush.bf16.msra.mxu0 0
  %80 = vmatpush.bf16.msra.mxu0 0
  %81 = vmatpush.bf16.msra.mxu0 0
  %82 = vmatpush.bf16.msra.mxu0 0
  %83 = vmatpush.bf16.msra.mxu0 0
  %84 = vmatpush.bf16.msra.mxu0 %v76
  %85 = vmatpush.bf16.msra.mxu0 %v58
  %86 = vmatmul.bf16.gmra.mxu0 %v63
  %v87 = vpop.f32.mrf.mxu0
  %v88 = vadd.f32 0.0, %v87
  %v89 = vpop.f32.mrf.mxu0
  %v90 = vadd.f32 0.0, %v89
  %91 = vmatmul.bf16.gmra.mxu0 %v66
  %v92 = vpop.f32.mrf.mxu0
  %v93 = vadd.f32 0.0, %v92
  %v94 = vpop.f32.mrf.mxu0
  %v95 = vadd.f32 0.0, %v94
  %96 = vmatmul.bf16.gmra.mxu0 %v69
  %v97 = vpop.f32.mrf.mxu0
  %v98 = vadd.f32 0.0, %v97
  %v99 = vpop.f32.mrf.mxu0
  %v100 = vadd.f32 0.0, %v99
  %101 = vmatmul.bf16.gmra.mxu0 %v72
  %v102 = vpop.f32.mrf.mxu0
  %v103 = vadd.f32 0.0, %v102
  %v104 = vpop.f32.mrf.mxu0
  %105 = vdwg.mxu0
  %v106 = vld [vmem:[%s1] sm:$0xff]
  %v107 = vld [vmem:[%s1 + $0x8] sm:$0xff]
  %v108 = vld [vmem:[%s1 + $0x10] sm:$0xf]
  %v109 = vld [vmem:[%s1 + $0x14] sm:$0xff]
  %v110 = vld [vmem:[%s1 + $0x1c] sm:$0xff]
  %v111 = vld [vmem:[%s1 + $0x24] sm:$0xf]
  %v112 = vld [vmem:[%s1 + $0x28] sm:$0xff]
  %v113 = vld [vmem:[%s1 + $0x30] sm:$0xff]
  %v114 = vld [vmem:[%s1 + $0x38] sm:$0xf]
  %v115 = vld [vmem:[%s1 + $0x3c] sm:$0xff]
  %v116 = vld [vmem:[%s1 + $0x44] sm:$0xff]
  %v117 = vld [vmem:[%s1 + $0x4c] sm:$0xf]
  %v118 = vld [vmem:[%s1 + $0x50] sm:$0xff]
  %v119 = vld [vmem:[%s1 + $0x58] sm:$0xff]
  %v120 = vld [vmem:[%s1 + $0x60] sm:$0xf]
  %v121 = vld [vmem:[%s1 + $0x64] sm:$0xff]
  %v122 = vld [vmem:[%s1 + $0x6c] sm:$0xff]
  %v123 = vld [vmem:[%s1 + $0x74] sm:$0xf]
  %v124 = vld [vmem:[%s1 + $0x78] sm:$0xff]
  %v125 = vld [vmem:[%s1 + $0x80] sm:$0xff]
  %v126 = vld [vmem:[%s1 + $0x88] sm:$0xf]
  %v127 = vld [vmem:[%s0] sm:$0xf]
  %v128 = vld [vmem:[%s0 + $0x4] sm:$0xf]
  %v129 = vld [vmem:[%s0 + $0x8] sm:$0xf]
  %v130 = vld [vmem:[%s0 + $0xc] sm:$0xf]
  %v131 = vld [vmem:[%s0 + $0x10] sm:$0xf]
  %v132 = vld [vmem:[%s0 + $0x14] sm:$0xf]
  %v133 = vld [vmem:[%s0 + $0x18] sm:$0xf]
  %v134 = vld [vmem:[%s0 + $0x1c] sm:$0xf]
  %v135 = vld [vmem:[%s0 + $0x20] sm:$0xf]
  %v136 = vld [vmem:[%s0 + $0x24] sm:$0xf]
  %v137 = vld [vmem:[%s0 + $0x28] sm:$0xf]
  %v138 = vld [vmem:[%s0 + $0x2c] sm:$0xf]
  %v139 = vld [vmem:[%s0 + $0x30] sm:$0xf]
  %v140 = vld [vmem:[%s0 + $0x34] sm:$0xf]
  %v141 = vld [vmem:[%s0 + $0x38] sm:$0xf]
  %v142 = vld [vmem:[%s0 + $0x3c] sm:$0xf]
  %v143 = vld [vmem:[%s0 + $0x40] sm:$0xf]
  %v144 = vld [vmem:[%s0 + $0x44] sm:$0xf]
  %v145 = vld [vmem:[%s0 + $0x48] sm:$0xf]
  %v146 = vld [vmem:[%s0 + $0x4c] sm:$0xf]
  %v147 = vld [vmem:[%s0 + $0x50] sm:$0xf]
  %v148 = vld [vmem:[%s0 + $0x54] sm:$0xf]
  %v149 = vld [vmem:[%s0 + $0x58] sm:$0xf]
  %v150 = vld [vmem:[%s0 + $0x5c] sm:$0xf]
  %v151 = vld [vmem:[%s0 + $0x60] sm:$0xf]
  %v152 = vld [vmem:[%s0 + $0x64] sm:$0xf]
  %v153 = vld [vmem:[%s0 + $0x68] sm:$0xf]
  %v154 = vld [vmem:[%s0 + $0x6c] sm:$0xf]
  %v155 = vld [vmem:[%s0 + $0x70] sm:$0xf]
  %v156 = vld [vmem:[%s0 + $0x74] sm:$0xf]
  %v157 = vld [vmem:[%s0 + $0x78] sm:$0xf]
  %v158 = vld [vmem:[%s0 + $0x7c] sm:$0xf]
  %v159 = vld [vmem:[%s0 + $0x80] sm:$0xf]
  %v160 = vld [vmem:[%s0 + $0x84] sm:$0xf]
  %v161 = vld [vmem:[%s0 + $0x88] sm:$0xf]
  %v162 = vld [vmem:[%s0 + $0x8c] sm:$0xf]
  %v163 = vld [vmem:[%s0 + $0x90] sm:$0xf]
  %v164 = vld [vmem:[%s0 + $0x94] sm:$0xf]
  %v165 = vld [vmem:[%s0 + $0x98] sm:$0xf]
  %v166 = vld [vmem:[%s0 + $0x9c] sm:$0xf]
  %v167 = vld [vmem:[%s0 + $0xa0] sm:$0xf]
  %v168 = vld [vmem:[%s0 + $0xa4] sm:$0xf]
  %v169 = vld [vmem:[%s0 + $0xa8] sm:$0xf]
  %v170 = vld [vmem:[%s0 + $0xac] sm:$0xf]
  %v171 = vld [vmem:[%s0 + $0xb0] sm:$0xf]
  %v172 = vld [vmem:[%s0 + $0xb4] sm:$0xf]
  %v173 = vld [vmem:[%s0 + $0xb8] sm:$0xf]
  %v174 = vld [vmem:[%s0 + $0xbc] sm:$0xf]
  %v175 = vld [vmem:[%s0 + $0xc0] sm:$0xf]
  %v176 = vld [vmem:[%s0 + $0xc4] sm:$0xf]
  %v177 = vld [vmem:[%s0 + $0xc8] sm:$0xf]
  %v178 = vld [vmem:[%s0 + $0xcc] sm:$0xf]
  %v179 = vld [vmem:[%s0 + $0xd0] sm:$0xf]
  %v180 = vld [vmem:[%s0 + $0xd4] sm:$0xf]
  %v181 = vld [vmem:[%s0 + $0xd8] sm:$0xf]
  %v182 = vld [vmem:[%s0 + $0xdc] sm:$0xf]
  %v183 = vld [vmem:[%s0 + $0xe0] sm:$0xf]
  %v184 = vld [vmem:[%s0 + $0xe4] sm:$0xf]
  %v185 = vld [vmem:[%s0 + $0xe8] sm:$0xf]
  %v186 = vld [vmem:[%s0 + $0xec] sm:$0xf]
  %v187 = vld [vmem:[%s0 + $0xf0] sm:$0xf]
  %v188 = vld [vmem:[%s0 + $0xf4] sm:$0xf]
  %v189 = vld [vmem:[%s0 + $0xf8] sm:$0xf]
  %v190 = vld [vmem:[%s0 + $0xfc] sm:$0xf]
  %v191 = vld [vmem:[%s0 + $0x100] sm:$0xf]
  %v192 = vld [vmem:[%s0 + $0x104] sm:$0xf]
  %v193 = vld [vmem:[%s0 + $0x108] sm:$0xf]
  %v194 = vld [vmem:[%s0 + $0x10c] sm:$0xf]
  %v195 = vunpack.c.l.bf16 %v127
  %v196 = vunpack.c.l.bf16 %v128
  %v197 = vunpack.c.l.bf16 %v129
  %v198 = vunpack.c.l.bf16 %v130
  %v199 = vunpack.c.l.bf16 %v131
  %v200 = vunpack.c.l.bf16 %v132
  %v201 = vunpack.c.l.bf16 %v133
  %v202 = vunpack.c.l.bf16 %v134
  %v203 = vunpack.c.l.bf16 %v135
  %v204 = vunpack.c.l.bf16 %v136
  %v205 = vunpack.c.l.bf16 %v137
  %v206 = vunpack.c.l.bf16 %v138
  %v207 = vunpack.c.l.bf16 %v139
  %v208 = vunpack.c.l.bf16 %v140
  %v209 = vunpack.c.l.bf16 %v141
  %v210 = vunpack.c.l.bf16 %v142
  %v211 = vunpack.c.l.bf16 %v143
  %v212 = vunpack.c.l.bf16 %v144
  %v213 = vunpack.c.l.bf16 %v145
  %v214 = vunpack.c.l.bf16 %v146
  %v215 = vunpack.c.l.bf16 %v147
  %v216 = vunpack.c.l.bf16 %v148
  %v217 = vunpack.c.l.bf16 %v149
  %v218 = vunpack.c.l.bf16 %v150
  %v219 = vunpack.c.l.bf16 %v151
  %v220 = vunpack.c.l.bf16 %v152
  %v221 = vunpack.c.l.bf16 %v153
  %v222 = vunpack.c.l.bf16 %v154
  %v223 = vunpack.c.l.bf16 %v155
  %v224 = vunpack.c.l.bf16 %v156
  %v225 = vunpack.c.l.bf16 %v157
  %v226 = vunpack.c.l.bf16 %v158
  %v227 = vunpack.c.l.bf16 %v159
  %v228 = vunpack.c.l.bf16 %v160
  %v229 = vunpack.c.l.bf16 %v161
  %v230 = vunpack.c.l.bf16 %v162
  %v231 = vunpack.c.l.bf16 %v163
  %v232 = vunpack.c.l.bf16 %v164
  %v233 = vunpack.c.l.bf16 %v165
  %v234 = vunpack.c.l.bf16 %v166
  %v235 = vunpack.c.l.bf16 %v167
  %v236 = vunpack.c.l.bf16 %v168
  %v237 = vunpack.c.l.bf16 %v169
  %v238 = vunpack.c.l.bf16 %v170
  %v239 = vunpack.c.l.bf16 %v171
  %v240 = vunpack.c.l.bf16 %v172
  %v241 = vunpack.c.l.bf16 %v173
  %v242 = vunpack.c.l.bf16 %v174
  %v243 = vunpack.c.l.bf16 %v175
  %v244 = vunpack.c.l.bf16 %v176
  %v245 = vunpack.c.l.bf16 %v177
  %v246 = vunpack.c.l.bf16 %v178
  %v247 = vunpack.c.l.bf16 %v179
  %v248 = vunpack.c.l.bf16 %v180
  %v249 = vunpack.c.l.bf16 %v181
  %v250 = vunpack.c.l.bf16 %v182
  %v251 = vunpack.c.l.bf16 %v183
  %v252 = vunpack.c.l.bf16 %v184
  %v253 = vunpack.c.l.bf16 %v185
  %v254 = vunpack.c.l.bf16 %v186
  %v255 = vunpack.c.l.bf16 %v187
  %v256 = vunpack.c.l.bf16 %v188
  %v257 = vunpack.c.l.bf16 %v189
  %v258 = vunpack.c.l.bf16 %v190
  %v259 = vunpack.c.l.bf16 %v191
  %v260 = vunpack.c.l.bf16 %v192
  %v261 = vunpack.c.l.bf16 %v193
  %v262 = vunpack.c.l.bf16 %v194
  %v263 = vmax.f32 %v195, 0.0
  %v264 = vmax.f32 %v196, 0.0
  %v265 = vmax.f32 %v197, 0.0
  %v266 = vmax.f32 %v198, 0.0
  %v267 = vmax.f32 %v199, 0.0
  %v268 = vmax.f32 %v200, 0.0
  %v269 = vmax.f32 %v201, 0.0
  %v270 = vmax.f32 %v202, 0.0
  %v271 = vmax.f32 %v203, 0.0
  %v272 = vmax.f32 %v204, 0.0
  %v273 = vmax.f32 %v205, 0.0
  %v274 = vmax.f32 %v206, 0.0
  %v275 = vmax.f32 %v207, 0.0
  %v276 = vmax.f32 %v208, 0.0
  %v277 = vmax.f32 %v209, 0.0
  %v278 = vmax.f32 %v210, 0.0
  %v279 = vmax.f32 %v211, 0.0
  %v280 = vmax.f32 %v212, 0.0
  %v281 = vmax.f32 %v213, 0.0
  %v282 = vmax.f32 %v214, 0.0
  %v283 = vmax.f32 %v215, 0.0
  %v284 = vmax.f32 %v216, 0.0
  %v285 = vmax.f32 %v217, 0.0
  %v286 = vmax.f32 %v218, 0.0
  %v287 = vmax.f32 %v219, 0.0
  %v288 = vmax.f32 %v220, 0.0
  %v289 = vmax.f32 %v221, 0.0
  %v290 = vmax.f32 %v222, 0.0
  %v291 = vmax.f32 %v223, 0.0
  %v292 = vmax.f32 %v224, 0.0
  %v293 = vmax.f32 %v225, 0.0
  %v294 = vmax.f32 %v226, 0.0
  %v295 = vmax.f32 %v227, 0.0
  %v296 = vmax.f32 %v228, 0.0
  %v297 = vmax.f32 %v229, 0.0
  %v298 = vmax.f32 %v230, 0.0
  %v299 = vmax.f32 %v231, 0.0
  %v300 = vmax.f32 %v232, 0.0
  %v301 = vmax.f32 %v233, 0.0
  %v302 = vmax.f32 %v234, 0.0
  %v303 = vmax.f32 %v235, 0.0
  %v304 = vmax.f32 %v236, 0.0
  %v305 = vmax.f32 %v237, 0.0
  %v306 = vmax.f32 %v238, 0.0
  %v307 = vmax.f32 %v239, 0.0
  %v308 = vmax.f32 %v240, 0.0
  %v309 = vmax.f32 %v241, 0.0
  %v310 = vmax.f32 %v242, 0.0
  %v311 = vmax.f32 %v243, 0.0
  %v312 = vmax.f32 %v244, 0.0
  %v313 = vmax.f32 %v245, 0.0
  %v314 = vmax.f32 %v246, 0.0
  %v315 = vmax.f32 %v247, 0.0
  %v316 = vmax.f32 %v248, 0.0
  %v317 = vmax.f32 %v249, 0.0
  %v318 = vmax.f32 %v250, 0.0
  %v319 = vmax.f32 %v251, 0.0
  %v320 = vmax.f32 %v252, 0.0
  %v321 = vmax.f32 %v253, 0.0
  %v322 = vmax.f32 %v254, 0.0
  %v323 = vmax.f32 %v255, 0.0
  %v324 = vmax.f32 %v256, 0.0
  %v325 = vmax.f32 %v257, 0.0
  %v326 = vmax.f32 %v258, 0.0
  %v327 = vmax.f32 %v259, 0.0
  %v328 = vmax.f32 %v260, 0.0
  %v329 = vmax.f32 %v261, 0.0
  %v330 = vmax.f32 %v262, 0.0
  %v331 = vpack.c.bf16 %v264, %v263
  %v332 = vpack.c.bf16 %v266, %v265
  %v333 = vpack.c.bf16 %v268, %v267
  %v334 = vpack.c.bf16 %v270, %v269
  %v335 = vpack.c.bf16 %v272, %v271
  %v336 = vpack.c.bf16 %v274, %v273
  %v337 = vpack.c.bf16 %v276, %v275
  %v338 = vpack.c.bf16 %v278, %v277
  %v339 = vpack.c.bf16 %v280, %v279
  %v340 = vpack.c.bf16 %v282, %v281
  %v341 = vpack.c.bf16 %v284, %v283
  %v342 = vpack.c.bf16 %v286, %v285
  %v343 = vpack.c.bf16 %v288, %v287
  %v344 = vpack.c.bf16 %v290, %v289
  %v345 = vpack.c.bf16 %v292, %v291
  %v346 = vpack.c.bf16 %v294, %v293
  %v347 = vpack.c.bf16 %v296, %v295
  %v348 = vpack.c.bf16 %v298, %v297
  %v349 = vpack.c.bf16 %v300, %v299
  %v350 = vpack.c.bf16 %v302, %v301
  %v351 = vpack.c.bf16 %v304, %v303
  %v352 = vpack.c.bf16 %v306, %v305
  %v353 = vpack.c.bf16 %v308, %v307
  %v354 = vpack.c.bf16 %v310, %v309
  %v355 = vpack.c.bf16 %v312, %v311
  %v356 = vpack.c.bf16 %v314, %v313
  %v357 = vpack.c.bf16 %v316, %v315
  %v358 = vpack.c.bf16 %v318, %v317
  %v359 = vpack.c.bf16 %v320, %v319
  %v360 = vpack.c.bf16 %v322, %v321
  %v361 = vpack.c.bf16 %v324, %v323
  %v362 = vpack.c.bf16 %v326, %v325
  %v363 = vpack.c.bf16 %v328, %v327
  %v364 = vpack.c.bf16 %v330, %v329
  %v365 = vld [vmem:[%s2] sm:$0xff]
  %v366 = vld [vmem:[%s2 + $0x8] sm:$0xff]
  %v367 = vld [vmem:[%s2 + $0x10] sm:$0xff]
  %v368 = vld [vmem:[%s2 + $0x18] sm:$0xff]
  %v369 = vld [vmem:[%s2 + $0x20] sm:$0xff]
  %v370 = vld [vmem:[%s2 + $0x28] sm:$0xff]
  %v371 = vld [vmem:[%s2 + $0x30] sm:$0xff]
  %373 = vset.pattern.permute.xlu0 0
  %374 = vperm.xlu0 %373, %v365
  %v375 = vpop.permute.xlu0 %374
  %378 = vset.pattern.permute.xlu0 0
  %379 = vperm.xlu0 %378, %v366
  %v380 = vpop.permute.xlu0 %379
  %383 = vset.pattern.permute.xlu0 0
  %384 = vperm.xlu0 %383, %v367
  %v385 = vpop.permute.xlu0 %384
  %388 = vset.pattern.permute.xlu0 0
  %389 = vperm.xlu0 %388, %v368
  %v390 = vpop.permute.xlu0 %389
  %393 = vset.pattern.permute.xlu0 0
  %394 = vperm.xlu0 %393, %v369
  %v395 = vpop.permute.xlu0 %394
  %398 = vset.pattern.permute.xlu0 0
  %399 = vperm.xlu0 %398, %v370
  %v400 = vpop.permute.xlu0 %399
  %403 = vset.pattern.permute.xlu0 0
  %404 = vperm.xlu0 %403, %v371
  %v405 = vpop.permute.xlu0 %404
  %v428 = vunpack.c.l.b16 %v106
  %v429 = vunpack.c.h.b16 %v106
  %v430 = vunpack.c.l.b16 %v107
  %v431 = vunpack.c.h.b16 %v107
  %v432 = vunpack.c.l.b16 %v108
  %v433 = vunpack.c.l.b16 %v109
  %v434 = vunpack.c.h.b16 %v109
  %v435 = vunpack.c.l.b16 %v110
  %v436 = vunpack.c.h.b16 %v110
  %v437 = vunpack.c.l.b16 %v111
  %v438 = vunpack.c.l.b16 %v112
  %v439 = vunpack.c.h.b16 %v112
  %v440 = vunpack.c.l.b16 %v113
  %v441 = vunpack.c.h.b16 %v113
  %v442 = vunpack.c.l.b16 %v114
  %v443 = vunpack.c.l.b16 %v115
  %v444 = vunpack.c.h.b16 %v115
  %v445 = vunpack.c.l.b16 %v116
  %v446 = vunpack.c.h.b16 %v116
  %v447 = vunpack.c.l.b16 %v117
  %v448 = vunpack.c.l.b16 %v118
  %v449 = vunpack.c.h.b16 %v118
  %v450 = vunpack.c.l.b16 %v119
  %v451 = vunpack.c.h.b16 %v119
  %v452 = vunpack.c.l.b16 %v120
  %v453 = vunpack.c.l.b16 %v121
  %v454 = vunpack.c.h.b16 %v121
  %v455 = vunpack.c.l.b16 %v122
  %v456 = vunpack.c.h.b16 %v122
  %v457 = vunpack.c.l.b16 %v123
  %v458 = vunpack.c.l.b16 %v124
  %v459 = vunpack.c.h.b16 %v124
  %v460 = vunpack.c.l.b16 %v125
  %v461 = vunpack.c.h.b16 %v125
  %v462 = vunpack.c.l.b16 %v126
  %v463 = vpack.c.b16 %v433, %v428
  %v464 = vpack.c.b16 %v434, %v429
  %v465 = vpack.c.b16 %v435, %v430
  %v466 = vpack.c.b16 %v436, %v431
  %v467 = vpack.c.b16 %v437, %v432
  %v468 = vpack.c.b16 %v443, %v438
  %v469 = vpack.c.b16 %v444, %v439
  %v470 = vpack.c.b16 %v445, %v440
  %v471 = vpack.c.b16 %v446, %v441
  %v472 = vpack.c.b16 %v447, %v442
  %v473 = vpack.c.b16 %v453, %v448
  %v474 = vpack.c.b16 %v454, %v449
  %v475 = vpack.c.b16 %v455, %v450
  %v476 = vpack.c.b16 %v456, %v451
  %v477 = vpack.c.b16 %v457, %v452
  %v478 = vpack.c.b16 %v458, %v458
  %v479 = vpack.c.b16 %v459, %v459
  %v480 = vpack.c.b16 %v460, %v460
  %v481 = vpack.c.b16 %v461, %v461
  %v482 = vpack.c.b16 %v462, %v462
  %vm499 = vcmask 261120
  %v501 = vsel %vm499, %v467, 0
  %v504 = vsel %vm499, %v472, 0
  %v507 = vsel %vm499, %v477, 0
  %v510 = vsel %vm499, %v482, 0
  %512 = vmatpush.bf16.msra.mxu0 %v338
  %513 = vmatpush.bf16.msra.mxu0 %v337
  %514 = vmatpush.bf16.msra.mxu0 %v336
  %515 = vmatpush.bf16.msra.mxu0 %v335
  %516 = vmatpush.bf16.msra.mxu0 %v334
  %517 = vmatpush.bf16.msra.mxu0 %v333
  %518 = vmatpush.bf16.msra.mxu0 %v332
  %519 = vmatpush.bf16.msra.mxu0 %v331
  %520 = vmatmul.bf16.gmra.mxu0 %v463
  %v521 = vpop.f32.mrf.mxu0
  %v522 = vadd.f32 %v375, %v521
  %v523 = vpop.f32.mrf.mxu0
  %v524 = vadd.f32 %v380, %v523
  %525 = vmatmul.bf16.gmra.mxu0 %v468
  %v526 = vpop.f32.mrf.mxu0
  %v527 = vadd.f32 %v385, %v526
  %v528 = vpop.f32.mrf.mxu0
  %v529 = vadd.f32 %v390, %v528
  %530 = vmatmul.bf16.gmra.mxu0 %v473
  %v531 = vpop.f32.mrf.mxu0
  %v532 = vadd.f32 %v395, %v531
  %v533 = vpop.f32.mrf.mxu0
  %v534 = vadd.f32 %v400, %v533
  %535 = vmatmul.bf16.gmra.mxu0 %v478
  %v536 = vpop.f32.mrf.mxu0
  %v537 = vadd.f32 %v405, %v536
  %v538 = vpop.f32.mrf.mxu0
  %539 = vdwg.mxu0
  %540 = vmatpush.bf16.msra.mxu0 %v346
  %541 = vmatpush.bf16.msra.mxu0 %v345
  %542 = vmatpush.bf16.msra.mxu0 %v344
  %543 = vmatpush.bf16.msra.mxu0 %v343
  %544 = vmatpush.bf16.msra.mxu0 %v342
  %545 = vmatpush.bf16.msra.mxu0 %v341
  %546 = vmatpush.bf16.msra.mxu0 %v340
  %547 = vmatpush.bf16.msra.mxu0 %v339
  %548 = vmatmul.bf16.gmra.mxu0 %v464
  %v549 = vpop.f32.mrf.mxu0
  %v550 = vadd.f32 %v522, %v549
  %v551 = vpop.f32.mrf.mxu0
  %v552 = vadd.f32 %v524, %v551
  %553 = vmatmul.bf16.gmra.mxu0 %v469
  %v554 = vpop.f32.mrf.mxu0
  %v555 = vadd.f32 %v527, %v554
  %v556 = vpop.f32.mrf.mxu0
  %v557 = vadd.f32 %v529, %v556
  %558 = vmatmul.bf16.gmra.mxu0 %v474
  %v559 = vpop.f32.mrf.mxu0
  %v560 = vadd.f32 %v532, %v559
  %v561 = vpop.f32.mrf.mxu0
  %v562 = vadd.f32 %v534, %v561
  %563 = vmatmul.bf16.gmra.mxu0 %v479
  %v564 = vpop.f32.mrf.mxu0
  %v565 = vadd.f32 %v537, %v564
  %v566 = vpop.f32.mrf.mxu0
  %567 = vdwg.mxu0
  %568 = vmatpush.bf16.msra.mxu0 %v354
  %569 = vmatpush.bf16.msra.mxu0 %v353
  %570 = vmatpush.bf16.msra.mxu0 %v352
  %571 = vmatpush.bf16.msra.mxu0 %v351
  %572 = vmatpush.bf16.msra.mxu0 %v350
  %573 = vmatpush.bf16.msra.mxu0 %v349
  %574 = vmatpush.bf16.msra.mxu0 %v348
  %575 = vmatpush.bf16.msra.mxu0 %v347
  %576 = vmatmul.bf16.gmra.mxu0 %v465
  %v577 = vpop.f32.mrf.mxu0
  %v578 = vadd.f32 %v550, %v577
  %v579 = vpop.f32.mrf.mxu0
  %v580 = vadd.f32 %v552, %v579
  %581 = vmatmul.bf16.gmra.mxu0 %v470
  %v582 = vpop.f32.mrf.mxu0
  %v583 = vadd.f32 %v555, %v582
  %v584 = vpop.f32.mrf.mxu0
  %v585 = vadd.f32 %v557, %v584
  %586 = vmatmul.bf16.gmra.mxu0 %v475
  %v587 = vpop.f32.mrf.mxu0
  %v588 = vadd.f32 %v560, %v587
  %v589 = vpop.f32.mrf.mxu0
  %v590 = vadd.f32 %v562, %v589
  %591 = vmatmul.bf16.gmra.mxu0 %v480
  %v592 = vpop.f32.mrf.mxu0
  %v593 = vadd.f32 %v565, %v592
  %v594 = vpop.f32.mrf.mxu0
  %595 = vdwg.mxu0
  %596 = vmatpush.bf16.msra.mxu0 %v362
  %597 = vmatpush.bf16.msra.mxu0 %v361
  %598 = vmatpush.bf16.msra.mxu0 %v360
  %599 = vmatpush.bf16.msra.mxu0 %v359
  %600 = vmatpush.bf16.msra.mxu0 %v358
  %601 = vmatpush.bf16.msra.mxu0 %v357
  %602 = vmatpush.bf16.msra.mxu0 %v356
  %603 = vmatpush.bf16.msra.mxu0 %v355
  %604 = vmatmul.bf16.gmra.mxu0 %v466
  %v605 = vpop.f32.mrf.mxu0
  %v606 = vadd.f32 %v578, %v605
  %v607 = vpop.f32.mrf.mxu0
  %v608 = vadd.f32 %v580, %v607
  %609 = vmatmul.bf16.gmra.mxu0 %v471
  %v610 = vpop.f32.mrf.mxu0
  %v611 = vadd.f32 %v583, %v610
  %v612 = vpop.f32.mrf.mxu0
  %v613 = vadd.f32 %v585, %v612
  %614 = vmatmul.bf16.gmra.mxu0 %v476
  %v615 = vpop.f32.mrf.mxu0
  %v616 = vadd.f32 %v588, %v615
  %v617 = vpop.f32.mrf.mxu0
  %v618 = vadd.f32 %v590, %v617
  %619 = vmatmul.bf16.gmra.mxu0 %v481
  %v620 = vpop.f32.mrf.mxu0
  %v621 = vadd.f32 %v593, %v620
  %v622 = vpop.f32.mrf.mxu0
  %623 = vdwg.mxu0
  %624 = vmatpush.bf16.msra.mxu0 0
  %625 = vmatpush.bf16.msra.mxu0 0
  %626 = vmatpush.bf16.msra.mxu0 0
  %627 = vmatpush.bf16.msra.mxu0 0
  %628 = vmatpush.bf16.msra.mxu0 0
  %629 = vmatpush.bf16.msra.mxu0 0
  %630 = vmatpush.bf16.msra.mxu0 %v364
  %631 = vmatpush.bf16.msra.mxu0 %v363
  %632 = vmatmul.bf16.gmra.mxu0 %v501
  %v633 = vpop.f32.mrf.mxu0
  %v634 = vadd.f32 %v606, %v633
  %v635 = vpop.f32.mrf.mxu0
  %v636 = vadd.f32 %v608, %v635
  %637 = vmatmul.bf16.gmra.mxu0 %v504
  %v638 = vpop.f32.mrf.mxu0
  %v639 = vadd.f32 %v611, %v638
  %v640 = vpop.f32.mrf.mxu0
  %v641 = vadd.f32 %v613, %v640
  %642 = vmatmul.bf16.gmra.mxu0 %v507
  %v643 = vpop.f32.mrf.mxu0
  %v644 = vadd.f32 %v616, %v643
  %v645 = vpop.f32.mrf.mxu0
  %v646 = vadd.f32 %v618, %v645
  %647 = vmatmul.bf16.gmra.mxu0 %v510
  %v648 = vpop.f32.mrf.mxu0
  %v649 = vadd.f32 %v621, %v648
  %v650 = vpop.f32.mrf.mxu0
  %651 = vdwg.mxu0
  %v652 = vadd.f32 %v634, %v88
  %v653 = vadd.f32 %v636, %v90
  %v654 = vadd.f32 %v639, %v93
  %v655 = vadd.f32 %v641, %v95
  %v656 = vadd.f32 %v644, %v98
  %v657 = vadd.f32 %v646, %v100
  %v658 = vadd.f32 %v649, %v103
  %v659 = vmax.f32 %v652, 0.0
  %v660 = vmax.f32 %v653, 0.0
  %v661 = vmax.f32 %v654, 0.0
  %v662 = vmax.f32 %v655, 0.0
  %v663 = vmax.f32 %v656, 0.0
  %v664 = vmax.f32 %v657, 0.0
  %v665 = vmax.f32 %v658, 0.0
  %v666 = vpack.c.bf16 %v660, %v659
  %v667 = vpack.c.bf16 %v662, %v661
  %v668 = vpack.c.bf16 %v664, %v663
  %v669 = vpack.c.bf16 %v665, %v665
  %v670 = vld [vmem:[%s4] sm:$0xf]
  %v671 = vld [vmem:[%s5] sm:$0xff]
  %673 = vset.pattern.permute.xlu0 0
  %674 = vperm.xlu0 %673, %v671
  %v675 = vpop.permute.xlu0 %674
  %vm677 = vcmask 457728
  %v679 = vsel %vm677, %v670, 0
  %vm681 = vcmask 1043456
  %v683 = vsel %vm681, %v669, 0
  %685 = vmatpush.bf16.msra.mxu0 0
  %686 = vmatpush.bf16.msra.mxu0 0
  %687 = vmatpush.bf16.msra.mxu0 0
  %688 = vmatpush.bf16.msra.mxu0 0
  %689 = vmatpush.bf16.msra.mxu0 %v683
  %690 = vmatpush.bf16.msra.mxu0 %v668
  %691 = vmatpush.bf16.msra.mxu0 %v667
  %692 = vmatpush.bf16.msra.mxu0 %v666
  %693 = vmatmul.bf16.gmra.mxu0 %v679
  %v694 = vpop.f32.mrf.mxu0
  %v695 = vadd.f32 %v675, %v694
  %v696 = vpop.f32.mrf.mxu0
  %697 = vdwg.mxu0
  %698 = vst [vmem:[%s6] sm:$0xff] %v695
  // Predicated region
  $region26: #{resvesselnet_pallas.7} parent=0 // pred_check
    _
  $region27: #{resvesselnet_pallas.7} parent=0 // pred_check_branch
    %700 = sbr.rel (0) target = $region29
  $region28: #{resvesselnet_pallas.7} parent=0 // pred_region
    _
  $region29: #{resvesselnet_pallas.7} parent=0 // pred_fallthru
    _
  // Predicated region
  $region30: #{resvesselnet_pallas.7} parent=0 // pred_check
    _
  $region31: #{resvesselnet_pallas.7} parent=0 // pred_check_branch
    %702 = sbr.rel (0) target = $region33
  $region32: #{resvesselnet_pallas.7} parent=0 // pred_region
    _
  $region33: #{resvesselnet_pallas.7} parent=0 // pred_fallthru
    _

</llo_original>
